<compile_context>
chip_gen: v5e
topology: v5e:2x2
jax: 0.10.0
libtpu: 0.0.40
codegen_flags: <defaults>
</compile_context>

<pallas_src>
import numpy as np
import jax
import jax.numpy as jnp
from jax import lax
from jax.experimental import pallas as pl
from jax.experimental.pallas import tpu as pltpu


def _bilstm_kernel(
    x_ref, mask_ref,
    wih0_ref, bih0_ref, wih1_ref, bih1_ref,
    whh0f_ref, whh0b_ref, whh1f_ref, whh1b_ref,
    out_ref,            # (T, Bb, 4H)  columns: [enc_f | dec_f | enc_b | dec_b]
    xg_ref, l0_ref,     # scratch: (T, Bb, 16H) gate pre-activations, (T, Bb, 4H) layer-0 h
):
    T, Bb, D = x_ref.shape
    H4 = out_ref.shape[-1]
    H = H4 // 4
    H2 = 2 * H
    H8 = 8 * H
    unroll = True if T <= 16 else (4 if T % 4 == 0 else (2 if T % 2 == 0 else 1))

    def run_layer(whh_f_ref, whh_b_ref, oref):
        """One fused forward/backward pass of one layer (enc+dec pairs block-diag)."""
        whh_f = whh_f_ref[...]                                    # (2H, 8H) hoisted loads
        whh_b = whh_b_ref[...]

        def cell(g, c):
            # gate columns per pair: [i(2H) | f(2H) | g(2H) | o(2H)], each [enc | dec]
            i = jax.nn.sigmoid(g[:, 0 * H2:1 * H2])
            f = jax.nn.sigmoid(g[:, 1 * H2:2 * H2])
            gg = jnp.tanh(g[:, 2 * H2:3 * H2])
            o = jax.nn.sigmoid(g[:, 3 * H2:4 * H2])
            c_new = f * c + i * gg
            return o * jnp.tanh(c_new), c_new

        def step(s, carry):
            hf, cf, hb, cb = carry                                # (Bb, 2H) each
            tf = s
            tb = T - 1 - s
            # single block-diagonal dot per pair; only h @ W_hh lives in the loop
            gf = xg_ref[tf, :, 0:H8] + jnp.dot(
                hf, whh_f, preferred_element_type=jnp.float32)
            gb = xg_ref[tb, :, H8:2 * H8] + jnp.dot(
                hb, whh_b, preferred_element_type=jnp.float32)
            hf_new, cf_new = cell(gf, cf)
            hb_new, cb_new = cell(gb, cb)
            mf = mask_ref[tf]                                     # (Bb, 1) 1.0 valid / 0.0 pad
            mb = mask_ref[tb]
            kf = 1.0 - mf
            kb = 1.0 - mb
            hf_v = hf_new * mf                                    # padded steps emit zeros
            hb_v = hb_new * mb
            oref[tf, :, 0:H2] = hf_v                              # one contiguous 2H store / pair
            oref[tb, :, H2:H4] = hb_v
            return (hf_v + hf * kf, cf_new * mf + cf * kf,        # state frozen on padding
                    hb_v + hb * kb, cb_new * mb + cb * kb)

        z = jnp.zeros((Bb, H2), jnp.float32)
        lax.fori_loop(0, T, step, (z, z, z, z), unroll=unroll)

    # ---- layer 0: one hoisted input projection for all 4 directions ----------
    x2d = x_ref[...].reshape(T * Bb, D)
    xg_ref[...] = (jnp.dot(x2d, wih0_ref[...], preferred_element_type=jnp.float32)
                   + bih0_ref[...]).reshape(T, Bb, 16 * H)
    run_layer(whh0f_ref, whh0b_ref, l0_ref)

    # ---- layer 1: hoisted input projection from layer-0 outputs --------------
    # enc/dec routing is done via zero blocks inside wih1 (built in _fold_params)
    l02d = l0_ref[...].reshape(T * Bb, H4)
    xg_ref[...] = (jnp.dot(l02d, wih1_ref[...], preferred_element_type=jnp.float32)
                   + bih1_ref[...]).reshape(T, Bb, 16 * H)
    run_layer(whh1f_ref, whh1b_ref, out_ref)


def _attn_mlp_kernel(ed_ref, w2_ref, wed_ref, ab_ref, fc1b_ref, fc2w_ref, fc2b_ref,
                     out_ref):
    """Attention + MLP head for a tile of Bb batch elements (grid over batch)."""
    T, Bb, H4 = ed_ref.shape
    H = H4 // 4

    # shared projections for the whole batch tile (tall matmuls for MXU fill)
    x_all = ed_ref[...].reshape(T * Bb, H4)
    p_all = jnp.dot(x_all, w2_ref[...],
                    preferred_element_type=jnp.float32).reshape(T, Bb, 2)
    pre_all = jnp.dot(x_all, wed_ref[...],
                      preferred_element_type=jnp.float32).reshape(T, Bb, 2 * H)

    for b in range(Bb):                                           # static unroll over the tile
        dp = p_all[:, b, 0:1]                                     # (T, 1) decoder score part
        ep = p_all[:, b, 1:2]                                     # (T, 1) encoder score part
        scores = dp + jnp.transpose(ep, (1, 0)) + ab_ref[...]     # (T_dec, T_enc)
        scores = scores - jnp.max(scores, axis=-1, keepdims=True)
        ex = jnp.exp(scores)
        attn = ex / jnp.sum(ex, axis=-1, keepdims=True)           # exact softmax
        pre_e = pre_all[:, b, 0:H]                                # enc_j @ fc1w_ctx  (T, H)
        pre_d = pre_all[:, b, H:2 * H]                            # dec_i @ fc1w_dec  (T, H)
        # fc1 (BN folded) fused: (attn @ enc) @ W == attn @ (enc @ W)
        h1 = (jnp.dot(attn, pre_e, preferred_element_type=jnp.float32)
              + pre_d + fc1b_ref[...])
        h1 = jnp.maximum(h1, 0.0)
        # fc2 is H -> 1: keep it on the VPU (multiply + lane reduce)
        logits = jnp.sum(h1 * fc2w_ref[...], axis=-1, keepdims=True) + fc2b_ref[...]
        out_ref[b] = jnp.transpose(jax.nn.sigmoid(logits), (1, 0))   # (1, T)


def _fold_params(p):
    """Fuse / permute the PyTorch-shaped parameters into kernel operands (XLA side)."""
    H = p['fc1_w'].shape[1]

    def pair_cols(we, wd):               # (In,4H),(In,4H) -> (In,8H): [iE iD|fE fD|gE gD|oE oD]
        return jnp.concatenate(
            [jnp.concatenate([we[:, g * H:(g + 1) * H], wd[:, g * H:(g + 1) * H]], axis=1)
             for g in range(4)], axis=1)

    def pair_whh(we, wd):                # (H,4H),(H,4H) -> (2H,8H) block-diagonal pair weight
        blk = jnp.zeros((2 * H, 8 * H), jnp.float32)
        for g in range(4):
            blk = blk.at[0:H, g * 2 * H:g * 2 * H + H].set(we[:, g * H:(g + 1) * H])
            blk = blk.at[H:2 * H, g * 2 * H + H:(g + 1) * 2 * H].set(wd[:, g * H:(g + 1) * H])
        return blk

    # layer-0 input projection for all four directions: columns [fwd pair 8H | bwd pair 8H]
    wih0 = jnp.concatenate([pair_cols(p['enc_wih0'][d], p['dec_wih0'][d]) for d in (0, 1)], axis=1)
    bih0 = jnp.concatenate([pair_cols(p['enc_b0'][d], p['dec_b0'][d]) for d in (0, 1)], axis=1)

    # layer-1 input projection: input rows follow the l0 output layout [enc_f|dec_f|enc_b|dec_b]
    wih1 = jnp.zeros((4 * H, 16 * H), jnp.float32)
    for d in range(2):                   # 0 = forward-time pair, 1 = backward-time pair
        for g in range(4):
            ce = d * 8 * H + g * 2 * H   # encoder gate slot
            cd = ce + H                  # decoder gate slot
            wih1 = wih1.at[0:H,         ce:ce + H].set(p['enc_wih1'][d][0:H,     g * H:(g + 1) * H])
            wih1 = wih1.at[2 * H:3 * H, ce:ce + H].set(p['enc_wih1'][d][H:2 * H, g * H:(g + 1) * H])
            wih1 = wih1.at[H:2 * H,     cd:cd + H].set(p['dec_wih1'][d][0:H,     g * H:(g + 1) * H])
            wih1 = wih1.at[3 * H:4 * H, cd:cd + H].set(p['dec_wih1'][d][H:2 * H, g * H:(g + 1) * H])
    bih1 = jnp.concatenate([pair_cols(p['enc_b1'][d], p['dec_b1'][d]) for d in (0, 1)], axis=1)

    whh0f = pair_whh(p['enc_whh0'][0], p['dec_whh0'][0])
    whh0b = pair_whh(p['enc_whh0'][1], p['dec_whh0'][1])
    whh1f = pair_whh(p['enc_whh1'][0], p['dec_whh1'][0])
    whh1b = pair_whh(p['enc_whh1'][1], p['dec_whh1'][1])
    rec = (wih0, bih0, wih1, bih1, whh0f, whh0b, whh1f, whh1b)

    # ---- attention / MLP head (rows follow the kernel layout [enc_f|dec_f|enc_b|dec_b]) ----
    aw = p['attn_w']                                       # rows: [dec_f | dec_b | enc_f | enc_b]
    w2 = jnp.zeros((4 * H, 2), jnp.float32)
    w2 = w2.at[H:2 * H, 0].set(aw[0:H, 0])                 # dec_f -> dp
    w2 = w2.at[3 * H:4 * H, 0].set(aw[H:2 * H, 0])         # dec_b -> dp
    w2 = w2.at[0:H, 1].set(aw[2 * H:3 * H, 0])             # enc_f -> ep
    w2 = w2.at[2 * H:3 * H, 1].set(aw[3 * H:4 * H, 0])     # enc_b -> ep
    ab = p['attn_b'].reshape(1, 1)

    # fold eval-mode BatchNorm1d into fc1
    scale = p['bn_g'] * lax.rsqrt(p['bn_v'] + 1e-5)        # (1, H)
    fc1w = p['fc1_w'] * scale                              # (4H, H), rows [ctx(2H) | dec(2H)]
    fc1b = (p['fc1_b'] - p['bn_m']) * scale + p['bn_b']
    wed = jnp.zeros((4 * H, 2 * H), jnp.float32)
    # columns [0:H]  -> pre_enc = enc @ fc1w_ctx   (enc_f, enc_b kernel rows)
    wed = wed.at[0:H, 0:H].set(fc1w[0:H])
    wed = wed.at[2 * H:3 * H, 0:H].set(fc1w[H:2 * H])
    # columns [H:2H] -> pre_dec = dec @ fc1w_dec   (dec_f, dec_b kernel rows)
    wed = wed.at[H:2 * H, H:2 * H].set(fc1w[2 * H:3 * H])
    wed = wed.at[3 * H:4 * H, H:2 * H].set(fc1w[3 * H:4 * H])

    head = (w2, wed, ab, fc1b, p['fc2_w'].reshape(1, -1), p['fc2_b'].reshape(1, 1))
    return rec, head


def _pick_batch_tile(B, per_elem_bytes, budget):
    """Largest batch tile that divides B, is the full batch or a multiple of 8
    (BlockSpec second-minor constraint), and keeps per-tile VMEM under budget."""
    if B % 8 != 0 or B * per_elem_bytes <= budget:
        return B
    bb = 8
    while bb * 2 <= B and B % (bb * 2) == 0 and (bb * 2) * per_elem_bytes <= budget:
        bb *= 2
    return bb


@jax.jit
def seq2seq_with_attention(embeddings, lengths, params):
    """embeddings: (B, T, D) f32, lengths: (B,) int -- returns (B, T) f32 scores."""
    B, T, D = embeddings.shape
    H = params['fc1_w'].shape[1]
    rec, head = _fold_params(params)

    x_tm = jnp.transpose(embeddings, (1, 0, 2)).astype(jnp.float32)        # (T, B, D)
    # packed-sequence validity mask, hoisted out of the recurrence entirely
    mask = (jnp.arange(T, dtype=jnp.int32)[:, None]
            < lengths.astype(jnp.int32)[None, :]).astype(jnp.float32)[:, :, None]   # (T, B, 1)

    BUDGET = 20 * 2 ** 20                                  # per-tile activation budget (bytes)
    VMEM_CAP = 40 * 2 ** 20                                # leave headroom even on v7x (64 MiB)

    # ---- kernel 1: both bidirectional LSTMs, gridded over batch tiles ----
    per1 = 4 * T * (2 * (D + 1 + 4 * H) + 20 * H)          # dbl-buffered io + xg + l0 per element
    Bb1 = _pick_batch_tile(B, per1, BUDGET)
    w1_bytes = 4 * sum(int(np.prod(w.shape)) for w in rec)
    vmem1 = int(min(VMEM_CAP, max(16 * 2 ** 20, Bb1 * per1 + w1_bytes + (2 << 20))))

    l1 = pl.pallas_call(
        _bilstm_kernel,
        out_shape=jax.ShapeDtypeStruct((T, B, 4 * H), jnp.float32),
        grid=(B // Bb1,),
        in_specs=[pl.BlockSpec((T, Bb1, D), lambda b: (0, b, 0)),
                  pl.BlockSpec((T, Bb1, 1), lambda b: (0, b, 0))]
                 + [pl.BlockSpec(w.shape, lambda b: (0, 0)) for w in rec],
        out_specs=pl.BlockSpec((T, Bb1, 4 * H), lambda b: (0, b, 0)),
        scratch_shapes=[pltpu.VMEM((T, Bb1, 16 * H), jnp.float32),
                        pltpu.VMEM((T, Bb1, 4 * H), jnp.float32)],
        compiler_params=pltpu.CompilerParams(
            dimension_semantics=("parallel",),
            vmem_limit_bytes=vmem1),
    )(x_tm, mask, *rec)

    # ---- kernel 2: attention + MLP head, reads the (T, B, 4H) layout directly ----
    per2 = 4 * (2 * (T * 4 * H + T) + T * T + T * (2 * H + 2) + T * H)
    Bb2 = _pick_batch_tile(B, per2, BUDGET)
    w2_bytes = 4 * sum(int(np.prod(w.shape)) for w in head)
    vmem2 = int(min(VMEM_CAP, max(16 * 2 ** 20, Bb2 * per2 + w2_bytes + (2 << 20))))

    out = pl.pallas_call(
        _attn_mlp_kernel,
        out_shape=jax.ShapeDtypeStruct((B, 1, T), jnp.float32),
        grid=(B // Bb2,),
        in_specs=[pl.BlockSpec((T, Bb2, 4 * H), lambda b: (0, b, 0))]
                 + [pl.BlockSpec(w.shape, lambda b: (0, 0)) for w in head],
        out_specs=pl.BlockSpec((Bb2, 1, T), lambda b: (b, 0, 0)),
        compiler_params=pltpu.CompilerParams(
            dimension_semantics=("parallel",),
            vmem_limit_bytes=vmem2),
    )(l1, *head)
    return out.reshape(B, T)


def init_params(key, input_dim, H):
    """Deterministic init matching the PyTorch parameter shapes (weights pre-transposed)."""
    k = 1.0 / np.sqrt(H)
    keys = iter(jax.random.split(key, 40))

    def u(shape):
        return jax.random.uniform(next(keys), shape, jnp.float32, -k, k)

    p = {}
    for prefix in ('enc', 'dec'):
        # layer 0: input_dim -> H ; layer 1: 2H (bidirectional concat) -> H
        p[prefix + '_wih0'] = u((2, input_dim, 4 * H))
        p[prefix + '_whh0'] = u((2, H, 4 * H))
        p[prefix + '_b0'] = u((2, 1, 4 * H)) + u((2, 1, 4 * H))   # b_ih + b_hh
        p[prefix + '_wih1'] = u((2, 2 * H, 4 * H))
        p[prefix + '_whh1'] = u((2, H, 4 * H))
        p[prefix + '_b1'] = u((2, 1, 4 * H)) + u((2, 1, 4 * H))
    p['attn_w'] = u((4 * H, 1))      # rows: [dec(2H) | enc(2H)]
    p['attn_b'] = u((1, 1))
    p['fc1_w'] = u((4 * H, H))       # rows: [context(2H) | dec(2H)]
    p['fc1_b'] = u((1, H))
    p['bn_g'] = jnp.ones((1, H), jnp.float32)
    p['bn_b'] = jnp.zeros((1, H), jnp.float32)
    p['bn_m'] = jnp.zeros((1, H), jnp.float32)   # running_mean
    p['bn_v'] = jnp.ones((1, H), jnp.float32)    # running_var
    p['fc2_w'] = u((H, 1))
    p['fc2_b'] = u((1, 1))
    return p


if __name__ == "__main__":
    B, T, D, H = 2, 8, 16, 32
    key = jax.random.PRNGKey(0)
    kp, kx = jax.random.split(key)
    params = init_params(kp, D, H)
    embeddings = jax.random.normal(kx, (B, T, D), jnp.float32)
    lengths = jnp.array([T, 5], jnp.int32)   # variable lengths exercise the packing mask

    scores = seq2seq_with_attention(embeddings, lengths, params)
    scores = jax.block_until_ready(scores)

    assert scores.shape == (B, T)
    assert bool(jnp.all(jnp.isfinite(scores)))
    assert bool(jnp.all((scores >= 0.0) & (scores <= 1.0)))
    print("KERNEL_OK")
</pallas_src>

<mosaic_0001>
module attributes {stable_mosaic.version = 11 : i64} {
  func.func @_bilstm_kernel(%arg0: i32, %arg1: memref<8x2x16xf32, #tpu.memory_space<vmem>>, %arg2: memref<8x2x1xf32, #tpu.memory_space<vmem>>, %arg3: memref<16x512xf32, #tpu.memory_space<vmem>>, %arg4: memref<1x512xf32, #tpu.memory_space<vmem>>, %arg5: memref<128x512xf32, #tpu.memory_space<vmem>>, %arg6: memref<1x512xf32, #tpu.memory_space<vmem>>, %arg7: memref<64x256xf32, #tpu.memory_space<vmem>>, %arg8: memref<64x256xf32, #tpu.memory_space<vmem>>, %arg9: memref<64x256xf32, #tpu.memory_space<vmem>>, %arg10: memref<64x256xf32, #tpu.memory_space<vmem>>, %arg11: memref<8x2x128xf32, #tpu.memory_space<vmem>>, %arg12: memref<8x2x512xf32, #tpu.memory_space<vmem>>, %arg13: memref<8x2x128xf32, #tpu.memory_space<vmem>>) attributes {dimension_semantics = [#tpu.dimension_semantics<parallel>], iteration_bounds = array<i64: 1>, scalar_prefetch = 0 : i64, scratch_operands = 2 : i64, tpu.core_type = #tpu.core_type<tc>, window_params = [{transform_indices = @transform_0, window_bounds = array<i64: 8, 2, 16>}, {transform_indices = @transform_1, window_bounds = array<i64: 8, 2, 1>}, {pipeline_mode = #tpu.pipeline_mode<synchronous>, transform_indices = @transform_2, window_bounds = array<i64: 16, 512>}, {pipeline_mode = #tpu.pipeline_mode<synchronous>, transform_indices = @transform_3, window_bounds = array<i64: 1, 512>}, {pipeline_mode = #tpu.pipeline_mode<synchronous>, transform_indices = @transform_4, window_bounds = array<i64: 128, 512>}, {pipeline_mode = #tpu.pipeline_mode<synchronous>, transform_indices = @transform_5, window_bounds = array<i64: 1, 512>}, {pipeline_mode = #tpu.pipeline_mode<synchronous>, transform_indices = @transform_6, window_bounds = array<i64: 64, 256>}, {pipeline_mode = #tpu.pipeline_mode<synchronous>, transform_indices = @transform_7, window_bounds = array<i64: 64, 256>}, {pipeline_mode = #tpu.pipeline_mode<synchronous>, transform_indices = @transform_8, window_bounds = array<i64: 64, 256>}, {pipeline_mode = #tpu.pipeline_mode<synchronous>, transform_indices = @transform_9, window_bounds = array<i64: 64, 256>}, {transform_indices = @transform_10, window_bounds = array<i64: 8, 2, 128>}]} {
    %c0 = arith.constant 0 : index
    %c0_0 = arith.constant 0 : index
    %c0_1 = arith.constant 0 : index
    %0 = vector.load %arg1[%c0, %c0_0, %c0_1] : memref<8x2x16xf32, #tpu.memory_space<vmem>>, vector<8x2x16xf32>
    %1 = vector.shape_cast %0 : vector<8x2x16xf32> to vector<16x16xf32>
    %c0_2 = arith.constant 0 : index
    %c0_3 = arith.constant 0 : index
    %2 = vector.load %arg3[%c0_2, %c0_3] : memref<16x512xf32, #tpu.memory_space<vmem>>, vector<16x512xf32>
    %cst = arith.constant dense<0.000000e+00> : vector<16x512xf32>
    %3 = tpu.matmul %1, %2, %cst {dimension_numbers = #tpu.dot_dimension_numbers<[1], [0], [0], [1], [0, 0, 1, 1], [], []>} : vector<16x16xf32>, vector<16x512xf32>, vector<16x512xf32> -> vector<16x512xf32>
    %c0_4 = arith.constant 0 : index
    %c0_5 = arith.constant 0 : index
    %4 = vector.load %arg4[%c0_4, %c0_5] : memref<1x512xf32, #tpu.memory_space<vmem>>, vector<1x512xf32>
    %5 = vector.broadcast %4 : vector<1x512xf32> to vector<16x512xf32>
    %6 = arith.addf %3, %5 : vector<16x512xf32>
    %7 = vector.shape_cast %6 : vector<16x512xf32> to vector<8x2x512xf32>
    %c0_6 = arith.constant 0 : index
    %c0_7 = arith.constant 0 : index
    %c0_8 = arith.constant 0 : index
    %8 = vector.load %arg12[%c0_6, %c0_7, %c0_8] : memref<8x2x512xf32, #tpu.memory_space<vmem>>, vector<8x2x512xf32>
    tpu.vector_store %arg12[%c0_6, %c0_7, %c0_8], %7 {strides = array<i32>} : memref<8x2x512xf32, #tpu.memory_space<vmem>>, vector<8x2x512xf32>,
    %c0_9 = arith.constant 0 : index
    %c0_10 = arith.constant 0 : index
    %9 = vector.load %arg7[%c0_9, %c0_10] : memref<64x256xf32, #tpu.memory_space<vmem>>, vector<64x256xf32>
    %c0_11 = arith.constant 0 : index
    %c0_12 = arith.constant 0 : index
    %10 = vector.load %arg8[%c0_11, %c0_12] : memref<64x256xf32, #tpu.memory_space<vmem>>, vector<64x256xf32>
    %cst_13 = arith.constant 0.000000e+00 : f32
    %11 = vector.broadcast %cst_13 : f32 to vector<2x64xf32>
    %c0_i32 = arith.constant 0 : i32
    %c7_i32 = arith.constant 7 : i32
    %12 = arith.subi %c7_i32, %c0_i32 : i32
    %13 = arith.index_cast %c0_i32 : i32 to index
    %c0_14 = arith.constant 0 : index
    %c0_15 = arith.constant 0 : index
    %14 = vector.load %arg12[%13, %c0_14, %c0_15] : memref<8x2x512xf32, #tpu.memory_space<vmem>>, vector<1x2x256xf32>
    %15 = vector.shape_cast %14 : vector<1x2x256xf32> to vector<2x256xf32>
    %cst_16 = arith.constant dense<0.000000e+00> : vector<2x256xf32>
    %16 = tpu.matmul %11, %9, %cst_16 {dimension_numbers = #tpu.dot_dimension_numbers<[1], [0], [0], [1], [0, 0, 1, 1], [], []>} : vector<2x64xf32>, vector<64x256xf32>, vector<2x256xf32> -> vector<2x256xf32>
    %17 = arith.addf %15, %16 : vector<2x256xf32>
    %18 = arith.index_cast %12 : i32 to index
    %c0_17 = arith.constant 0 : index
    %c256 = arith.constant 256 : index
    %19 = vector.load %arg12[%18, %c0_17, %c256] : memref<8x2x512xf32, #tpu.memory_space<vmem>>, vector<1x2x256xf32>
    %20 = vector.shape_cast %19 : vector<1x2x256xf32> to vector<2x256xf32>
    %cst_18 = arith.constant dense<0.000000e+00> : vector<2x256xf32>
    %21 = tpu.matmul %11, %10, %cst_18 {dimension_numbers = #tpu.dot_dimension_numbers<[1], [0], [0], [1], [0, 0, 1, 1], [], []>} : vector<2x64xf32>, vector<64x256xf32>, vector<2x256xf32> -> vector<2x256xf32>
    %22 = arith.addf %20, %21 : vector<2x256xf32>
    %23 = vector.extract_strided_slice %17 {offsets = [0, 0], sizes = [2, 64], strides = [1, 1]} : vector<2x256xf32> to vector<2x64xf32>
    %24 = arith.negf %23 : vector<2x64xf32>
    %25 = math.exp %24 : vector<2x64xf32>
    %cst_19 = arith.constant 1.000000e+00 : f32
    %26 = vector.broadcast %cst_19 : f32 to vector<2x64xf32>
    %27 = arith.addf %26, %25 : vector<2x64xf32>
    %28 = arith.divf %26, %27 : vector<2x64xf32>
    %29 = vector.extract_strided_slice %17 {offsets = [0, 64], sizes = [2, 64], strides = [1, 1]} : vector<2x256xf32> to vector<2x64xf32>
    %30 = arith.negf %29 : vector<2x64xf32>
    %31 = math.exp %30 : vector<2x64xf32>
    %cst_20 = arith.constant 1.000000e+00 : f32
    %32 = vector.broadcast %cst_20 : f32 to vector<2x64xf32>
    %33 = arith.addf %32, %31 : vector<2x64xf32>
    %34 = arith.divf %32, %33 : vector<2x64xf32>
    %35 = vector.extract_strided_slice %17 {offsets = [0, 128], sizes = [2, 64], strides = [1, 1]} : vector<2x256xf32> to vector<2x64xf32>
    %36 = math.tanh %35 : vector<2x64xf32>
    %37 = vector.extract_strided_slice %17 {offsets = [0, 192], sizes = [2, 64], strides = [1, 1]} : vector<2x256xf32> to vector<2x64xf32>
    %38 = arith.negf %37 : vector<2x64xf32>
    %39 = math.exp %38 : vector<2x64xf32>
    %cst_21 = arith.constant 1.000000e+00 : f32
    %40 = vector.broadcast %cst_21 : f32 to vector<2x64xf32>
    %41 = arith.addf %40, %39 : vector<2x64xf32>
    %42 = arith.divf %40, %41 : vector<2x64xf32>
    %43 = arith.mulf %34, %11 : vector<2x64xf32>
    %44 = arith.mulf %28, %36 : vector<2x64xf32>
    %45 = arith.addf %43, %44 : vector<2x64xf32>
    %46 = math.tanh %45 : vector<2x64xf32>
    %47 = arith.mulf %42, %46 : vector<2x64xf32>
    %48 = vector.extract_strided_slice %22 {offsets = [0, 0], sizes = [2, 64], strides = [1, 1]} : vector<2x256xf32> to vector<2x64xf32>
    %49 = arith.negf %48 : vector<2x64xf32>
    %50 = math.exp %49 : vector<2x64xf32>
    %cst_22 = arith.constant 1.000000e+00 : f32
    %51 = vector.broadcast %cst_22 : f32 to vector<2x64xf32>
    %52 = arith.addf %51, %50 : vector<2x64xf32>
    %53 = arith.divf %51, %52 : vector<2x64xf32>
    %54 = vector.extract_strided_slice %22 {offsets = [0, 64], sizes = [2, 64], strides = [1, 1]} : vector<2x256xf32> to vector<2x64xf32>
    %55 = arith.negf %54 : vector<2x64xf32>
    %56 = math.exp %55 : vector<2x64xf32>
    %cst_23 = arith.constant 1.000000e+00 : f32
    %57 = vector.broadcast %cst_23 : f32 to vector<2x64xf32>
    %58 = arith.addf %57, %56 : vector<2x64xf32>
    %59 = arith.divf %57, %58 : vector<2x64xf32>
    %60 = vector.extract_strided_slice %22 {offsets = [0, 128], sizes = [2, 64], strides = [1, 1]} : vector<2x256xf32> to vector<2x64xf32>
    %61 = math.tanh %60 : vector<2x64xf32>
    %62 = vector.extract_strided_slice %22 {offsets = [0, 192], sizes = [2, 64], strides = [1, 1]} : vector<2x256xf32> to vector<2x64xf32>
    %63 = arith.negf %62 : vector<2x64xf32>
    %64 = math.exp %63 : vector<2x64xf32>
    %cst_24 = arith.constant 1.000000e+00 : f32
    %65 = vector.broadcast %cst_24 : f32 to vector<2x64xf32>
    %66 = arith.addf %65, %64 : vector<2x64xf32>
    %67 = arith.divf %65, %66 : vector<2x64xf32>
    %68 = arith.mulf %59, %11 : vector<2x64xf32>
    %69 = arith.mulf %53, %61 : vector<2x64xf32>
    %70 = arith.addf %68, %69 : vector<2x64xf32>
    %71 = math.tanh %70 : vector<2x64xf32>
    %72 = arith.mulf %67, %71 : vector<2x64xf32>
    %73 = arith.index_cast %c0_i32 : i32 to index
    %c0_25 = arith.constant 0 : index
    %c0_26 = arith.constant 0 : index
    %74 = vector.load %arg2[%73, %c0_25, %c0_26] : memref<8x2x1xf32, #tpu.memory_space<vmem>>, vector<1x2x1xf32>
    %75 = vector.shape_cast %74 : vector<1x2x1xf32> to vector<2x1xf32>
    %76 = arith.index_cast %12 : i32 to index
    %c0_27 = arith.constant 0 : index
    %c0_28 = arith.constant 0 : index
    %77 = vector.load %arg2[%76, %c0_27, %c0_28] : memref<8x2x1xf32, #tpu.memory_space<vmem>>, vector<1x2x1xf32>
    %78 = vector.shape_cast %77 : vector<1x2x1xf32> to vector<2x1xf32>
    %cst_29 = arith.constant 1.000000e+00 : f32
    %79 = vector.broadcast %cst_29 : f32 to vector<2x1xf32>
    %80 = arith.subf %79, %75 : vector<2x1xf32>
    %cst_30 = arith.constant 1.000000e+00 : f32
    %81 = vector.broadcast %cst_30 : f32 to vector<2x1xf32>
    %82 = arith.subf %81, %78 : vector<2x1xf32>
    %83 = vector.broadcast %75 : vector<2x1xf32> to vector<2x64xf32>
    %84 = arith.mulf %47, %83 : vector<2x64xf32>
    %85 = vector.broadcast %78 : vector<2x1xf32> to vector<2x64xf32>
    %86 = arith.mulf %72, %85 : vector<2x64xf32>
    %87 = arith.index_cast %c0_i32 : i32 to index
    %c0_31 = arith.constant 0 : index
    %c0_32 = arith.constant 0 : index
    %88 = vector.load %arg13[%87, %c0_31, %c0_32] : memref<8x2x128xf32, #tpu.memory_space<vmem>>, vector<1x2x64xf32>
    %89 = vector.shape_cast %88 : vector<1x2x64xf32> to vector<2x64xf32>
    %90 = vector.shape_cast %84 : vector<2x64xf32> to vector<1x2x64xf32>
    tpu.vector_store %arg13[%87, %c0_31, %c0_32], %90 {strides = array<i32>} : memref<8x2x128xf32, #tpu.memory_space<vmem>>, vector<1x2x64xf32>,
    %91 = arith.index_cast %12 : i32 to index
    %c0_33 = arith.constant 0 : index
    %c64 = arith.constant 64 : index
    %92 = vector.load %arg13[%91, %c0_33, %c64] : memref<8x2x128xf32, #tpu.memory_space<vmem>>, vector<1x2x64xf32>
    %93 = vector.shape_cast %92 : vector<1x2x64xf32> to vector<2x64xf32>
    %94 = vector.shape_cast %86 : vector<2x64xf32> to vector<1x2x64xf32>
    tpu.vector_store %arg13[%91, %c0_33, %c64], %94 {strides = array<i32>} : memref<8x2x128xf32, #tpu.memory_space<vmem>>, vector<1x2x64xf32>,
    %95 = vector.broadcast %80 : vector<2x1xf32> to vector<2x64xf32>
    %96 = arith.mulf %11, %95 : vector<2x64xf32>
    %97 = arith.addf %84, %96 : vector<2x64xf32>
    %98 = vector.broadcast %75 : vector<2x1xf32> to vector<2x64xf32>
    %99 = arith.mulf %45, %98 : vector<2x64xf32>
    %100 = vector.broadcast %80 : vector<2x1xf32> to vector<2x64xf32>
    %101 = arith.mulf %11, %100 : vector<2x64xf32>
    %102 = arith.addf %99, %101 : vector<2x64xf32>
    %103 = vector.broadcast %82 : vector<2x1xf32> to vector<2x64xf32>
    %104 = arith.mulf %11, %103 : vector<2x64xf32>
    %105 = arith.addf %86, %104 : vector<2x64xf32>
    %106 = vector.broadcast %78 : vector<2x1xf32> to vector<2x64xf32>
    %107 = arith.mulf %70, %106 : vector<2x64xf32>
    %108 = vector.broadcast %82 : vector<2x1xf32> to vector<2x64xf32>
    %109 = arith.mulf %11, %108 : vector<2x64xf32>
    %110 = arith.addf %107, %109 : vector<2x64xf32>
    %c1_i32 = arith.constant 1 : i32
    %c7_i32_34 = arith.constant 7 : i32
    %111 = arith.subi %c7_i32_34, %c1_i32 : i32
    %112 = arith.index_cast %c1_i32 : i32 to index
    %c0_35 = arith.constant 0 : index
    %c0_36 = arith.constant 0 : index
    %113 = vector.load %arg12[%112, %c0_35, %c0_36] : memref<8x2x512xf32, #tpu.memory_space<vmem>>, vector<1x2x256xf32>
    %114 = vector.shape_cast %113 : vector<1x2x256xf32> to vector<2x256xf32>
    %cst_37 = arith.constant dense<0.000000e+00> : vector<2x256xf32>
    %115 = tpu.matmul %97, %9, %cst_37 {dimension_numbers = #tpu.dot_dimension_numbers<[1], [0], [0], [1], [0, 0, 1, 1], [], []>} : vector<2x64xf32>, vector<64x256xf32>, vector<2x256xf32> -> vector<2x256xf32>
    %116 = arith.addf %114, %115 : vector<2x256xf32>
    %117 = arith.index_cast %111 : i32 to index
    %c0_38 = arith.constant 0 : index
    %c256_39 = arith.constant 256 : index
    %118 = vector.load %arg12[%117, %c0_38, %c256_39] : memref<8x2x512xf32, #tpu.memory_space<vmem>>, vector<1x2x256xf32>
    %119 = vector.shape_cast %118 : vector<1x2x256xf32> to vector<2x256xf32>
    %cst_40 = arith.constant dense<0.000000e+00> : vector<2x256xf32>
    %120 = tpu.matmul %105, %10, %cst_40 {dimension_numbers = #tpu.dot_dimension_numbers<[1], [0], [0], [1], [0, 0, 1, 1], [], []>} : vector<2x64xf32>, vector<64x256xf32>, vector<2x256xf32> -> vector<2x256xf32>
    %121 = arith.addf %119, %120 : vector<2x256xf32>
    %122 = vector.extract_strided_slice %116 {offsets = [0, 0], sizes = [2, 64], strides = [1, 1]} : vector<2x256xf32> to vector<2x64xf32>
    %123 = arith.negf %122 : vector<2x64xf32>
    %124 = math.exp %123 : vector<2x64xf32>
    %cst_41 = arith.constant 1.000000e+00 : f32
    %125 = vector.broadcast %cst_41 : f32 to vector<2x64xf32>
    %126 = arith.addf %125, %124 : vector<2x64xf32>
    %127 = arith.divf %125, %126 : vector<2x64xf32>
    %128 = vector.extract_strided_slice %116 {offsets = [0, 64], sizes = [2, 64], strides = [1, 1]} : vector<2x256xf32> to vector<2x64xf32>
    %129 = arith.negf %128 : vector<2x64xf32>
    %130 = math.exp %129 : vector<2x64xf32>
    %cst_42 = arith.constant 1.000000e+00 : f32
    %131 = vector.broadcast %cst_42 : f32 to vector<2x64xf32>
    %132 = arith.addf %131, %130 : vector<2x64xf32>
    %133 = arith.divf %131, %132 : vector<2x64xf32>
    %134 = vector.extract_strided_slice %116 {offsets = [0, 128], sizes = [2, 64], strides = [1, 1]} : vector<2x256xf32> to vector<2x64xf32>
    %135 = math.tanh %134 : vector<2x64xf32>
    %136 = vector.extract_strided_slice %116 {offsets = [0, 192], sizes = [2, 64], strides = [1, 1]} : vector<2x256xf32> to vector<2x64xf32>
    %137 = arith.negf %136 : vector<2x64xf32>
    %138 = math.exp %137 : vector<2x64xf32>
    %cst_43 = arith.constant 1.000000e+00 : f32
    %139 = vector.broadcast %cst_43 : f32 to vector<2x64xf32>
    %140 = arith.addf %139, %138 : vector<2x64xf32>
    %141 = arith.divf %139, %140 : vector<2x64xf32>
    %142 = arith.mulf %133, %102 : vector<2x64xf32>
    %143 = arith.mulf %127, %135 : vector<2x64xf32>
    %144 = arith.addf %142, %143 : vector<2x64xf32>
    %145 = math.tanh %144 : vector<2x64xf32>
    %146 = arith.mulf %141, %145 : vector<2x64xf32>
    %147 = vector.extract_strided_slice %121 {offsets = [0, 0], sizes = [2, 64], strides = [1, 1]} : vector<2x256xf32> to vector<2x64xf32>
    %148 = arith.negf %147 : vector<2x64xf32>
    %149 = math.exp %148 : vector<2x64xf32>
    %cst_44 = arith.constant 1.000000e+00 : f32
    %150 = vector.broadcast %cst_44 : f32 to vector<2x64xf32>
    %151 = arith.addf %150, %149 : vector<2x64xf32>
    %152 = arith.divf %150, %151 : vector<2x64xf32>
    %153 = vector.extract_strided_slice %121 {offsets = [0, 64], sizes = [2, 64], strides = [1, 1]} : vector<2x256xf32> to vector<2x64xf32>
    %154 = arith.negf %153 : vector<2x64xf32>
    %155 = math.exp %154 : vector<2x64xf32>
    %cst_45 = arith.constant 1.000000e+00 : f32
    %156 = vector.broadcast %cst_45 : f32 to vector<2x64xf32>
    %157 = arith.addf %156, %155 : vector<2x64xf32>
    %158 = arith.divf %156, %157 : vector<2x64xf32>
    %159 = vector.extract_strided_slice %121 {offsets = [0, 128], sizes = [2, 64], strides = [1, 1]} : vector<2x256xf32> to vector<2x64xf32>
    %160 = math.tanh %159 : vector<2x64xf32>
    %161 = vector.extract_strided_slice %121 {offsets = [0, 192], sizes = [2, 64], strides = [1, 1]} : vector<2x256xf32> to vector<2x64xf32>
    %162 = arith.negf %161 : vector<2x64xf32>
    %163 = math.exp %162 : vector<2x64xf32>
    %cst_46 = arith.constant 1.000000e+00 : f32
    %164 = vector.broadcast %cst_46 : f32 to vector<2x64xf32>
    %165 = arith.addf %164, %163 : vector<2x64xf32>
    %166 = arith.divf %164, %165 : vector<2x64xf32>
    %167 = arith.mulf %158, %110 : vector<2x64xf32>
    %168 = arith.mulf %152, %160 : vector<2x64xf32>
    %169 = arith.addf %167, %168 : vector<2x64xf32>
    %170 = math.tanh %169 : vector<2x64xf32>
    %171 = arith.mulf %166, %170 : vector<2x64xf32>
    %172 = arith.index_cast %c1_i32 : i32 to index
    %c0_47 = arith.constant 0 : index
    %c0_48 = arith.constant 0 : index
    %173 = vector.load %arg2[%172, %c0_47, %c0_48] : memref<8x2x1xf32, #tpu.memory_space<vmem>>, vector<1x2x1xf32>
    %174 = vector.shape_cast %173 : vector<1x2x1xf32> to vector<2x1xf32>
    %175 = arith.index_cast %111 : i32 to index
    %c0_49 = arith.constant 0 : index
    %c0_50 = arith.constant 0 : index
    %176 = vector.load %arg2[%175, %c0_49, %c0_50] : memref<8x2x1xf32, #tpu.memory_space<vmem>>, vector<1x2x1xf32>
    %177 = vector.shape_cast %176 : vector<1x2x1xf32> to vector<2x1xf32>
    %cst_51 = arith.constant 1.000000e+00 : f32
    %178 = vector.broadcast %cst_51 : f32 to vector<2x1xf32>
    %179 = arith.subf %178, %174 : vector<2x1xf32>
    %cst_52 = arith.constant 1.000000e+00 : f32
    %180 = vector.broadcast %cst_52 : f32 to vector<2x1xf32>
    %181 = arith.subf %180, %177 : vector<2x1xf32>
    %182 = vector.broadcast %174 : vector<2x1xf32> to vector<2x64xf32>
    %183 = arith.mulf %146, %182 : vector<2x64xf32>
    %184 = vector.broadcast %177 : vector<2x1xf32> to vector<2x64xf32>
    %185 = arith.mulf %171, %184 : vector<2x64xf32>
    %186 = arith.index_cast %c1_i32 : i32 to index
    %c0_53 = arith.constant 0 : index
    %c0_54 = arith.constant 0 : index
    %187 = vector.load %arg13[%186, %c0_53, %c0_54] : memref<8x2x128xf32, #tpu.memory_space<vmem>>, vector<1x2x64xf32>
    %188 = vector.shape_cast %187 : vector<1x2x64xf32> to vector<2x64xf32>
    %189 = vector.shape_cast %183 : vector<2x64xf32> to vector<1x2x64xf32>
    tpu.vector_store %arg13[%186, %c0_53, %c0_54], %189 {strides = array<i32>} : memref<8x2x128xf32, #tpu.memory_space<vmem>>, vector<1x2x64xf32>,
    %190 = arith.index_cast %111 : i32 to index
    %c0_55 = arith.constant 0 : index
    %c64_56 = arith.constant 64 : index
    %191 = vector.load %arg13[%190, %c0_55, %c64_56] : memref<8x2x128xf32, #tpu.memory_space<vmem>>, vector<1x2x64xf32>
    %192 = vector.shape_cast %191 : vector<1x2x64xf32> to vector<2x64xf32>
    %193 = vector.shape_cast %185 : vector<2x64xf32> to vector<1x2x64xf32>
    tpu.vector_store %arg13[%190, %c0_55, %c64_56], %193 {strides = array<i32>} : memref<8x2x128xf32, #tpu.memory_space<vmem>>, vector<1x2x64xf32>,
    %194 = vector.broadcast %179 : vector<2x1xf32> to vector<2x64xf32>
    %195 = arith.mulf %97, %194 : vector<2x64xf32>
    %196 = arith.addf %183, %195 : vector<2x64xf32>
    %197 = vector.broadcast %174 : vector<2x1xf32> to vector<2x64xf32>
    %198 = arith.mulf %144, %197 : vector<2x64xf32>
    %199 = vector.broadcast %179 : vector<2x1xf32> to vector<2x64xf32>
    %200 = arith.mulf %102, %199 : vector<2x64xf32>
    %201 = arith.addf %198, %200 : vector<2x64xf32>
    %202 = vector.broadcast %181 : vector<2x1xf32> to vector<2x64xf32>
    %203 = arith.mulf %105, %202 : vector<2x64xf32>
    %204 = arith.addf %185, %203 : vector<2x64xf32>
    %205 = vector.broadcast %177 : vector<2x1xf32> to vector<2x64xf32>
    %206 = arith.mulf %169, %205 : vector<2x64xf32>
    %207 = vector.broadcast %181 : vector<2x1xf32> to vector<2x64xf32>
    %208 = arith.mulf %110, %207 : vector<2x64xf32>
    %209 = arith.addf %206, %208 : vector<2x64xf32>
    %c2_i32 = arith.constant 2 : i32
    %c7_i32_57 = arith.constant 7 : i32
    %210 = arith.subi %c7_i32_57, %c2_i32 : i32
    %211 = arith.index_cast %c2_i32 : i32 to index
    %c0_58 = arith.constant 0 : index
    %c0_59 = arith.constant 0 : index
    %212 = vector.load %arg12[%211, %c0_58, %c0_59] : memref<8x2x512xf32, #tpu.memory_space<vmem>>, vector<1x2x256xf32>
    %213 = vector.shape_cast %212 : vector<1x2x256xf32> to vector<2x256xf32>
    %cst_60 = arith.constant dense<0.000000e+00> : vector<2x256xf32>
    %214 = tpu.matmul %196, %9, %cst_60 {dimension_numbers = #tpu.dot_dimension_numbers<[1], [0], [0], [1], [0, 0, 1, 1], [], []>} : vector<2x64xf32>, vector<64x256xf32>, vector<2x256xf32> -> vector<2x256xf32>
    %215 = arith.addf %213, %214 : vector<2x256xf32>
    %216 = arith.index_cast %210 : i32 to index
    %c0_61 = arith.constant 0 : index
    %c256_62 = arith.constant 256 : index
    %217 = vector.load %arg12[%216, %c0_61, %c256_62] : memref<8x2x512xf32, #tpu.memory_space<vmem>>, vector<1x2x256xf32>
    %218 = vector.shape_cast %217 : vector<1x2x256xf32> to vector<2x256xf32>
    %cst_63 = arith.constant dense<0.000000e+00> : vector<2x256xf32>
    %219 = tpu.matmul %204, %10, %cst_63 {dimension_numbers = #tpu.dot_dimension_numbers<[1], [0], [0], [1], [0, 0, 1, 1], [], []>} : vector<2x64xf32>, vector<64x256xf32>, vector<2x256xf32> -> vector<2x256xf32>
    %220 = arith.addf %218, %219 : vector<2x256xf32>
    %221 = vector.extract_strided_slice %215 {offsets = [0, 0], sizes = [2, 64], strides = [1, 1]} : vector<2x256xf32> to vector<2x64xf32>
    %222 = arith.negf %221 : vector<2x64xf32>
    %223 = math.exp %222 : vector<2x64xf32>
    %cst_64 = arith.constant 1.000000e+00 : f32
    %224 = vector.broadcast %cst_64 : f32 to vector<2x64xf32>
    %225 = arith.addf %224, %223 : vector<2x64xf32>
    %226 = arith.divf %224, %225 : vector<2x64xf32>
    %227 = vector.extract_strided_slice %215 {offsets = [0, 64], sizes = [2, 64], strides = [1, 1]} : vector<2x256xf32> to vector<2x64xf32>
    %228 = arith.negf %227 : vector<2x64xf32>
    %229 = math.exp %228 : vector<2x64xf32>
    %cst_65 = arith.constant 1.000000e+00 : f32
    %230 = vector.broadcast %cst_65 : f32 to vector<2x64xf32>
    %231 = arith.addf %230, %229 : vector<2x64xf32>
    %232 = arith.divf %230, %231 : vector<2x64xf32>
    %233 = vector.extract_strided_slice %215 {offsets = [0, 128], sizes = [2, 64], strides = [1, 1]} : vector<2x256xf32> to vector<2x64xf32>
    %234 = math.tanh %233 : vector<2x64xf32>
    %235 = vector.extract_strided_slice %215 {offsets = [0, 192], sizes = [2, 64], strides = [1, 1]} : vector<2x256xf32> to vector<2x64xf32>
    %236 = arith.negf %235 : vector<2x64xf32>
    %237 = math.exp %236 : vector<2x64xf32>
    %cst_66 = arith.constant 1.000000e+00 : f32
    %238 = vector.broadcast %cst_66 : f32 to vector<2x64xf32>
    %239 = arith.addf %238, %237 : vector<2x64xf32>
    %240 = arith.divf %238, %239 : vector<2x64xf32>
    %241 = arith.mulf %232, %201 : vector<2x64xf32>
    %242 = arith.mulf %226, %234 : vector<2x64xf32>
    %243 = arith.addf %241, %242 : vector<2x64xf32>
    %244 = math.tanh %243 : vector<2x64xf32>
    %245 = arith.mulf %240, %244 : vector<2x64xf32>
    %246 = vector.extract_strided_slice %220 {offsets = [0, 0], sizes = [2, 64], strides = [1, 1]} : vector<2x256xf32> to vector<2x64xf32>
    %247 = arith.negf %246 : vector<2x64xf32>
    %248 = math.exp %247 : vector<2x64xf32>
    %cst_67 = arith.constant 1.000000e+00 : f32
    %249 = vector.broadcast %cst_67 : f32 to vector<2x64xf32>
    %250 = arith.addf %249, %248 : vector<2x64xf32>
    %251 = arith.divf %249, %250 : vector<2x64xf32>
    %252 = vector.extract_strided_slice %220 {offsets = [0, 64], sizes = [2, 64], strides = [1, 1]} : vector<2x256xf32> to vector<2x64xf32>
    %253 = arith.negf %252 : vector<2x64xf32>
    %254 = math.exp %253 : vector<2x64xf32>
    %cst_68 = arith.constant 1.000000e+00 : f32
    %255 = vector.broadcast %cst_68 : f32 to vector<2x64xf32>
    %256 = arith.addf %255, %254 : vector<2x64xf32>
    %257 = arith.divf %255, %256 : vector<2x64xf32>
    %258 = vector.extract_strided_slice %220 {offsets = [0, 128], sizes = [2, 64], strides = [1, 1]} : vector<2x256xf32> to vector<2x64xf32>
    %259 = math.tanh %258 : vector<2x64xf32>
    %260 = vector.extract_strided_slice %220 {offsets = [0, 192], sizes = [2, 64], strides = [1, 1]} : vector<2x256xf32> to vector<2x64xf32>
    %261 = arith.negf %260 : vector<2x64xf32>
    %262 = math.exp %261 : vector<2x64xf32>
    %cst_69 = arith.constant 1.000000e+00 : f32
    %263 = vector.broadcast %cst_69 : f32 to vector<2x64xf32>
    %264 = arith.addf %263, %262 : vector<2x64xf32>
    %265 = arith.divf %263, %264 : vector<2x64xf32>
    %266 = arith.mulf %257, %209 : vector<2x64xf32>
    %267 = arith.mulf %251, %259 : vector<2x64xf32>
    %268 = arith.addf %266, %267 : vector<2x64xf32>
    %269 = math.tanh %268 : vector<2x64xf32>
    %270 = arith.mulf %265, %269 : vector<2x64xf32>
    %271 = arith.index_cast %c2_i32 : i32 to index
    %c0_70 = arith.constant 0 : index
    %c0_71 = arith.constant 0 : index
    %272 = vector.load %arg2[%271, %c0_70, %c0_71] : memref<8x2x1xf32, #tpu.memory_space<vmem>>, vector<1x2x1xf32>
    %273 = vector.shape_cast %272 : vector<1x2x1xf32> to vector<2x1xf32>
    %274 = arith.index_cast %210 : i32 to index
    %c0_72 = arith.constant 0 : index
    %c0_73 = arith.constant 0 : index
    %275 = vector.load %arg2[%274, %c0_72, %c0_73] : memref<8x2x1xf32, #tpu.memory_space<vmem>>, vector<1x2x1xf32>
    %276 = vector.shape_cast %275 : vector<1x2x1xf32> to vector<2x1xf32>
    %cst_74 = arith.constant 1.000000e+00 : f32
    %277 = vector.broadcast %cst_74 : f32 to vector<2x1xf32>
    %278 = arith.subf %277, %273 : vector<2x1xf32>
    %cst_75 = arith.constant 1.000000e+00 : f32
    %279 = vector.broadcast %cst_75 : f32 to vector<2x1xf32>
    %280 = arith.subf %279, %276 : vector<2x1xf32>
    %281 = vector.broadcast %273 : vector<2x1xf32> to vector<2x64xf32>
    %282 = arith.mulf %245, %281 : vector<2x64xf32>
    %283 = vector.broadcast %276 : vector<2x1xf32> to vector<2x64xf32>
    %284 = arith.mulf %270, %283 : vector<2x64xf32>
    %285 = arith.index_cast %c2_i32 : i32 to index
    %c0_76 = arith.constant 0 : index
    %c0_77 = arith.constant 0 : index
    %286 = vector.load %arg13[%285, %c0_76, %c0_77] : memref<8x2x128xf32, #tpu.memory_space<vmem>>, vector<1x2x64xf32>
    %287 = vector.shape_cast %286 : vector<1x2x64xf32> to vector<2x64xf32>
    %288 = vector.shape_cast %282 : vector<2x64xf32> to vector<1x2x64xf32>
    tpu.vector_store %arg13[%285, %c0_76, %c0_77], %288 {strides = array<i32>} : memref<8x2x128xf32, #tpu.memory_space<vmem>>, vector<1x2x64xf32>,
    %289 = arith.index_cast %210 : i32 to index
    %c0_78 = arith.constant 0 : index
    %c64_79 = arith.constant 64 : index
    %290 = vector.load %arg13[%289, %c0_78, %c64_79] : memref<8x2x128xf32, #tpu.memory_space<vmem>>, vector<1x2x64xf32>
    %291 = vector.shape_cast %290 : vector<1x2x64xf32> to vector<2x64xf32>
    %292 = vector.shape_cast %284 : vector<2x64xf32> to vector<1x2x64xf32>
    tpu.vector_store %arg13[%289, %c0_78, %c64_79], %292 {strides = array<i32>} : memref<8x2x128xf32, #tpu.memory_space<vmem>>, vector<1x2x64xf32>,
    %293 = vector.broadcast %278 : vector<2x1xf32> to vector<2x64xf32>
    %294 = arith.mulf %196, %293 : vector<2x64xf32>
    %295 = arith.addf %282, %294 : vector<2x64xf32>
    %296 = vector.broadcast %273 : vector<2x1xf32> to vector<2x64xf32>
    %297 = arith.mulf %243, %296 : vector<2x64xf32>
    %298 = vector.broadcast %278 : vector<2x1xf32> to vector<2x64xf32>
    %299 = arith.mulf %201, %298 : vector<2x64xf32>
    %300 = arith.addf %297, %299 : vector<2x64xf32>
    %301 = vector.broadcast %280 : vector<2x1xf32> to vector<2x64xf32>
    %302 = arith.mulf %204, %301 : vector<2x64xf32>
    %303 = arith.addf %284, %302 : vector<2x64xf32>
    %304 = vector.broadcast %276 : vector<2x1xf32> to vector<2x64xf32>
    %305 = arith.mulf %268, %304 : vector<2x64xf32>
    %306 = vector.broadcast %280 : vector<2x1xf32> to vector<2x64xf32>
    %307 = arith.mulf %209, %306 : vector<2x64xf32>
    %308 = arith.addf %305, %307 : vector<2x64xf32>
    %c3_i32 = arith.constant 3 : i32
    %c7_i32_80 = arith.constant 7 : i32
    %309 = arith.subi %c7_i32_80, %c3_i32 : i32
    %310 = arith.index_cast %c3_i32 : i32 to index
    %c0_81 = arith.constant 0 : index
    %c0_82 = arith.constant 0 : index
    %311 = vector.load %arg12[%310, %c0_81, %c0_82] : memref<8x2x512xf32, #tpu.memory_space<vmem>>, vector<1x2x256xf32>
    %312 = vector.shape_cast %311 : vector<1x2x256xf32> to vector<2x256xf32>
    %cst_83 = arith.constant dense<0.000000e+00> : vector<2x256xf32>
    %313 = tpu.matmul %295, %9, %cst_83 {dimension_numbers = #tpu.dot_dimension_numbers<[1], [0], [0], [1], [0, 0, 1, 1], [], []>} : vector<2x64xf32>, vector<64x256xf32>, vector<2x256xf32> -> vector<2x256xf32>
    %314 = arith.addf %312, %313 : vector<2x256xf32>
    %315 = arith.index_cast %309 : i32 to index
    %c0_84 = arith.constant 0 : index
    %c256_85 = arith.constant 256 : index
    %316 = vector.load %arg12[%315, %c0_84, %c256_85] : memref<8x2x512xf32, #tpu.memory_space<vmem>>, vector<1x2x256xf32>
    %317 = vector.shape_cast %316 : vector<1x2x256xf32> to vector<2x256xf32>
    %cst_86 = arith.constant dense<0.000000e+00> : vector<2x256xf32>
    %318 = tpu.matmul %303, %10, %cst_86 {dimension_numbers = #tpu.dot_dimension_numbers<[1], [0], [0], [1], [0, 0, 1, 1], [], []>} : vector<2x64xf32>, vector<64x256xf32>, vector<2x256xf32> -> vector<2x256xf32>
    %319 = arith.addf %317, %318 : vector<2x256xf32>
    %320 = vector.extract_strided_slice %314 {offsets = [0, 0], sizes = [2, 64], strides = [1, 1]} : vector<2x256xf32> to vector<2x64xf32>
    %321 = arith.negf %320 : vector<2x64xf32>
    %322 = math.exp %321 : vector<2x64xf32>
    %cst_87 = arith.constant 1.000000e+00 : f32
    %323 = vector.broadcast %cst_87 : f32 to vector<2x64xf32>
    %324 = arith.addf %323, %322 : vector<2x64xf32>
    %325 = arith.divf %323, %324 : vector<2x64xf32>
    %326 = vector.extract_strided_slice %314 {offsets = [0, 64], sizes = [2, 64], strides = [1, 1]} : vector<2x256xf32> to vector<2x64xf32>
    %327 = arith.negf %326 : vector<2x64xf32>
    %328 = math.exp %327 : vector<2x64xf32>
    %cst_88 = arith.constant 1.000000e+00 : f32
    %329 = vector.broadcast %cst_88 : f32 to vector<2x64xf32>
    %330 = arith.addf %329, %328 : vector<2x64xf32>
    %331 = arith.divf %329, %330 : vector<2x64xf32>
    %332 = vector.extract_strided_slice %314 {offsets = [0, 128], sizes = [2, 64], strides = [1, 1]} : vector<2x256xf32> to vector<2x64xf32>
    %333 = math.tanh %332 : vector<2x64xf32>
    %334 = vector.extract_strided_slice %314 {offsets = [0, 192], sizes = [2, 64], strides = [1, 1]} : vector<2x256xf32> to vector<2x64xf32>
    %335 = arith.negf %334 : vector<2x64xf32>
    %336 = math.exp %335 : vector<2x64xf32>
    %cst_89 = arith.constant 1.000000e+00 : f32
    %337 = vector.broadcast %cst_89 : f32 to vector<2x64xf32>
    %338 = arith.addf %337, %336 : vector<2x64xf32>
    %339 = arith.divf %337, %338 : vector<2x64xf32>
    %340 = arith.mulf %331, %300 : vector<2x64xf32>
    %341 = arith.mulf %325, %333 : vector<2x64xf32>
    %342 = arith.addf %340, %341 : vector<2x64xf32>
    %343 = math.tanh %342 : vector<2x64xf32>
    %344 = arith.mulf %339, %343 : vector<2x64xf32>
    %345 = vector.extract_strided_slice %319 {offsets = [0, 0], sizes = [2, 64], strides = [1, 1]} : vector<2x256xf32> to vector<2x64xf32>
    %346 = arith.negf %345 : vector<2x64xf32>
    %347 = math.exp %346 : vector<2x64xf32>
    %cst_90 = arith.constant 1.000000e+00 : f32
    %348 = vector.broadcast %cst_90 : f32 to vector<2x64xf32>
    %349 = arith.addf %348, %347 : vector<2x64xf32>
    %350 = arith.divf %348, %349 : vector<2x64xf32>
    %351 = vector.extract_strided_slice %319 {offsets = [0, 64], sizes = [2, 64], strides = [1, 1]} : vector<2x256xf32> to vector<2x64xf32>
    %352 = arith.negf %351 : vector<2x64xf32>
    %353 = math.exp %352 : vector<2x64xf32>
    %cst_91 = arith.constant 1.000000e+00 : f32
    %354 = vector.broadcast %cst_91 : f32 to vector<2x64xf32>
    %355 = arith.addf %354, %353 : vector<2x64xf32>
    %356 = arith.divf %354, %355 : vector<2x64xf32>
    %357 = vector.extract_strided_slice %319 {offsets = [0, 128], sizes = [2, 64], strides = [1, 1]} : vector<2x256xf32> to vector<2x64xf32>
    %358 = math.tanh %357 : vector<2x64xf32>
    %359 = vector.extract_strided_slice %319 {offsets = [0, 192], sizes = [2, 64], strides = [1, 1]} : vector<2x256xf32> to vector<2x64xf32>
    %360 = arith.negf %359 : vector<2x64xf32>
    %361 = math.exp %360 : vector<2x64xf32>
    %cst_92 = arith.constant 1.000000e+00 : f32
    %362 = vector.broadcast %cst_92 : f32 to vector<2x64xf32>
    %363 = arith.addf %362, %361 : vector<2x64xf32>
    %364 = arith.divf %362, %363 : vector<2x64xf32>
    %365 = arith.mulf %356, %308 : vector<2x64xf32>
    %366 = arith.mulf %350, %358 : vector<2x64xf32>
    %367 = arith.addf %365, %366 : vector<2x64xf32>
    %368 = math.tanh %367 : vector<2x64xf32>
    %369 = arith.mulf %364, %368 : vector<2x64xf32>
    %370 = arith.index_cast %c3_i32 : i32 to index
    %c0_93 = arith.constant 0 : index
    %c0_94 = arith.constant 0 : index
    %371 = vector.load %arg2[%370, %c0_93, %c0_94] : memref<8x2x1xf32, #tpu.memory_space<vmem>>, vector<1x2x1xf32>
    %372 = vector.shape_cast %371 : vector<1x2x1xf32> to vector<2x1xf32>
    %373 = arith.index_cast %309 : i32 to index
    %c0_95 = arith.constant 0 : index
    %c0_96 = arith.constant 0 : index
    %374 = vector.load %arg2[%373, %c0_95, %c0_96] : memref<8x2x1xf32, #tpu.memory_space<vmem>>, vector<1x2x1xf32>
    %375 = vector.shape_cast %374 : vector<1x2x1xf32> to vector<2x1xf32>
    %cst_97 = arith.constant 1.000000e+00 : f32
    %376 = vector.broadcast %cst_97 : f32 to vector<2x1xf32>
    %377 = arith.subf %376, %372 : vector<2x1xf32>
    %cst_98 = arith.constant 1.000000e+00 : f32
    %378 = vector.broadcast %cst_98 : f32 to vector<2x1xf32>
    %379 = arith.subf %378, %375 : vector<2x1xf32>
    %380 = vector.broadcast %372 : vector<2x1xf32> to vector<2x64xf32>
    %381 = arith.mulf %344, %380 : vector<2x64xf32>
    %382 = vector.broadcast %375 : vector<2x1xf32> to vector<2x64xf32>
    %383 = arith.mulf %369, %382 : vector<2x64xf32>
    %384 = arith.index_cast %c3_i32 : i32 to index
    %c0_99 = arith.constant 0 : index
    %c0_100 = arith.constant 0 : index
    %385 = vector.load %arg13[%384, %c0_99, %c0_100] : memref<8x2x128xf32, #tpu.memory_space<vmem>>, vector<1x2x64xf32>
    %386 = vector.shape_cast %385 : vector<1x2x64xf32> to vector<2x64xf32>
    %387 = vector.shape_cast %381 : vector<2x64xf32> to vector<1x2x64xf32>
    tpu.vector_store %arg13[%384, %c0_99, %c0_100], %387 {strides = array<i32>} : memref<8x2x128xf32, #tpu.memory_space<vmem>>, vector<1x2x64xf32>,
    %388 = arith.index_cast %309 : i32 to index
    %c0_101 = arith.constant 0 : index
    %c64_102 = arith.constant 64 : index
    %389 = vector.load %arg13[%388, %c0_101, %c64_102] : memref<8x2x128xf32, #tpu.memory_space<vmem>>, vector<1x2x64xf32>
    %390 = vector.shape_cast %389 : vector<1x2x64xf32> to vector<2x64xf32>
    %391 = vector.shape_cast %383 : vector<2x64xf32> to vector<1x2x64xf32>
    tpu.vector_store %arg13[%388, %c0_101, %c64_102], %391 {strides = array<i32>} : memref<8x2x128xf32, #tpu.memory_space<vmem>>, vector<1x2x64xf32>,
    %392 = vector.broadcast %377 : vector<2x1xf32> to vector<2x64xf32>
    %393 = arith.mulf %295, %392 : vector<2x64xf32>
    %394 = arith.addf %381, %393 : vector<2x64xf32>
    %395 = vector.broadcast %372 : vector<2x1xf32> to vector<2x64xf32>
    %396 = arith.mulf %342, %395 : vector<2x64xf32>
    %397 = vector.broadcast %377 : vector<2x1xf32> to vector<2x64xf32>
    %398 = arith.mulf %300, %397 : vector<2x64xf32>
    %399 = arith.addf %396, %398 : vector<2x64xf32>
    %400 = vector.broadcast %379 : vector<2x1xf32> to vector<2x64xf32>
    %401 = arith.mulf %303, %400 : vector<2x64xf32>
    %402 = arith.addf %383, %401 : vector<2x64xf32>
    %403 = vector.broadcast %375 : vector<2x1xf32> to vector<2x64xf32>
    %404 = arith.mulf %367, %403 : vector<2x64xf32>
    %405 = vector.broadcast %379 : vector<2x1xf32> to vector<2x64xf32>
    %406 = arith.mulf %308, %405 : vector<2x64xf32>
    %407 = arith.addf %404, %406 : vector<2x64xf32>
    %c4_i32 = arith.constant 4 : i32
    %c7_i32_103 = arith.constant 7 : i32
    %408 = arith.subi %c7_i32_103, %c4_i32 : i32
    %409 = arith.index_cast %c4_i32 : i32 to index
    %c0_104 = arith.constant 0 : index
    %c0_105 = arith.constant 0 : index
    %410 = vector.load %arg12[%409, %c0_104, %c0_105] : memref<8x2x512xf32, #tpu.memory_space<vmem>>, vector<1x2x256xf32>
    %411 = vector.shape_cast %410 : vector<1x2x256xf32> to vector<2x256xf32>
    %cst_106 = arith.constant dense<0.000000e+00> : vector<2x256xf32>
    %412 = tpu.matmul %394, %9, %cst_106 {dimension_numbers = #tpu.dot_dimension_numbers<[1], [0], [0], [1], [0, 0, 1, 1], [], []>} : vector<2x64xf32>, vector<64x256xf32>, vector<2x256xf32> -> vector<2x256xf32>
    %413 = arith.addf %411, %412 : vector<2x256xf32>
    %414 = arith.index_cast %408 : i32 to index
    %c0_107 = arith.constant 0 : index
    %c256_108 = arith.constant 256 : index
    %415 = vector.load %arg12[%414, %c0_107, %c256_108] : memref<8x2x512xf32, #tpu.memory_space<vmem>>, vector<1x2x256xf32>
    %416 = vector.shape_cast %415 : vector<1x2x256xf32> to vector<2x256xf32>
    %cst_109 = arith.constant dense<0.000000e+00> : vector<2x256xf32>
    %417 = tpu.matmul %402, %10, %cst_109 {dimension_numbers = #tpu.dot_dimension_numbers<[1], [0], [0], [1], [0, 0, 1, 1], [], []>} : vector<2x64xf32>, vector<64x256xf32>, vector<2x256xf32> -> vector<2x256xf32>
    %418 = arith.addf %416, %417 : vector<2x256xf32>
    %419 = vector.extract_strided_slice %413 {offsets = [0, 0], sizes = [2, 64], strides = [1, 1]} : vector<2x256xf32> to vector<2x64xf32>
    %420 = arith.negf %419 : vector<2x64xf32>
    %421 = math.exp %420 : vector<2x64xf32>
    %cst_110 = arith.constant 1.000000e+00 : f32
    %422 = vector.broadcast %cst_110 : f32 to vector<2x64xf32>
    %423 = arith.addf %422, %421 : vector<2x64xf32>
    %424 = arith.divf %422, %423 : vector<2x64xf32>
    %425 = vector.extract_strided_slice %413 {offsets = [0, 64], sizes = [2, 64], strides = [1, 1]} : vector<2x256xf32> to vector<2x64xf32>
    %426 = arith.negf %425 : vector<2x64xf32>
    %427 = math.exp %426 : vector<2x64xf32>
    %cst_111 = arith.constant 1.000000e+00 : f32
    %428 = vector.broadcast %cst_111 : f32 to vector<2x64xf32>
    %429 = arith.addf %428, %427 : vector<2x64xf32>
    %430 = arith.divf %428, %429 : vector<2x64xf32>
    %431 = vector.extract_strided_slice %413 {offsets = [0, 128], sizes = [2, 64], strides = [1, 1]} : vector<2x256xf32> to vector<2x64xf32>
    %432 = math.tanh %431 : vector<2x64xf32>
    %433 = vector.extract_strided_slice %413 {offsets = [0, 192], sizes = [2, 64], strides = [1, 1]} : vector<2x256xf32> to vector<2x64xf32>
    %434 = arith.negf %433 : vector<2x64xf32>
    %435 = math.exp %434 : vector<2x64xf32>
    %cst_112 = arith.constant 1.000000e+00 : f32
    %436 = vector.broadcast %cst_112 : f32 to vector<2x64xf32>
    %437 = arith.addf %436, %435 : vector<2x64xf32>
    %438 = arith.divf %436, %437 : vector<2x64xf32>
    %439 = arith.mulf %430, %399 : vector<2x64xf32>
    %440 = arith.mulf %424, %432 : vector<2x64xf32>
    %441 = arith.addf %439, %440 : vector<2x64xf32>
    %442 = math.tanh %441 : vector<2x64xf32>
    %443 = arith.mulf %438, %442 : vector<2x64xf32>
    %444 = vector.extract_strided_slice %418 {offsets = [0, 0], sizes = [2, 64], strides = [1, 1]} : vector<2x256xf32> to vector<2x64xf32>
    %445 = arith.negf %444 : vector<2x64xf32>
    %446 = math.exp %445 : vector<2x64xf32>
    %cst_113 = arith.constant 1.000000e+00 : f32
    %447 = vector.broadcast %cst_113 : f32 to vector<2x64xf32>
    %448 = arith.addf %447, %446 : vector<2x64xf32>
    %449 = arith.divf %447, %448 : vector<2x64xf32>
    %450 = vector.extract_strided_slice %418 {offsets = [0, 64], sizes = [2, 64], strides = [1, 1]} : vector<2x256xf32> to vector<2x64xf32>
    %451 = arith.negf %450 : vector<2x64xf32>
    %452 = math.exp %451 : vector<2x64xf32>
    %cst_114 = arith.constant 1.000000e+00 : f32
    %453 = vector.broadcast %cst_114 : f32 to vector<2x64xf32>
    %454 = arith.addf %453, %452 : vector<2x64xf32>
    %455 = arith.divf %453, %454 : vector<2x64xf32>
    %456 = vector.extract_strided_slice %418 {offsets = [0, 128], sizes = [2, 64], strides = [1, 1]} : vector<2x256xf32> to vector<2x64xf32>
    %457 = math.tanh %456 : vector<2x64xf32>
    %458 = vector.extract_strided_slice %418 {offsets = [0, 192], sizes = [2, 64], strides = [1, 1]} : vector<2x256xf32> to vector<2x64xf32>
    %459 = arith.negf %458 : vector<2x64xf32>
    %460 = math.exp %459 : vector<2x64xf32>
    %cst_115 = arith.constant 1.000000e+00 : f32
    %461 = vector.broadcast %cst_115 : f32 to vector<2x64xf32>
    %462 = arith.addf %461, %460 : vector<2x64xf32>
    %463 = arith.divf %461, %462 : vector<2x64xf32>
    %464 = arith.mulf %455, %407 : vector<2x64xf32>
    %465 = arith.mulf %449, %457 : vector<2x64xf32>
    %466 = arith.addf %464, %465 : vector<2x64xf32>
    %467 = math.tanh %466 : vector<2x64xf32>
    %468 = arith.mulf %463, %467 : vector<2x64xf32>
    %469 = arith.index_cast %c4_i32 : i32 to index
    %c0_116 = arith.constant 0 : index
    %c0_117 = arith.constant 0 : index
    %470 = vector.load %arg2[%469, %c0_116, %c0_117] : memref<8x2x1xf32, #tpu.memory_space<vmem>>, vector<1x2x1xf32>
    %471 = vector.shape_cast %470 : vector<1x2x1xf32> to vector<2x1xf32>
    %472 = arith.index_cast %408 : i32 to index
    %c0_118 = arith.constant 0 : index
    %c0_119 = arith.constant 0 : index
    %473 = vector.load %arg2[%472, %c0_118, %c0_119] : memref<8x2x1xf32, #tpu.memory_space<vmem>>, vector<1x2x1xf32>
    %474 = vector.shape_cast %473 : vector<1x2x1xf32> to vector<2x1xf32>
    %cst_120 = arith.constant 1.000000e+00 : f32
    %475 = vector.broadcast %cst_120 : f32 to vector<2x1xf32>
    %476 = arith.subf %475, %471 : vector<2x1xf32>
    %cst_121 = arith.constant 1.000000e+00 : f32
    %477 = vector.broadcast %cst_121 : f32 to vector<2x1xf32>
    %478 = arith.subf %477, %474 : vector<2x1xf32>
    %479 = vector.broadcast %471 : vector<2x1xf32> to vector<2x64xf32>
    %480 = arith.mulf %443, %479 : vector<2x64xf32>
    %481 = vector.broadcast %474 : vector<2x1xf32> to vector<2x64xf32>
    %482 = arith.mulf %468, %481 : vector<2x64xf32>
    %483 = arith.index_cast %c4_i32 : i32 to index
    %c0_122 = arith.constant 0 : index
    %c0_123 = arith.constant 0 : index
    %484 = vector.load %arg13[%483, %c0_122, %c0_123] : memref<8x2x128xf32, #tpu.memory_space<vmem>>, vector<1x2x64xf32>
    %485 = vector.shape_cast %484 : vector<1x2x64xf32> to vector<2x64xf32>
    %486 = vector.shape_cast %480 : vector<2x64xf32> to vector<1x2x64xf32>
    tpu.vector_store %arg13[%483, %c0_122, %c0_123], %486 {strides = array<i32>} : memref<8x2x128xf32, #tpu.memory_space<vmem>>, vector<1x2x64xf32>,
    %487 = arith.index_cast %408 : i32 to index
    %c0_124 = arith.constant 0 : index
    %c64_125 = arith.constant 64 : index
    %488 = vector.load %arg13[%487, %c0_124, %c64_125] : memref<8x2x128xf32, #tpu.memory_space<vmem>>, vector<1x2x64xf32>
    %489 = vector.shape_cast %488 : vector<1x2x64xf32> to vector<2x64xf32>
    %490 = vector.shape_cast %482 : vector<2x64xf32> to vector<1x2x64xf32>
    tpu.vector_store %arg13[%487, %c0_124, %c64_125], %490 {strides = array<i32>} : memref<8x2x128xf32, #tpu.memory_space<vmem>>, vector<1x2x64xf32>,
    %491 = vector.broadcast %476 : vector<2x1xf32> to vector<2x64xf32>
    %492 = arith.mulf %394, %491 : vector<2x64xf32>
    %493 = arith.addf %480, %492 : vector<2x64xf32>
    %494 = vector.broadcast %471 : vector<2x1xf32> to vector<2x64xf32>
    %495 = arith.mulf %441, %494 : vector<2x64xf32>
    %496 = vector.broadcast %476 : vector<2x1xf32> to vector<2x64xf32>
    %497 = arith.mulf %399, %496 : vector<2x64xf32>
    %498 = arith.addf %495, %497 : vector<2x64xf32>
    %499 = vector.broadcast %478 : vector<2x1xf32> to vector<2x64xf32>
    %500 = arith.mulf %402, %499 : vector<2x64xf32>
    %501 = arith.addf %482, %500 : vector<2x64xf32>
    %502 = vector.broadcast %474 : vector<2x1xf32> to vector<2x64xf32>
    %503 = arith.mulf %466, %502 : vector<2x64xf32>
    %504 = vector.broadcast %478 : vector<2x1xf32> to vector<2x64xf32>
    %505 = arith.mulf %407, %504 : vector<2x64xf32>
    %506 = arith.addf %503, %505 : vector<2x64xf32>
    %c5_i32 = arith.constant 5 : i32
    %c7_i32_126 = arith.constant 7 : i32
    %507 = arith.subi %c7_i32_126, %c5_i32 : i32
    %508 = arith.index_cast %c5_i32 : i32 to index
    %c0_127 = arith.constant 0 : index
    %c0_128 = arith.constant 0 : index
    %509 = vector.load %arg12[%508, %c0_127, %c0_128] : memref<8x2x512xf32, #tpu.memory_space<vmem>>, vector<1x2x256xf32>
    %510 = vector.shape_cast %509 : vector<1x2x256xf32> to vector<2x256xf32>
    %cst_129 = arith.constant dense<0.000000e+00> : vector<2x256xf32>
    %511 = tpu.matmul %493, %9, %cst_129 {dimension_numbers = #tpu.dot_dimension_numbers<[1], [0], [0], [1], [0, 0, 1, 1], [], []>} : vector<2x64xf32>, vector<64x256xf32>, vector<2x256xf32> -> vector<2x256xf32>
    %512 = arith.addf %510, %511 : vector<2x256xf32>
    %513 = arith.index_cast %507 : i32 to index
    %c0_130 = arith.constant 0 : index
    %c256_131 = arith.constant 256 : index
    %514 = vector.load %arg12[%513, %c0_130, %c256_131] : memref<8x2x512xf32, #tpu.memory_space<vmem>>, vector<1x2x256xf32>
    %515 = vector.shape_cast %514 : vector<1x2x256xf32> to vector<2x256xf32>
    %cst_132 = arith.constant dense<0.000000e+00> : vector<2x256xf32>
    %516 = tpu.matmul %501, %10, %cst_132 {dimension_numbers = #tpu.dot_dimension_numbers<[1], [0], [0], [1], [0, 0, 1, 1], [], []>} : vector<2x64xf32>, vector<64x256xf32>, vector<2x256xf32> -> vector<2x256xf32>
    %517 = arith.addf %515, %516 : vector<2x256xf32>
    %518 = vector.extract_strided_slice %512 {offsets = [0, 0], sizes = [2, 64], strides = [1, 1]} : vector<2x256xf32> to vector<2x64xf32>
    %519 = arith.negf %518 : vector<2x64xf32>
    %520 = math.exp %519 : vector<2x64xf32>
    %cst_133 = arith.constant 1.000000e+00 : f32
    %521 = vector.broadcast %cst_133 : f32 to vector<2x64xf32>
    %522 = arith.addf %521, %520 : vector<2x64xf32>
    %523 = arith.divf %521, %522 : vector<2x64xf32>
    %524 = vector.extract_strided_slice %512 {offsets = [0, 64], sizes = [2, 64], strides = [1, 1]} : vector<2x256xf32> to vector<2x64xf32>
    %525 = arith.negf %524 : vector<2x64xf32>
    %526 = math.exp %525 : vector<2x64xf32>
    %cst_134 = arith.constant 1.000000e+00 : f32
    %527 = vector.broadcast %cst_134 : f32 to vector<2x64xf32>
    %528 = arith.addf %527, %526 : vector<2x64xf32>
    %529 = arith.divf %527, %528 : vector<2x64xf32>
    %530 = vector.extract_strided_slice %512 {offsets = [0, 128], sizes = [2, 64], strides = [1, 1]} : vector<2x256xf32> to vector<2x64xf32>
    %531 = math.tanh %530 : vector<2x64xf32>
    %532 = vector.extract_strided_slice %512 {offsets = [0, 192], sizes = [2, 64], strides = [1, 1]} : vector<2x256xf32> to vector<2x64xf32>
    %533 = arith.negf %532 : vector<2x64xf32>
    %534 = math.exp %533 : vector<2x64xf32>
    %cst_135 = arith.constant 1.000000e+00 : f32
    %535 = vector.broadcast %cst_135 : f32 to vector<2x64xf32>
    %536 = arith.addf %535, %534 : vector<2x64xf32>
    %537 = arith.divf %535, %536 : vector<2x64xf32>
    %538 = arith.mulf %529, %498 : vector<2x64xf32>
    %539 = arith.mulf %523, %531 : vector<2x64xf32>
    %540 = arith.addf %538, %539 : vector<2x64xf32>
    %541 = math.tanh %540 : vector<2x64xf32>
    %542 = arith.mulf %537, %541 : vector<2x64xf32>
    %543 = vector.extract_strided_slice %517 {offsets = [0, 0], sizes = [2, 64], strides = [1, 1]} : vector<2x256xf32> to vector<2x64xf32>
    %544 = arith.negf %543 : vector<2x64xf32>
    %545 = math.exp %544 : vector<2x64xf32>
    %cst_136 = arith.constant 1.000000e+00 : f32
    %546 = vector.broadcast %cst_136 : f32 to vector<2x64xf32>
    %547 = arith.addf %546, %545 : vector<2x64xf32>
    %548 = arith.divf %546, %547 : vector<2x64xf32>
    %549 = vector.extract_strided_slice %517 {offsets = [0, 64], sizes = [2, 64], strides = [1, 1]} : vector<2x256xf32> to vector<2x64xf32>
    %550 = arith.negf %549 : vector<2x64xf32>
    %551 = math.exp %550 : vector<2x64xf32>
    %cst_137 = arith.constant 1.000000e+00 : f32
    %552 = vector.broadcast %cst_137 : f32 to vector<2x64xf32>
    %553 = arith.addf %552, %551 : vector<2x64xf32>
    %554 = arith.divf %552, %553 : vector<2x64xf32>
    %555 = vector.extract_strided_slice %517 {offsets = [0, 128], sizes = [2, 64], strides = [1, 1]} : vector<2x256xf32> to vector<2x64xf32>
    %556 = math.tanh %555 : vector<2x64xf32>
    %557 = vector.extract_strided_slice %517 {offsets = [0, 192], sizes = [2, 64], strides = [1, 1]} : vector<2x256xf32> to vector<2x64xf32>
    %558 = arith.negf %557 : vector<2x64xf32>
    %559 = math.exp %558 : vector<2x64xf32>
    %cst_138 = arith.constant 1.000000e+00 : f32
    %560 = vector.broadcast %cst_138 : f32 to vector<2x64xf32>
    %561 = arith.addf %560, %559 : vector<2x64xf32>
    %562 = arith.divf %560, %561 : vector<2x64xf32>
    %563 = arith.mulf %554, %506 : vector<2x64xf32>
    %564 = arith.mulf %548, %556 : vector<2x64xf32>
    %565 = arith.addf %563, %564 : vector<2x64xf32>
    %566 = math.tanh %565 : vector<2x64xf32>
    %567 = arith.mulf %562, %566 : vector<2x64xf32>
    %568 = arith.index_cast %c5_i32 : i32 to index
    %c0_139 = arith.constant 0 : index
    %c0_140 = arith.constant 0 : index
    %569 = vector.load %arg2[%568, %c0_139, %c0_140] : memref<8x2x1xf32, #tpu.memory_space<vmem>>, vector<1x2x1xf32>
    %570 = vector.shape_cast %569 : vector<1x2x1xf32> to vector<2x1xf32>
    %571 = arith.index_cast %507 : i32 to index
    %c0_141 = arith.constant 0 : index
    %c0_142 = arith.constant 0 : index
    %572 = vector.load %arg2[%571, %c0_141, %c0_142] : memref<8x2x1xf32, #tpu.memory_space<vmem>>, vector<1x2x1xf32>
    %573 = vector.shape_cast %572 : vector<1x2x1xf32> to vector<2x1xf32>
    %cst_143 = arith.constant 1.000000e+00 : f32
    %574 = vector.broadcast %cst_143 : f32 to vector<2x1xf32>
    %575 = arith.subf %574, %570 : vector<2x1xf32>
    %cst_144 = arith.constant 1.000000e+00 : f32
    %576 = vector.broadcast %cst_144 : f32 to vector<2x1xf32>
    %577 = arith.subf %576, %573 : vector<2x1xf32>
    %578 = vector.broadcast %570 : vector<2x1xf32> to vector<2x64xf32>
    %579 = arith.mulf %542, %578 : vector<2x64xf32>
    %580 = vector.broadcast %573 : vector<2x1xf32> to vector<2x64xf32>
    %581 = arith.mulf %567, %580 : vector<2x64xf32>
    %582 = arith.index_cast %c5_i32 : i32 to index
    %c0_145 = arith.constant 0 : index
    %c0_146 = arith.constant 0 : index
    %583 = vector.load %arg13[%582, %c0_145, %c0_146] : memref<8x2x128xf32, #tpu.memory_space<vmem>>, vector<1x2x64xf32>
    %584 = vector.shape_cast %583 : vector<1x2x64xf32> to vector<2x64xf32>
    %585 = vector.shape_cast %579 : vector<2x64xf32> to vector<1x2x64xf32>
    tpu.vector_store %arg13[%582, %c0_145, %c0_146], %585 {strides = array<i32>} : memref<8x2x128xf32, #tpu.memory_space<vmem>>, vector<1x2x64xf32>,
    %586 = arith.index_cast %507 : i32 to index
    %c0_147 = arith.constant 0 : index
    %c64_148 = arith.constant 64 : index
    %587 = vector.load %arg13[%586, %c0_147, %c64_148] : memref<8x2x128xf32, #tpu.memory_space<vmem>>, vector<1x2x64xf32>
    %588 = vector.shape_cast %587 : vector<1x2x64xf32> to vector<2x64xf32>
    %589 = vector.shape_cast %581 : vector<2x64xf32> to vector<1x2x64xf32>
    tpu.vector_store %arg13[%586, %c0_147, %c64_148], %589 {strides = array<i32>} : memref<8x2x128xf32, #tpu.memory_space<vmem>>, vector<1x2x64xf32>,
    %590 = vector.broadcast %575 : vector<2x1xf32> to vector<2x64xf32>
    %591 = arith.mulf %493, %590 : vector<2x64xf32>
    %592 = arith.addf %579, %591 : vector<2x64xf32>
    %593 = vector.broadcast %570 : vector<2x1xf32> to vector<2x64xf32>
    %594 = arith.mulf %540, %593 : vector<2x64xf32>
    %595 = vector.broadcast %575 : vector<2x1xf32> to vector<2x64xf32>
    %596 = arith.mulf %498, %595 : vector<2x64xf32>
    %597 = arith.addf %594, %596 : vector<2x64xf32>
    %598 = vector.broadcast %577 : vector<2x1xf32> to vector<2x64xf32>
    %599 = arith.mulf %501, %598 : vector<2x64xf32>
    %600 = arith.addf %581, %599 : vector<2x64xf32>
    %601 = vector.broadcast %573 : vector<2x1xf32> to vector<2x64xf32>
    %602 = arith.mulf %565, %601 : vector<2x64xf32>
    %603 = vector.broadcast %577 : vector<2x1xf32> to vector<2x64xf32>
    %604 = arith.mulf %506, %603 : vector<2x64xf32>
    %605 = arith.addf %602, %604 : vector<2x64xf32>
    %c6_i32 = arith.constant 6 : i32
    %c7_i32_149 = arith.constant 7 : i32
    %606 = arith.subi %c7_i32_149, %c6_i32 : i32
    %607 = arith.index_cast %c6_i32 : i32 to index
    %c0_150 = arith.constant 0 : index
    %c0_151 = arith.constant 0 : index
    %608 = vector.load %arg12[%607, %c0_150, %c0_151] : memref<8x2x512xf32, #tpu.memory_space<vmem>>, vector<1x2x256xf32>
    %609 = vector.shape_cast %608 : vector<1x2x256xf32> to vector<2x256xf32>
    %cst_152 = arith.constant dense<0.000000e+00> : vector<2x256xf32>
    %610 = tpu.matmul %592, %9, %cst_152 {dimension_numbers = #tpu.dot_dimension_numbers<[1], [0], [0], [1], [0, 0, 1, 1], [], []>} : vector<2x64xf32>, vector<64x256xf32>, vector<2x256xf32> -> vector<2x256xf32>
    %611 = arith.addf %609, %610 : vector<2x256xf32>
    %612 = arith.index_cast %606 : i32 to index
    %c0_153 = arith.constant 0 : index
    %c256_154 = arith.constant 256 : index
    %613 = vector.load %arg12[%612, %c0_153, %c256_154] : memref<8x2x512xf32, #tpu.memory_space<vmem>>, vector<1x2x256xf32>
    %614 = vector.shape_cast %613 : vector<1x2x256xf32> to vector<2x256xf32>
    %cst_155 = arith.constant dense<0.000000e+00> : vector<2x256xf32>
    %615 = tpu.matmul %600, %10, %cst_155 {dimension_numbers = #tpu.dot_dimension_numbers<[1], [0], [0], [1], [0, 0, 1, 1], [], []>} : vector<2x64xf32>, vector<64x256xf32>, vector<2x256xf32> -> vector<2x256xf32>
    %616 = arith.addf %614, %615 : vector<2x256xf32>
    %617 = vector.extract_strided_slice %611 {offsets = [0, 0], sizes = [2, 64], strides = [1, 1]} : vector<2x256xf32> to vector<2x64xf32>
    %618 = arith.negf %617 : vector<2x64xf32>
    %619 = math.exp %618 : vector<2x64xf32>
    %cst_156 = arith.constant 1.000000e+00 : f32
    %620 = vector.broadcast %cst_156 : f32 to vector<2x64xf32>
    %621 = arith.addf %620, %619 : vector<2x64xf32>
    %622 = arith.divf %620, %621 : vector<2x64xf32>
    %623 = vector.extract_strided_slice %611 {offsets = [0, 64], sizes = [2, 64], strides = [1, 1]} : vector<2x256xf32> to vector<2x64xf32>
    %624 = arith.negf %623 : vector<2x64xf32>
    %625 = math.exp %624 : vector<2x64xf32>
    %cst_157 = arith.constant 1.000000e+00 : f32
    %626 = vector.broadcast %cst_157 : f32 to vector<2x64xf32>
    %627 = arith.addf %626, %625 : vector<2x64xf32>
    %628 = arith.divf %626, %627 : vector<2x64xf32>
    %629 = vector.extract_strided_slice %611 {offsets = [0, 128], sizes = [2, 64], strides = [1, 1]} : vector<2x256xf32> to vector<2x64xf32>
    %630 = math.tanh %629 : vector<2x64xf32>
    %631 = vector.extract_strided_slice %611 {offsets = [0, 192], sizes = [2, 64], strides = [1, 1]} : vector<2x256xf32> to vector<2x64xf32>
    %632 = arith.negf %631 : vector<2x64xf32>
    %633 = math.exp %632 : vector<2x64xf32>
    %cst_158 = arith.constant 1.000000e+00 : f32
    %634 = vector.broadcast %cst_158 : f32 to vector<2x64xf32>
    %635 = arith.addf %634, %633 : vector<2x64xf32>
    %636 = arith.divf %634, %635 : vector<2x64xf32>
    %637 = arith.mulf %628, %597 : vector<2x64xf32>
    %638 = arith.mulf %622, %630 : vector<2x64xf32>
    %639 = arith.addf %637, %638 : vector<2x64xf32>
    %640 = math.tanh %639 : vector<2x64xf32>
    %641 = arith.mulf %636, %640 : vector<2x64xf32>
    %642 = vector.extract_strided_slice %616 {offsets = [0, 0], sizes = [2, 64], strides = [1, 1]} : vector<2x256xf32> to vector<2x64xf32>
    %643 = arith.negf %642 : vector<2x64xf32>
    %644 = math.exp %643 : vector<2x64xf32>
    %cst_159 = arith.constant 1.000000e+00 : f32
    %645 = vector.broadcast %cst_159 : f32 to vector<2x64xf32>
    %646 = arith.addf %645, %644 : vector<2x64xf32>
    %647 = arith.divf %645, %646 : vector<2x64xf32>
    %648 = vector.extract_strided_slice %616 {offsets = [0, 64], sizes = [2, 64], strides = [1, 1]} : vector<2x256xf32> to vector<2x64xf32>
    %649 = arith.negf %648 : vector<2x64xf32>
    %650 = math.exp %649 : vector<2x64xf32>
    %cst_160 = arith.constant 1.000000e+00 : f32
    %651 = vector.broadcast %cst_160 : f32 to vector<2x64xf32>
    %652 = arith.addf %651, %650 : vector<2x64xf32>
    %653 = arith.divf %651, %652 : vector<2x64xf32>
    %654 = vector.extract_strided_slice %616 {offsets = [0, 128], sizes = [2, 64], strides = [1, 1]} : vector<2x256xf32> to vector<2x64xf32>
    %655 = math.tanh %654 : vector<2x64xf32>
    %656 = vector.extract_strided_slice %616 {offsets = [0, 192], sizes = [2, 64], strides = [1, 1]} : vector<2x256xf32> to vector<2x64xf32>
    %657 = arith.negf %656 : vector<2x64xf32>
    %658 = math.exp %657 : vector<2x64xf32>
    %cst_161 = arith.constant 1.000000e+00 : f32
    %659 = vector.broadcast %cst_161 : f32 to vector<2x64xf32>
    %660 = arith.addf %659, %658 : vector<2x64xf32>
    %661 = arith.divf %659, %660 : vector<2x64xf32>
    %662 = arith.mulf %653, %605 : vector<2x64xf32>
    %663 = arith.mulf %647, %655 : vector<2x64xf32>
    %664 = arith.addf %662, %663 : vector<2x64xf32>
    %665 = math.tanh %664 : vector<2x64xf32>
    %666 = arith.mulf %661, %665 : vector<2x64xf32>
    %667 = arith.index_cast %c6_i32 : i32 to index
    %c0_162 = arith.constant 0 : index
    %c0_163 = arith.constant 0 : index
    %668 = vector.load %arg2[%667, %c0_162, %c0_163] : memref<8x2x1xf32, #tpu.memory_space<vmem>>, vector<1x2x1xf32>
    %669 = vector.shape_cast %668 : vector<1x2x1xf32> to vector<2x1xf32>
    %670 = arith.index_cast %606 : i32 to index
    %c0_164 = arith.constant 0 : index
    %c0_165 = arith.constant 0 : index
    %671 = vector.load %arg2[%670, %c0_164, %c0_165] : memref<8x2x1xf32, #tpu.memory_space<vmem>>, vector<1x2x1xf32>
    %672 = vector.shape_cast %671 : vector<1x2x1xf32> to vector<2x1xf32>
    %cst_166 = arith.constant 1.000000e+00 : f32
    %673 = vector.broadcast %cst_166 : f32 to vector<2x1xf32>
    %674 = arith.subf %673, %669 : vector<2x1xf32>
    %cst_167 = arith.constant 1.000000e+00 : f32
    %675 = vector.broadcast %cst_167 : f32 to vector<2x1xf32>
    %676 = arith.subf %675, %672 : vector<2x1xf32>
    %677 = vector.broadcast %669 : vector<2x1xf32> to vector<2x64xf32>
    %678 = arith.mulf %641, %677 : vector<2x64xf32>
    %679 = vector.broadcast %672 : vector<2x1xf32> to vector<2x64xf32>
    %680 = arith.mulf %666, %679 : vector<2x64xf32>
    %681 = arith.index_cast %c6_i32 : i32 to index
    %c0_168 = arith.constant 0 : index
    %c0_169 = arith.constant 0 : index
    %682 = vector.load %arg13[%681, %c0_168, %c0_169] : memref<8x2x128xf32, #tpu.memory_space<vmem>>, vector<1x2x64xf32>
    %683 = vector.shape_cast %682 : vector<1x2x64xf32> to vector<2x64xf32>
    %684 = vector.shape_cast %678 : vector<2x64xf32> to vector<1x2x64xf32>
    tpu.vector_store %arg13[%681, %c0_168, %c0_169], %684 {strides = array<i32>} : memref<8x2x128xf32, #tpu.memory_space<vmem>>, vector<1x2x64xf32>,
    %685 = arith.index_cast %606 : i32 to index
    %c0_170 = arith.constant 0 : index
    %c64_171 = arith.constant 64 : index
    %686 = vector.load %arg13[%685, %c0_170, %c64_171] : memref<8x2x128xf32, #tpu.memory_space<vmem>>, vector<1x2x64xf32>
    %687 = vector.shape_cast %686 : vector<1x2x64xf32> to vector<2x64xf32>
    %688 = vector.shape_cast %680 : vector<2x64xf32> to vector<1x2x64xf32>
    tpu.vector_store %arg13[%685, %c0_170, %c64_171], %688 {strides = array<i32>} : memref<8x2x128xf32, #tpu.memory_space<vmem>>, vector<1x2x64xf32>,
    %689 = vector.broadcast %674 : vector<2x1xf32> to vector<2x64xf32>
    %690 = arith.mulf %592, %689 : vector<2x64xf32>
    %691 = arith.addf %678, %690 : vector<2x64xf32>
    %692 = vector.broadcast %669 : vector<2x1xf32> to vector<2x64xf32>
    %693 = arith.mulf %639, %692 : vector<2x64xf32>
    %694 = vector.broadcast %674 : vector<2x1xf32> to vector<2x64xf32>
    %695 = arith.mulf %597, %694 : vector<2x64xf32>
    %696 = arith.addf %693, %695 : vector<2x64xf32>
    %697 = vector.broadcast %676 : vector<2x1xf32> to vector<2x64xf32>
    %698 = arith.mulf %600, %697 : vector<2x64xf32>
    %699 = arith.addf %680, %698 : vector<2x64xf32>
    %700 = vector.broadcast %672 : vector<2x1xf32> to vector<2x64xf32>
    %701 = arith.mulf %664, %700 : vector<2x64xf32>
    %702 = vector.broadcast %676 : vector<2x1xf32> to vector<2x64xf32>
    %703 = arith.mulf %605, %702 : vector<2x64xf32>
    %704 = arith.addf %701, %703 : vector<2x64xf32>
    %c7_i32_172 = arith.constant 7 : i32
    %c7_i32_173 = arith.constant 7 : i32
    %705 = arith.subi %c7_i32_173, %c7_i32_172 : i32
    %706 = arith.index_cast %c7_i32_172 : i32 to index
    %c0_174 = arith.constant 0 : index
    %c0_175 = arith.constant 0 : index
    %707 = vector.load %arg12[%706, %c0_174, %c0_175] : memref<8x2x512xf32, #tpu.memory_space<vmem>>, vector<1x2x256xf32>
    %708 = vector.shape_cast %707 : vector<1x2x256xf32> to vector<2x256xf32>
    %cst_176 = arith.constant dense<0.000000e+00> : vector<2x256xf32>
    %709 = tpu.matmul %691, %9, %cst_176 {dimension_numbers = #tpu.dot_dimension_numbers<[1], [0], [0], [1], [0, 0, 1, 1], [], []>} : vector<2x64xf32>, vector<64x256xf32>, vector<2x256xf32> -> vector<2x256xf32>
    %710 = arith.addf %708, %709 : vector<2x256xf32>
    %711 = arith.index_cast %705 : i32 to index
    %c0_177 = arith.constant 0 : index
    %c256_178 = arith.constant 256 : index
    %712 = vector.load %arg12[%711, %c0_177, %c256_178] : memref<8x2x512xf32, #tpu.memory_space<vmem>>, vector<1x2x256xf32>
    %713 = vector.shape_cast %712 : vector<1x2x256xf32> to vector<2x256xf32>
    %cst_179 = arith.constant dense<0.000000e+00> : vector<2x256xf32>
    %714 = tpu.matmul %699, %10, %cst_179 {dimension_numbers = #tpu.dot_dimension_numbers<[1], [0], [0], [1], [0, 0, 1, 1], [], []>} : vector<2x64xf32>, vector<64x256xf32>, vector<2x256xf32> -> vector<2x256xf32>
    %715 = arith.addf %713, %714 : vector<2x256xf32>
    %716 = vector.extract_strided_slice %710 {offsets = [0, 0], sizes = [2, 64], strides = [1, 1]} : vector<2x256xf32> to vector<2x64xf32>
    %717 = arith.negf %716 : vector<2x64xf32>
    %718 = math.exp %717 : vector<2x64xf32>
    %cst_180 = arith.constant 1.000000e+00 : f32
    %719 = vector.broadcast %cst_180 : f32 to vector<2x64xf32>
    %720 = arith.addf %719, %718 : vector<2x64xf32>
    %721 = arith.divf %719, %720 : vector<2x64xf32>
    %722 = vector.extract_strided_slice %710 {offsets = [0, 64], sizes = [2, 64], strides = [1, 1]} : vector<2x256xf32> to vector<2x64xf32>
    %723 = arith.negf %722 : vector<2x64xf32>
    %724 = math.exp %723 : vector<2x64xf32>
    %cst_181 = arith.constant 1.000000e+00 : f32
    %725 = vector.broadcast %cst_181 : f32 to vector<2x64xf32>
    %726 = arith.addf %725, %724 : vector<2x64xf32>
    %727 = arith.divf %725, %726 : vector<2x64xf32>
    %728 = vector.extract_strided_slice %710 {offsets = [0, 128], sizes = [2, 64], strides = [1, 1]} : vector<2x256xf32> to vector<2x64xf32>
    %729 = math.tanh %728 : vector<2x64xf32>
    %730 = vector.extract_strided_slice %710 {offsets = [0, 192], sizes = [2, 64], strides = [1, 1]} : vector<2x256xf32> to vector<2x64xf32>
    %731 = arith.negf %730 : vector<2x64xf32>
    %732 = math.exp %731 : vector<2x64xf32>
    %cst_182 = arith.constant 1.000000e+00 : f32
    %733 = vector.broadcast %cst_182 : f32 to vector<2x64xf32>
    %734 = arith.addf %733, %732 : vector<2x64xf32>
    %735 = arith.divf %733, %734 : vector<2x64xf32>
    %736 = arith.mulf %727, %696 : vector<2x64xf32>
    %737 = arith.mulf %721, %729 : vector<2x64xf32>
    %738 = arith.addf %736, %737 : vector<2x64xf32>
    %739 = math.tanh %738 : vector<2x64xf32>
    %740 = arith.mulf %735, %739 : vector<2x64xf32>
    %741 = vector.extract_strided_slice %715 {offsets = [0, 0], sizes = [2, 64], strides = [1, 1]} : vector<2x256xf32> to vector<2x64xf32>
    %742 = arith.negf %741 : vector<2x64xf32>
    %743 = math.exp %742 : vector<2x64xf32>
    %cst_183 = arith.constant 1.000000e+00 : f32
    %744 = vector.broadcast %cst_183 : f32 to vector<2x64xf32>
    %745 = arith.addf %744, %743 : vector<2x64xf32>
    %746 = arith.divf %744, %745 : vector<2x64xf32>
    %747 = vector.extract_strided_slice %715 {offsets = [0, 64], sizes = [2, 64], strides = [1, 1]} : vector<2x256xf32> to vector<2x64xf32>
    %748 = arith.negf %747 : vector<2x64xf32>
    %749 = math.exp %748 : vector<2x64xf32>
    %cst_184 = arith.constant 1.000000e+00 : f32
    %750 = vector.broadcast %cst_184 : f32 to vector<2x64xf32>
    %751 = arith.addf %750, %749 : vector<2x64xf32>
    %752 = arith.divf %750, %751 : vector<2x64xf32>
    %753 = vector.extract_strided_slice %715 {offsets = [0, 128], sizes = [2, 64], strides = [1, 1]} : vector<2x256xf32> to vector<2x64xf32>
    %754 = math.tanh %753 : vector<2x64xf32>
    %755 = vector.extract_strided_slice %715 {offsets = [0, 192], sizes = [2, 64], strides = [1, 1]} : vector<2x256xf32> to vector<2x64xf32>
    %756 = arith.negf %755 : vector<2x64xf32>
    %757 = math.exp %756 : vector<2x64xf32>
    %cst_185 = arith.constant 1.000000e+00 : f32
    %758 = vector.broadcast %cst_185 : f32 to vector<2x64xf32>
    %759 = arith.addf %758, %757 : vector<2x64xf32>
    %760 = arith.divf %758, %759 : vector<2x64xf32>
    %761 = arith.mulf %752, %704 : vector<2x64xf32>
    %762 = arith.mulf %746, %754 : vector<2x64xf32>
    %763 = arith.addf %761, %762 : vector<2x64xf32>
    %764 = math.tanh %763 : vector<2x64xf32>
    %765 = arith.mulf %760, %764 : vector<2x64xf32>
    %766 = arith.index_cast %c7_i32_172 : i32 to index
    %c0_186 = arith.constant 0 : index
    %c0_187 = arith.constant 0 : index
    %767 = vector.load %arg2[%766, %c0_186, %c0_187] : memref<8x2x1xf32, #tpu.memory_space<vmem>>, vector<1x2x1xf32>
    %768 = vector.shape_cast %767 : vector<1x2x1xf32> to vector<2x1xf32>
    %769 = arith.index_cast %705 : i32 to index
    %c0_188 = arith.constant 0 : index
    %c0_189 = arith.constant 0 : index
    %770 = vector.load %arg2[%769, %c0_188, %c0_189] : memref<8x2x1xf32, #tpu.memory_space<vmem>>, vector<1x2x1xf32>
    %771 = vector.shape_cast %770 : vector<1x2x1xf32> to vector<2x1xf32>
    %cst_190 = arith.constant 1.000000e+00 : f32
    %772 = vector.broadcast %cst_190 : f32 to vector<2x1xf32>
    %773 = arith.subf %772, %768 : vector<2x1xf32>
    %cst_191 = arith.constant 1.000000e+00 : f32
    %774 = vector.broadcast %cst_191 : f32 to vector<2x1xf32>
    %775 = arith.subf %774, %771 : vector<2x1xf32>
    %776 = vector.broadcast %768 : vector<2x1xf32> to vector<2x64xf32>
    %777 = arith.mulf %740, %776 : vector<2x64xf32>
    %778 = vector.broadcast %771 : vector<2x1xf32> to vector<2x64xf32>
    %779 = arith.mulf %765, %778 : vector<2x64xf32>
    %780 = arith.index_cast %c7_i32_172 : i32 to index
    %c0_192 = arith.constant 0 : index
    %c0_193 = arith.constant 0 : index
    %781 = vector.load %arg13[%780, %c0_192, %c0_193] : memref<8x2x128xf32, #tpu.memory_space<vmem>>, vector<1x2x64xf32>
    %782 = vector.shape_cast %781 : vector<1x2x64xf32> to vector<2x64xf32>
    %783 = vector.shape_cast %777 : vector<2x64xf32> to vector<1x2x64xf32>
    tpu.vector_store %arg13[%780, %c0_192, %c0_193], %783 {strides = array<i32>} : memref<8x2x128xf32, #tpu.memory_space<vmem>>, vector<1x2x64xf32>,
    %784 = arith.index_cast %705 : i32 to index
    %c0_194 = arith.constant 0 : index
    %c64_195 = arith.constant 64 : index
    %785 = vector.load %arg13[%784, %c0_194, %c64_195] : memref<8x2x128xf32, #tpu.memory_space<vmem>>, vector<1x2x64xf32>
    %786 = vector.shape_cast %785 : vector<1x2x64xf32> to vector<2x64xf32>
    %787 = vector.shape_cast %779 : vector<2x64xf32> to vector<1x2x64xf32>
    tpu.vector_store %arg13[%784, %c0_194, %c64_195], %787 {strides = array<i32>} : memref<8x2x128xf32, #tpu.memory_space<vmem>>, vector<1x2x64xf32>,
    %788 = vector.broadcast %773 : vector<2x1xf32> to vector<2x64xf32>
    %789 = arith.mulf %691, %788 : vector<2x64xf32>
    %790 = arith.addf %777, %789 : vector<2x64xf32>
    %791 = vector.broadcast %768 : vector<2x1xf32> to vector<2x64xf32>
    %792 = arith.mulf %738, %791 : vector<2x64xf32>
    %793 = vector.broadcast %773 : vector<2x1xf32> to vector<2x64xf32>
    %794 = arith.mulf %696, %793 : vector<2x64xf32>
    %795 = arith.addf %792, %794 : vector<2x64xf32>
    %796 = vector.broadcast %775 : vector<2x1xf32> to vector<2x64xf32>
    %797 = arith.mulf %699, %796 : vector<2x64xf32>
    %798 = arith.addf %779, %797 : vector<2x64xf32>
    %799 = vector.broadcast %771 : vector<2x1xf32> to vector<2x64xf32>
    %800 = arith.mulf %763, %799 : vector<2x64xf32>
    %801 = vector.broadcast %775 : vector<2x1xf32> to vector<2x64xf32>
    %802 = arith.mulf %704, %801 : vector<2x64xf32>
    %803 = arith.addf %800, %802 : vector<2x64xf32>
    %c8_i32 = arith.constant 8 : i32
    %c0_196 = arith.constant 0 : index
    %c0_197 = arith.constant 0 : index
    %c0_198 = arith.constant 0 : index
    %804 = vector.load %arg13[%c0_196, %c0_197, %c0_198] : memref<8x2x128xf32, #tpu.memory_space<vmem>>, vector<8x2x128xf32>
    %805 = vector.shape_cast %804 : vector<8x2x128xf32> to vector<16x128xf32>
    %c0_199 = arith.constant 0 : index
    %c0_200 = arith.constant 0 : index
    %806 = vector.load %arg5[%c0_199, %c0_200] : memref<128x512xf32, #tpu.memory_space<vmem>>, vector<128x512xf32>
    %cst_201 = arith.constant dense<0.000000e+00> : vector<16x512xf32>
    %807 = tpu.matmul %805, %806, %cst_201 {dimension_numbers = #tpu.dot_dimension_numbers<[1], [0], [0], [1], [0, 0, 1, 1], [], []>} : vector<16x128xf32>, vector<128x512xf32>, vector<16x512xf32> -> vector<16x512xf32>
    %c0_202 = arith.constant 0 : index
    %c0_203 = arith.constant 0 : index
    %808 = vector.load %arg6[%c0_202, %c0_203] : memref<1x512xf32, #tpu.memory_space<vmem>>, vector<1x512xf32>
    %809 = vector.broadcast %808 : vector<1x512xf32> to vector<16x512xf32>
    %810 = arith.addf %807, %809 : vector<16x512xf32>
    %811 = vector.shape_cast %810 : vector<16x512xf32> to vector<8x2x512xf32>
    %c0_204 = arith.constant 0 : index
    %c0_205 = arith.constant 0 : index
    %c0_206 = arith.constant 0 : index
    %812 = vector.load %arg12[%c0_204, %c0_205, %c0_206] : memref<8x2x512xf32, #tpu.memory_space<vmem>>, vector<8x2x512xf32>
    tpu.vector_store %arg12[%c0_204, %c0_205, %c0_206], %811 {strides = array<i32>} : memref<8x2x512xf32, #tpu.memory_space<vmem>>, vector<8x2x512xf32>,
    %c0_207 = arith.constant 0 : index
    %c0_208 = arith.constant 0 : index
    %813 = vector.load %arg9[%c0_207, %c0_208] : memref<64x256xf32, #tpu.memory_space<vmem>>, vector<64x256xf32>
    %c0_209 = arith.constant 0 : index
    %c0_210 = arith.constant 0 : index
    %814 = vector.load %arg10[%c0_209, %c0_210] : memref<64x256xf32, #tpu.memory_space<vmem>>, vector<64x256xf32>
    %cst_211 = arith.constant 0.000000e+00 : f32
    %815 = vector.broadcast %cst_211 : f32 to vector<2x64xf32>
    %c0_i32_212 = arith.constant 0 : i32
    %c7_i32_213 = arith.constant 7 : i32
    %816 = arith.subi %c7_i32_213, %c0_i32_212 : i32
    %817 = arith.index_cast %c0_i32_212 : i32 to index
    %c0_214 = arith.constant 0 : index
    %c0_215 = arith.constant 0 : index
    %818 = vector.load %arg12[%817, %c0_214, %c0_215] : memref<8x2x512xf32, #tpu.memory_space<vmem>>, vector<1x2x256xf32>
    %819 = vector.shape_cast %818 : vector<1x2x256xf32> to vector<2x256xf32>
    %cst_216 = arith.constant dense<0.000000e+00> : vector<2x256xf32>
    %820 = tpu.matmul %815, %813, %cst_216 {dimension_numbers = #tpu.dot_dimension_numbers<[1], [0], [0], [1], [0, 0, 1, 1], [], []>} : vector<2x64xf32>, vector<64x256xf32>, vector<2x256xf32> -> vector<2x256xf32>
    %821 = arith.addf %819, %820 : vector<2x256xf32>
    %822 = arith.index_cast %816 : i32 to index
    %c0_217 = arith.constant 0 : index
    %c256_218 = arith.constant 256 : index
    %823 = vector.load %arg12[%822, %c0_217, %c256_218] : memref<8x2x512xf32, #tpu.memory_space<vmem>>, vector<1x2x256xf32>
    %824 = vector.shape_cast %823 : vector<1x2x256xf32> to vector<2x256xf32>
    %cst_219 = arith.constant dense<0.000000e+00> : vector<2x256xf32>
    %825 = tpu.matmul %815, %814, %cst_219 {dimension_numbers = #tpu.dot_dimension_numbers<[1], [0], [0], [1], [0, 0, 1, 1], [], []>} : vector<2x64xf32>, vector<64x256xf32>, vector<2x256xf32> -> vector<2x256xf32>
    %826 = arith.addf %824, %825 : vector<2x256xf32>
    %827 = vector.extract_strided_slice %821 {offsets = [0, 0], sizes = [2, 64], strides = [1, 1]} : vector<2x256xf32> to vector<2x64xf32>
    %828 = arith.negf %827 : vector<2x64xf32>
    %829 = math.exp %828 : vector<2x64xf32>
    %cst_220 = arith.constant 1.000000e+00 : f32
    %830 = vector.broadcast %cst_220 : f32 to vector<2x64xf32>
    %831 = arith.addf %830, %829 : vector<2x64xf32>
    %832 = arith.divf %830, %831 : vector<2x64xf32>
    %833 = vector.extract_strided_slice %821 {offsets = [0, 64], sizes = [2, 64], strides = [1, 1]} : vector<2x256xf32> to vector<2x64xf32>
    %834 = arith.negf %833 : vector<2x64xf32>
    %835 = math.exp %834 : vector<2x64xf32>
    %cst_221 = arith.constant 1.000000e+00 : f32
    %836 = vector.broadcast %cst_221 : f32 to vector<2x64xf32>
    %837 = arith.addf %836, %835 : vector<2x64xf32>
    %838 = arith.divf %836, %837 : vector<2x64xf32>
    %839 = vector.extract_strided_slice %821 {offsets = [0, 128], sizes = [2, 64], strides = [1, 1]} : vector<2x256xf32> to vector<2x64xf32>
    %840 = math.tanh %839 : vector<2x64xf32>
    %841 = vector.extract_strided_slice %821 {offsets = [0, 192], sizes = [2, 64], strides = [1, 1]} : vector<2x256xf32> to vector<2x64xf32>
    %842 = arith.negf %841 : vector<2x64xf32>
    %843 = math.exp %842 : vector<2x64xf32>
    %cst_222 = arith.constant 1.000000e+00 : f32
    %844 = vector.broadcast %cst_222 : f32 to vector<2x64xf32>
    %845 = arith.addf %844, %843 : vector<2x64xf32>
    %846 = arith.divf %844, %845 : vector<2x64xf32>
    %847 = arith.mulf %838, %815 : vector<2x64xf32>
    %848 = arith.mulf %832, %840 : vector<2x64xf32>
    %849 = arith.addf %847, %848 : vector<2x64xf32>
    %850 = math.tanh %849 : vector<2x64xf32>
    %851 = arith.mulf %846, %850 : vector<2x64xf32>
    %852 = vector.extract_strided_slice %826 {offsets = [0, 0], sizes = [2, 64], strides = [1, 1]} : vector<2x256xf32> to vector<2x64xf32>
    %853 = arith.negf %852 : vector<2x64xf32>
    %854 = math.exp %853 : vector<2x64xf32>
    %cst_223 = arith.constant 1.000000e+00 : f32
    %855 = vector.broadcast %cst_223 : f32 to vector<2x64xf32>
    %856 = arith.addf %855, %854 : vector<2x64xf32>
    %857 = arith.divf %855, %856 : vector<2x64xf32>
    %858 = vector.extract_strided_slice %826 {offsets = [0, 64], sizes = [2, 64], strides = [1, 1]} : vector<2x256xf32> to vector<2x64xf32>
    %859 = arith.negf %858 : vector<2x64xf32>
    %860 = math.exp %859 : vector<2x64xf32>
    %cst_224 = arith.constant 1.000000e+00 : f32
    %861 = vector.broadcast %cst_224 : f32 to vector<2x64xf32>
    %862 = arith.addf %861, %860 : vector<2x64xf32>
    %863 = arith.divf %861, %862 : vector<2x64xf32>
    %864 = vector.extract_strided_slice %826 {offsets = [0, 128], sizes = [2, 64], strides = [1, 1]} : vector<2x256xf32> to vector<2x64xf32>
    %865 = math.tanh %864 : vector<2x64xf32>
    %866 = vector.extract_strided_slice %826 {offsets = [0, 192], sizes = [2, 64], strides = [1, 1]} : vector<2x256xf32> to vector<2x64xf32>
    %867 = arith.negf %866 : vector<2x64xf32>
    %868 = math.exp %867 : vector<2x64xf32>
    %cst_225 = arith.constant 1.000000e+00 : f32
    %869 = vector.broadcast %cst_225 : f32 to vector<2x64xf32>
    %870 = arith.addf %869, %868 : vector<2x64xf32>
    %871 = arith.divf %869, %870 : vector<2x64xf32>
    %872 = arith.mulf %863, %815 : vector<2x64xf32>
    %873 = arith.mulf %857, %865 : vector<2x64xf32>
    %874 = arith.addf %872, %873 : vector<2x64xf32>
    %875 = math.tanh %874 : vector<2x64xf32>
    %876 = arith.mulf %871, %875 : vector<2x64xf32>
    %877 = arith.index_cast %c0_i32_212 : i32 to index
    %c0_226 = arith.constant 0 : index
    %c0_227 = arith.constant 0 : index
    %878 = vector.load %arg2[%877, %c0_226, %c0_227] : memref<8x2x1xf32, #tpu.memory_space<vmem>>, vector<1x2x1xf32>
    %879 = vector.shape_cast %878 : vector<1x2x1xf32> to vector<2x1xf32>
    %880 = arith.index_cast %816 : i32 to index
    %c0_228 = arith.constant 0 : index
    %c0_229 = arith.constant 0 : index
    %881 = vector.load %arg2[%880, %c0_228, %c0_229] : memref<8x2x1xf32, #tpu.memory_space<vmem>>, vector<1x2x1xf32>
    %882 = vector.shape_cast %881 : vector<1x2x1xf32> to vector<2x1xf32>
    %cst_230 = arith.constant 1.000000e+00 : f32
    %883 = vector.broadcast %cst_230 : f32 to vector<2x1xf32>
    %884 = arith.subf %883, %879 : vector<2x1xf32>
    %cst_231 = arith.constant 1.000000e+00 : f32
    %885 = vector.broadcast %cst_231 : f32 to vector<2x1xf32>
    %886 = arith.subf %885, %882 : vector<2x1xf32>
    %887 = vector.broadcast %879 : vector<2x1xf32> to vector<2x64xf32>
    %888 = arith.mulf %851, %887 : vector<2x64xf32>
    %889 = vector.broadcast %882 : vector<2x1xf32> to vector<2x64xf32>
    %890 = arith.mulf %876, %889 : vector<2x64xf32>
    %891 = arith.index_cast %c0_i32_212 : i32 to index
    %c0_232 = arith.constant 0 : index
    %c0_233 = arith.constant 0 : index
    %892 = vector.load %arg11[%891, %c0_232, %c0_233] : memref<8x2x128xf32, #tpu.memory_space<vmem>>, vector<1x2x64xf32>
    %893 = vector.shape_cast %892 : vector<1x2x64xf32> to vector<2x64xf32>
    %894 = vector.shape_cast %888 : vector<2x64xf32> to vector<1x2x64xf32>
    tpu.vector_store %arg11[%891, %c0_232, %c0_233], %894 {strides = array<i32>} : memref<8x2x128xf32, #tpu.memory_space<vmem>>, vector<1x2x64xf32>,
    %895 = arith.index_cast %816 : i32 to index
    %c0_234 = arith.constant 0 : index
    %c64_235 = arith.constant 64 : index
    %896 = vector.load %arg11[%895, %c0_234, %c64_235] : memref<8x2x128xf32, #tpu.memory_space<vmem>>, vector<1x2x64xf32>
    %897 = vector.shape_cast %896 : vector<1x2x64xf32> to vector<2x64xf32>
    %898 = vector.shape_cast %890 : vector<2x64xf32> to vector<1x2x64xf32>
    tpu.vector_store %arg11[%895, %c0_234, %c64_235], %898 {strides = array<i32>} : memref<8x2x128xf32, #tpu.memory_space<vmem>>, vector<1x2x64xf32>,
    %899 = vector.broadcast %884 : vector<2x1xf32> to vector<2x64xf32>
    %900 = arith.mulf %815, %899 : vector<2x64xf32>
    %901 = arith.addf %888, %900 : vector<2x64xf32>
    %902 = vector.broadcast %879 : vector<2x1xf32> to vector<2x64xf32>
    %903 = arith.mulf %849, %902 : vector<2x64xf32>
    %904 = vector.broadcast %884 : vector<2x1xf32> to vector<2x64xf32>
    %905 = arith.mulf %815, %904 : vector<2x64xf32>
    %906 = arith.addf %903, %905 : vector<2x64xf32>
    %907 = vector.broadcast %886 : vector<2x1xf32> to vector<2x64xf32>
    %908 = arith.mulf %815, %907 : vector<2x64xf32>
    %909 = arith.addf %890, %908 : vector<2x64xf32>
    %910 = vector.broadcast %882 : vector<2x1xf32> to vector<2x64xf32>
    %911 = arith.mulf %874, %910 : vector<2x64xf32>
    %912 = vector.broadcast %886 : vector<2x1xf32> to vector<2x64xf32>
    %913 = arith.mulf %815, %912 : vector<2x64xf32>
    %914 = arith.addf %911, %913 : vector<2x64xf32>
    %c1_i32_236 = arith.constant 1 : i32
    %c7_i32_237 = arith.constant 7 : i32
    %915 = arith.subi %c7_i32_237, %c1_i32_236 : i32
    %916 = arith.index_cast %c1_i32_236 : i32 to index
    %c0_238 = arith.constant 0 : index
    %c0_239 = arith.constant 0 : index
    %917 = vector.load %arg12[%916, %c0_238, %c0_239] : memref<8x2x512xf32, #tpu.memory_space<vmem>>, vector<1x2x256xf32>
    %918 = vector.shape_cast %917 : vector<1x2x256xf32> to vector<2x256xf32>
    %cst_240 = arith.constant dense<0.000000e+00> : vector<2x256xf32>
    %919 = tpu.matmul %901, %813, %cst_240 {dimension_numbers = #tpu.dot_dimension_numbers<[1], [0], [0], [1], [0, 0, 1, 1], [], []>} : vector<2x64xf32>, vector<64x256xf32>, vector<2x256xf32> -> vector<2x256xf32>
    %920 = arith.addf %918, %919 : vector<2x256xf32>
    %921 = arith.index_cast %915 : i32 to index
    %c0_241 = arith.constant 0 : index
    %c256_242 = arith.constant 256 : index
    %922 = vector.load %arg12[%921, %c0_241, %c256_242] : memref<8x2x512xf32, #tpu.memory_space<vmem>>, vector<1x2x256xf32>
    %923 = vector.shape_cast %922 : vector<1x2x256xf32> to vector<2x256xf32>
    %cst_243 = arith.constant dense<0.000000e+00> : vector<2x256xf32>
    %924 = tpu.matmul %909, %814, %cst_243 {dimension_numbers = #tpu.dot_dimension_numbers<[1], [0], [0], [1], [0, 0, 1, 1], [], []>} : vector<2x64xf32>, vector<64x256xf32>, vector<2x256xf32> -> vector<2x256xf32>
    %925 = arith.addf %923, %924 : vector<2x256xf32>
    %926 = vector.extract_strided_slice %920 {offsets = [0, 0], sizes = [2, 64], strides = [1, 1]} : vector<2x256xf32> to vector<2x64xf32>
    %927 = arith.negf %926 : vector<2x64xf32>
    %928 = math.exp %927 : vector<2x64xf32>
    %cst_244 = arith.constant 1.000000e+00 : f32
    %929 = vector.broadcast %cst_244 : f32 to vector<2x64xf32>
    %930 = arith.addf %929, %928 : vector<2x64xf32>
    %931 = arith.divf %929, %930 : vector<2x64xf32>
    %932 = vector.extract_strided_slice %920 {offsets = [0, 64], sizes = [2, 64], strides = [1, 1]} : vector<2x256xf32> to vector<2x64xf32>
    %933 = arith.negf %932 : vector<2x64xf32>
    %934 = math.exp %933 : vector<2x64xf32>
    %cst_245 = arith.constant 1.000000e+00 : f32
    %935 = vector.broadcast %cst_245 : f32 to vector<2x64xf32>
    %936 = arith.addf %935, %934 : vector<2x64xf32>
    %937 = arith.divf %935, %936 : vector<2x64xf32>
    %938 = vector.extract_strided_slice %920 {offsets = [0, 128], sizes = [2, 64], strides = [1, 1]} : vector<2x256xf32> to vector<2x64xf32>
    %939 = math.tanh %938 : vector<2x64xf32>
    %940 = vector.extract_strided_slice %920 {offsets = [0, 192], sizes = [2, 64], strides = [1, 1]} : vector<2x256xf32> to vector<2x64xf32>
    %941 = arith.negf %940 : vector<2x64xf32>
    %942 = math.exp %941 : vector<2x64xf32>
    %cst_246 = arith.constant 1.000000e+00 : f32
    %943 = vector.broadcast %cst_246 : f32 to vector<2x64xf32>
    %944 = arith.addf %943, %942 : vector<2x64xf32>
    %945 = arith.divf %943, %944 : vector<2x64xf32>
    %946 = arith.mulf %937, %906 : vector<2x64xf32>
    %947 = arith.mulf %931, %939 : vector<2x64xf32>
    %948 = arith.addf %946, %947 : vector<2x64xf32>
    %949 = math.tanh %948 : vector<2x64xf32>
    %950 = arith.mulf %945, %949 : vector<2x64xf32>
    %951 = vector.extract_strided_slice %925 {offsets = [0, 0], sizes = [2, 64], strides = [1, 1]} : vector<2x256xf32> to vector<2x64xf32>
    %952 = arith.negf %951 : vector<2x64xf32>
    %953 = math.exp %952 : vector<2x64xf32>
    %cst_247 = arith.constant 1.000000e+00 : f32
    %954 = vector.broadcast %cst_247 : f32 to vector<2x64xf32>
    %955 = arith.addf %954, %953 : vector<2x64xf32>
    %956 = arith.divf %954, %955 : vector<2x64xf32>
    %957 = vector.extract_strided_slice %925 {offsets = [0, 64], sizes = [2, 64], strides = [1, 1]} : vector<2x256xf32> to vector<2x64xf32>
    %958 = arith.negf %957 : vector<2x64xf32>
    %959 = math.exp %958 : vector<2x64xf32>
    %cst_248 = arith.constant 1.000000e+00 : f32
    %960 = vector.broadcast %cst_248 : f32 to vector<2x64xf32>
    %961 = arith.addf %960, %959 : vector<2x64xf32>
    %962 = arith.divf %960, %961 : vector<2x64xf32>
    %963 = vector.extract_strided_slice %925 {offsets = [0, 128], sizes = [2, 64], strides = [1, 1]} : vector<2x256xf32> to vector<2x64xf32>
    %964 = math.tanh %963 : vector<2x64xf32>
    %965 = vector.extract_strided_slice %925 {offsets = [0, 192], sizes = [2, 64], strides = [1, 1]} : vector<2x256xf32> to vector<2x64xf32>
    %966 = arith.negf %965 : vector<2x64xf32>
    %967 = math.exp %966 : vector<2x64xf32>
    %cst_249 = arith.constant 1.000000e+00 : f32
    %968 = vector.broadcast %cst_249 : f32 to vector<2x64xf32>
    %969 = arith.addf %968, %967 : vector<2x64xf32>
    %970 = arith.divf %968, %969 : vector<2x64xf32>
    %971 = arith.mulf %962, %914 : vector<2x64xf32>
    %972 = arith.mulf %956, %964 : vector<2x64xf32>
    %973 = arith.addf %971, %972 : vector<2x64xf32>
    %974 = math.tanh %973 : vector<2x64xf32>
    %975 = arith.mulf %970, %974 : vector<2x64xf32>
    %976 = arith.index_cast %c1_i32_236 : i32 to index
    %c0_250 = arith.constant 0 : index
    %c0_251 = arith.constant 0 : index
    %977 = vector.load %arg2[%976, %c0_250, %c0_251] : memref<8x2x1xf32, #tpu.memory_space<vmem>>, vector<1x2x1xf32>
    %978 = vector.shape_cast %977 : vector<1x2x1xf32> to vector<2x1xf32>
    %979 = arith.index_cast %915 : i32 to index
    %c0_252 = arith.constant 0 : index
    %c0_253 = arith.constant 0 : index
    %980 = vector.load %arg2[%979, %c0_252, %c0_253] : memref<8x2x1xf32, #tpu.memory_space<vmem>>, vector<1x2x1xf32>
    %981 = vector.shape_cast %980 : vector<1x2x1xf32> to vector<2x1xf32>
    %cst_254 = arith.constant 1.000000e+00 : f32
    %982 = vector.broadcast %cst_254 : f32 to vector<2x1xf32>
    %983 = arith.subf %982, %978 : vector<2x1xf32>
    %cst_255 = arith.constant 1.000000e+00 : f32
    %984 = vector.broadcast %cst_255 : f32 to vector<2x1xf32>
    %985 = arith.subf %984, %981 : vector<2x1xf32>
    %986 = vector.broadcast %978 : vector<2x1xf32> to vector<2x64xf32>
    %987 = arith.mulf %950, %986 : vector<2x64xf32>
    %988 = vector.broadcast %981 : vector<2x1xf32> to vector<2x64xf32>
    %989 = arith.mulf %975, %988 : vector<2x64xf32>
    %990 = arith.index_cast %c1_i32_236 : i32 to index
    %c0_256 = arith.constant 0 : index
    %c0_257 = arith.constant 0 : index
    %991 = vector.load %arg11[%990, %c0_256, %c0_257] : memref<8x2x128xf32, #tpu.memory_space<vmem>>, vector<1x2x64xf32>
    %992 = vector.shape_cast %991 : vector<1x2x64xf32> to vector<2x64xf32>
    %993 = vector.shape_cast %987 : vector<2x64xf32> to vector<1x2x64xf32>
    tpu.vector_store %arg11[%990, %c0_256, %c0_257], %993 {strides = array<i32>} : memref<8x2x128xf32, #tpu.memory_space<vmem>>, vector<1x2x64xf32>,
    %994 = arith.index_cast %915 : i32 to index
    %c0_258 = arith.constant 0 : index
    %c64_259 = arith.constant 64 : index
    %995 = vector.load %arg11[%994, %c0_258, %c64_259] : memref<8x2x128xf32, #tpu.memory_space<vmem>>, vector<1x2x64xf32>
    %996 = vector.shape_cast %995 : vector<1x2x64xf32> to vector<2x64xf32>
    %997 = vector.shape_cast %989 : vector<2x64xf32> to vector<1x2x64xf32>
    tpu.vector_store %arg11[%994, %c0_258, %c64_259], %997 {strides = array<i32>} : memref<8x2x128xf32, #tpu.memory_space<vmem>>, vector<1x2x64xf32>,
    %998 = vector.broadcast %983 : vector<2x1xf32> to vector<2x64xf32>
    %999 = arith.mulf %901, %998 : vector<2x64xf32>
    %1000 = arith.addf %987, %999 : vector<2x64xf32>
    %1001 = vector.broadcast %978 : vector<2x1xf32> to vector<2x64xf32>
    %1002 = arith.mulf %948, %1001 : vector<2x64xf32>
    %1003 = vector.broadcast %983 : vector<2x1xf32> to vector<2x64xf32>
    %1004 = arith.mulf %906, %1003 : vector<2x64xf32>
    %1005 = arith.addf %1002, %1004 : vector<2x64xf32>
    %1006 = vector.broadcast %985 : vector<2x1xf32> to vector<2x64xf32>
    %1007 = arith.mulf %909, %1006 : vector<2x64xf32>
    %1008 = arith.addf %989, %1007 : vector<2x64xf32>
    %1009 = vector.broadcast %981 : vector<2x1xf32> to vector<2x64xf32>
    %1010 = arith.mulf %973, %1009 : vector<2x64xf32>
    %1011 = vector.broadcast %985 : vector<2x1xf32> to vector<2x64xf32>
    %1012 = arith.mulf %914, %1011 : vector<2x64xf32>
    %1013 = arith.addf %1010, %1012 : vector<2x64xf32>
    %c2_i32_260 = arith.constant 2 : i32
    %c7_i32_261 = arith.constant 7 : i32
    %1014 = arith.subi %c7_i32_261, %c2_i32_260 : i32
    %1015 = arith.index_cast %c2_i32_260 : i32 to index
    %c0_262 = arith.constant 0 : index
    %c0_263 = arith.constant 0 : index
    %1016 = vector.load %arg12[%1015, %c0_262, %c0_263] : memref<8x2x512xf32, #tpu.memory_space<vmem>>, vector<1x2x256xf32>
    %1017 = vector.shape_cast %1016 : vector<1x2x256xf32> to vector<2x256xf32>
    %cst_264 = arith.constant dense<0.000000e+00> : vector<2x256xf32>
    %1018 = tpu.matmul %1000, %813, %cst_264 {dimension_numbers = #tpu.dot_dimension_numbers<[1], [0], [0], [1], [0, 0, 1, 1], [], []>} : vector<2x64xf32>, vector<64x256xf32>, vector<2x256xf32> -> vector<2x256xf32>
    %1019 = arith.addf %1017, %1018 : vector<2x256xf32>
    %1020 = arith.index_cast %1014 : i32 to index
    %c0_265 = arith.constant 0 : index
    %c256_266 = arith.constant 256 : index
    %1021 = vector.load %arg12[%1020, %c0_265, %c256_266] : memref<8x2x512xf32, #tpu.memory_space<vmem>>, vector<1x2x256xf32>
    %1022 = vector.shape_cast %1021 : vector<1x2x256xf32> to vector<2x256xf32>
    %cst_267 = arith.constant dense<0.000000e+00> : vector<2x256xf32>
    %1023 = tpu.matmul %1008, %814, %cst_267 {dimension_numbers = #tpu.dot_dimension_numbers<[1], [0], [0], [1], [0, 0, 1, 1], [], []>} : vector<2x64xf32>, vector<64x256xf32>, vector<2x256xf32> -> vector<2x256xf32>
    %1024 = arith.addf %1022, %1023 : vector<2x256xf32>
    %1025 = vector.extract_strided_slice %1019 {offsets = [0, 0], sizes = [2, 64], strides = [1, 1]} : vector<2x256xf32> to vector<2x64xf32>
    %1026 = arith.negf %1025 : vector<2x64xf32>
    %1027 = math.exp %1026 : vector<2x64xf32>
    %cst_268 = arith.constant 1.000000e+00 : f32
    %1028 = vector.broadcast %cst_268 : f32 to vector<2x64xf32>
    %1029 = arith.addf %1028, %1027 : vector<2x64xf32>
    %1030 = arith.divf %1028, %1029 : vector<2x64xf32>
    %1031 = vector.extract_strided_slice %1019 {offsets = [0, 64], sizes = [2, 64], strides = [1, 1]} : vector<2x256xf32> to vector<2x64xf32>
    %1032 = arith.negf %1031 : vector<2x64xf32>
    %1033 = math.exp %1032 : vector<2x64xf32>
    %cst_269 = arith.constant 1.000000e+00 : f32
    %1034 = vector.broadcast %cst_269 : f32 to vector<2x64xf32>
    %1035 = arith.addf %1034, %1033 : vector<2x64xf32>
    %1036 = arith.divf %1034, %1035 : vector<2x64xf32>
    %1037 = vector.extract_strided_slice %1019 {offsets = [0, 128], sizes = [2, 64], strides = [1, 1]} : vector<2x256xf32> to vector<2x64xf32>
    %1038 = math.tanh %1037 : vector<2x64xf32>
    %1039 = vector.extract_strided_slice %1019 {offsets = [0, 192], sizes = [2, 64], strides = [1, 1]} : vector<2x256xf32> to vector<2x64xf32>
    %1040 = arith.negf %1039 : vector<2x64xf32>
    %1041 = math.exp %1040 : vector<2x64xf32>
    %cst_270 = arith.constant 1.000000e+00 : f32
    %1042 = vector.broadcast %cst_270 : f32 to vector<2x64xf32>
    %1043 = arith.addf %1042, %1041 : vector<2x64xf32>
    %1044 = arith.divf %1042, %1043 : vector<2x64xf32>
    %1045 = arith.mulf %1036, %1005 : vector<2x64xf32>
    %1046 = arith.mulf %1030, %1038 : vector<2x64xf32>
    %1047 = arith.addf %1045, %1046 : vector<2x64xf32>
    %1048 = math.tanh %1047 : vector<2x64xf32>
    %1049 = arith.mulf %1044, %1048 : vector<2x64xf32>
    %1050 = vector.extract_strided_slice %1024 {offsets = [0, 0], sizes = [2, 64], strides = [1, 1]} : vector<2x256xf32> to vector<2x64xf32>
    %1051 = arith.negf %1050 : vector<2x64xf32>
    %1052 = math.exp %1051 : vector<2x64xf32>
    %cst_271 = arith.constant 1.000000e+00 : f32
    %1053 = vector.broadcast %cst_271 : f32 to vector<2x64xf32>
    %1054 = arith.addf %1053, %1052 : vector<2x64xf32>
    %1055 = arith.divf %1053, %1054 : vector<2x64xf32>
    %1056 = vector.extract_strided_slice %1024 {offsets = [0, 64], sizes = [2, 64], strides = [1, 1]} : vector<2x256xf32> to vector<2x64xf32>
    %1057 = arith.negf %1056 : vector<2x64xf32>
    %1058 = math.exp %1057 : vector<2x64xf32>
    %cst_272 = arith.constant 1.000000e+00 : f32
    %1059 = vector.broadcast %cst_272 : f32 to vector<2x64xf32>
    %1060 = arith.addf %1059, %1058 : vector<2x64xf32>
    %1061 = arith.divf %1059, %1060 : vector<2x64xf32>
    %1062 = vector.extract_strided_slice %1024 {offsets = [0, 128], sizes = [2, 64], strides = [1, 1]} : vector<2x256xf32> to vector<2x64xf32>
    %1063 = math.tanh %1062 : vector<2x64xf32>
    %1064 = vector.extract_strided_slice %1024 {offsets = [0, 192], sizes = [2, 64], strides = [1, 1]} : vector<2x256xf32> to vector<2x64xf32>
    %1065 = arith.negf %1064 : vector<2x64xf32>
    %1066 = math.exp %1065 : vector<2x64xf32>
    %cst_273 = arith.constant 1.000000e+00 : f32
    %1067 = vector.broadcast %cst_273 : f32 to vector<2x64xf32>
    %1068 = arith.addf %1067, %1066 : vector<2x64xf32>
    %1069 = arith.divf %1067, %1068 : vector<2x64xf32>
    %1070 = arith.mulf %1061, %1013 : vector<2x64xf32>
    %1071 = arith.mulf %1055, %1063 : vector<2x64xf32>
    %1072 = arith.addf %1070, %1071 : vector<2x64xf32>
    %1073 = math.tanh %1072 : vector<2x64xf32>
    %1074 = arith.mulf %1069, %1073 : vector<2x64xf32>
    %1075 = arith.index_cast %c2_i32_260 : i32 to index
    %c0_274 = arith.constant 0 : index
    %c0_275 = arith.constant 0 : index
    %1076 = vector.load %arg2[%1075, %c0_274, %c0_275] : memref<8x2x1xf32, #tpu.memory_space<vmem>>, vector<1x2x1xf32>
    %1077 = vector.shape_cast %1076 : vector<1x2x1xf32> to vector<2x1xf32>
    %1078 = arith.index_cast %1014 : i32 to index
    %c0_276 = arith.constant 0 : index
    %c0_277 = arith.constant 0 : index
    %1079 = vector.load %arg2[%1078, %c0_276, %c0_277] : memref<8x2x1xf32, #tpu.memory_space<vmem>>, vector<1x2x1xf32>
    %1080 = vector.shape_cast %1079 : vector<1x2x1xf32> to vector<2x1xf32>
    %cst_278 = arith.constant 1.000000e+00 : f32
    %1081 = vector.broadcast %cst_278 : f32 to vector<2x1xf32>
    %1082 = arith.subf %1081, %1077 : vector<2x1xf32>
    %cst_279 = arith.constant 1.000000e+00 : f32
    %1083 = vector.broadcast %cst_279 : f32 to vector<2x1xf32>
    %1084 = arith.subf %1083, %1080 : vector<2x1xf32>
    %1085 = vector.broadcast %1077 : vector<2x1xf32> to vector<2x64xf32>
    %1086 = arith.mulf %1049, %1085 : vector<2x64xf32>
    %1087 = vector.broadcast %1080 : vector<2x1xf32> to vector<2x64xf32>
    %1088 = arith.mulf %1074, %1087 : vector<2x64xf32>
    %1089 = arith.index_cast %c2_i32_260 : i32 to index
    %c0_280 = arith.constant 0 : index
    %c0_281 = arith.constant 0 : index
    %1090 = vector.load %arg11[%1089, %c0_280, %c0_281] : memref<8x2x128xf32, #tpu.memory_space<vmem>>, vector<1x2x64xf32>
    %1091 = vector.shape_cast %1090 : vector<1x2x64xf32> to vector<2x64xf32>
    %1092 = vector.shape_cast %1086 : vector<2x64xf32> to vector<1x2x64xf32>
    tpu.vector_store %arg11[%1089, %c0_280, %c0_281], %1092 {strides = array<i32>} : memref<8x2x128xf32, #tpu.memory_space<vmem>>, vector<1x2x64xf32>,
    %1093 = arith.index_cast %1014 : i32 to index
    %c0_282 = arith.constant 0 : index
    %c64_283 = arith.constant 64 : index
    %1094 = vector.load %arg11[%1093, %c0_282, %c64_283] : memref<8x2x128xf32, #tpu.memory_space<vmem>>, vector<1x2x64xf32>
    %1095 = vector.shape_cast %1094 : vector<1x2x64xf32> to vector<2x64xf32>
    %1096 = vector.shape_cast %1088 : vector<2x64xf32> to vector<1x2x64xf32>
    tpu.vector_store %arg11[%1093, %c0_282, %c64_283], %1096 {strides = array<i32>} : memref<8x2x128xf32, #tpu.memory_space<vmem>>, vector<1x2x64xf32>,
    %1097 = vector.broadcast %1082 : vector<2x1xf32> to vector<2x64xf32>
    %1098 = arith.mulf %1000, %1097 : vector<2x64xf32>
    %1099 = arith.addf %1086, %1098 : vector<2x64xf32>
    %1100 = vector.broadcast %1077 : vector<2x1xf32> to vector<2x64xf32>
    %1101 = arith.mulf %1047, %1100 : vector<2x64xf32>
    %1102 = vector.broadcast %1082 : vector<2x1xf32> to vector<2x64xf32>
    %1103 = arith.mulf %1005, %1102 : vector<2x64xf32>
    %1104 = arith.addf %1101, %1103 : vector<2x64xf32>
    %1105 = vector.broadcast %1084 : vector<2x1xf32> to vector<2x64xf32>
    %1106 = arith.mulf %1008, %1105 : vector<2x64xf32>
    %1107 = arith.addf %1088, %1106 : vector<2x64xf32>
    %1108 = vector.broadcast %1080 : vector<2x1xf32> to vector<2x64xf32>
    %1109 = arith.mulf %1072, %1108 : vector<2x64xf32>
    %1110 = vector.broadcast %1084 : vector<2x1xf32> to vector<2x64xf32>
    %1111 = arith.mulf %1013, %1110 : vector<2x64xf32>
    %1112 = arith.addf %1109, %1111 : vector<2x64xf32>
    %c3_i32_284 = arith.constant 3 : i32
    %c7_i32_285 = arith.constant 7 : i32
    %1113 = arith.subi %c7_i32_285, %c3_i32_284 : i32
    %1114 = arith.index_cast %c3_i32_284 : i32 to index
    %c0_286 = arith.constant 0 : index
    %c0_287 = arith.constant 0 : index
    %1115 = vector.load %arg12[%1114, %c0_286, %c0_287] : memref<8x2x512xf32, #tpu.memory_space<vmem>>, vector<1x2x256xf32>
    %1116 = vector.shape_cast %1115 : vector<1x2x256xf32> to vector<2x256xf32>
    %cst_288 = arith.constant dense<0.000000e+00> : vector<2x256xf32>
    %1117 = tpu.matmul %1099, %813, %cst_288 {dimension_numbers = #tpu.dot_dimension_numbers<[1], [0], [0], [1], [0, 0, 1, 1], [], []>} : vector<2x64xf32>, vector<64x256xf32>, vector<2x256xf32> -> vector<2x256xf32>
    %1118 = arith.addf %1116, %1117 : vector<2x256xf32>
    %1119 = arith.index_cast %1113 : i32 to index
    %c0_289 = arith.constant 0 : index
    %c256_290 = arith.constant 256 : index
    %1120 = vector.load %arg12[%1119, %c0_289, %c256_290] : memref<8x2x512xf32, #tpu.memory_space<vmem>>, vector<1x2x256xf32>
    %1121 = vector.shape_cast %1120 : vector<1x2x256xf32> to vector<2x256xf32>
    %cst_291 = arith.constant dense<0.000000e+00> : vector<2x256xf32>
    %1122 = tpu.matmul %1107, %814, %cst_291 {dimension_numbers = #tpu.dot_dimension_numbers<[1], [0], [0], [1], [0, 0, 1, 1], [], []>} : vector<2x64xf32>, vector<64x256xf32>, vector<2x256xf32> -> vector<2x256xf32>
    %1123 = arith.addf %1121, %1122 : vector<2x256xf32>
    %1124 = vector.extract_strided_slice %1118 {offsets = [0, 0], sizes = [2, 64], strides = [1, 1]} : vector<2x256xf32> to vector<2x64xf32>
    %1125 = arith.negf %1124 : vector<2x64xf32>
    %1126 = math.exp %1125 : vector<2x64xf32>
    %cst_292 = arith.constant 1.000000e+00 : f32
    %1127 = vector.broadcast %cst_292 : f32 to vector<2x64xf32>
    %1128 = arith.addf %1127, %1126 : vector<2x64xf32>
    %1129 = arith.divf %1127, %1128 : vector<2x64xf32>
    %1130 = vector.extract_strided_slice %1118 {offsets = [0, 64], sizes = [2, 64], strides = [1, 1]} : vector<2x256xf32> to vector<2x64xf32>
    %1131 = arith.negf %1130 : vector<2x64xf32>
    %1132 = math.exp %1131 : vector<2x64xf32>
    %cst_293 = arith.constant 1.000000e+00 : f32
    %1133 = vector.broadcast %cst_293 : f32 to vector<2x64xf32>
    %1134 = arith.addf %1133, %1132 : vector<2x64xf32>
    %1135 = arith.divf %1133, %1134 : vector<2x64xf32>
    %1136 = vector.extract_strided_slice %1118 {offsets = [0, 128], sizes = [2, 64], strides = [1, 1]} : vector<2x256xf32> to vector<2x64xf32>
    %1137 = math.tanh %1136 : vector<2x64xf32>
    %1138 = vector.extract_strided_slice %1118 {offsets = [0, 192], sizes = [2, 64], strides = [1, 1]} : vector<2x256xf32> to vector<2x64xf32>
    %1139 = arith.negf %1138 : vector<2x64xf32>
    %1140 = math.exp %1139 : vector<2x64xf32>
    %cst_294 = arith.constant 1.000000e+00 : f32
    %1141 = vector.broadcast %cst_294 : f32 to vector<2x64xf32>
    %1142 = arith.addf %1141, %1140 : vector<2x64xf32>
    %1143 = arith.divf %1141, %1142 : vector<2x64xf32>
    %1144 = arith.mulf %1135, %1104 : vector<2x64xf32>
    %1145 = arith.mulf %1129, %1137 : vector<2x64xf32>
    %1146 = arith.addf %1144, %1145 : vector<2x64xf32>
    %1147 = math.tanh %1146 : vector<2x64xf32>
    %1148 = arith.mulf %1143, %1147 : vector<2x64xf32>
    %1149 = vector.extract_strided_slice %1123 {offsets = [0, 0], sizes = [2, 64], strides = [1, 1]} : vector<2x256xf32> to vector<2x64xf32>
    %1150 = arith.negf %1149 : vector<2x64xf32>
    %1151 = math.exp %1150 : vector<2x64xf32>
    %cst_295 = arith.constant 1.000000e+00 : f32
    %1152 = vector.broadcast %cst_295 : f32 to vector<2x64xf32>
    %1153 = arith.addf %1152, %1151 : vector<2x64xf32>
    %1154 = arith.divf %1152, %1153 : vector<2x64xf32>
    %1155 = vector.extract_strided_slice %1123 {offsets = [0, 64], sizes = [2, 64], strides = [1, 1]} : vector<2x256xf32> to vector<2x64xf32>
    %1156 = arith.negf %1155 : vector<2x64xf32>
    %1157 = math.exp %1156 : vector<2x64xf32>
    %cst_296 = arith.constant 1.000000e+00 : f32
    %1158 = vector.broadcast %cst_296 : f32 to vector<2x64xf32>
    %1159 = arith.addf %1158, %1157 : vector<2x64xf32>
    %1160 = arith.divf %1158, %1159 : vector<2x64xf32>
    %1161 = vector.extract_strided_slice %1123 {offsets = [0, 128], sizes = [2, 64], strides = [1, 1]} : vector<2x256xf32> to vector<2x64xf32>
    %1162 = math.tanh %1161 : vector<2x64xf32>
    %1163 = vector.extract_strided_slice %1123 {offsets = [0, 192], sizes = [2, 64], strides = [1, 1]} : vector<2x256xf32> to vector<2x64xf32>
    %1164 = arith.negf %1163 : vector<2x64xf32>
    %1165 = math.exp %1164 : vector<2x64xf32>
    %cst_297 = arith.constant 1.000000e+00 : f32
    %1166 = vector.broadcast %cst_297 : f32 to vector<2x64xf32>
    %1167 = arith.addf %1166, %1165 : vector<2x64xf32>
    %1168 = arith.divf %1166, %1167 : vector<2x64xf32>
    %1169 = arith.mulf %1160, %1112 : vector<2x64xf32>
    %1170 = arith.mulf %1154, %1162 : vector<2x64xf32>
    %1171 = arith.addf %1169, %1170 : vector<2x64xf32>
    %1172 = math.tanh %1171 : vector<2x64xf32>
    %1173 = arith.mulf %1168, %1172 : vector<2x64xf32>
    %1174 = arith.index_cast %c3_i32_284 : i32 to index
    %c0_298 = arith.constant 0 : index
    %c0_299 = arith.constant 0 : index
    %1175 = vector.load %arg2[%1174, %c0_298, %c0_299] : memref<8x2x1xf32, #tpu.memory_space<vmem>>, vector<1x2x1xf32>
    %1176 = vector.shape_cast %1175 : vector<1x2x1xf32> to vector<2x1xf32>
    %1177 = arith.index_cast %1113 : i32 to index
    %c0_300 = arith.constant 0 : index
    %c0_301 = arith.constant 0 : index
    %1178 = vector.load %arg2[%1177, %c0_300, %c0_301] : memref<8x2x1xf32, #tpu.memory_space<vmem>>, vector<1x2x1xf32>
    %1179 = vector.shape_cast %1178 : vector<1x2x1xf32> to vector<2x1xf32>
    %cst_302 = arith.constant 1.000000e+00 : f32
    %1180 = vector.broadcast %cst_302 : f32 to vector<2x1xf32>
    %1181 = arith.subf %1180, %1176 : vector<2x1xf32>
    %cst_303 = arith.constant 1.000000e+00 : f32
    %1182 = vector.broadcast %cst_303 : f32 to vector<2x1xf32>
    %1183 = arith.subf %1182, %1179 : vector<2x1xf32>
    %1184 = vector.broadcast %1176 : vector<2x1xf32> to vector<2x64xf32>
    %1185 = arith.mulf %1148, %1184 : vector<2x64xf32>
    %1186 = vector.broadcast %1179 : vector<2x1xf32> to vector<2x64xf32>
    %1187 = arith.mulf %1173, %1186 : vector<2x64xf32>
    %1188 = arith.index_cast %c3_i32_284 : i32 to index
    %c0_304 = arith.constant 0 : index
    %c0_305 = arith.constant 0 : index
    %1189 = vector.load %arg11[%1188, %c0_304, %c0_305] : memref<8x2x128xf32, #tpu.memory_space<vmem>>, vector<1x2x64xf32>
    %1190 = vector.shape_cast %1189 : vector<1x2x64xf32> to vector<2x64xf32>
    %1191 = vector.shape_cast %1185 : vector<2x64xf32> to vector<1x2x64xf32>
    tpu.vector_store %arg11[%1188, %c0_304, %c0_305], %1191 {strides = array<i32>} : memref<8x2x128xf32, #tpu.memory_space<vmem>>, vector<1x2x64xf32>,
    %1192 = arith.index_cast %1113 : i32 to index
    %c0_306 = arith.constant 0 : index
    %c64_307 = arith.constant 64 : index
    %1193 = vector.load %arg11[%1192, %c0_306, %c64_307] : memref<8x2x128xf32, #tpu.memory_space<vmem>>, vector<1x2x64xf32>
    %1194 = vector.shape_cast %1193 : vector<1x2x64xf32> to vector<2x64xf32>
    %1195 = vector.shape_cast %1187 : vector<2x64xf32> to vector<1x2x64xf32>
    tpu.vector_store %arg11[%1192, %c0_306, %c64_307], %1195 {strides = array<i32>} : memref<8x2x128xf32, #tpu.memory_space<vmem>>, vector<1x2x64xf32>,
    %1196 = vector.broadcast %1181 : vector<2x1xf32> to vector<2x64xf32>
    %1197 = arith.mulf %1099, %1196 : vector<2x64xf32>
    %1198 = arith.addf %1185, %1197 : vector<2x64xf32>
    %1199 = vector.broadcast %1176 : vector<2x1xf32> to vector<2x64xf32>
    %1200 = arith.mulf %1146, %1199 : vector<2x64xf32>
    %1201 = vector.broadcast %1181 : vector<2x1xf32> to vector<2x64xf32>
    %1202 = arith.mulf %1104, %1201 : vector<2x64xf32>
    %1203 = arith.addf %1200, %1202 : vector<2x64xf32>
    %1204 = vector.broadcast %1183 : vector<2x1xf32> to vector<2x64xf32>
    %1205 = arith.mulf %1107, %1204 : vector<2x64xf32>
    %1206 = arith.addf %1187, %1205 : vector<2x64xf32>
    %1207 = vector.broadcast %1179 : vector<2x1xf32> to vector<2x64xf32>
    %1208 = arith.mulf %1171, %1207 : vector<2x64xf32>
    %1209 = vector.broadcast %1183 : vector<2x1xf32> to vector<2x64xf32>
    %1210 = arith.mulf %1112, %1209 : vector<2x64xf32>
    %1211 = arith.addf %1208, %1210 : vector<2x64xf32>
    %c4_i32_308 = arith.constant 4 : i32
    %c7_i32_309 = arith.constant 7 : i32
    %1212 = arith.subi %c7_i32_309, %c4_i32_308 : i32
    %1213 = arith.index_cast %c4_i32_308 : i32 to index
    %c0_310 = arith.constant 0 : index
    %c0_311 = arith.constant 0 : index
    %1214 = vector.load %arg12[%1213, %c0_310, %c0_311] : memref<8x2x512xf32, #tpu.memory_space<vmem>>, vector<1x2x256xf32>
    %1215 = vector.shape_cast %1214 : vector<1x2x256xf32> to vector<2x256xf32>
    %cst_312 = arith.constant dense<0.000000e+00> : vector<2x256xf32>
    %1216 = tpu.matmul %1198, %813, %cst_312 {dimension_numbers = #tpu.dot_dimension_numbers<[1], [0], [0], [1], [0, 0, 1, 1], [], []>} : vector<2x64xf32>, vector<64x256xf32>, vector<2x256xf32> -> vector<2x256xf32>
    %1217 = arith.addf %1215, %1216 : vector<2x256xf32>
    %1218 = arith.index_cast %1212 : i32 to index
    %c0_313 = arith.constant 0 : index
    %c256_314 = arith.constant 256 : index
    %1219 = vector.load %arg12[%1218, %c0_313, %c256_314] : memref<8x2x512xf32, #tpu.memory_space<vmem>>, vector<1x2x256xf32>
    %1220 = vector.shape_cast %1219 : vector<1x2x256xf32> to vector<2x256xf32>
    %cst_315 = arith.constant dense<0.000000e+00> : vector<2x256xf32>
    %1221 = tpu.matmul %1206, %814, %cst_315 {dimension_numbers = #tpu.dot_dimension_numbers<[1], [0], [0], [1], [0, 0, 1, 1], [], []>} : vector<2x64xf32>, vector<64x256xf32>, vector<2x256xf32> -> vector<2x256xf32>
    %1222 = arith.addf %1220, %1221 : vector<2x256xf32>
    %1223 = vector.extract_strided_slice %1217 {offsets = [0, 0], sizes = [2, 64], strides = [1, 1]} : vector<2x256xf32> to vector<2x64xf32>
    %1224 = arith.negf %1223 : vector<2x64xf32>
    %1225 = math.exp %1224 : vector<2x64xf32>
    %cst_316 = arith.constant 1.000000e+00 : f32
    %1226 = vector.broadcast %cst_316 : f32 to vector<2x64xf32>
    %1227 = arith.addf %1226, %1225 : vector<2x64xf32>
    %1228 = arith.divf %1226, %1227 : vector<2x64xf32>
    %1229 = vector.extract_strided_slice %1217 {offsets = [0, 64], sizes = [2, 64], strides = [1, 1]} : vector<2x256xf32> to vector<2x64xf32>
    %1230 = arith.negf %1229 : vector<2x64xf32>
    %1231 = math.exp %1230 : vector<2x64xf32>
    %cst_317 = arith.constant 1.000000e+00 : f32
    %1232 = vector.broadcast %cst_317 : f32 to vector<2x64xf32>
    %1233 = arith.addf %1232, %1231 : vector<2x64xf32>
    %1234 = arith.divf %1232, %1233 : vector<2x64xf32>
    %1235 = vector.extract_strided_slice %1217 {offsets = [0, 128], sizes = [2, 64], strides = [1, 1]} : vector<2x256xf32> to vector<2x64xf32>
    %1236 = math.tanh %1235 : vector<2x64xf32>
    %1237 = vector.extract_strided_slice %1217 {offsets = [0, 192], sizes = [2, 64], strides = [1, 1]} : vector<2x256xf32> to vector<2x64xf32>
    %1238 = arith.negf %1237 : vector<2x64xf32>
    %1239 = math.exp %1238 : vector<2x64xf32>
    %cst_318 = arith.constant 1.000000e+00 : f32
    %1240 = vector.broadcast %cst_318 : f32 to vector<2x64xf32>
    %1241 = arith.addf %1240, %1239 : vector<2x64xf32>
    %1242 = arith.divf %1240, %1241 : vector<2x64xf32>
    %1243 = arith.mulf %1234, %1203 : vector<2x64xf32>
    %1244 = arith.mulf %1228, %1236 : vector<2x64xf32>
    %1245 = arith.addf %1243, %1244 : vector<2x64xf32>
    %1246 = math.tanh %1245 : vector<2x64xf32>
    %1247 = arith.mulf %1242, %1246 : vector<2x64xf32>
    %1248 = vector.extract_strided_slice %1222 {offsets = [0, 0], sizes = [2, 64], strides = [1, 1]} : vector<2x256xf32> to vector<2x64xf32>
    %1249 = arith.negf %1248 : vector<2x64xf32>
    %1250 = math.exp %1249 : vector<2x64xf32>
    %cst_319 = arith.constant 1.000000e+00 : f32
    %1251 = vector.broadcast %cst_319 : f32 to vector<2x64xf32>
    %1252 = arith.addf %1251, %1250 : vector<2x64xf32>
    %1253 = arith.divf %1251, %1252 : vector<2x64xf32>
    %1254 = vector.extract_strided_slice %1222 {offsets = [0, 64], sizes = [2, 64], strides = [1, 1]} : vector<2x256xf32> to vector<2x64xf32>
    %1255 = arith.negf %1254 : vector<2x64xf32>
    %1256 = math.exp %1255 : vector<2x64xf32>
    %cst_320 = arith.constant 1.000000e+00 : f32
    %1257 = vector.broadcast %cst_320 : f32 to vector<2x64xf32>
    %1258 = arith.addf %1257, %1256 : vector<2x64xf32>
    %1259 = arith.divf %1257, %1258 : vector<2x64xf32>
    %1260 = vector.extract_strided_slice %1222 {offsets = [0, 128], sizes = [2, 64], strides = [1, 1]} : vector<2x256xf32> to vector<2x64xf32>
    %1261 = math.tanh %1260 : vector<2x64xf32>
    %1262 = vector.extract_strided_slice %1222 {offsets = [0, 192], sizes = [2, 64], strides = [1, 1]} : vector<2x256xf32> to vector<2x64xf32>
    %1263 = arith.negf %1262 : vector<2x64xf32>
    %1264 = math.exp %1263 : vector<2x64xf32>
    %cst_321 = arith.constant 1.000000e+00 : f32
    %1265 = vector.broadcast %cst_321 : f32 to vector<2x64xf32>
    %1266 = arith.addf %1265, %1264 : vector<2x64xf32>
    %1267 = arith.divf %1265, %1266 : vector<2x64xf32>
    %1268 = arith.mulf %1259, %1211 : vector<2x64xf32>
    %1269 = arith.mulf %1253, %1261 : vector<2x64xf32>
    %1270 = arith.addf %1268, %1269 : vector<2x64xf32>
    %1271 = math.tanh %1270 : vector<2x64xf32>
    %1272 = arith.mulf %1267, %1271 : vector<2x64xf32>
    %1273 = arith.index_cast %c4_i32_308 : i32 to index
    %c0_322 = arith.constant 0 : index
    %c0_323 = arith.constant 0 : index
    %1274 = vector.load %arg2[%1273, %c0_322, %c0_323] : memref<8x2x1xf32, #tpu.memory_space<vmem>>, vector<1x2x1xf32>
    %1275 = vector.shape_cast %1274 : vector<1x2x1xf32> to vector<2x1xf32>
    %1276 = arith.index_cast %1212 : i32 to index
    %c0_324 = arith.constant 0 : index
    %c0_325 = arith.constant 0 : index
    %1277 = vector.load %arg2[%1276, %c0_324, %c0_325] : memref<8x2x1xf32, #tpu.memory_space<vmem>>, vector<1x2x1xf32>
    %1278 = vector.shape_cast %1277 : vector<1x2x1xf32> to vector<2x1xf32>
    %cst_326 = arith.constant 1.000000e+00 : f32
    %1279 = vector.broadcast %cst_326 : f32 to vector<2x1xf32>
    %1280 = arith.subf %1279, %1275 : vector<2x1xf32>
    %cst_327 = arith.constant 1.000000e+00 : f32
    %1281 = vector.broadcast %cst_327 : f32 to vector<2x1xf32>
    %1282 = arith.subf %1281, %1278 : vector<2x1xf32>
    %1283 = vector.broadcast %1275 : vector<2x1xf32> to vector<2x64xf32>
    %1284 = arith.mulf %1247, %1283 : vector<2x64xf32>
    %1285 = vector.broadcast %1278 : vector<2x1xf32> to vector<2x64xf32>
    %1286 = arith.mulf %1272, %1285 : vector<2x64xf32>
    %1287 = arith.index_cast %c4_i32_308 : i32 to index
    %c0_328 = arith.constant 0 : index
    %c0_329 = arith.constant 0 : index
    %1288 = vector.load %arg11[%1287, %c0_328, %c0_329] : memref<8x2x128xf32, #tpu.memory_space<vmem>>, vector<1x2x64xf32>
    %1289 = vector.shape_cast %1288 : vector<1x2x64xf32> to vector<2x64xf32>
    %1290 = vector.shape_cast %1284 : vector<2x64xf32> to vector<1x2x64xf32>
    tpu.vector_store %arg11[%1287, %c0_328, %c0_329], %1290 {strides = array<i32>} : memref<8x2x128xf32, #tpu.memory_space<vmem>>, vector<1x2x64xf32>,
    %1291 = arith.index_cast %1212 : i32 to index
    %c0_330 = arith.constant 0 : index
    %c64_331 = arith.constant 64 : index
    %1292 = vector.load %arg11[%1291, %c0_330, %c64_331] : memref<8x2x128xf32, #tpu.memory_space<vmem>>, vector<1x2x64xf32>
    %1293 = vector.shape_cast %1292 : vector<1x2x64xf32> to vector<2x64xf32>
    %1294 = vector.shape_cast %1286 : vector<2x64xf32> to vector<1x2x64xf32>
    tpu.vector_store %arg11[%1291, %c0_330, %c64_331], %1294 {strides = array<i32>} : memref<8x2x128xf32, #tpu.memory_space<vmem>>, vector<1x2x64xf32>,
    %1295 = vector.broadcast %1280 : vector<2x1xf32> to vector<2x64xf32>
    %1296 = arith.mulf %1198, %1295 : vector<2x64xf32>
    %1297 = arith.addf %1284, %1296 : vector<2x64xf32>
    %1298 = vector.broadcast %1275 : vector<2x1xf32> to vector<2x64xf32>
    %1299 = arith.mulf %1245, %1298 : vector<2x64xf32>
    %1300 = vector.broadcast %1280 : vector<2x1xf32> to vector<2x64xf32>
    %1301 = arith.mulf %1203, %1300 : vector<2x64xf32>
    %1302 = arith.addf %1299, %1301 : vector<2x64xf32>
    %1303 = vector.broadcast %1282 : vector<2x1xf32> to vector<2x64xf32>
    %1304 = arith.mulf %1206, %1303 : vector<2x64xf32>
    %1305 = arith.addf %1286, %1304 : vector<2x64xf32>
    %1306 = vector.broadcast %1278 : vector<2x1xf32> to vector<2x64xf32>
    %1307 = arith.mulf %1270, %1306 : vector<2x64xf32>
    %1308 = vector.broadcast %1282 : vector<2x1xf32> to vector<2x64xf32>
    %1309 = arith.mulf %1211, %1308 : vector<2x64xf32>
    %1310 = arith.addf %1307, %1309 : vector<2x64xf32>
    %c5_i32_332 = arith.constant 5 : i32
    %c7_i32_333 = arith.constant 7 : i32
    %1311 = arith.subi %c7_i32_333, %c5_i32_332 : i32
    %1312 = arith.index_cast %c5_i32_332 : i32 to index
    %c0_334 = arith.constant 0 : index
    %c0_335 = arith.constant 0 : index
    %1313 = vector.load %arg12[%1312, %c0_334, %c0_335] : memref<8x2x512xf32, #tpu.memory_space<vmem>>, vector<1x2x256xf32>
    %1314 = vector.shape_cast %1313 : vector<1x2x256xf32> to vector<2x256xf32>
    %cst_336 = arith.constant dense<0.000000e+00> : vector<2x256xf32>
    %1315 = tpu.matmul %1297, %813, %cst_336 {dimension_numbers = #tpu.dot_dimension_numbers<[1], [0], [0], [1], [0, 0, 1, 1], [], []>} : vector<2x64xf32>, vector<64x256xf32>, vector<2x256xf32> -> vector<2x256xf32>
    %1316 = arith.addf %1314, %1315 : vector<2x256xf32>
    %1317 = arith.index_cast %1311 : i32 to index
    %c0_337 = arith.constant 0 : index
    %c256_338 = arith.constant 256 : index
    %1318 = vector.load %arg12[%1317, %c0_337, %c256_338] : memref<8x2x512xf32, #tpu.memory_space<vmem>>, vector<1x2x256xf32>
    %1319 = vector.shape_cast %1318 : vector<1x2x256xf32> to vector<2x256xf32>
    %cst_339 = arith.constant dense<0.000000e+00> : vector<2x256xf32>
    %1320 = tpu.matmul %1305, %814, %cst_339 {dimension_numbers = #tpu.dot_dimension_numbers<[1], [0], [0], [1], [0, 0, 1, 1], [], []>} : vector<2x64xf32>, vector<64x256xf32>, vector<2x256xf32> -> vector<2x256xf32>
    %1321 = arith.addf %1319, %1320 : vector<2x256xf32>
    %1322 = vector.extract_strided_slice %1316 {offsets = [0, 0], sizes = [2, 64], strides = [1, 1]} : vector<2x256xf32> to vector<2x64xf32>
    %1323 = arith.negf %1322 : vector<2x64xf32>
    %1324 = math.exp %1323 : vector<2x64xf32>
    %cst_340 = arith.constant 1.000000e+00 : f32
    %1325 = vector.broadcast %cst_340 : f32 to vector<2x64xf32>
    %1326 = arith.addf %1325, %1324 : vector<2x64xf32>
    %1327 = arith.divf %1325, %1326 : vector<2x64xf32>
    %1328 = vector.extract_strided_slice %1316 {offsets = [0, 64], sizes = [2, 64], strides = [1, 1]} : vector<2x256xf32> to vector<2x64xf32>
    %1329 = arith.negf %1328 : vector<2x64xf32>
    %1330 = math.exp %1329 : vector<2x64xf32>
    %cst_341 = arith.constant 1.000000e+00 : f32
    %1331 = vector.broadcast %cst_341 : f32 to vector<2x64xf32>
    %1332 = arith.addf %1331, %1330 : vector<2x64xf32>
    %1333 = arith.divf %1331, %1332 : vector<2x64xf32>
    %1334 = vector.extract_strided_slice %1316 {offsets = [0, 128], sizes = [2, 64], strides = [1, 1]} : vector<2x256xf32> to vector<2x64xf32>
    %1335 = math.tanh %1334 : vector<2x64xf32>
    %1336 = vector.extract_strided_slice %1316 {offsets = [0, 192], sizes = [2, 64], strides = [1, 1]} : vector<2x256xf32> to vector<2x64xf32>
    %1337 = arith.negf %1336 : vector<2x64xf32>
    %1338 = math.exp %1337 : vector<2x64xf32>
    %cst_342 = arith.constant 1.000000e+00 : f32
    %1339 = vector.broadcast %cst_342 : f32 to vector<2x64xf32>
    %1340 = arith.addf %1339, %1338 : vector<2x64xf32>
    %1341 = arith.divf %1339, %1340 : vector<2x64xf32>
    %1342 = arith.mulf %1333, %1302 : vector<2x64xf32>
    %1343 = arith.mulf %1327, %1335 : vector<2x64xf32>
    %1344 = arith.addf %1342, %1343 : vector<2x64xf32>
    %1345 = math.tanh %1344 : vector<2x64xf32>
    %1346 = arith.mulf %1341, %1345 : vector<2x64xf32>
    %1347 = vector.extract_strided_slice %1321 {offsets = [0, 0], sizes = [2, 64], strides = [1, 1]} : vector<2x256xf32> to vector<2x64xf32>
    %1348 = arith.negf %1347 : vector<2x64xf32>
    %1349 = math.exp %1348 : vector<2x64xf32>
    %cst_343 = arith.constant 1.000000e+00 : f32
    %1350 = vector.broadcast %cst_343 : f32 to vector<2x64xf32>
    %1351 = arith.addf %1350, %1349 : vector<2x64xf32>
    %1352 = arith.divf %1350, %1351 : vector<2x64xf32>
    %1353 = vector.extract_strided_slice %1321 {offsets = [0, 64], sizes = [2, 64], strides = [1, 1]} : vector<2x256xf32> to vector<2x64xf32>
    %1354 = arith.negf %1353 : vector<2x64xf32>
    %1355 = math.exp %1354 : vector<2x64xf32>
    %cst_344 = arith.constant 1.000000e+00 : f32
    %1356 = vector.broadcast %cst_344 : f32 to vector<2x64xf32>
    %1357 = arith.addf %1356, %1355 : vector<2x64xf32>
    %1358 = arith.divf %1356, %1357 : vector<2x64xf32>
    %1359 = vector.extract_strided_slice %1321 {offsets = [0, 128], sizes = [2, 64], strides = [1, 1]} : vector<2x256xf32> to vector<2x64xf32>
    %1360 = math.tanh %1359 : vector<2x64xf32>
    %1361 = vector.extract_strided_slice %1321 {offsets = [0, 192], sizes = [2, 64], strides = [1, 1]} : vector<2x256xf32> to vector<2x64xf32>
    %1362 = arith.negf %1361 : vector<2x64xf32>
    %1363 = math.exp %1362 : vector<2x64xf32>
    %cst_345 = arith.constant 1.000000e+00 : f32
    %1364 = vector.broadcast %cst_345 : f32 to vector<2x64xf32>
    %1365 = arith.addf %1364, %1363 : vector<2x64xf32>
    %1366 = arith.divf %1364, %1365 : vector<2x64xf32>
    %1367 = arith.mulf %1358, %1310 : vector<2x64xf32>
    %1368 = arith.mulf %1352, %1360 : vector<2x64xf32>
    %1369 = arith.addf %1367, %1368 : vector<2x64xf32>
    %1370 = math.tanh %1369 : vector<2x64xf32>
    %1371 = arith.mulf %1366, %1370 : vector<2x64xf32>
    %1372 = arith.index_cast %c5_i32_332 : i32 to index
    %c0_346 = arith.constant 0 : index
    %c0_347 = arith.constant 0 : index
    %1373 = vector.load %arg2[%1372, %c0_346, %c0_347] : memref<8x2x1xf32, #tpu.memory_space<vmem>>, vector<1x2x1xf32>
    %1374 = vector.shape_cast %1373 : vector<1x2x1xf32> to vector<2x1xf32>
    %1375 = arith.index_cast %1311 : i32 to index
    %c0_348 = arith.constant 0 : index
    %c0_349 = arith.constant 0 : index
    %1376 = vector.load %arg2[%1375, %c0_348, %c0_349] : memref<8x2x1xf32, #tpu.memory_space<vmem>>, vector<1x2x1xf32>
    %1377 = vector.shape_cast %1376 : vector<1x2x1xf32> to vector<2x1xf32>
    %cst_350 = arith.constant 1.000000e+00 : f32
    %1378 = vector.broadcast %cst_350 : f32 to vector<2x1xf32>
    %1379 = arith.subf %1378, %1374 : vector<2x1xf32>
    %cst_351 = arith.constant 1.000000e+00 : f32
    %1380 = vector.broadcast %cst_351 : f32 to vector<2x1xf32>
    %1381 = arith.subf %1380, %1377 : vector<2x1xf32>
    %1382 = vector.broadcast %1374 : vector<2x1xf32> to vector<2x64xf32>
    %1383 = arith.mulf %1346, %1382 : vector<2x64xf32>
    %1384 = vector.broadcast %1377 : vector<2x1xf32> to vector<2x64xf32>
    %1385 = arith.mulf %1371, %1384 : vector<2x64xf32>
    %1386 = arith.index_cast %c5_i32_332 : i32 to index
    %c0_352 = arith.constant 0 : index
    %c0_353 = arith.constant 0 : index
    %1387 = vector.load %arg11[%1386, %c0_352, %c0_353] : memref<8x2x128xf32, #tpu.memory_space<vmem>>, vector<1x2x64xf32>
    %1388 = vector.shape_cast %1387 : vector<1x2x64xf32> to vector<2x64xf32>
    %1389 = vector.shape_cast %1383 : vector<2x64xf32> to vector<1x2x64xf32>
    tpu.vector_store %arg11[%1386, %c0_352, %c0_353], %1389 {strides = array<i32>} : memref<8x2x128xf32, #tpu.memory_space<vmem>>, vector<1x2x64xf32>,
    %1390 = arith.index_cast %1311 : i32 to index
    %c0_354 = arith.constant 0 : index
    %c64_355 = arith.constant 64 : index
    %1391 = vector.load %arg11[%1390, %c0_354, %c64_355] : memref<8x2x128xf32, #tpu.memory_space<vmem>>, vector<1x2x64xf32>
    %1392 = vector.shape_cast %1391 : vector<1x2x64xf32> to vector<2x64xf32>
    %1393 = vector.shape_cast %1385 : vector<2x64xf32> to vector<1x2x64xf32>
    tpu.vector_store %arg11[%1390, %c0_354, %c64_355], %1393 {strides = array<i32>} : memref<8x2x128xf32, #tpu.memory_space<vmem>>, vector<1x2x64xf32>,
    %1394 = vector.broadcast %1379 : vector<2x1xf32> to vector<2x64xf32>
    %1395 = arith.mulf %1297, %1394 : vector<2x64xf32>
    %1396 = arith.addf %1383, %1395 : vector<2x64xf32>
    %1397 = vector.broadcast %1374 : vector<2x1xf32> to vector<2x64xf32>
    %1398 = arith.mulf %1344, %1397 : vector<2x64xf32>
    %1399 = vector.broadcast %1379 : vector<2x1xf32> to vector<2x64xf32>
    %1400 = arith.mulf %1302, %1399 : vector<2x64xf32>
    %1401 = arith.addf %1398, %1400 : vector<2x64xf32>
    %1402 = vector.broadcast %1381 : vector<2x1xf32> to vector<2x64xf32>
    %1403 = arith.mulf %1305, %1402 : vector<2x64xf32>
    %1404 = arith.addf %1385, %1403 : vector<2x64xf32>
    %1405 = vector.broadcast %1377 : vector<2x1xf32> to vector<2x64xf32>
    %1406 = arith.mulf %1369, %1405 : vector<2x64xf32>
    %1407 = vector.broadcast %1381 : vector<2x1xf32> to vector<2x64xf32>
    %1408 = arith.mulf %1310, %1407 : vector<2x64xf32>
    %1409 = arith.addf %1406, %1408 : vector<2x64xf32>
    %c6_i32_356 = arith.constant 6 : i32
    %c7_i32_357 = arith.constant 7 : i32
    %1410 = arith.subi %c7_i32_357, %c6_i32_356 : i32
    %1411 = arith.index_cast %c6_i32_356 : i32 to index
    %c0_358 = arith.constant 0 : index
    %c0_359 = arith.constant 0 : index
    %1412 = vector.load %arg12[%1411, %c0_358, %c0_359] : memref<8x2x512xf32, #tpu.memory_space<vmem>>, vector<1x2x256xf32>
    %1413 = vector.shape_cast %1412 : vector<1x2x256xf32> to vector<2x256xf32>
    %cst_360 = arith.constant dense<0.000000e+00> : vector<2x256xf32>
    %1414 = tpu.matmul %1396, %813, %cst_360 {dimension_numbers = #tpu.dot_dimension_numbers<[1], [0], [0], [1], [0, 0, 1, 1], [], []>} : vector<2x64xf32>, vector<64x256xf32>, vector<2x256xf32> -> vector<2x256xf32>
    %1415 = arith.addf %1413, %1414 : vector<2x256xf32>
    %1416 = arith.index_cast %1410 : i32 to index
    %c0_361 = arith.constant 0 : index
    %c256_362 = arith.constant 256 : index
    %1417 = vector.load %arg12[%1416, %c0_361, %c256_362] : memref<8x2x512xf32, #tpu.memory_space<vmem>>, vector<1x2x256xf32>
    %1418 = vector.shape_cast %1417 : vector<1x2x256xf32> to vector<2x256xf32>
    %cst_363 = arith.constant dense<0.000000e+00> : vector<2x256xf32>
    %1419 = tpu.matmul %1404, %814, %cst_363 {dimension_numbers = #tpu.dot_dimension_numbers<[1], [0], [0], [1], [0, 0, 1, 1], [], []>} : vector<2x64xf32>, vector<64x256xf32>, vector<2x256xf32> -> vector<2x256xf32>
    %1420 = arith.addf %1418, %1419 : vector<2x256xf32>
    %1421 = vector.extract_strided_slice %1415 {offsets = [0, 0], sizes = [2, 64], strides = [1, 1]} : vector<2x256xf32> to vector<2x64xf32>
    %1422 = arith.negf %1421 : vector<2x64xf32>
    %1423 = math.exp %1422 : vector<2x64xf32>
    %cst_364 = arith.constant 1.000000e+00 : f32
    %1424 = vector.broadcast %cst_364 : f32 to vector<2x64xf32>
    %1425 = arith.addf %1424, %1423 : vector<2x64xf32>
    %1426 = arith.divf %1424, %1425 : vector<2x64xf32>
    %1427 = vector.extract_strided_slice %1415 {offsets = [0, 64], sizes = [2, 64], strides = [1, 1]} : vector<2x256xf32> to vector<2x64xf32>
    %1428 = arith.negf %1427 : vector<2x64xf32>
    %1429 = math.exp %1428 : vector<2x64xf32>
    %cst_365 = arith.constant 1.000000e+00 : f32
    %1430 = vector.broadcast %cst_365 : f32 to vector<2x64xf32>
    %1431 = arith.addf %1430, %1429 : vector<2x64xf32>
    %1432 = arith.divf %1430, %1431 : vector<2x64xf32>
    %1433 = vector.extract_strided_slice %1415 {offsets = [0, 128], sizes = [2, 64], strides = [1, 1]} : vector<2x256xf32> to vector<2x64xf32>
    %1434 = math.tanh %1433 : vector<2x64xf32>
    %1435 = vector.extract_strided_slice %1415 {offsets = [0, 192], sizes = [2, 64], strides = [1, 1]} : vector<2x256xf32> to vector<2x64xf32>
    %1436 = arith.negf %1435 : vector<2x64xf32>
    %1437 = math.exp %1436 : vector<2x64xf32>
    %cst_366 = arith.constant 1.000000e+00 : f32
    %1438 = vector.broadcast %cst_366 : f32 to vector<2x64xf32>
    %1439 = arith.addf %1438, %1437 : vector<2x64xf32>
    %1440 = arith.divf %1438, %1439 : vector<2x64xf32>
    %1441 = arith.mulf %1432, %1401 : vector<2x64xf32>
    %1442 = arith.mulf %1426, %1434 : vector<2x64xf32>
    %1443 = arith.addf %1441, %1442 : vector<2x64xf32>
    %1444 = math.tanh %1443 : vector<2x64xf32>
    %1445 = arith.mulf %1440, %1444 : vector<2x64xf32>
    %1446 = vector.extract_strided_slice %1420 {offsets = [0, 0], sizes = [2, 64], strides = [1, 1]} : vector<2x256xf32> to vector<2x64xf32>
    %1447 = arith.negf %1446 : vector<2x64xf32>
    %1448 = math.exp %1447 : vector<2x64xf32>
    %cst_367 = arith.constant 1.000000e+00 : f32
    %1449 = vector.broadcast %cst_367 : f32 to vector<2x64xf32>
    %1450 = arith.addf %1449, %1448 : vector<2x64xf32>
    %1451 = arith.divf %1449, %1450 : vector<2x64xf32>
    %1452 = vector.extract_strided_slice %1420 {offsets = [0, 64], sizes = [2, 64], strides = [1, 1]} : vector<2x256xf32> to vector<2x64xf32>
    %1453 = arith.negf %1452 : vector<2x64xf32>
    %1454 = math.exp %1453 : vector<2x64xf32>
    %cst_368 = arith.constant 1.000000e+00 : f32
    %1455 = vector.broadcast %cst_368 : f32 to vector<2x64xf32>
    %1456 = arith.addf %1455, %1454 : vector<2x64xf32>
    %1457 = arith.divf %1455, %1456 : vector<2x64xf32>
    %1458 = vector.extract_strided_slice %1420 {offsets = [0, 128], sizes = [2, 64], strides = [1, 1]} : vector<2x256xf32> to vector<2x64xf32>
    %1459 = math.tanh %1458 : vector<2x64xf32>
    %1460 = vector.extract_strided_slice %1420 {offsets = [0, 192], sizes = [2, 64], strides = [1, 1]} : vector<2x256xf32> to vector<2x64xf32>
    %1461 = arith.negf %1460 : vector<2x64xf32>
    %1462 = math.exp %1461 : vector<2x64xf32>
    %cst_369 = arith.constant 1.000000e+00 : f32
    %1463 = vector.broadcast %cst_369 : f32 to vector<2x64xf32>
    %1464 = arith.addf %1463, %1462 : vector<2x64xf32>
    %1465 = arith.divf %1463, %1464 : vector<2x64xf32>
    %1466 = arith.mulf %1457, %1409 : vector<2x64xf32>
    %1467 = arith.mulf %1451, %1459 : vector<2x64xf32>
    %1468 = arith.addf %1466, %1467 : vector<2x64xf32>
    %1469 = math.tanh %1468 : vector<2x64xf32>
    %1470 = arith.mulf %1465, %1469 : vector<2x64xf32>
    %1471 = arith.index_cast %c6_i32_356 : i32 to index
    %c0_370 = arith.constant 0 : index
    %c0_371 = arith.constant 0 : index
    %1472 = vector.load %arg2[%1471, %c0_370, %c0_371] : memref<8x2x1xf32, #tpu.memory_space<vmem>>, vector<1x2x1xf32>
    %1473 = vector.shape_cast %1472 : vector<1x2x1xf32> to vector<2x1xf32>
    %1474 = arith.index_cast %1410 : i32 to index
    %c0_372 = arith.constant 0 : index
    %c0_373 = arith.constant 0 : index
    %1475 = vector.load %arg2[%1474, %c0_372, %c0_373] : memref<8x2x1xf32, #tpu.memory_space<vmem>>, vector<1x2x1xf32>
    %1476 = vector.shape_cast %1475 : vector<1x2x1xf32> to vector<2x1xf32>
    %cst_374 = arith.constant 1.000000e+00 : f32
    %1477 = vector.broadcast %cst_374 : f32 to vector<2x1xf32>
    %1478 = arith.subf %1477, %1473 : vector<2x1xf32>
    %cst_375 = arith.constant 1.000000e+00 : f32
    %1479 = vector.broadcast %cst_375 : f32 to vector<2x1xf32>
    %1480 = arith.subf %1479, %1476 : vector<2x1xf32>
    %1481 = vector.broadcast %1473 : vector<2x1xf32> to vector<2x64xf32>
    %1482 = arith.mulf %1445, %1481 : vector<2x64xf32>
    %1483 = vector.broadcast %1476 : vector<2x1xf32> to vector<2x64xf32>
    %1484 = arith.mulf %1470, %1483 : vector<2x64xf32>
    %1485 = arith.index_cast %c6_i32_356 : i32 to index
    %c0_376 = arith.constant 0 : index
    %c0_377 = arith.constant 0 : index
    %1486 = vector.load %arg11[%1485, %c0_376, %c0_377] : memref<8x2x128xf32, #tpu.memory_space<vmem>>, vector<1x2x64xf32>
    %1487 = vector.shape_cast %1486 : vector<1x2x64xf32> to vector<2x64xf32>
    %1488 = vector.shape_cast %1482 : vector<2x64xf32> to vector<1x2x64xf32>
    tpu.vector_store %arg11[%1485, %c0_376, %c0_377], %1488 {strides = array<i32>} : memref<8x2x128xf32, #tpu.memory_space<vmem>>, vector<1x2x64xf32>,
    %1489 = arith.index_cast %1410 : i32 to index
    %c0_378 = arith.constant 0 : index
    %c64_379 = arith.constant 64 : index
    %1490 = vector.load %arg11[%1489, %c0_378, %c64_379] : memref<8x2x128xf32, #tpu.memory_space<vmem>>, vector<1x2x64xf32>
    %1491 = vector.shape_cast %1490 : vector<1x2x64xf32> to vector<2x64xf32>
    %1492 = vector.shape_cast %1484 : vector<2x64xf32> to vector<1x2x64xf32>
    tpu.vector_store %arg11[%1489, %c0_378, %c64_379], %1492 {strides = array<i32>} : memref<8x2x128xf32, #tpu.memory_space<vmem>>, vector<1x2x64xf32>,
    %1493 = vector.broadcast %1478 : vector<2x1xf32> to vector<2x64xf32>
    %1494 = arith.mulf %1396, %1493 : vector<2x64xf32>
    %1495 = arith.addf %1482, %1494 : vector<2x64xf32>
    %1496 = vector.broadcast %1473 : vector<2x1xf32> to vector<2x64xf32>
    %1497 = arith.mulf %1443, %1496 : vector<2x64xf32>
    %1498 = vector.broadcast %1478 : vector<2x1xf32> to vector<2x64xf32>
    %1499 = arith.mulf %1401, %1498 : vector<2x64xf32>
    %1500 = arith.addf %1497, %1499 : vector<2x64xf32>
    %1501 = vector.broadcast %1480 : vector<2x1xf32> to vector<2x64xf32>
    %1502 = arith.mulf %1404, %1501 : vector<2x64xf32>
    %1503 = arith.addf %1484, %1502 : vector<2x64xf32>
    %1504 = vector.broadcast %1476 : vector<2x1xf32> to vector<2x64xf32>
    %1505 = arith.mulf %1468, %1504 : vector<2x64xf32>
    %1506 = vector.broadcast %1480 : vector<2x1xf32> to vector<2x64xf32>
    %1507 = arith.mulf %1409, %1506 : vector<2x64xf32>
    %1508 = arith.addf %1505, %1507 : vector<2x64xf32>
    %c7_i32_380 = arith.constant 7 : i32
    %c7_i32_381 = arith.constant 7 : i32
    %1509 = arith.subi %c7_i32_381, %c7_i32_380 : i32
    %1510 = arith.index_cast %c7_i32_380 : i32 to index
    %c0_382 = arith.constant 0 : index
    %c0_383 = arith.constant 0 : index
    %1511 = vector.load %arg12[%1510, %c0_382, %c0_383] : memref<8x2x512xf32, #tpu.memory_space<vmem>>, vector<1x2x256xf32>
    %1512 = vector.shape_cast %1511 : vector<1x2x256xf32> to vector<2x256xf32>
    %cst_384 = arith.constant dense<0.000000e+00> : vector<2x256xf32>
    %1513 = tpu.matmul %1495, %813, %cst_384 {dimension_numbers = #tpu.dot_dimension_numbers<[1], [0], [0], [1], [0, 0, 1, 1], [], []>} : vector<2x64xf32>, vector<64x256xf32>, vector<2x256xf32> -> vector<2x256xf32>
    %1514 = arith.addf %1512, %1513 : vector<2x256xf32>
    %1515 = arith.index_cast %1509 : i32 to index
    %c0_385 = arith.constant 0 : index
    %c256_386 = arith.constant 256 : index
    %1516 = vector.load %arg12[%1515, %c0_385, %c256_386] : memref<8x2x512xf32, #tpu.memory_space<vmem>>, vector<1x2x256xf32>
    %1517 = vector.shape_cast %1516 : vector<1x2x256xf32> to vector<2x256xf32>
    %cst_387 = arith.constant dense<0.000000e+00> : vector<2x256xf32>
    %1518 = tpu.matmul %1503, %814, %cst_387 {dimension_numbers = #tpu.dot_dimension_numbers<[1], [0], [0], [1], [0, 0, 1, 1], [], []>} : vector<2x64xf32>, vector<64x256xf32>, vector<2x256xf32> -> vector<2x256xf32>
    %1519 = arith.addf %1517, %1518 : vector<2x256xf32>
    %1520 = vector.extract_strided_slice %1514 {offsets = [0, 0], sizes = [2, 64], strides = [1, 1]} : vector<2x256xf32> to vector<2x64xf32>
    %1521 = arith.negf %1520 : vector<2x64xf32>
    %1522 = math.exp %1521 : vector<2x64xf32>
    %cst_388 = arith.constant 1.000000e+00 : f32
    %1523 = vector.broadcast %cst_388 : f32 to vector<2x64xf32>
    %1524 = arith.addf %1523, %1522 : vector<2x64xf32>
    %1525 = arith.divf %1523, %1524 : vector<2x64xf32>
    %1526 = vector.extract_strided_slice %1514 {offsets = [0, 64], sizes = [2, 64], strides = [1, 1]} : vector<2x256xf32> to vector<2x64xf32>
    %1527 = arith.negf %1526 : vector<2x64xf32>
    %1528 = math.exp %1527 : vector<2x64xf32>
    %cst_389 = arith.constant 1.000000e+00 : f32
    %1529 = vector.broadcast %cst_389 : f32 to vector<2x64xf32>
    %1530 = arith.addf %1529, %1528 : vector<2x64xf32>
    %1531 = arith.divf %1529, %1530 : vector<2x64xf32>
    %1532 = vector.extract_strided_slice %1514 {offsets = [0, 128], sizes = [2, 64], strides = [1, 1]} : vector<2x256xf32> to vector<2x64xf32>
    %1533 = math.tanh %1532 : vector<2x64xf32>
    %1534 = vector.extract_strided_slice %1514 {offsets = [0, 192], sizes = [2, 64], strides = [1, 1]} : vector<2x256xf32> to vector<2x64xf32>
    %1535 = arith.negf %1534 : vector<2x64xf32>
    %1536 = math.exp %1535 : vector<2x64xf32>
    %cst_390 = arith.constant 1.000000e+00 : f32
    %1537 = vector.broadcast %cst_390 : f32 to vector<2x64xf32>
    %1538 = arith.addf %1537, %1536 : vector<2x64xf32>
    %1539 = arith.divf %1537, %1538 : vector<2x64xf32>
    %1540 = arith.mulf %1531, %1500 : vector<2x64xf32>
    %1541 = arith.mulf %1525, %1533 : vector<2x64xf32>
    %1542 = arith.addf %1540, %1541 : vector<2x64xf32>
    %1543 = math.tanh %1542 : vector<2x64xf32>
    %1544 = arith.mulf %1539, %1543 : vector<2x64xf32>
    %1545 = vector.extract_strided_slice %1519 {offsets = [0, 0], sizes = [2, 64], strides = [1, 1]} : vector<2x256xf32> to vector<2x64xf32>
    %1546 = arith.negf %1545 : vector<2x64xf32>
    %1547 = math.exp %1546 : vector<2x64xf32>
    %cst_391 = arith.constant 1.000000e+00 : f32
    %1548 = vector.broadcast %cst_391 : f32 to vector<2x64xf32>
    %1549 = arith.addf %1548, %1547 : vector<2x64xf32>
    %1550 = arith.divf %1548, %1549 : vector<2x64xf32>
    %1551 = vector.extract_strided_slice %1519 {offsets = [0, 64], sizes = [2, 64], strides = [1, 1]} : vector<2x256xf32> to vector<2x64xf32>
    %1552 = arith.negf %1551 : vector<2x64xf32>
    %1553 = math.exp %1552 : vector<2x64xf32>
    %cst_392 = arith.constant 1.000000e+00 : f32
    %1554 = vector.broadcast %cst_392 : f32 to vector<2x64xf32>
    %1555 = arith.addf %1554, %1553 : vector<2x64xf32>
    %1556 = arith.divf %1554, %1555 : vector<2x64xf32>
    %1557 = vector.extract_strided_slice %1519 {offsets = [0, 128], sizes = [2, 64], strides = [1, 1]} : vector<2x256xf32> to vector<2x64xf32>
    %1558 = math.tanh %1557 : vector<2x64xf32>
    %1559 = vector.extract_strided_slice %1519 {offsets = [0, 192], sizes = [2, 64], strides = [1, 1]} : vector<2x256xf32> to vector<2x64xf32>
    %1560 = arith.negf %1559 : vector<2x64xf32>
    %1561 = math.exp %1560 : vector<2x64xf32>
    %cst_393 = arith.constant 1.000000e+00 : f32
    %1562 = vector.broadcast %cst_393 : f32 to vector<2x64xf32>
    %1563 = arith.addf %1562, %1561 : vector<2x64xf32>
    %1564 = arith.divf %1562, %1563 : vector<2x64xf32>
    %1565 = arith.mulf %1556, %1508 : vector<2x64xf32>
    %1566 = arith.mulf %1550, %1558 : vector<2x64xf32>
    %1567 = arith.addf %1565, %1566 : vector<2x64xf32>
    %1568 = math.tanh %1567 : vector<2x64xf32>
    %1569 = arith.mulf %1564, %1568 : vector<2x64xf32>
    %1570 = arith.index_cast %c7_i32_380 : i32 to index
    %c0_394 = arith.constant 0 : index
    %c0_395 = arith.constant 0 : index
    %1571 = vector.load %arg2[%1570, %c0_394, %c0_395] : memref<8x2x1xf32, #tpu.memory_space<vmem>>, vector<1x2x1xf32>
    %1572 = vector.shape_cast %1571 : vector<1x2x1xf32> to vector<2x1xf32>
    %1573 = arith.index_cast %1509 : i32 to index
    %c0_396 = arith.constant 0 : index
    %c0_397 = arith.constant 0 : index
    %1574 = vector.load %arg2[%1573, %c0_396, %c0_397] : memref<8x2x1xf32, #tpu.memory_space<vmem>>, vector<1x2x1xf32>
    %1575 = vector.shape_cast %1574 : vector<1x2x1xf32> to vector<2x1xf32>
    %cst_398 = arith.constant 1.000000e+00 : f32
    %1576 = vector.broadcast %cst_398 : f32 to vector<2x1xf32>
    %1577 = arith.subf %1576, %1572 : vector<2x1xf32>
    %cst_399 = arith.constant 1.000000e+00 : f32
    %1578 = vector.broadcast %cst_399 : f32 to vector<2x1xf32>
    %1579 = arith.subf %1578, %1575 : vector<2x1xf32>
    %1580 = vector.broadcast %1572 : vector<2x1xf32> to vector<2x64xf32>
    %1581 = arith.mulf %1544, %1580 : vector<2x64xf32>
    %1582 = vector.broadcast %1575 : vector<2x1xf32> to vector<2x64xf32>
    %1583 = arith.mulf %1569, %1582 : vector<2x64xf32>
    %1584 = arith.index_cast %c7_i32_380 : i32 to index
    %c0_400 = arith.constant 0 : index
    %c0_401 = arith.constant 0 : index
    %1585 = vector.load %arg11[%1584, %c0_400, %c0_401] : memref<8x2x128xf32, #tpu.memory_space<vmem>>, vector<1x2x64xf32>
    %1586 = vector.shape_cast %1585 : vector<1x2x64xf32> to vector<2x64xf32>
    %1587 = vector.shape_cast %1581 : vector<2x64xf32> to vector<1x2x64xf32>
    tpu.vector_store %arg11[%1584, %c0_400, %c0_401], %1587 {strides = array<i32>} : memref<8x2x128xf32, #tpu.memory_space<vmem>>, vector<1x2x64xf32>,
    %1588 = arith.index_cast %1509 : i32 to index
    %c0_402 = arith.constant 0 : index
    %c64_403 = arith.constant 64 : index
    %1589 = vector.load %arg11[%1588, %c0_402, %c64_403] : memref<8x2x128xf32, #tpu.memory_space<vmem>>, vector<1x2x64xf32>
    %1590 = vector.shape_cast %1589 : vector<1x2x64xf32> to vector<2x64xf32>
    %1591 = vector.shape_cast %1583 : vector<2x64xf32> to vector<1x2x64xf32>
    tpu.vector_store %arg11[%1588, %c0_402, %c64_403], %1591 {strides = array<i32>} : memref<8x2x128xf32, #tpu.memory_space<vmem>>, vector<1x2x64xf32>,
    %1592 = vector.broadcast %1577 : vector<2x1xf32> to vector<2x64xf32>
    %1593 = arith.mulf %1495, %1592 : vector<2x64xf32>
    %1594 = arith.addf %1581, %1593 : vector<2x64xf32>
    %1595 = vector.broadcast %1572 : vector<2x1xf32> to vector<2x64xf32>
    %1596 = arith.mulf %1542, %1595 : vector<2x64xf32>
    %1597 = vector.broadcast %1577 : vector<2x1xf32> to vector<2x64xf32>
    %1598 = arith.mulf %1500, %1597 : vector<2x64xf32>
    %1599 = arith.addf %1596, %1598 : vector<2x64xf32>
    %1600 = vector.broadcast %1579 : vector<2x1xf32> to vector<2x64xf32>
    %1601 = arith.mulf %1503, %1600 : vector<2x64xf32>
    %1602 = arith.addf %1583, %1601 : vector<2x64xf32>
    %1603 = vector.broadcast %1575 : vector<2x1xf32> to vector<2x64xf32>
    %1604 = arith.mulf %1567, %1603 : vector<2x64xf32>
    %1605 = vector.broadcast %1579 : vector<2x1xf32> to vector<2x64xf32>
    %1606 = arith.mulf %1508, %1605 : vector<2x64xf32>
    %1607 = arith.addf %1604, %1606 : vector<2x64xf32>
    %c8_i32_404 = arith.constant 8 : i32
    return
  }
  func.func @transform_0(%arg0: i32) -> (i32, i32, i32) {
    %c0_i32 = arith.constant 0 : i32
    %c0_i32_0 = arith.constant 0 : i32
    %c0_i32_1 = arith.constant 0 : i32
    return %c0_i32, %arg0, %c0_i32_0 : i32, i32, i32
  }
  func.func @transform_1(%arg0: i32) -> (i32, i32, i32) {
    %c0_i32 = arith.constant 0 : i32
    %c0_i32_0 = arith.constant 0 : i32
    %c0_i32_1 = arith.constant 0 : i32
    return %c0_i32, %arg0, %c0_i32_0 : i32, i32, i32
  }
  func.func @transform_2(%arg0: i32) -> (i32, i32) {
    %c0_i32 = arith.constant 0 : i32
    %c0_i32_0 = arith.constant 0 : i32
    %c0_i32_1 = arith.constant 0 : i32
    return %c0_i32, %c0_i32_0 : i32, i32
  }
  func.func @transform_3(%arg0: i32) -> (i32, i32) {
    %c0_i32 = arith.constant 0 : i32
    %c0_i32_0 = arith.constant 0 : i32
    %c0_i32_1 = arith.constant 0 : i32
    return %c0_i32, %c0_i32_0 : i32, i32
  }
  func.func @transform_4(%arg0: i32) -> (i32, i32) {
    %c0_i32 = arith.constant 0 : i32
    %c0_i32_0 = arith.constant 0 : i32
    %c0_i32_1 = arith.constant 0 : i32
    return %c0_i32, %c0_i32_0 : i32, i32
  }
  func.func @transform_5(%arg0: i32) -> (i32, i32) {
    %c0_i32 = arith.constant 0 : i32
    %c0_i32_0 = arith.constant 0 : i32
    %c0_i32_1 = arith.constant 0 : i32
    return %c0_i32, %c0_i32_0 : i32, i32
  }
  func.func @transform_6(%arg0: i32) -> (i32, i32) {
    %c0_i32 = arith.constant 0 : i32
    %c0_i32_0 = arith.constant 0 : i32
    %c0_i32_1 = arith.constant 0 : i32
    return %c0_i32, %c0_i32_0 : i32, i32
  }
  func.func @transform_7(%arg0: i32) -> (i32, i32) {
    %c0_i32 = arith.constant 0 : i32
    %c0_i32_0 = arith.constant 0 : i32
    %c0_i32_1 = arith.constant 0 : i32
    return %c0_i32, %c0_i32_0 : i32, i32
  }
  func.func @transform_8(%arg0: i32) -> (i32, i32) {
    %c0_i32 = arith.constant 0 : i32
    %c0_i32_0 = arith.constant 0 : i32
    %c0_i32_1 = arith.constant 0 : i32
    return %c0_i32, %c0_i32_0 : i32, i32
  }
  func.func @transform_9(%arg0: i32) -> (i32, i32) {
    %c0_i32 = arith.constant 0 : i32
    %c0_i32_0 = arith.constant 0 : i32
    %c0_i32_1 = arith.constant 0 : i32
    return %c0_i32, %c0_i32_0 : i32, i32
  }
  func.func @transform_10(%arg0: i32) -> (i32, i32, i32) {
    %c0_i32 = arith.constant 0 : i32
    %c0_i32_0 = arith.constant 0 : i32
    %c0_i32_1 = arith.constant 0 : i32
    return %c0_i32, %arg0, %c0_i32_0 : i32, i32, i32
  }
}

module attributes {stable_mosaic.version = 11 : i64} {
  func.func @_attn_mlp_kernel(%arg0: i32, %arg1: memref<8x2x128xf32, #tpu.memory_space<vmem>>, %arg2: memref<128x2xf32, #tpu.memory_space<vmem>>, %arg3: memref<128x64xf32, #tpu.memory_space<vmem>>, %arg4: memref<1x1xf32, #tpu.memory_space<vmem>>, %arg5: memref<1x32xf32, #tpu.memory_space<vmem>>, %arg6: memref<1x32xf32, #tpu.memory_space<vmem>>, %arg7: memref<1x1xf32, #tpu.memory_space<vmem>>, %arg8: memref<2x1x8xf32, #tpu.memory_space<vmem>>) attributes {dimension_semantics = [#tpu.dimension_semantics<parallel>], iteration_bounds = array<i64: 1>, scalar_prefetch = 0 : i64, scratch_operands = 0 : i64, tpu.core_type = #tpu.core_type<tc>, window_params = [{transform_indices = @transform_0, window_bounds = array<i64: 8, 2, 128>}, {pipeline_mode = #tpu.pipeline_mode<synchronous>, transform_indices = @transform_1, window_bounds = array<i64: 128, 2>}, {pipeline_mode = #tpu.pipeline_mode<synchronous>, transform_indices = @transform_2, window_bounds = array<i64: 128, 64>}, {pipeline_mode = #tpu.pipeline_mode<synchronous>, transform_indices = @transform_3, window_bounds = array<i64: 1, 1>}, {pipeline_mode = #tpu.pipeline_mode<synchronous>, transform_indices = @transform_4, window_bounds = array<i64: 1, 32>}, {pipeline_mode = #tpu.pipeline_mode<synchronous>, transform_indices = @transform_5, window_bounds = array<i64: 1, 32>}, {pipeline_mode = #tpu.pipeline_mode<synchronous>, transform_indices = @transform_6, window_bounds = array<i64: 1, 1>}, {transform_indices = @transform_7, window_bounds = array<i64: 2, 1, 8>}]} {
    %c0 = arith.constant 0 : index
    %c0_0 = arith.constant 0 : index
    %c0_1 = arith.constant 0 : index
    %0 = vector.load %arg1[%c0, %c0_0, %c0_1] : memref<8x2x128xf32, #tpu.memory_space<vmem>>, vector<8x2x128xf32>
    %1 = vector.shape_cast %0 : vector<8x2x128xf32> to vector<16x128xf32>
    %c0_2 = arith.constant 0 : index
    %c0_3 = arith.constant 0 : index
    %2 = vector.load %arg2[%c0_2, %c0_3] : memref<128x2xf32, #tpu.memory_space<vmem>>, vector<128x2xf32>
    %cst = arith.constant dense<0.000000e+00> : vector<16x2xf32>
    %3 = tpu.matmul %1, %2, %cst {dimension_numbers = #tpu.dot_dimension_numbers<[1], [0], [0], [1], [0, 0, 1, 1], [], []>} : vector<16x128xf32>, vector<128x2xf32>, vector<16x2xf32> -> vector<16x2xf32>
    %4 = vector.shape_cast %3 : vector<16x2xf32> to vector<8x2x2xf32>
    %c0_4 = arith.constant 0 : index
    %c0_5 = arith.constant 0 : index
    %5 = vector.load %arg3[%c0_4, %c0_5] : memref<128x64xf32, #tpu.memory_space<vmem>>, vector<128x64xf32>
    %cst_6 = arith.constant dense<0.000000e+00> : vector<16x64xf32>
    %6 = tpu.matmul %1, %5, %cst_6 {dimension_numbers = #tpu.dot_dimension_numbers<[1], [0], [0], [1], [0, 0, 1, 1], [], []>} : vector<16x128xf32>, vector<128x64xf32>, vector<16x64xf32> -> vector<16x64xf32>
    %7 = vector.shape_cast %6 : vector<16x64xf32> to vector<8x2x64xf32>
    %8 = vector.extract_strided_slice %4 {offsets = [0, 0, 0], sizes = [8, 1, 1], strides = [1, 1, 1]} : vector<8x2x2xf32> to vector<8x1x1xf32>
    %9 = vector.shape_cast %8 : vector<8x1x1xf32> to vector<8x1xf32>
    %10 = vector.extract_strided_slice %4 {offsets = [0, 0, 1], sizes = [8, 1, 1], strides = [1, 1, 1]} : vector<8x2x2xf32> to vector<8x1x1xf32>
    %11 = vector.shape_cast %10 : vector<8x1x1xf32> to vector<8x1xf32>
    %12 = tpu.transpose %11, [1, 0] : vector<8x1xf32> -> vector<1x8xf32>
    %13 = vector.broadcast %9 : vector<8x1xf32> to vector<8x8xf32>
    %14 = vector.broadcast %12 : vector<1x8xf32> to vector<8x8xf32>
    %15 = arith.addf %13, %14 : vector<8x8xf32>
    %c0_7 = arith.constant 0 : index
    %c0_8 = arith.constant 0 : index
    %16 = vector.load %arg4[%c0_7, %c0_8] : memref<1x1xf32, #tpu.memory_space<vmem>>, vector<1x1xf32>
    %17 = vector.broadcast %16 : vector<1x1xf32> to vector<8x8xf32>
    %18 = arith.addf %15, %17 : vector<8x8xf32>
    %cst_9 = arith.constant dense<0xFF800000> : vector<8xf32>
    %19 = vector.multi_reduction <maximumf>, %18, %cst_9 [1] : vector<8x8xf32> to vector<8xf32>
    %20 = vector.shape_cast %19 : vector<8xf32> to vector<8x1xf32>
    %21 = vector.broadcast %20 : vector<8x1xf32> to vector<8x8xf32>
    %22 = arith.subf %18, %21 : vector<8x8xf32>
    %23 = math.exp %22 : vector<8x8xf32>
    %cst_10 = arith.constant dense<0.000000e+00> : vector<8xf32>
    %24 = vector.multi_reduction <add>, %23, %cst_10 [1] : vector<8x8xf32> to vector<8xf32>
    %25 = vector.shape_cast %24 : vector<8xf32> to vector<8x1xf32>
    %26 = vector.broadcast %25 : vector<8x1xf32> to vector<8x8xf32>
    %27 = arith.divf %23, %26 : vector<8x8xf32>
    %28 = vector.extract_strided_slice %7 {offsets = [0, 0, 0], sizes = [8, 1, 32], strides = [1, 1, 1]} : vector<8x2x64xf32> to vector<8x1x32xf32>
    %29 = vector.shape_cast %28 : vector<8x1x32xf32> to vector<8x32xf32>
    %30 = vector.extract_strided_slice %7 {offsets = [0, 0, 32], sizes = [8, 1, 32], strides = [1, 1, 1]} : vector<8x2x64xf32> to vector<8x1x32xf32>
    %31 = vector.shape_cast %30 : vector<8x1x32xf32> to vector<8x32xf32>
    %cst_11 = arith.constant dense<0.000000e+00> : vector<8x32xf32>
    %32 = tpu.matmul %27, %29, %cst_11 {dimension_numbers = #tpu.dot_dimension_numbers<[1], [0], [0], [1], [0, 0, 1, 1], [], []>} : vector<8x8xf32>, vector<8x32xf32>, vector<8x32xf32> -> vector<8x32xf32>
    %33 = arith.addf %32, %31 : vector<8x32xf32>
    %c0_12 = arith.constant 0 : index
    %c0_13 = arith.constant 0 : index
    %34 = vector.load %arg5[%c0_12, %c0_13] : memref<1x32xf32, #tpu.memory_space<vmem>>, vector<1x32xf32>
    %35 = vector.broadcast %34 : vector<1x32xf32> to vector<8x32xf32>
    %36 = arith.addf %33, %35 : vector<8x32xf32>
    %cst_14 = arith.constant 0.000000e+00 : f32
    %37 = vector.broadcast %cst_14 : f32 to vector<8x32xf32>
    %38 = arith.maximumf %36, %37 : vector<8x32xf32>
    %c0_15 = arith.constant 0 : index
    %c0_16 = arith.constant 0 : index
    %39 = vector.load %arg6[%c0_15, %c0_16] : memref<1x32xf32, #tpu.memory_space<vmem>>, vector<1x32xf32>
    %40 = vector.broadcast %39 : vector<1x32xf32> to vector<8x32xf32>
    %41 = arith.mulf %38, %40 : vector<8x32xf32>
    %cst_17 = arith.constant dense<0.000000e+00> : vector<8xf32>
    %42 = vector.multi_reduction <add>, %41, %cst_17 [1] : vector<8x32xf32> to vector<8xf32>
    %43 = vector.shape_cast %42 : vector<8xf32> to vector<8x1xf32>
    %c0_18 = arith.constant 0 : index
    %c0_19 = arith.constant 0 : index
    %44 = vector.load %arg7[%c0_18, %c0_19] : memref<1x1xf32, #tpu.memory_space<vmem>>, vector<1x1xf32>
    %45 = vector.broadcast %44 : vector<1x1xf32> to vector<8x1xf32>
    %46 = arith.addf %43, %45 : vector<8x1xf32>
    %47 = arith.negf %46 : vector<8x1xf32>
    %48 = math.exp %47 : vector<8x1xf32>
    %cst_20 = arith.constant 1.000000e+00 : f32
    %49 = vector.broadcast %cst_20 : f32 to vector<8x1xf32>
    %50 = arith.addf %49, %48 : vector<8x1xf32>
    %51 = arith.divf %49, %50 : vector<8x1xf32>
    %52 = tpu.transpose %51, [1, 0] : vector<8x1xf32> -> vector<1x8xf32>
    %c0_21 = arith.constant 0 : index
    %c0_22 = arith.constant 0 : index
    %c0_23 = arith.constant 0 : index
    %53 = vector.load %arg8[%c0_21, %c0_22, %c0_23] : memref<2x1x8xf32, #tpu.memory_space<vmem>>, vector<1x1x8xf32>
    %54 = vector.shape_cast %53 : vector<1x1x8xf32> to vector<1x8xf32>
    %55 = vector.shape_cast %52 : vector<1x8xf32> to vector<1x1x8xf32>
    tpu.vector_store %arg8[%c0_21, %c0_22, %c0_23], %55 {strides = array<i32>} : memref<2x1x8xf32, #tpu.memory_space<vmem>>, vector<1x1x8xf32>,
    %56 = vector.extract_strided_slice %4 {offsets = [0, 1, 0], sizes = [8, 1, 1], strides = [1, 1, 1]} : vector<8x2x2xf32> to vector<8x1x1xf32>
    %57 = vector.shape_cast %56 : vector<8x1x1xf32> to vector<8x1xf32>
    %58 = vector.extract_strided_slice %4 {offsets = [0, 1, 1], sizes = [8, 1, 1], strides = [1, 1, 1]} : vector<8x2x2xf32> to vector<8x1x1xf32>
    %59 = vector.shape_cast %58 : vector<8x1x1xf32> to vector<8x1xf32>
    %60 = tpu.transpose %59, [1, 0] : vector<8x1xf32> -> vector<1x8xf32>
    %61 = vector.broadcast %57 : vector<8x1xf32> to vector<8x8xf32>
    %62 = vector.broadcast %60 : vector<1x8xf32> to vector<8x8xf32>
    %63 = arith.addf %61, %62 : vector<8x8xf32>
    %c0_24 = arith.constant 0 : index
    %c0_25 = arith.constant 0 : index
    %64 = vector.load %arg4[%c0_24, %c0_25] : memref<1x1xf32, #tpu.memory_space<vmem>>, vector<1x1xf32>
    %65 = vector.broadcast %64 : vector<1x1xf32> to vector<8x8xf32>
    %66 = arith.addf %63, %65 : vector<8x8xf32>
    %cst_26 = arith.constant dense<0xFF800000> : vector<8xf32>
    %67 = vector.multi_reduction <maximumf>, %66, %cst_26 [1] : vector<8x8xf32> to vector<8xf32>
    %68 = vector.shape_cast %67 : vector<8xf32> to vector<8x1xf32>
    %69 = vector.broadcast %68 : vector<8x1xf32> to vector<8x8xf32>
    %70 = arith.subf %66, %69 : vector<8x8xf32>
    %71 = math.exp %70 : vector<8x8xf32>
    %cst_27 = arith.constant dense<0.000000e+00> : vector<8xf32>
    %72 = vector.multi_reduction <add>, %71, %cst_27 [1] : vector<8x8xf32> to vector<8xf32>
    %73 = vector.shape_cast %72 : vector<8xf32> to vector<8x1xf32>
    %74 = vector.broadcast %73 : vector<8x1xf32> to vector<8x8xf32>
    %75 = arith.divf %71, %74 : vector<8x8xf32>
    %76 = vector.extract_strided_slice %7 {offsets = [0, 1, 0], sizes = [8, 1, 32], strides = [1, 1, 1]} : vector<8x2x64xf32> to vector<8x1x32xf32>
    %77 = vector.shape_cast %76 : vector<8x1x32xf32> to vector<8x32xf32>
    %78 = vector.extract_strided_slice %7 {offsets = [0, 1, 32], sizes = [8, 1, 32], strides = [1, 1, 1]} : vector<8x2x64xf32> to vector<8x1x32xf32>
    %79 = vector.shape_cast %78 : vector<8x1x32xf32> to vector<8x32xf32>
    %cst_28 = arith.constant dense<0.000000e+00> : vector<8x32xf32>
    %80 = tpu.matmul %75, %77, %cst_28 {dimension_numbers = #tpu.dot_dimension_numbers<[1], [0], [0], [1], [0, 0, 1, 1], [], []>} : vector<8x8xf32>, vector<8x32xf32>, vector<8x32xf32> -> vector<8x32xf32>
    %81 = arith.addf %80, %79 : vector<8x32xf32>
    %c0_29 = arith.constant 0 : index
    %c0_30 = arith.constant 0 : index
    %82 = vector.load %arg5[%c0_29, %c0_30] : memref<1x32xf32, #tpu.memory_space<vmem>>, vector<1x32xf32>
    %83 = vector.broadcast %82 : vector<1x32xf32> to vector<8x32xf32>
    %84 = arith.addf %81, %83 : vector<8x32xf32>
    %cst_31 = arith.constant 0.000000e+00 : f32
    %85 = vector.broadcast %cst_31 : f32 to vector<8x32xf32>
    %86 = arith.maximumf %84, %85 : vector<8x32xf32>
    %c0_32 = arith.constant 0 : index
    %c0_33 = arith.constant 0 : index
    %87 = vector.load %arg6[%c0_32, %c0_33] : memref<1x32xf32, #tpu.memory_space<vmem>>, vector<1x32xf32>
    %88 = vector.broadcast %87 : vector<1x32xf32> to vector<8x32xf32>
    %89 = arith.mulf %86, %88 : vector<8x32xf32>
    %cst_34 = arith.constant dense<0.000000e+00> : vector<8xf32>
    %90 = vector.multi_reduction <add>, %89, %cst_34 [1] : vector<8x32xf32> to vector<8xf32>
    %91 = vector.shape_cast %90 : vector<8xf32> to vector<8x1xf32>
    %c0_35 = arith.constant 0 : index
    %c0_36 = arith.constant 0 : index
    %92 = vector.load %arg7[%c0_35, %c0_36] : memref<1x1xf32, #tpu.memory_space<vmem>>, vector<1x1xf32>
    %93 = vector.broadcast %92 : vector<1x1xf32> to vector<8x1xf32>
    %94 = arith.addf %91, %93 : vector<8x1xf32>
    %95 = arith.negf %94 : vector<8x1xf32>
    %96 = math.exp %95 : vector<8x1xf32>
    %cst_37 = arith.constant 1.000000e+00 : f32
    %97 = vector.broadcast %cst_37 : f32 to vector<8x1xf32>
    %98 = arith.addf %97, %96 : vector<8x1xf32>
    %99 = arith.divf %97, %98 : vector<8x1xf32>
    %100 = tpu.transpose %99, [1, 0] : vector<8x1xf32> -> vector<1x8xf32>
    %c1 = arith.constant 1 : index
    %c0_38 = arith.constant 0 : index
    %c0_39 = arith.constant 0 : index
    %101 = vector.load %arg8[%c1, %c0_38, %c0_39] : memref<2x1x8xf32, #tpu.memory_space<vmem>>, vector<1x1x8xf32>
    %102 = vector.shape_cast %101 : vector<1x1x8xf32> to vector<1x8xf32>
    %103 = vector.shape_cast %100 : vector<1x8xf32> to vector<1x1x8xf32>
    tpu.vector_store %arg8[%c1, %c0_38, %c0_39], %103 {strides = array<i32>} : memref<2x1x8xf32, #tpu.memory_space<vmem>>, vector<1x1x8xf32>,
    return
  }
  func.func @transform_0(%arg0: i32) -> (i32, i32, i32) {
    %c0_i32 = arith.constant 0 : i32
    %c0_i32_0 = arith.constant 0 : i32
    %c0_i32_1 = arith.constant 0 : i32
    return %c0_i32, %arg0, %c0_i32_0 : i32, i32, i32
  }
  func.func @transform_1(%arg0: i32) -> (i32, i32) {
    %c0_i32 = arith.constant 0 : i32
    %c0_i32_0 = arith.constant 0 : i32
    %c0_i32_1 = arith.constant 0 : i32
    return %c0_i32, %c0_i32_0 : i32, i32
  }
  func.func @transform_2(%arg0: i32) -> (i32, i32) {
    %c0_i32 = arith.constant 0 : i32
    %c0_i32_0 = arith.constant 0 : i32
    %c0_i32_1 = arith.constant 0 : i32
    return %c0_i32, %c0_i32_0 : i32, i32
  }
  func.func @transform_3(%arg0: i32) -> (i32, i32) {
    %c0_i32 = arith.constant 0 : i32
    %c0_i32_0 = arith.constant 0 : i32
    %c0_i32_1 = arith.constant 0 : i32
    return %c0_i32, %c0_i32_0 : i32, i32
  }
  func.func @transform_4(%arg0: i32) -> (i32, i32) {
    %c0_i32 = arith.constant 0 : i32
    %c0_i32_0 = arith.constant 0 : i32
    %c0_i32_1 = arith.constant 0 : i32
    return %c0_i32, %c0_i32_0 : i32, i32
  }
  func.func @transform_5(%arg0: i32) -> (i32, i32) {
    %c0_i32 = arith.constant 0 : i32
    %c0_i32_0 = arith.constant 0 : i32
    %c0_i32_1 = arith.constant 0 : i32
    return %c0_i32, %c0_i32_0 : i32, i32
  }
  func.func @transform_6(%arg0: i32) -> (i32, i32) {
    %c0_i32 = arith.constant 0 : i32
    %c0_i32_0 = arith.constant 0 : i32
    %c0_i32_1 = arith.constant 0 : i32
    return %c0_i32, %c0_i32_0 : i32, i32
  }
  func.func @transform_7(%arg0: i32) -> (i32, i32, i32) {
    %c0_i32 = arith.constant 0 : i32
    %c0_i32_0 = arith.constant 0 : i32
    %c0_i32_1 = arith.constant 0 : i32
    return %arg0, %c0_i32, %c0_i32_0 : i32, i32, i32
  }
}

</mosaic_0001>

<llo_original>
// kernel: seq2seq_with_attention.3
$region0: #{seq2seq_with_attention.3}
  #allocation0 [shape = 'u32[]', space=smem, size = 0x4, offset = 0x4, fixed_abs, tag = 'smem constant byte address 0x4 - core index']
  #allocation1 [shape = 'u32[72,128]{1,0:T(1,128)}', space=vmem, size = 0x9000, scoped, tag = 'internal scratch']
  #allocation2 [shape = 'f32[1,1]{1,0:T(1,128)S(1)}', space=vmem, size = 0x200, scoped, tag = 'scoped memory for seq2seq_with_attention.3']
  #allocation3 [shape = 'f32[1,1]{1,0:T(1,128)S(1)}', space=vmem, size = 0x200, scoped, tag = 'scoped memory for seq2seq_with_attention.3']
  %s0 = inlined_call_operand.vmem [shape: f32[8,2,128], index: 0, kind: input, shape index: {}]
  %s1 = inlined_call_operand.vmem [shape: f32[128,2], index: 1, kind: input, shape index: {}]
  %s2 = inlined_call_operand.vmem [shape: f32[128,64], index: 2, kind: input, shape index: {}]
  %s3 = inlined_call_operand.<no memory space> [shape: f32[1,1], index: 3, kind: input, shape index: {}]
  %s4 = inlined_call_operand.vmem [shape: f32[1,32], index: 4, kind: input, shape index: {}]
  %s5 = inlined_call_operand.vmem [shape: f32[1,32], index: 5, kind: input, shape index: {}]
  %s6 = inlined_call_operand.<no memory space> [shape: f32[1,1], index: 6, kind: input, shape index: {}]
  %s7 = inlined_call_operand.hbm [shape: f32[2,1,8], index: 7, kind: output, shape index: {}]
  %s8 = sld [smem:[#allocation0]]
  $region38: #{seq2seq_with_attention.3} parent=0
    _
  %s10 = ssub.s32 1, %s8
  %s11 = scalar_select 0, %s10, %s8
  %v12 = vstv %s3
  %13 = vst [vmem:[#allocation2] sm:$0x1] %v12
  %v14 = vstv %s6
  %15 = vst [vmem:[#allocation3] sm:$0x1] %v14
  $region1: #{seq2seq_with_attention.3} parent=0
    #allocation4 [shape = 'u8[1024]{0}', space=vmem, size = 0x400, scoped, tag = 'output window, operand 0, single buffered']
    #allocation5 [shape = 's32[1]{0}', space=sflag, size = 0x4, scoped, tag = 'scoped memory for seq2seq_with_attention.3']
    %16 = vsyncpa [#allocation5], 0
    // Predicated region
    $region2: #{seq2seq_with_attention.3} parent=1 // pred_check
      _
    $region3: #{seq2seq_with_attention.3} parent=1 // pred_check_branch
      %18 = sbr.rel (0) target = $region5
    $region4: #{seq2seq_with_attention.3} parent=1 // pred_region
      _
    $region5: #{seq2seq_with_attention.3} parent=1 // pred_fallthru
      _
    // Predicated region
    $region6: #{seq2seq_with_attention.3} parent=1 // pred_check
      _
    $region7: #{seq2seq_with_attention.3} parent=1 // pred_check_branch
      %20 = sbr.rel (0) target = $region9
    $region8: #{seq2seq_with_attention.3} parent=1 // pred_region
      _
    $region9: #{seq2seq_with_attention.3} parent=1 // pred_fallthru
      _
    // Predicated region
    $region10: #{seq2seq_with_attention.3} parent=1 // pred_check
      _
    $region11: #{seq2seq_with_attention.3} parent=1 // pred_check_branch
      %22 = sbr.rel (0) target = $region13
    $region12: #{seq2seq_with_attention.3} parent=1 // pred_region
      _
    $region13: #{seq2seq_with_attention.3} parent=1 // pred_fallthru
      _
    // Predicated region
    $region14: #{seq2seq_with_attention.3} parent=1 // pred_check
      _
    $region15: #{seq2seq_with_attention.3} parent=1 // pred_check_branch
      %24 = sbr.rel (0) target = $region17
    $region16: #{seq2seq_with_attention.3} parent=1 // pred_region
      _
    $region17: #{seq2seq_with_attention.3} parent=1 // pred_fallthru
      _
    // Predicated region
    $region18: #{seq2seq_with_attention.3} parent=1 // pred_check
      _
    $region19: #{seq2seq_with_attention.3} parent=1 // pred_check_branch
      %26 = sbr.rel (0) target = $region21
    $region20: #{seq2seq_with_attention.3} parent=1 // pred_region
      _
    $region21: #{seq2seq_with_attention.3} parent=1 // pred_fallthru
      _
    // Predicated region
    $region22: #{seq2seq_with_attention.3} parent=1 // pred_check
      _
    $region23: #{seq2seq_with_attention.3} parent=1 // pred_check_branch
      %28 = sbr.rel (0) target = $region25
    $region24: #{seq2seq_with_attention.3} parent=1 // pred_region
      _
    $region25: #{seq2seq_with_attention.3} parent=1 // pred_fallthru
      _
    // Predicated region
    $region26: #{seq2seq_with_attention.3} parent=1 // pred_check
      _
    $region27: #{seq2seq_with_attention.3} parent=1 // pred_check_branch
      %30 = sbr.rel (0) target = $region29
    $region28: #{seq2seq_with_attention.3} parent=1 // pred_region
      _
    $region29: #{seq2seq_with_attention.3} parent=1 // pred_fallthru
      _
    %v31 = vld [vmem:[%s0] sm:$0x3]
    %v32 = vld [vmem:[%s0 + $0x2] sm:$0x3]
    %v33 = vld [vmem:[%s0 + $0x4] sm:$0x3]
    %v34 = vld [vmem:[%s0 + $0x6] sm:$0x3]
    %v35 = vld [vmem:[%s0 + $0x8] sm:$0x3]
    %v36 = vld [vmem:[%s0 + $0xa] sm:$0x3]
    %v37 = vld [vmem:[%s0 + $0xc] sm:$0x3]
    %v38 = vld [vmem:[%s0 + $0xe] sm:$0x3]
    %v39 = vld [vmem:[%s1] sm:$0xff]
    %v40 = vld [vmem:[%s1 + $0x8] sm:$0xff]
    %v41 = vld [vmem:[%s1 + $0x10] sm:$0xff]
    %v42 = vld [vmem:[%s1 + $0x18] sm:$0xff]
    %v43 = vld [vmem:[%s1 + $0x20] sm:$0xff]
    %v44 = vld [vmem:[%s1 + $0x28] sm:$0xff]
    %v45 = vld [vmem:[%s1 + $0x30] sm:$0xff]
    %v46 = vld [vmem:[%s1 + $0x38] sm:$0xff]
    %v47 = vld [vmem:[%s1 + $0x40] sm:$0xff]
    %v48 = vld [vmem:[%s1 + $0x48] sm:$0xff]
    %v49 = vld [vmem:[%s1 + $0x50] sm:$0xff]
    %v50 = vld [vmem:[%s1 + $0x58] sm:$0xff]
    %v51 = vld [vmem:[%s1 + $0x60] sm:$0xff]
    %v52 = vld [vmem:[%s1 + $0x68] sm:$0xff]
    %v53 = vld [vmem:[%s1 + $0x70] sm:$0xff]
    %v54 = vld [vmem:[%s1 + $0x78] sm:$0xff]
    %63 = vst [vmem:[#allocation1] ss:$4 sm:$0xff] %v31
    %s64 = scalar_lea.vmem [#allocation1], 1
    %65 = vst [vmem:[%s64] ss:$4 sm:$0xff] %v32
    %s66 = scalar_lea.vmem [#allocation1], 2
    %67 = vst [vmem:[%s66] ss:$4 sm:$0xff] %v33
    %s68 = scalar_lea.vmem [#allocation1], 3
    %69 = vst [vmem:[%s68] ss:$4 sm:$0xff] %v34
    %s70 = scalar_lea.vmem [#allocation1], 32
    %71 = vst [vmem:[%s70] ss:$4 sm:$0xff] %v35
    %s72 = scalar_lea.vmem [#allocation1], 33
    %73 = vst [vmem:[%s72] ss:$4 sm:$0xff] %v36
    %s74 = scalar_lea.vmem [#allocation1], 34
    %75 = vst [vmem:[%s74] ss:$4 sm:$0xff] %v37
    %s76 = scalar_lea.vmem [#allocation1], 35
    %77 = vst [vmem:[%s76] ss:$4 sm:$0xff] %v38
    %v78 = vld.sshfl [vmem:[#allocation1] sm:$0xff pattern:$0x73625140]
    %v79 = vld.sshfl [vmem:[#allocation1 + $0x20] sm:$0xff pattern:$0x73625140]
    %82 = vmatpush.msra.mxu0 %v54
    %83 = vmatpush.msra.mxu0 %v53
    %84 = vmatpush.msra.mxu0 %v52
    %85 = vmatpush.msra.mxu0 %v51
    %86 = vmatpush.msra.mxu0 %v50
    %87 = vmatpush.msra.mxu0 %v49
    %88 = vmatpush.msra.mxu0 %v48
    %89 = vmatpush.msra.mxu0 %v47
    %90 = vmatpush.msra.mxu0 %v46
    %91 = vmatpush.msra.mxu0 %v45
    %92 = vmatpush.msra.mxu0 %v44
    %93 = vmatpush.msra.mxu0 %v43
    %94 = vmatpush.msra.mxu0 %v42
    %95 = vmatpush.msra.mxu0 %v41
    %96 = vmatpush.msra.mxu0 %v40
    %97 = vmatpush.msra.mxu0 %v39
    %98 = vmatmul.f32.gmra.mxu0 %v78
    %v99 = vpop.f32.mrf.mxu0
    %v100 = vadd.f32 0.0, %v99
    %101 = vmatmul.f32.gmra.mxu0 %v79
    %v102 = vpop.f32.mrf.mxu0
    %v103 = vadd.f32 0.0, %v102
    %104 = vdwg.mxu0
    %v107 = vrot.slane %v100, 2
    %v108 = vrot.slane %v100, 4
    %v109 = vrot.slane %v100, 6
    %v110 = vrot.slane %v103, 2
    %v111 = vrot.slane %v103, 4
    %v112 = vrot.slane %v103, 6
    %v113 = vld [vmem:[%s2] sm:$0xff]
    %v114 = vld [vmem:[%s2 + $0x8] sm:$0xff]
    %v115 = vld [vmem:[%s2 + $0x10] sm:$0xff]
    %v116 = vld [vmem:[%s2 + $0x18] sm:$0xff]
    %v117 = vld [vmem:[%s2 + $0x20] sm:$0xff]
    %v118 = vld [vmem:[%s2 + $0x28] sm:$0xff]
    %v119 = vld [vmem:[%s2 + $0x30] sm:$0xff]
    %v120 = vld [vmem:[%s2 + $0x38] sm:$0xff]
    %v121 = vld [vmem:[%s2 + $0x40] sm:$0xff]
    %v122 = vld [vmem:[%s2 + $0x48] sm:$0xff]
    %v123 = vld [vmem:[%s2 + $0x50] sm:$0xff]
    %v124 = vld [vmem:[%s2 + $0x58] sm:$0xff]
    %v125 = vld [vmem:[%s2 + $0x60] sm:$0xff]
    %v126 = vld [vmem:[%s2 + $0x68] sm:$0xff]
    %v127 = vld [vmem:[%s2 + $0x70] sm:$0xff]
    %v128 = vld [vmem:[%s2 + $0x78] sm:$0xff]
    %129 = vst [vmem:[#allocation1] ss:$4 sm:$0xff] %v31
    %s130 = scalar_lea.vmem [#allocation1], 1
    %131 = vst [vmem:[%s130] ss:$4 sm:$0xff] %v32
    %s132 = scalar_lea.vmem [#allocation1], 2
    %133 = vst [vmem:[%s132] ss:$4 sm:$0xff] %v33
    %s134 = scalar_lea.vmem [#allocation1], 3
    %135 = vst [vmem:[%s134] ss:$4 sm:$0xff] %v34
    %s136 = scalar_lea.vmem [#allocation1], 32
    %137 = vst [vmem:[%s136] ss:$4 sm:$0xff] %v35
    %s138 = scalar_lea.vmem [#allocation1], 33
    %139 = vst [vmem:[%s138] ss:$4 sm:$0xff] %v36
    %s140 = scalar_lea.vmem [#allocation1], 34
    %141 = vst [vmem:[%s140] ss:$4 sm:$0xff] %v37
    %s142 = scalar_lea.vmem [#allocation1], 35
    %143 = vst [vmem:[%s142] ss:$4 sm:$0xff] %v38
    %v144 = vld.sshfl [vmem:[#allocation1] sm:$0xff pattern:$0x73625140]
    %v145 = vld.sshfl [vmem:[#allocation1 + $0x20] sm:$0xff pattern:$0x73625140]
    %148 = vmatpush.msra.mxu0 %v128
    %149 = vmatpush.msra.mxu0 %v127
    %150 = vmatpush.msra.mxu0 %v126
    %151 = vmatpush.msra.mxu0 %v125
    %152 = vmatpush.msra.mxu0 %v124
    %153 = vmatpush.msra.mxu0 %v123
    %154 = vmatpush.msra.mxu0 %v122
    %155 = vmatpush.msra.mxu0 %v121
    %156 = vmatpush.msra.mxu0 %v120
    %157 = vmatpush.msra.mxu0 %v119
    %158 = vmatpush.msra.mxu0 %v118
    %159 = vmatpush.msra.mxu0 %v117
    %160 = vmatpush.msra.mxu0 %v116
    %161 = vmatpush.msra.mxu0 %v115
    %162 = vmatpush.msra.mxu0 %v114
    %163 = vmatpush.msra.mxu0 %v113
    %164 = vmatmul.f32.gmra.mxu0 %v144
    %v165 = vpop.f32.mrf.mxu0
    %v166 = vadd.f32 0.0, %v165
    %167 = vmatmul.f32.gmra.mxu0 %v145
    %v168 = vpop.f32.mrf.mxu0
    %v169 = vadd.f32 0.0, %v168
    %170 = vdwg.mxu0
    %v173 = vrot.slane %v166, 2
    %v174 = vrot.slane %v166, 4
    %v175 = vrot.slane %v166, 6
    %v176 = vrot.slane %v169, 2
    %v177 = vrot.slane %v169, 4
    %v178 = vrot.slane %v169, 6
    %v179 = vperm.slane %v100, 0
    %v180 = vperm.slane %v107, 0
    %v181 = vperm.slane %v108, 0
    %v182 = vperm.slane %v109, 0
    %v183 = vperm.slane %v103, 0
    %v184 = vperm.slane %v110, 0
    %v185 = vperm.slane %v111, 0
    %v186 = vperm.slane %v112, 0
    %vm187 = vcmask 1041409
    %v188 = vsel %vm187, %v180, %v179
    %vm189 = vcmask 1042434
    %v190 = vsel %vm189, %v181, %v188
    %vm191 = vcmask 1043459
    %v192 = vsel %vm191, %v182, %v190
    %vm193 = vcmask 1044484
    %v194 = vsel %vm193, %v183, %v192
    %vm195 = vcmask 1045509
    %v196 = vsel %vm195, %v184, %v194
    %vm197 = vcmask 1046534
    %v198 = vsel %vm197, %v185, %v196
    %vm199 = vcmask 1047559
    %v200 = vsel %vm199, %v186, %v198
    %201 = vrot.lane.b32.xlu0 %v200, 127
    %v202 = vpop.permute.xlu0 %201
    %204 = vxpose.xlu0.b32.start [1/16] %v202, 128
    %205 = vxpose.xlu0.b32.cont [2/16] 0.0, 128
    %206 = vxpose.xlu0.b32.cont [3/16] 0.0, 128
    %207 = vxpose.xlu0.b32.cont [4/16] 0.0, 128
    %208 = vxpose.xlu0.b32.cont [5/16] 0.0, 128
    %209 = vxpose.xlu0.b32.cont [6/16] 0.0, 128
    %210 = vxpose.xlu0.b32.cont [7/16] 0.0, 128
    %211 = vxpose.xlu0.b32.cont [8/16] 0.0, 128
    %212 = vxpose.xlu0.b32.cont [9/16] 0.0, 128
    %213 = vxpose.xlu0.b32.cont [10/16] 0.0, 128
    %214 = vxpose.xlu0.b32.cont [11/16] 0.0, 128
    %215 = vxpose.xlu0.b32.cont [12/16] 0.0, 128
    %216 = vxpose.xlu0.b32.cont [13/16] 0.0, 128
    %217 = vxpose.xlu0.b32.cont [14/16] 0.0, 128
    %218 = vxpose.xlu0.b32.cont [15/16] 0.0, 128
    %219 = vxpose.xlu0.b32.end [16/16] 0.0, 128
    %v220 = vpop.trf.xlu0
    %v221 = vpop.trf.xlu0
    %v222 = vpop.trf.xlu0
    %v223 = vpop.trf.xlu0
    %v224 = vpop.trf.xlu0
    %v225 = vpop.trf.xlu0
    %v226 = vpop.trf.xlu0
    %v227 = vpop.trf.xlu0
    %v228 = vpop.trf.xlu0
    %v229 = vpop.trf.xlu0
    %v230 = vpop.trf.xlu0
    %v231 = vpop.trf.xlu0
    %v232 = vpop.trf.xlu0
    %v233 = vpop.trf.xlu0
    %v234 = vpop.trf.xlu0
    %v235 = vpop.trf.xlu0
    %236 = vset.pattern.permute.xlu0 0
    %237 = vperm.xlu0 %236, %v100
    %v238 = vpop.permute.xlu0 %237
    %v241 = vunpack.c.l.s4 269488144
    %v242 = vunpack.c.0.s8 %v241
    %v243 = vperm.slane %v238, %v242
    %244 = vset.pattern.permute.xlu0 0
    %245 = vperm.xlu0 %244, %v107
    %v246 = vpop.permute.xlu0 %245
    %v249 = vunpack.c.l.s4 269488144
    %v250 = vunpack.c.0.s8 %v249
    %v251 = vperm.slane %v246, %v250
    %252 = vset.pattern.permute.xlu0 0
    %253 = vperm.xlu0 %252, %v108
    %v254 = vpop.permute.xlu0 %253
    %v257 = vunpack.c.l.s4 269488144
    %v258 = vunpack.c.0.s8 %v257
    %v259 = vperm.slane %v254, %v258
    %260 = vset.pattern.permute.xlu0 0
    %261 = vperm.xlu0 %260, %v109
    %v262 = vpop.permute.xlu0 %261
    %v265 = vunpack.c.l.s4 269488144
    %v266 = vunpack.c.0.s8 %v265
    %v267 = vperm.slane %v262, %v266
    %268 = vset.pattern.permute.xlu0 0
    %269 = vperm.xlu0 %268, %v103
    %v270 = vpop.permute.xlu0 %269
    %v273 = vunpack.c.l.s4 269488144
    %v274 = vunpack.c.0.s8 %v273
    %v275 = vperm.slane %v270, %v274
    %276 = vset.pattern.permute.xlu0 0
    %277 = vperm.xlu0 %276, %v110
    %v278 = vpop.permute.xlu0 %277
    %v281 = vunpack.c.l.s4 269488144
    %v282 = vunpack.c.0.s8 %v281
    %v283 = vperm.slane %v278, %v282
    %284 = vset.pattern.permute.xlu0 0
    %285 = vperm.xlu0 %284, %v111
    %v286 = vpop.permute.xlu0 %285
    %v289 = vunpack.c.l.s4 269488144
    %v290 = vunpack.c.0.s8 %v289
    %v291 = vperm.slane %v286, %v290
    %292 = vset.pattern.permute.xlu0 0
    %293 = vperm.xlu0 %292, %v112
    %v294 = vpop.permute.xlu0 %293
    %v297 = vunpack.c.l.s4 269488144
    %v298 = vunpack.c.0.s8 %v297
    %v299 = vperm.slane %v294, %v298
    %v300 = vperm.slane %v220, 0
    %v302 = vrot.slane %v300, 2
    %v303 = vrot.slane %v300, 4
    %v304 = vrot.slane %v300, 6
    %v305 = vrot.slane %v300, 1
    %v306 = vrot.slane %v302, 1
    %v307 = vrot.slane %v303, 1
    %v308 = vrot.slane %v304, 1
    %v317 = vadd.f32 %v243, %v300
    %v318 = vadd.f32 %v251, %v305
    %v319 = vadd.f32 %v259, %v302
    %v320 = vadd.f32 %v267, %v306
    %v321 = vadd.f32 %v275, %v303
    %v322 = vadd.f32 %v283, %v307
    %v323 = vadd.f32 %v291, %v304
    %v324 = vadd.f32 %v299, %v308
    %v325 = vld [vmem:[#allocation2] sm:$0x1]
    %v327 = vperm.slane %v325, 0
    %328 = vset.pattern.permute.xlu0 0
    %329 = vperm.xlu0 %328, %v327
    %v330 = vpop.permute.xlu0 %329
    %v332 = vadd.f32 %v317, %v330
    %v333 = vadd.f32 %v318, %v330
    %v334 = vadd.f32 %v319, %v330
    %v335 = vadd.f32 %v320, %v330
    %v336 = vadd.f32 %v321, %v330
    %v337 = vadd.f32 %v322, %v330
    %v338 = vadd.f32 %v323, %v330
    %v339 = vadd.f32 %v324, %v330
    %v348 = vperm.slane %v332, 0
    %v349 = vperm.slane %v333, 0
    %v350 = vperm.slane %v334, 0
    %v351 = vperm.slane %v335, 0
    %v352 = vperm.slane %v336, 0
    %v353 = vperm.slane %v337, 0
    %v354 = vperm.slane %v338, 0
    %v355 = vperm.slane %v339, 0
    %v356 = vsel %vm187, %v349, %v348
    %v357 = vsel %vm189, %v350, %v356
    %v358 = vsel %vm191, %v351, %v357
    %v359 = vsel %vm193, %v352, %v358
    %v360 = vsel %vm195, %v353, %v359
    %v361 = vsel %vm197, %v354, %v360
    %v362 = vsel %vm199, %v355, %v361
    %vm364 = vcmask 64512
    %v365 = vsel %vm364, %v362, -inf
    %366 = vmax.xlane.f32.xlu0 %v365
    %v367 = vpop.xlane.xlu0 %366
    %v370 = vunpack.c.l.s4 269488144
    %v371 = vunpack.c.0.s8 %v370
    %v372 = vperm.slane %v367, %v371
    %v374 = vunpack.c.l.s4 842150450
    %v375 = vunpack.c.0.s8 %v374
    %v376 = vperm.slane %v367, %v375
    %v378 = vunpack.c.l.s4 1414812756
    %v379 = vunpack.c.0.s8 %v378
    %v380 = vperm.slane %v367, %v379
    %v382 = vunpack.c.l.s4 1987475062
    %v383 = vunpack.c.0.s8 %v382
    %v384 = vperm.slane %v367, %v383
    %v385 = vrot.slane %v372, 1
    %v386 = vrot.slane %v376, 1
    %v387 = vrot.slane %v380, 1
    %v388 = vrot.slane %v384, 1
    %v397 = vsub.f32 %v332, %v372
    %v398 = vsub.f32 %v333, %v385
    %v399 = vsub.f32 %v334, %v376
    %v400 = vsub.f32 %v335, %v386
    %v401 = vsub.f32 %v336, %v380
    %v402 = vsub.f32 %v337, %v387
    %v403 = vsub.f32 %v338, %v384
    %v404 = vsub.f32 %v339, %v388
    %v405 = vmul.f32 %v397, 1.442695
    %v406 = vpow.pop %v405
    %v407 = vmul.f32 %v398, 1.442695
    %v408 = vpow.pop %v407
    %v409 = vmul.f32 %v399, 1.442695
    %v410 = vpow.pop %v409
    %v411 = vmul.f32 %v400, 1.442695
    %v412 = vpow.pop %v411
    %v413 = vmul.f32 %v401, 1.442695
    %v414 = vpow.pop %v413
    %v415 = vmul.f32 %v402, 1.442695
    %v416 = vpow.pop %v415
    %v417 = vmul.f32 %v403, 1.442695
    %v418 = vpow.pop %v417
    %v419 = vmul.f32 %v404, 1.442695
    %v420 = vpow.pop %v419
    %v429 = vperm.slane %v406, 0
    %v430 = vperm.slane %v408, 0
    %v431 = vperm.slane %v410, 0
    %v432 = vperm.slane %v412, 0
    %v433 = vperm.slane %v414, 0
    %v434 = vperm.slane %v416, 0
    %v435 = vperm.slane %v418, 0
    %v436 = vperm.slane %v420, 0
    %v437 = vsel %vm187, %v430, %v429
    %v438 = vsel %vm189, %v431, %v437
    %v439 = vsel %vm191, %v432, %v438
    %v440 = vsel %vm193, %v433, %v439
    %v441 = vsel %vm195, %v434, %v440
    %v442 = vsel %vm197, %v435, %v441
    %v443 = vsel %vm199, %v436, %v442
    %v445 = vsel %vm364, %v443, 0.0
    %446 = vadd.xlane.f32.xlu0 %v445
    %v447 = vpop.xlane.xlu0 %446
    %v450 = vunpack.c.l.s4 269488144
    %v451 = vunpack.c.0.s8 %v450
    %v452 = vperm.slane %v447, %v451
    %v454 = vunpack.c.l.s4 842150450
    %v455 = vunpack.c.0.s8 %v454
    %v456 = vperm.slane %v447, %v455
    %v458 = vunpack.c.l.s4 1414812756
    %v459 = vunpack.c.0.s8 %v458
    %v460 = vperm.slane %v447, %v459
    %v462 = vunpack.c.l.s4 1987475062
    %v463 = vunpack.c.0.s8 %v462
    %v464 = vperm.slane %v447, %v463
    %v465 = vrot.slane %v452, 1
    %v466 = vrot.slane %v456, 1
    %v467 = vrot.slane %v460, 1
    %v468 = vrot.slane %v464, 1
    %v477 = vrcp.pop %v452
    %v478 = vmul.f32 %v452, %v477
    %v479 = vsub.f32 1.0, %v478
    %v480 = vmul.f32 %v477, %v479
    %v481 = vadd.f32 %v477, %v480
    %vm482 = vweird.f32 %v452
    %vm483 = vweird.f32 %v477
    %vm484 = vmor %vm482, %vm483
    %v485 = vsel %vm484, %v477, %v481
    %v486 = vand.u32 2147483647, %v452
    %vm487 = vcmp.eq.f32.partialorder %v486, 8.507059e+37
    %v488 = vand.u32 %v452, 2147483648
    %v489 = vor.u32 1.1754944e-38, %v488
    %v490 = vsel %vm487, %v489, %v485
    %v491 = vmul.f32 %v406, %v490
    %v492 = vrcp.pop %v465
    %v493 = vmul.f32 %v465, %v492
    %v494 = vsub.f32 1.0, %v493
    %v495 = vmul.f32 %v492, %v494
    %v496 = vadd.f32 %v492, %v495
    %vm497 = vweird.f32 %v465
    %vm498 = vweird.f32 %v492
    %vm499 = vmor %vm497, %vm498
    %v500 = vsel %vm499, %v492, %v496
    %v501 = vand.u32 2147483647, %v465
    %vm502 = vcmp.eq.f32.partialorder %v501, 8.507059e+37
    %v503 = vand.u32 %v465, 2147483648
    %v504 = vor.u32 1.1754944e-38, %v503
    %v505 = vsel %vm502, %v504, %v500
    %v506 = vmul.f32 %v408, %v505
    %v507 = vrcp.pop %v456
    %v508 = vmul.f32 %v456, %v507
    %v509 = vsub.f32 1.0, %v508
    %v510 = vmul.f32 %v507, %v509
    %v511 = vadd.f32 %v507, %v510
    %vm512 = vweird.f32 %v456
    %vm513 = vweird.f32 %v507
    %vm514 = vmor %vm512, %vm513
    %v515 = vsel %vm514, %v507, %v511
    %v516 = vand.u32 2147483647, %v456
    %vm517 = vcmp.eq.f32.partialorder %v516, 8.507059e+37
    %v518 = vand.u32 %v456, 2147483648
    %v519 = vor.u32 1.1754944e-38, %v518
    %v520 = vsel %vm517, %v519, %v515
    %v521 = vmul.f32 %v410, %v520
    %v522 = vrcp.pop %v466
    %v523 = vmul.f32 %v466, %v522
    %v524 = vsub.f32 1.0, %v523
    %v525 = vmul.f32 %v522, %v524
    %v526 = vadd.f32 %v522, %v525
    %vm527 = vweird.f32 %v466
    %vm528 = vweird.f32 %v522
    %vm529 = vmor %vm527, %vm528
    %v530 = vsel %vm529, %v522, %v526
    %v531 = vand.u32 2147483647, %v466
    %vm532 = vcmp.eq.f32.partialorder %v531, 8.507059e+37
    %v533 = vand.u32 %v466, 2147483648
    %v534 = vor.u32 1.1754944e-38, %v533
    %v535 = vsel %vm532, %v534, %v530
    %v536 = vmul.f32 %v412, %v535
    %v537 = vrcp.pop %v460
    %v538 = vmul.f32 %v460, %v537
    %v539 = vsub.f32 1.0, %v538
    %v540 = vmul.f32 %v537, %v539
    %v541 = vadd.f32 %v537, %v540
    %vm542 = vweird.f32 %v460
    %vm543 = vweird.f32 %v537
    %vm544 = vmor %vm542, %vm543
    %v545 = vsel %vm544, %v537, %v541
    %v546 = vand.u32 2147483647, %v460
    %vm547 = vcmp.eq.f32.partialorder %v546, 8.507059e+37
    %v548 = vand.u32 %v460, 2147483648
    %v549 = vor.u32 1.1754944e-38, %v548
    %v550 = vsel %vm547, %v549, %v545
    %v551 = vmul.f32 %v414, %v550
    %v552 = vrcp.pop %v467
    %v553 = vmul.f32 %v467, %v552
    %v554 = vsub.f32 1.0, %v553
    %v555 = vmul.f32 %v552, %v554
    %v556 = vadd.f32 %v552, %v555
    %vm557 = vweird.f32 %v467
    %vm558 = vweird.f32 %v552
    %vm559 = vmor %vm557, %vm558
    %v560 = vsel %vm559, %v552, %v556
    %v561 = vand.u32 2147483647, %v467
    %vm562 = vcmp.eq.f32.partialorder %v561, 8.507059e+37
    %v563 = vand.u32 %v467, 2147483648
    %v564 = vor.u32 1.1754944e-38, %v563
    %v565 = vsel %vm562, %v564, %v560
    %v566 = vmul.f32 %v416, %v565
    %v567 = vrcp.pop %v464
    %v568 = vmul.f32 %v464, %v567
    %v569 = vsub.f32 1.0, %v568
    %v570 = vmul.f32 %v567, %v569
    %v571 = vadd.f32 %v567, %v570
    %vm572 = vweird.f32 %v464
    %vm573 = vweird.f32 %v567
    %vm574 = vmor %vm572, %vm573
    %v575 = vsel %vm574, %v567, %v571
    %v576 = vand.u32 2147483647, %v464
    %vm577 = vcmp.eq.f32.partialorder %v576, 8.507059e+37
    %v578 = vand.u32 %v464, 2147483648
    %v579 = vor.u32 1.1754944e-38, %v578
    %v580 = vsel %vm577, %v579, %v575
    %v581 = vmul.f32 %v418, %v580
    %v582 = vrcp.pop %v468
    %v583 = vmul.f32 %v468, %v582
    %v584 = vsub.f32 1.0, %v583
    %v585 = vmul.f32 %v582, %v584
    %v586 = vadd.f32 %v582, %v585
    %vm587 = vweird.f32 %v468
    %vm588 = vweird.f32 %v582
    %vm589 = vmor %vm587, %vm588
    %v590 = vsel %vm589, %v582, %v586
    %v591 = vand.u32 2147483647, %v468
    %vm592 = vcmp.eq.f32.partialorder %v591, 8.507059e+37
    %v593 = vand.u32 %v468, 2147483648
    %v594 = vor.u32 1.1754944e-38, %v593
    %v595 = vsel %vm592, %v594, %v590
    %v596 = vmul.f32 %v420, %v595
    %v605 = vperm.slane %v491, 0
    %v606 = vperm.slane %v506, 0
    %v607 = vperm.slane %v521, 0
    %v608 = vperm.slane %v536, 0
    %v609 = vperm.slane %v551, 0
    %v610 = vperm.slane %v566, 0
    %v611 = vperm.slane %v581, 0
    %v612 = vperm.slane %v596, 0
    %v613 = vsel %vm187, %v606, %v605
    %v614 = vsel %vm189, %v607, %v613
    %v615 = vsel %vm191, %v608, %v614
    %v616 = vsel %vm193, %v609, %v615
    %v617 = vsel %vm195, %v610, %v616
    %v618 = vsel %vm197, %v611, %v617
    %v619 = vsel %vm199, %v612, %v618
    %v620 = vperm.slane %v166, 0
    %v621 = vperm.slane %v173, 0
    %v622 = vperm.slane %v174, 0
    %v623 = vperm.slane %v175, 0
    %v624 = vperm.slane %v169, 0
    %v625 = vperm.slane %v176, 0
    %v626 = vperm.slane %v177, 0
    %v627 = vperm.slane %v178, 0
    %v628 = vsel %vm187, %v621, %v620
    %v629 = vsel %vm189, %v622, %v628
    %v630 = vsel %vm191, %v623, %v629
    %v631 = vsel %vm193, %v624, %v630
    %v632 = vsel %vm195, %v625, %v631
    %v633 = vsel %vm197, %v626, %v632
    %v634 = vsel %vm199, %v627, %v633
    %636 = vrot.lane.b32.xlu0 %v634, 96
    %v637 = vpop.permute.xlu0 %636
    %v639 = vsel %vm364, %v619, 0
    %641 = vmatpush.msra.mxu0 0.0
    %642 = vmatpush.msra.mxu0 0.0
    %643 = vmatpush.msra.mxu0 0.0
    %644 = vmatpush.msra.mxu0 0.0
    %645 = vmatpush.msra.mxu0 0.0
    %646 = vmatpush.msra.mxu0 0.0
    %647 = vmatpush.msra.mxu0 0.0
    %648 = vmatpush.msra.mxu0 0.0
    %649 = vmatpush.msra.mxu0 0.0
    %650 = vmatpush.msra.mxu0 0.0
    %651 = vmatpush.msra.mxu0 0.0
    %652 = vmatpush.msra.mxu0 0.0
    %653 = vmatpush.msra.mxu0 0.0
    %654 = vmatpush.msra.mxu0 0.0
    %655 = vmatpush.msra.mxu0 0.0
    %656 = vmatpush.msra.mxu0 %v634
    %657 = vmatmul.f32.gmra.mxu0 %v639
    %v658 = vpop.f32.mrf.mxu0
    %v659 = vadd.f32 %v637, %v658
    %660 = vdwg.mxu0
    %v661 = vld [vmem:[%s4] sm:$0x1]
    %v663 = vperm.slane %v661, 0
    %v665 = vadd.f32 %v659, %v663
    %v666 = vmax.f32 %v665, 0.0
    %v667 = vld [vmem:[%s5] sm:$0x1]
    %v669 = vperm.slane %v667, 0
    %v671 = vmul.f32 %v666, %v669
    %vm672 = vcmask 261120
    %v673 = vsel %vm672, %v671, 0.0
    %674 = vadd.xlane.f32.xlu0 %v673
    %v675 = vpop.xlane.xlu0 %674
    %v676 = vld [vmem:[#allocation3] sm:$0x1]
    %v678 = vperm.slane %v676, 0
    %v680 = vadd.f32 %v675, %v678
    %v681 = vxor.u32 %v680, 2147483648
    %v682 = vmul.f32 %v681, 1.442695
    %v683 = vpow.pop %v682
    %v684 = vadd.f32 %v683, 1.0
    %v685 = vrcp.pop %v684
    %v686 = vmul.f32 %v684, %v685
    %v687 = vsub.f32 1.0, %v686
    %v688 = vmul.f32 %v685, %v687
    %v689 = vadd.f32 %v685, %v688
    %vm690 = vweird.f32 %v684
    %vm691 = vweird.f32 %v685
    %vm692 = vmor %vm690, %vm691
    %v693 = vsel %vm692, %v685, %v689
    %v694 = vand.u32 2147483647, %v684
    %vm695 = vcmp.eq.f32.partialorder %v694, 8.507059e+37
    %v696 = vand.u32 %v684, 2147483648
    %v697 = vor.u32 1.1754944e-38, %v696
    %v698 = vsel %vm695, %v697, %v693
    %v699 = vmul.f32 1.0, %v698
    %700 = vxpose.xlu0.b32.start [1/16] %v699, 128
    %701 = vxpose.xlu0.b32.cont [2/16] 0.0, 128
    %702 = vxpose.xlu0.b32.cont [3/16] 0.0, 128
    %703 = vxpose.xlu0.b32.cont [4/16] 0.0, 128
    %704 = vxpose.xlu0.b32.cont [5/16] 0.0, 128
    %705 = vxpose.xlu0.b32.cont [6/16] 0.0, 128
    %706 = vxpose.xlu0.b32.cont [7/16] 0.0, 128
    %707 = vxpose.xlu0.b32.cont [8/16] 0.0, 128
    %708 = vxpose.xlu0.b32.cont [9/16] 0.0, 128
    %709 = vxpose.xlu0.b32.cont [10/16] 0.0, 128
    %710 = vxpose.xlu0.b32.cont [11/16] 0.0, 128
    %711 = vxpose.xlu0.b32.cont [12/16] 0.0, 128
    %712 = vxpose.xlu0.b32.cont [13/16] 0.0, 128
    %713 = vxpose.xlu0.b32.cont [14/16] 0.0, 128
    %714 = vxpose.xlu0.b32.cont [15/16] 0.0, 128
    %715 = vxpose.xlu0.b32.end [16/16] 0.0, 128
    %v716 = vpop.trf.xlu0
    %v717 = vpop.trf.xlu0
    %v718 = vpop.trf.xlu0
    %v719 = vpop.trf.xlu0
    %v720 = vpop.trf.xlu0
    %v721 = vpop.trf.xlu0
    %v722 = vpop.trf.xlu0
    %v723 = vpop.trf.xlu0
    %v724 = vpop.trf.xlu0
    %v725 = vpop.trf.xlu0
    %v726 = vpop.trf.xlu0
    %v727 = vpop.trf.xlu0
    %v728 = vpop.trf.xlu0
    %v729 = vpop.trf.xlu0
    %v730 = vpop.trf.xlu0
    %v731 = vpop.trf.xlu0
    %vm732 = vcmask 57344
    %733 = vst.msk [vmem:[#allocation4] sm:$0x1] %vm732, %v716
    %v734 = vperm.slane %v100, 1
    %v735 = vperm.slane %v107, 1
    %v736 = vperm.slane %v108, 1
    %v737 = vperm.slane %v109, 1
    %v738 = vperm.slane %v103, 1
    %v739 = vperm.slane %v110, 1
    %v740 = vperm.slane %v111, 1
    %v741 = vperm.slane %v112, 1
    %v742 = vsel %vm187, %v735, %v734
    %v743 = vsel %vm189, %v736, %v742
    %v744 = vsel %vm191, %v737, %v743
    %v745 = vsel %vm193, %v738, %v744
    %v746 = vsel %vm195, %v739, %v745
    %v747 = vsel %vm197, %v740, %v746
    %v748 = vsel %vm199, %v741, %v747
    %749 = vrot.lane.b32.xlu0 %v748, 127
    %v750 = vpop.permute.xlu0 %749
    %752 = vxpose.xlu0.b32.start [1/16] %v750, 128
    %753 = vxpose.xlu0.b32.cont [2/16] 0.0, 128
    %754 = vxpose.xlu0.b32.cont [3/16] 0.0, 128
    %755 = vxpose.xlu0.b32.cont [4/16] 0.0, 128
    %756 = vxpose.xlu0.b32.cont [5/16] 0.0, 128
    %757 = vxpose.xlu0.b32.cont [6/16] 0.0, 128
    %758 = vxpose.xlu0.b32.cont [7/16] 0.0, 128
    %759 = vxpose.xlu0.b32.cont [8/16] 0.0, 128
    %760 = vxpose.xlu0.b32.cont [9/16] 0.0, 128
    %761 = vxpose.xlu0.b32.cont [10/16] 0.0, 128
    %762 = vxpose.xlu0.b32.cont [11/16] 0.0, 128
    %763 = vxpose.xlu0.b32.cont [12/16] 0.0, 128
    %764 = vxpose.xlu0.b32.cont [13/16] 0.0, 128
    %765 = vxpose.xlu0.b32.cont [14/16] 0.0, 128
    %766 = vxpose.xlu0.b32.cont [15/16] 0.0, 128
    %767 = vxpose.xlu0.b32.end [16/16] 0.0, 128
    %v768 = vpop.trf.xlu0
    %v769 = vpop.trf.xlu0
    %v770 = vpop.trf.xlu0
    %v771 = vpop.trf.xlu0
    %v772 = vpop.trf.xlu0
    %v773 = vpop.trf.xlu0
    %v774 = vpop.trf.xlu0
    %v775 = vpop.trf.xlu0
    %v776 = vpop.trf.xlu0
    %v777 = vpop.trf.xlu0
    %v778 = vpop.trf.xlu0
    %v779 = vpop.trf.xlu0
    %v780 = vpop.trf.xlu0
    %v781 = vpop.trf.xlu0
    %v782 = vpop.trf.xlu0
    %v783 = vpop.trf.xlu0
    %v784 = vperm.slane %v768, 0
    %v786 = vrot.slane %v784, 2
    %v787 = vrot.slane %v784, 4
    %v788 = vrot.slane %v784, 6
    %v789 = vrot.slane %v784, 7
    %v790 = vrot.slane %v786, 7
    %v791 = vrot.slane %v787, 7
    %v792 = vrot.slane %v788, 7
    %v801 = vadd.f32 %v243, %v789
    %v802 = vadd.f32 %v251, %v784
    %v803 = vadd.f32 %v259, %v790
    %v804 = vadd.f32 %v267, %v786
    %v805 = vadd.f32 %v275, %v791
    %v806 = vadd.f32 %v283, %v787
    %v807 = vadd.f32 %v291, %v792
    %v808 = vadd.f32 %v299, %v788
    %v809 = vld [vmem:[#allocation2] sm:$0x1]
    %v811 = vperm.slane %v809, 0
    %812 = vset.pattern.permute.xlu0 0
    %813 = vperm.xlu0 %812, %v811
    %v814 = vpop.permute.xlu0 %813
    %v816 = vadd.f32 %v801, %v814
    %v817 = vadd.f32 %v802, %v814
    %v818 = vadd.f32 %v803, %v814
    %v819 = vadd.f32 %v804, %v814
    %v820 = vadd.f32 %v805, %v814
    %v821 = vadd.f32 %v806, %v814
    %v822 = vadd.f32 %v807, %v814
    %v823 = vadd.f32 %v808, %v814
    %v832 = vperm.slane %v816, 1
    %v833 = vperm.slane %v817, 1
    %v834 = vperm.slane %v818, 1
    %v835 = vperm.slane %v819, 1
    %v836 = vperm.slane %v820, 1
    %v837 = vperm.slane %v821, 1
    %v838 = vperm.slane %v822, 1
    %v839 = vperm.slane %v823, 1
    %v840 = vsel %vm189, %v833, %v832
    %v841 = vsel %vm191, %v834, %v840
    %v842 = vsel %vm193, %v835, %v841
    %v843 = vsel %vm195, %v836, %v842
    %v844 = vsel %vm197, %v837, %v843
    %v845 = vsel %vm199, %v838, %v844
    %vm848 = vcmask 64513
    %v849 = vsel %vm848, %v845, -inf
    %850 = vmax.xlane.f32.xlu0 %v849
    %v851 = vpop.xlane.xlu0 %850
    %v852 = vsel %vm732, %v839, -inf
    %853 = vmax.xlane.f32.xlu0 %v852
    %v854 = vpop.xlane.xlu0 %853
    %v858 = vunpack.c.l.s4 269488144
    %v859 = vunpack.c.0.s8 %v858
    %v860 = vperm.slane %v851, %v859
    %v862 = vunpack.c.l.s4 842150450
    %v863 = vunpack.c.0.s8 %v862
    %v864 = vperm.slane %v851, %v863
    %v866 = vunpack.c.l.s4 1414812756
    %v867 = vunpack.c.0.s8 %v866
    %v868 = vperm.slane %v851, %v867
    %v870 = vunpack.c.l.s4 1987475062
    %v871 = vunpack.c.0.s8 %v870
    %v872 = vperm.slane %v851, %v871
    %v874 = vunpack.c.l.s4 269488144
    %v875 = vunpack.c.0.s8 %v874
    %v876 = vperm.slane %v854, %v875
    %v877 = vrot.slane %v864, 7
    %v878 = vrot.slane %v868, 7
    %v879 = vrot.slane %v872, 7
    %v880 = vrot.slane %v876, 7
    %v889 = vsub.f32 %v816, %v860
    %v890 = vsub.f32 %v817, %v877
    %v891 = vsub.f32 %v818, %v864
    %v892 = vsub.f32 %v819, %v878
    %v893 = vsub.f32 %v820, %v868
    %v894 = vsub.f32 %v821, %v879
    %v895 = vsub.f32 %v822, %v872
    %v896 = vsub.f32 %v823, %v880
    %v897 = vmul.f32 %v889, 1.442695
    %v898 = vpow.pop %v897
    %v899 = vmul.f32 %v890, 1.442695
    %v900 = vpow.pop %v899
    %v901 = vmul.f32 %v891, 1.442695
    %v902 = vpow.pop %v901
    %v903 = vmul.f32 %v892, 1.442695
    %v904 = vpow.pop %v903
    %v905 = vmul.f32 %v893, 1.442695
    %v906 = vpow.pop %v905
    %v907 = vmul.f32 %v894, 1.442695
    %v908 = vpow.pop %v907
    %v909 = vmul.f32 %v895, 1.442695
    %v910 = vpow.pop %v909
    %v911 = vmul.f32 %v896, 1.442695
    %v912 = vpow.pop %v911
    %v921 = vperm.slane %v898, 1
    %v922 = vperm.slane %v900, 1
    %v923 = vperm.slane %v902, 1
    %v924 = vperm.slane %v904, 1
    %v925 = vperm.slane %v906, 1
    %v926 = vperm.slane %v908, 1
    %v927 = vperm.slane %v910, 1
    %v928 = vperm.slane %v912, 1
    %v929 = vsel %vm189, %v922, %v921
    %v930 = vsel %vm191, %v923, %v929
    %v931 = vsel %vm193, %v924, %v930
    %v932 = vsel %vm195, %v925, %v931
    %v933 = vsel %vm197, %v926, %v932
    %v934 = vsel %vm199, %v927, %v933
    %v937 = vsel %vm848, %v934, 0.0
    %938 = vadd.xlane.f32.xlu0 %v937
    %v939 = vpop.xlane.xlu0 %938
    %v940 = vsel %vm732, %v928, 0.0
    %941 = vadd.xlane.f32.xlu0 %v940
    %v942 = vpop.xlane.xlu0 %941
    %v946 = vunpack.c.l.s4 269488144
    %v947 = vunpack.c.0.s8 %v946
    %v948 = vperm.slane %v939, %v947
    %v950 = vunpack.c.l.s4 842150450
    %v951 = vunpack.c.0.s8 %v950
    %v952 = vperm.slane %v939, %v951
    %v954 = vunpack.c.l.s4 1414812756
    %v955 = vunpack.c.0.s8 %v954
    %v956 = vperm.slane %v939, %v955
    %v958 = vunpack.c.l.s4 1987475062
    %v959 = vunpack.c.0.s8 %v958
    %v960 = vperm.slane %v939, %v959
    %v962 = vunpack.c.l.s4 269488144
    %v963 = vunpack.c.0.s8 %v962
    %v964 = vperm.slane %v942, %v963
    %v965 = vrot.slane %v952, 7
    %v966 = vrot.slane %v956, 7
    %v967 = vrot.slane %v960, 7
    %v968 = vrot.slane %v964, 7
    %v977 = vrcp.pop %v948
    %v978 = vmul.f32 %v948, %v977
    %v979 = vsub.f32 1.0, %v978
    %v980 = vmul.f32 %v977, %v979
    %v981 = vadd.f32 %v977, %v980
    %vm982 = vweird.f32 %v948
    %vm983 = vweird.f32 %v977
    %vm984 = vmor %vm982, %vm983
    %v985 = vsel %vm984, %v977, %v981
    %v986 = vand.u32 2147483647, %v948
    %vm987 = vcmp.eq.f32.partialorder %v986, 8.507059e+37
    %v988 = vand.u32 %v948, 2147483648
    %v989 = vor.u32 1.1754944e-38, %v988
    %v990 = vsel %vm987, %v989, %v985
    %v991 = vmul.f32 %v898, %v990
    %v992 = vrcp.pop %v965
    %v993 = vmul.f32 %v965, %v992
    %v994 = vsub.f32 1.0, %v993
    %v995 = vmul.f32 %v992, %v994
    %v996 = vadd.f32 %v992, %v995
    %vm997 = vweird.f32 %v965
    %vm998 = vweird.f32 %v992
    %vm999 = vmor %vm997, %vm998
    %v1000 = vsel %vm999, %v992, %v996
    %v1001 = vand.u32 2147483647, %v965
    %vm1002 = vcmp.eq.f32.partialorder %v1001, 8.507059e+37
    %v1003 = vand.u32 %v965, 2147483648
    %v1004 = vor.u32 1.1754944e-38, %v1003
    %v1005 = vsel %vm1002, %v1004, %v1000
    %v1006 = vmul.f32 %v900, %v1005
    %v1007 = vrcp.pop %v952
    %v1008 = vmul.f32 %v952, %v1007
    %v1009 = vsub.f32 1.0, %v1008
    %v1010 = vmul.f32 %v1007, %v1009
    %v1011 = vadd.f32 %v1007, %v1010
    %vm1012 = vweird.f32 %v952
    %vm1013 = vweird.f32 %v1007
    %vm1014 = vmor %vm1012, %vm1013
    %v1015 = vsel %vm1014, %v1007, %v1011
    %v1016 = vand.u32 2147483647, %v952
    %vm1017 = vcmp.eq.f32.partialorder %v1016, 8.507059e+37
    %v1018 = vand.u32 %v952, 2147483648
    %v1019 = vor.u32 1.1754944e-38, %v1018
    %v1020 = vsel %vm1017, %v1019, %v1015
    %v1021 = vmul.f32 %v902, %v1020
    %v1022 = vrcp.pop %v966
    %v1023 = vmul.f32 %v966, %v1022
    %v1024 = vsub.f32 1.0, %v1023
    %v1025 = vmul.f32 %v1022, %v1024
    %v1026 = vadd.f32 %v1022, %v1025
    %vm1027 = vweird.f32 %v966
    %vm1028 = vweird.f32 %v1022
    %vm1029 = vmor %vm1027, %vm1028
    %v1030 = vsel %vm1029, %v1022, %v1026
    %v1031 = vand.u32 2147483647, %v966
    %vm1032 = vcmp.eq.f32.partialorder %v1031, 8.507059e+37
    %v1033 = vand.u32 %v966, 2147483648
    %v1034 = vor.u32 1.1754944e-38, %v1033
    %v1035 = vsel %vm1032, %v1034, %v1030
    %v1036 = vmul.f32 %v904, %v1035
    %v1037 = vrcp.pop %v956
    %v1038 = vmul.f32 %v956, %v1037
    %v1039 = vsub.f32 1.0, %v1038
    %v1040 = vmul.f32 %v1037, %v1039
    %v1041 = vadd.f32 %v1037, %v1040
    %vm1042 = vweird.f32 %v956
    %vm1043 = vweird.f32 %v1037
    %vm1044 = vmor %vm1042, %vm1043
    %v1045 = vsel %vm1044, %v1037, %v1041
    %v1046 = vand.u32 2147483647, %v956
    %vm1047 = vcmp.eq.f32.partialorder %v1046, 8.507059e+37
    %v1048 = vand.u32 %v956, 2147483648
    %v1049 = vor.u32 1.1754944e-38, %v1048
    %v1050 = vsel %vm1047, %v1049, %v1045
    %v1051 = vmul.f32 %v906, %v1050
    %v1052 = vrcp.pop %v967
    %v1053 = vmul.f32 %v967, %v1052
    %v1054 = vsub.f32 1.0, %v1053
    %v1055 = vmul.f32 %v1052, %v1054
    %v1056 = vadd.f32 %v1052, %v1055
    %vm1057 = vweird.f32 %v967
    %vm1058 = vweird.f32 %v1052
    %vm1059 = vmor %vm1057, %vm1058
    %v1060 = vsel %vm1059, %v1052, %v1056
    %v1061 = vand.u32 2147483647, %v967
    %vm1062 = vcmp.eq.f32.partialorder %v1061, 8.507059e+37
    %v1063 = vand.u32 %v967, 2147483648
    %v1064 = vor.u32 1.1754944e-38, %v1063
    %v1065 = vsel %vm1062, %v1064, %v1060
    %v1066 = vmul.f32 %v908, %v1065
    %v1067 = vrcp.pop %v960
    %v1068 = vmul.f32 %v960, %v1067
    %v1069 = vsub.f32 1.0, %v1068
    %v1070 = vmul.f32 %v1067, %v1069
    %v1071 = vadd.f32 %v1067, %v1070
    %vm1072 = vweird.f32 %v960
    %vm1073 = vweird.f32 %v1067
    %vm1074 = vmor %vm1072, %vm1073
    %v1075 = vsel %vm1074, %v1067, %v1071
    %v1076 = vand.u32 2147483647, %v960
    %vm1077 = vcmp.eq.f32.partialorder %v1076, 8.507059e+37
    %v1078 = vand.u32 %v960, 2147483648
    %v1079 = vor.u32 1.1754944e-38, %v1078
    %v1080 = vsel %vm1077, %v1079, %v1075
    %v1081 = vmul.f32 %v910, %v1080
    %v1082 = vrcp.pop %v968
    %v1083 = vmul.f32 %v968, %v1082
    %v1084 = vsub.f32 1.0, %v1083
    %v1085 = vmul.f32 %v1082, %v1084
    %v1086 = vadd.f32 %v1082, %v1085
    %vm1087 = vweird.f32 %v968
    %vm1088 = vweird.f32 %v1082
    %vm1089 = vmor %vm1087, %vm1088
    %v1090 = vsel %vm1089, %v1082, %v1086
    %v1091 = vand.u32 2147483647, %v968
    %vm1092 = vcmp.eq.f32.partialorder %v1091, 8.507059e+37
    %v1093 = vand.u32 %v968, 2147483648
    %v1094 = vor.u32 1.1754944e-38, %v1093
    %v1095 = vsel %vm1092, %v1094, %v1090
    %v1096 = vmul.f32 %v912, %v1095
    %v1105 = vperm.slane %v991, 1
    %v1106 = vperm.slane %v1006, 1
    %v1107 = vperm.slane %v1021, 1
    %v1108 = vperm.slane %v1036, 1
    %v1109 = vperm.slane %v1051, 1
    %v1110 = vperm.slane %v1066, 1
    %v1111 = vperm.slane %v1081, 1
    %v1112 = vperm.slane %v1096, 1
    %v1113 = vsel %vm187, %v1106, %v1105
    %v1114 = vsel %vm189, %v1107, %v1113
    %v1115 = vsel %vm191, %v1108, %v1114
    %v1116 = vsel %vm193, %v1109, %v1115
    %v1117 = vsel %vm195, %v1110, %v1116
    %v1118 = vsel %vm197, %v1111, %v1117
    %v1119 = vsel %vm199, %v1112, %v1118
    %v1120 = vperm.slane %v166, 1
    %v1121 = vperm.slane %v173, 1
    %v1122 = vperm.slane %v174, 1
    %v1123 = vperm.slane %v175, 1
    %v1124 = vperm.slane %v169, 1
    %v1125 = vperm.slane %v176, 1
    %v1126 = vperm.slane %v177, 1
    %v1127 = vperm.slane %v178, 1
    %v1128 = vsel %vm187, %v1121, %v1120
    %v1129 = vsel %vm189, %v1122, %v1128
    %v1130 = vsel %vm191, %v1123, %v1129
    %v1131 = vsel %vm193, %v1124, %v1130
    %v1132 = vsel %vm195, %v1125, %v1131
    %v1133 = vsel %vm197, %v1126, %v1132
    %v1134 = vsel %vm199, %v1127, %v1133
    %1136 = vrot.lane.b32.xlu0 %v1134, 96
    %v1137 = vpop.permute.xlu0 %1136
    %v1139 = vsel %vm364, %v1119, 0
    %1141 = vmatpush.msra.mxu0 0.0
    %1142 = vmatpush.msra.mxu0 0.0
    %1143 = vmatpush.msra.mxu0 0.0
    %1144 = vmatpush.msra.mxu0 0.0
    %1145 = vmatpush.msra.mxu0 0.0
    %1146 = vmatpush.msra.mxu0 0.0
    %1147 = vmatpush.msra.mxu0 0.0
    %1148 = vmatpush.msra.mxu0 0.0
    %1149 = vmatpush.msra.mxu0 0.0
    %1150 = vmatpush.msra.mxu0 0.0
    %1151 = vmatpush.msra.mxu0 0.0
    %1152 = vmatpush.msra.mxu0 0.0
    %1153 = vmatpush.msra.mxu0 0.0
    %1154 = vmatpush.msra.mxu0 0.0
    %1155 = vmatpush.msra.mxu0 0.0
    %1156 = vmatpush.msra.mxu0 %v1134
    %1157 = vmatmul.f32.gmra.mxu0 %v1139
    %v1158 = vpop.f32.mrf.mxu0
    %v1159 = vadd.f32 %v1137, %v1158
    %1160 = vdwg.mxu0
    %v1161 = vld [vmem:[%s4] sm:$0x1]
    %v1163 = vperm.slane %v1161, 0
    %v1165 = vadd.f32 %v1159, %v1163
    %v1166 = vmax.f32 %v1165, 0.0
    %v1167 = vld [vmem:[%s5] sm:$0x1]
    %v1169 = vperm.slane %v1167, 0
    %v1171 = vmul.f32 %v1166, %v1169
    %v1172 = vsel %vm672, %v1171, 0.0
    %1173 = vadd.xlane.f32.xlu0 %v1172
    %v1174 = vpop.xlane.xlu0 %1173
    %v1175 = vld [vmem:[#allocation3] sm:$0x1]
    %v1177 = vperm.slane %v1175, 0
    %v1179 = vadd.f32 %v1174, %v1177
    %v1180 = vxor.u32 %v1179, 2147483648
    %v1181 = vmul.f32 %v1180, 1.442695
    %v1182 = vpow.pop %v1181
    %v1183 = vadd.f32 %v1182, 1.0
    %v1184 = vrcp.pop %v1183
    %v1185 = vmul.f32 %v1183, %v1184
    %v1186 = vsub.f32 1.0, %v1185
    %v1187 = vmul.f32 %v1184, %v1186
    %v1188 = vadd.f32 %v1184, %v1187
    %vm1189 = vweird.f32 %v1183
    %vm1190 = vweird.f32 %v1184
    %vm1191 = vmor %vm1189, %vm1190
    %v1192 = vsel %vm1191, %v1184, %v1188
    %v1193 = vand.u32 2147483647, %v1183
    %vm1194 = vcmp.eq.f32.partialorder %v1193, 8.507059e+37
    %v1195 = vand.u32 %v1183, 2147483648
    %v1196 = vor.u32 1.1754944e-38, %v1195
    %v1197 = vsel %vm1194, %v1196, %v1192
    %v1198 = vmul.f32 1.0, %v1197
    %1199 = vxpose.xlu0.b32.start [1/16] %v1198, 128
    %1200 = vxpose.xlu0.b32.cont [2/16] 0.0, 128
    %1201 = vxpose.xlu0.b32.cont [3/16] 0.0, 128
    %1202 = vxpose.xlu0.b32.cont [4/16] 0.0, 128
    %1203 = vxpose.xlu0.b32.cont [5/16] 0.0, 128
    %1204 = vxpose.xlu0.b32.cont [6/16] 0.0, 128
    %1205 = vxpose.xlu0.b32.cont [7/16] 0.0, 128
    %1206 = vxpose.xlu0.b32.cont [8/16] 0.0, 128
    %1207 = vxpose.xlu0.b32.cont [9/16] 0.0, 128
    %1208 = vxpose.xlu0.b32.cont [10/16] 0.0, 128
    %1209 = vxpose.xlu0.b32.cont [11/16] 0.0, 128
    %1210 = vxpose.xlu0.b32.cont [12/16] 0.0, 128
    %1211 = vxpose.xlu0.b32.cont [13/16] 0.0, 128
    %1212 = vxpose.xlu0.b32.cont [14/16] 0.0, 128
    %1213 = vxpose.xlu0.b32.cont [15/16] 0.0, 128
    %1214 = vxpose.xlu0.b32.end [16/16] 0.0, 128
    %v1215 = vpop.trf.xlu0
    %v1216 = vpop.trf.xlu0
    %v1217 = vpop.trf.xlu0
    %v1218 = vpop.trf.xlu0
    %v1219 = vpop.trf.xlu0
    %v1220 = vpop.trf.xlu0
    %v1221 = vpop.trf.xlu0
    %v1222 = vpop.trf.xlu0
    %v1223 = vpop.trf.xlu0
    %v1224 = vpop.trf.xlu0
    %v1225 = vpop.trf.xlu0
    %v1226 = vpop.trf.xlu0
    %v1227 = vpop.trf.xlu0
    %v1228 = vpop.trf.xlu0
    %v1229 = vpop.trf.xlu0
    %v1230 = vpop.trf.xlu0
    %s1231 = scalar_lea.vmem [#allocation4], 1
    %1232 = vst.msk [vmem:[%s1231] sm:$0x1] %vm732, %v1215
    // Predicated region
    $region30: #{seq2seq_with_attention.3} parent=1 // pred_check
      _
    $region31: #{seq2seq_with_attention.3} parent=1 // pred_check_branch
      %1234 = sbr.rel (0) target = $region33
    $region32: #{seq2seq_with_attention.3} parent=1 // pred_region
      %1236 = vsyncadd [#allocation5], 0
      %s1237 = sshll.u32 [#allocation4], 4
      %s1238 = int_to_ptr.vmem [resolvable:$true] %s1237
      %s1239 = sshll.u32 %s7, 4
      %s1240 = int_to_ptr.hbm [resolvable:$true] %s1239
      %1245 = dma.vmem_to_hbm [thread:$0]  %s1238, 32, %s1240, [#allocation5], 16, 16, 1
    $region33: #{seq2seq_with_attention.3} parent=1 // pred_fallthru
      _
    // Predicated region
    $region34: #{seq2seq_with_attention.3} parent=1 // pred_check
      _
    $region35: #{seq2seq_with_attention.3} parent=1 // pred_check_branch
      %1247 = sbr.rel (0) target = $region37
    $region36: #{seq2seq_with_attention.3} parent=1 // pred_region
      %1249 = dma.done [#allocation5], 32
    $region37: #{seq2seq_with_attention.3} parent=1 // pred_fallthru
      _
    %1250 = vsyncpa [#allocation5], 1

// kernel: seq2seq_with_attention.2
$region0: #{seq2seq_with_attention.2}
  #allocation0 [shape = 'u32[]', space=smem, size = 0x4, offset = 0x4, fixed_abs, tag = 'smem constant byte address 0x4 - core index']
  #allocation1 [shape = 'u32[72,128]{1,0:T(1,128)}', space=vmem, size = 0x9000, scoped, tag = 'internal scratch']
  #allocation2 [shape = 'f32[8,2,512]{2,1,0:T(2,128)}', space=vmem, size = 0x8000, scoped, tag = 'scratch operand']
  #allocation3 [shape = 'f32[8,2,128]{2,1,0:T(2,128)}', space=vmem, size = 0x2000, scoped, tag = 'scratch operand']
  %s0 = inlined_call_operand.vmem [shape: f32[8,2,16], index: 0, kind: input, shape index: {}]
  %s1 = inlined_call_operand.vmem [shape: f32[8,2,1], index: 1, kind: input, shape index: {}]
  %s2 = inlined_call_operand.vmem [shape: f32[16,512], index: 2, kind: input, shape index: {}]
  %s3 = inlined_call_operand.vmem [shape: f32[1,512], index: 3, kind: input, shape index: {}]
  %s4 = inlined_call_operand.vmem [shape: f32[128,512], index: 4, kind: input, shape index: {}]
  %s5 = inlined_call_operand.vmem [shape: f32[1,512], index: 5, kind: input, shape index: {}]
  %s6 = inlined_call_operand.vmem [shape: f32[64,256], index: 6, kind: input, shape index: {}]
  %s7 = inlined_call_operand.vmem [shape: f32[64,256], index: 7, kind: input, shape index: {}]
  %s8 = inlined_call_operand.vmem [shape: f32[64,256], index: 8, kind: input, shape index: {}]
  %s9 = inlined_call_operand.vmem [shape: f32[64,256], index: 9, kind: input, shape index: {}]
  %s10 = inlined_call_operand.vmem [shape: f32[8,2,128], index: 10, kind: output, shape index: {}]
  %s11 = sld [smem:[#allocation0]]
  $region50: #{seq2seq_with_attention.2} parent=0
    _
  %s13 = ssub.s32 1, %s11
  %s14 = scalar_select 0, %s13, %s11
  // Predicated region
  $region2: #{seq2seq_with_attention.2} parent=0 // pred_check
    _
  $region3: #{seq2seq_with_attention.2} parent=0 // pred_check_branch
    %16 = sbr.rel (0) target = $region5
  $region4: #{seq2seq_with_attention.2} parent=0 // pred_region
    _
  $region5: #{seq2seq_with_attention.2} parent=0 // pred_fallthru
    _
  // Predicated region
  $region6: #{seq2seq_with_attention.2} parent=0 // pred_check
    _
  $region7: #{seq2seq_with_attention.2} parent=0 // pred_check_branch
    %18 = sbr.rel (0) target = $region9
  $region8: #{seq2seq_with_attention.2} parent=0 // pred_region
    _
  $region9: #{seq2seq_with_attention.2} parent=0 // pred_fallthru
    _
  // Predicated region
  $region10: #{seq2seq_with_attention.2} parent=0 // pred_check
    _
  $region11: #{seq2seq_with_attention.2} parent=0 // pred_check_branch
    %20 = sbr.rel (0) target = $region13
  $region12: #{seq2seq_with_attention.2} parent=0 // pred_region
    _
  $region13: #{seq2seq_with_attention.2} parent=0 // pred_fallthru
    _
  // Predicated region
  $region14: #{seq2seq_with_attention.2} parent=0 // pred_check
    _
  $region15: #{seq2seq_with_attention.2} parent=0 // pred_check_branch
    %22 = sbr.rel (0) target = $region17
  $region16: #{seq2seq_with_attention.2} parent=0 // pred_region
    _
  $region17: #{seq2seq_with_attention.2} parent=0 // pred_fallthru
    _
  // Predicated region
  $region18: #{seq2seq_with_attention.2} parent=0 // pred_check
    _
  $region19: #{seq2seq_with_attention.2} parent=0 // pred_check_branch
    %24 = sbr.rel (0) target = $region21
  $region20: #{seq2seq_with_attention.2} parent=0 // pred_region
    _
  $region21: #{seq2seq_with_attention.2} parent=0 // pred_fallthru
    _
  // Predicated region
  $region22: #{seq2seq_with_attention.2} parent=0 // pred_check
    _
  $region23: #{seq2seq_with_attention.2} parent=0 // pred_check_branch
    %26 = sbr.rel (0) target = $region25
  $region24: #{seq2seq_with_attention.2} parent=0 // pred_region
    _
  $region25: #{seq2seq_with_attention.2} parent=0 // pred_fallthru
    _
  // Predicated region
  $region26: #{seq2seq_with_attention.2} parent=0 // pred_check
    _
  $region27: #{seq2seq_with_attention.2} parent=0 // pred_check_branch
    %28 = sbr.rel (0) target = $region29
  $region28: #{seq2seq_with_attention.2} parent=0 // pred_region
    _
  $region29: #{seq2seq_with_attention.2} parent=0 // pred_fallthru
    _
  // Predicated region
  $region30: #{seq2seq_with_attention.2} parent=0 // pred_check
    _
  $region31: #{seq2seq_with_attention.2} parent=0 // pred_check_branch
    %30 = sbr.rel (0) target = $region33
  $region32: #{seq2seq_with_attention.2} parent=0 // pred_region
    _
  $region33: #{seq2seq_with_attention.2} parent=0 // pred_fallthru
    _
  // Predicated region
  $region34: #{seq2seq_with_attention.2} parent=0 // pred_check
    _
  $region35: #{seq2seq_with_attention.2} parent=0 // pred_check_branch
    %32 = sbr.rel (0) target = $region37
  $region36: #{seq2seq_with_attention.2} parent=0 // pred_region
    _
  $region37: #{seq2seq_with_attention.2} parent=0 // pred_fallthru
    _
  // Predicated region
  $region38: #{seq2seq_with_attention.2} parent=0 // pred_check
    _
  $region39: #{seq2seq_with_attention.2} parent=0 // pred_check_branch
    %34 = sbr.rel (0) target = $region41
  $region40: #{seq2seq_with_attention.2} parent=0 // pred_region
    _
  $region41: #{seq2seq_with_attention.2} parent=0 // pred_fallthru
    _
  %v35 = vld [vmem:[%s0] sm:$0x3]
  %v36 = vld [vmem:[%s0 + $0x2] sm:$0x3]
  %v37 = vld [vmem:[%s0 + $0x4] sm:$0x3]
  %v38 = vld [vmem:[%s0 + $0x6] sm:$0x3]
  %v39 = vld [vmem:[%s0 + $0x8] sm:$0x3]
  %v40 = vld [vmem:[%s0 + $0xa] sm:$0x3]
  %v41 = vld [vmem:[%s0 + $0xc] sm:$0x3]
  %v42 = vld [vmem:[%s0 + $0xe] sm:$0x3]
  %v43 = vld [vmem:[%s2] sm:$0xff]
  %v44 = vld [vmem:[%s2 + $0x8] sm:$0xff]
  %v45 = vld [vmem:[%s2 + $0x10] sm:$0xff]
  %v46 = vld [vmem:[%s2 + $0x18] sm:$0xff]
  %v47 = vld [vmem:[%s2 + $0x20] sm:$0xff]
  %v48 = vld [vmem:[%s2 + $0x28] sm:$0xff]
  %v49 = vld [vmem:[%s2 + $0x30] sm:$0xff]
  %v50 = vld [vmem:[%s2 + $0x38] sm:$0xff]
  %v51 = vld [vmem:[%s3] sm:$0xf]
  %v53 = vperm.slane %v51, 0
  %v54 = vperm.slane %v51, 1
  %v55 = vperm.slane %v51, 2
  %v56 = vperm.slane %v51, 3
  %69 = vst [vmem:[#allocation1] ss:$4 sm:$0xff] %v35
  %s70 = scalar_lea.vmem [#allocation1], 1
  %71 = vst [vmem:[%s70] ss:$4 sm:$0xff] %v36
  %s72 = scalar_lea.vmem [#allocation1], 2
  %73 = vst [vmem:[%s72] ss:$4 sm:$0xff] %v37
  %s74 = scalar_lea.vmem [#allocation1], 3
  %75 = vst [vmem:[%s74] ss:$4 sm:$0xff] %v38
  %s76 = scalar_lea.vmem [#allocation1], 32
  %77 = vst [vmem:[%s76] ss:$4 sm:$0xff] %v39
  %s78 = scalar_lea.vmem [#allocation1], 33
  %79 = vst [vmem:[%s78] ss:$4 sm:$0xff] %v40
  %s80 = scalar_lea.vmem [#allocation1], 34
  %81 = vst [vmem:[%s80] ss:$4 sm:$0xff] %v41
  %s82 = scalar_lea.vmem [#allocation1], 35
  %83 = vst [vmem:[%s82] ss:$4 sm:$0xff] %v42
  %v84 = vld.sshfl [vmem:[#allocation1] sm:$0xff pattern:$0x73625140]
  %v85 = vld.sshfl [vmem:[#allocation1 + $0x20] sm:$0xff pattern:$0x73625140]
  %vm86 = vcmask 130048
  %v87 = vsel %vm86, %v84, 0
  %v89 = vsel %vm86, %v85, 0
  %91 = vmatpush.msra.mxu0 0.0
  %92 = vmatpush.msra.mxu0 0.0
  %93 = vmatpush.msra.mxu0 0.0
  %94 = vmatpush.msra.mxu0 0.0
  %95 = vmatpush.msra.mxu0 0.0
  %96 = vmatpush.msra.mxu0 0.0
  %97 = vmatpush.msra.mxu0 0.0
  %98 = vmatpush.msra.mxu0 0.0
  %99 = vmatpush.msra.mxu0 0.0
  %100 = vmatpush.msra.mxu0 0.0
  %101 = vmatpush.msra.mxu0 0.0
  %102 = vmatpush.msra.mxu0 0.0
  %103 = vmatpush.msra.mxu0 0.0
  %104 = vmatpush.msra.mxu0 0.0
  %105 = vmatpush.msra.mxu0 %v47
  %106 = vmatpush.msra.mxu0 %v43
  %107 = vmatmul.f32.gmra.mxu0 %v87
  %v108 = vpop.f32.mrf.mxu0
  %v109 = vadd.f32 %v53, %v108
  %110 = vmatmul.f32.gmra.mxu0 %v89
  %v111 = vpop.f32.mrf.mxu0
  %v112 = vadd.f32 %v53, %v111
  %113 = vdwg.mxu0
  %114 = vmatpush.msra.mxu0 0.0
  %115 = vmatpush.msra.mxu0 0.0
  %116 = vmatpush.msra.mxu0 0.0
  %117 = vmatpush.msra.mxu0 0.0
  %118 = vmatpush.msra.mxu0 0.0
  %119 = vmatpush.msra.mxu0 0.0
  %120 = vmatpush.msra.mxu0 0.0
  %121 = vmatpush.msra.mxu0 0.0
  %122 = vmatpush.msra.mxu0 0.0
  %123 = vmatpush.msra.mxu0 0.0
  %124 = vmatpush.msra.mxu0 0.0
  %125 = vmatpush.msra.mxu0 0.0
  %126 = vmatpush.msra.mxu0 0.0
  %127 = vmatpush.msra.mxu0 0.0
  %128 = vmatpush.msra.mxu0 %v48
  %129 = vmatpush.msra.mxu0 %v44
  %130 = vmatmul.f32.gmra.mxu0 %v87
  %v131 = vpop.f32.mrf.mxu0
  %v132 = vadd.f32 %v54, %v131
  %133 = vmatmul.f32.gmra.mxu0 %v89
  %v134 = vpop.f32.mrf.mxu0
  %v135 = vadd.f32 %v54, %v134
  %136 = vdwg.mxu0
  %137 = vmatpush.msra.mxu0 0.0
  %138 = vmatpush.msra.mxu0 0.0
  %139 = vmatpush.msra.mxu0 0.0
  %140 = vmatpush.msra.mxu0 0.0
  %141 = vmatpush.msra.mxu0 0.0
  %142 = vmatpush.msra.mxu0 0.0
  %143 = vmatpush.msra.mxu0 0.0
  %144 = vmatpush.msra.mxu0 0.0
  %145 = vmatpush.msra.mxu0 0.0
  %146 = vmatpush.msra.mxu0 0.0
  %147 = vmatpush.msra.mxu0 0.0
  %148 = vmatpush.msra.mxu0 0.0
  %149 = vmatpush.msra.mxu0 0.0
  %150 = vmatpush.msra.mxu0 0.0
  %151 = vmatpush.msra.mxu0 %v49
  %152 = vmatpush.msra.mxu0 %v45
  %153 = vmatmul.f32.gmra.mxu0 %v87
  %v154 = vpop.f32.mrf.mxu0
  %v155 = vadd.f32 %v55, %v154
  %156 = vmatmul.f32.gmra.mxu0 %v89
  %v157 = vpop.f32.mrf.mxu0
  %v158 = vadd.f32 %v55, %v157
  %159 = vdwg.mxu0
  %160 = vmatpush.msra.mxu0 0.0
  %161 = vmatpush.msra.mxu0 0.0
  %162 = vmatpush.msra.mxu0 0.0
  %163 = vmatpush.msra.mxu0 0.0
  %164 = vmatpush.msra.mxu0 0.0
  %165 = vmatpush.msra.mxu0 0.0
  %166 = vmatpush.msra.mxu0 0.0
  %167 = vmatpush.msra.mxu0 0.0
  %168 = vmatpush.msra.mxu0 0.0
  %169 = vmatpush.msra.mxu0 0.0
  %170 = vmatpush.msra.mxu0 0.0
  %171 = vmatpush.msra.mxu0 0.0
  %172 = vmatpush.msra.mxu0 0.0
  %173 = vmatpush.msra.mxu0 0.0
  %174 = vmatpush.msra.mxu0 %v50
  %175 = vmatpush.msra.mxu0 %v46
  %176 = vmatmul.f32.gmra.mxu0 %v87
  %v177 = vpop.f32.mrf.mxu0
  %v178 = vadd.f32 %v56, %v177
  %179 = vmatmul.f32.gmra.mxu0 %v89
  %v180 = vpop.f32.mrf.mxu0
  %v181 = vadd.f32 %v56, %v180
  %182 = vdwg.mxu0
  %v191 = vrot.slane %v132, 6
  %v192 = vrot.slane %v155, 4
  %v193 = vrot.slane %v178, 2
  %v194 = vrot.slane %v135, 6
  %v195 = vrot.slane %v158, 4
  %v196 = vrot.slane %v181, 2
  %vm197 = vcmask 1041408
  %v198 = vsel %vm197, %v109, %v191
  %vm199 = vcmask 1045508
  %v200 = vsel %vm199, %v192, %v193
  %vm201 = vcmask 1043456
  %v202 = vsel %vm201, %v198, %v200
  %vm203 = vcmask 1043458
  %v204 = vsel %vm203, %v109, %v191
  %vm205 = vcmask 1045504
  %v206 = vsel %vm205, %v193, %v192
  %vm207 = vcmask 1045506
  %v208 = vsel %vm207, %v204, %v206
  %v209 = vrot.slane %v208, 2
  %v210 = vsel %vm199, %v109, %v191
  %v211 = vsel %vm197, %v192, %v193
  %v212 = vsel %vm201, %v211, %v210
  %v213 = vrot.slane %v212, 4
  %v214 = vsel %vm205, %v191, %v109
  %v215 = vsel %vm203, %v192, %v193
  %v216 = vsel %vm207, %v215, %v214
  %v217 = vrot.slane %v216, 6
  %v218 = vsel %vm197, %v112, %v194
  %v219 = vsel %vm199, %v195, %v196
  %v220 = vsel %vm201, %v218, %v219
  %v221 = vsel %vm203, %v112, %v194
  %v222 = vsel %vm205, %v196, %v195
  %v223 = vsel %vm207, %v221, %v222
  %v224 = vrot.slane %v223, 2
  %v225 = vsel %vm199, %v112, %v194
  %v226 = vsel %vm197, %v195, %v196
  %v227 = vsel %vm201, %v226, %v225
  %v228 = vrot.slane %v227, 4
  %v229 = vsel %vm205, %v194, %v112
  %v230 = vsel %vm203, %v195, %v196
  %v231 = vsel %vm207, %v230, %v229
  %v232 = vrot.slane %v231, 6
  %241 = vst [vmem:[#allocation2] sm:$0xff] %v202
  %242 = vst [vmem:[#allocation2 + $0x8] sm:$0xff] %v209
  %243 = vst [vmem:[#allocation2 + $0x10] sm:$0xff] %v213
  %244 = vst [vmem:[#allocation2 + $0x18] sm:$0xff] %v217
  %245 = vst [vmem:[#allocation2 + $0x20] sm:$0xff] %v220
  %246 = vst [vmem:[#allocation2 + $0x28] sm:$0xff] %v224
  %247 = vst [vmem:[#allocation2 + $0x30] sm:$0xff] %v228
  %248 = vst [vmem:[#allocation2 + $0x38] sm:$0xff] %v232
  %v249 = vld [vmem:[%s6] sm:$0xff]
  %v250 = vld [vmem:[%s6 + $0x8] sm:$0xff]
  %v251 = vld [vmem:[%s6 + $0x10] sm:$0xff]
  %v252 = vld [vmem:[%s6 + $0x18] sm:$0xff]
  %v253 = vld [vmem:[%s6 + $0x20] sm:$0xff]
  %v254 = vld [vmem:[%s6 + $0x28] sm:$0xff]
  %v255 = vld [vmem:[%s6 + $0x30] sm:$0xff]
  %v256 = vld [vmem:[%s6 + $0x38] sm:$0xff]
  %v257 = vld [vmem:[%s6 + $0x40] sm:$0xff]
  %v258 = vld [vmem:[%s6 + $0x48] sm:$0xff]
  %v259 = vld [vmem:[%s6 + $0x50] sm:$0xff]
  %v260 = vld [vmem:[%s6 + $0x58] sm:$0xff]
  %v261 = vld [vmem:[%s6 + $0x60] sm:$0xff]
  %v262 = vld [vmem:[%s6 + $0x68] sm:$0xff]
  %v263 = vld [vmem:[%s6 + $0x70] sm:$0xff]
  %v264 = vld [vmem:[%s6 + $0x78] sm:$0xff]
  %v265 = vld [vmem:[%s7] sm:$0xff]
  %v266 = vld [vmem:[%s7 + $0x8] sm:$0xff]
  %v267 = vld [vmem:[%s7 + $0x10] sm:$0xff]
  %v268 = vld [vmem:[%s7 + $0x18] sm:$0xff]
  %v269 = vld [vmem:[%s7 + $0x20] sm:$0xff]
  %v270 = vld [vmem:[%s7 + $0x28] sm:$0xff]
  %v271 = vld [vmem:[%s7 + $0x30] sm:$0xff]
  %v272 = vld [vmem:[%s7 + $0x38] sm:$0xff]
  %v273 = vld [vmem:[%s7 + $0x40] sm:$0xff]
  %v274 = vld [vmem:[%s7 + $0x48] sm:$0xff]
  %v275 = vld [vmem:[%s7 + $0x50] sm:$0xff]
  %v276 = vld [vmem:[%s7 + $0x58] sm:$0xff]
  %v277 = vld [vmem:[%s7 + $0x60] sm:$0xff]
  %v278 = vld [vmem:[%s7 + $0x68] sm:$0xff]
  %v279 = vld [vmem:[%s7 + $0x70] sm:$0xff]
  %v280 = vld [vmem:[%s7 + $0x78] sm:$0xff]
  %v281 = vld [vmem:[#allocation2] sm:$0xf]
  %vm282 = vcmask 523264
  %v284 = vsel %vm282, 0.0, 0
  %286 = vmatpush.msra.mxu0 0.0
  %287 = vmatpush.msra.mxu0 0.0
  %288 = vmatpush.msra.mxu0 0.0
  %289 = vmatpush.msra.mxu0 0.0
  %290 = vmatpush.msra.mxu0 0.0
  %291 = vmatpush.msra.mxu0 0.0
  %292 = vmatpush.msra.mxu0 0.0
  %293 = vmatpush.msra.mxu0 0.0
  %294 = vmatpush.msra.mxu0 %v263
  %295 = vmatpush.msra.mxu0 %v261
  %296 = vmatpush.msra.mxu0 %v259
  %297 = vmatpush.msra.mxu0 %v257
  %298 = vmatpush.msra.mxu0 %v255
  %299 = vmatpush.msra.mxu0 %v253
  %300 = vmatpush.msra.mxu0 %v251
  %301 = vmatpush.msra.mxu0 %v249
  %302 = vmatmul.f32.gmra.mxu0 %v284
  %v303 = vpop.f32.mrf.mxu0
  %v304 = vadd.f32 0.0, %v303
  %305 = vdwg.mxu0
  %306 = vmatpush.msra.mxu0 0.0
  %307 = vmatpush.msra.mxu0 0.0
  %308 = vmatpush.msra.mxu0 0.0
  %309 = vmatpush.msra.mxu0 0.0
  %310 = vmatpush.msra.mxu0 0.0
  %311 = vmatpush.msra.mxu0 0.0
  %312 = vmatpush.msra.mxu0 0.0
  %313 = vmatpush.msra.mxu0 0.0
  %314 = vmatpush.msra.mxu0 %v264
  %315 = vmatpush.msra.mxu0 %v262
  %316 = vmatpush.msra.mxu0 %v260
  %317 = vmatpush.msra.mxu0 %v258
  %318 = vmatpush.msra.mxu0 %v256
  %319 = vmatpush.msra.mxu0 %v254
  %320 = vmatpush.msra.mxu0 %v252
  %321 = vmatpush.msra.mxu0 %v250
  %322 = vmatmul.f32.gmra.mxu0 %v284
  %v323 = vpop.f32.mrf.mxu0
  %v324 = vadd.f32 0.0, %v323
  %325 = vdwg.mxu0
  %v328 = vrot.slane %v324, 6
  %v329 = vsel %vm197, %v304, %v328
  %v331 = vadd.f32 %v281, %v329
  %s332 = scalar_lea.vmem [#allocation2], 56
  %v333 = vld [vmem:[%s332 + $0x4] sm:$0xf]
  %334 = vmatpush.msra.mxu0 0.0
  %335 = vmatpush.msra.mxu0 0.0
  %336 = vmatpush.msra.mxu0 0.0
  %337 = vmatpush.msra.mxu0 0.0
  %338 = vmatpush.msra.mxu0 0.0
  %339 = vmatpush.msra.mxu0 0.0
  %340 = vmatpush.msra.mxu0 0.0
  %341 = vmatpush.msra.mxu0 0.0
  %342 = vmatpush.msra.mxu0 %v279
  %343 = vmatpush.msra.mxu0 %v277
  %344 = vmatpush.msra.mxu0 %v275
  %345 = vmatpush.msra.mxu0 %v273
  %346 = vmatpush.msra.mxu0 %v271
  %347 = vmatpush.msra.mxu0 %v269
  %348 = vmatpush.msra.mxu0 %v267
  %349 = vmatpush.msra.mxu0 %v265
  %350 = vmatmul.f32.gmra.mxu0 %v284
  %v351 = vpop.f32.mrf.mxu0
  %v352 = vadd.f32 0.0, %v351
  %353 = vdwg.mxu0
  %354 = vmatpush.msra.mxu0 0.0
  %355 = vmatpush.msra.mxu0 0.0
  %356 = vmatpush.msra.mxu0 0.0
  %357 = vmatpush.msra.mxu0 0.0
  %358 = vmatpush.msra.mxu0 0.0
  %359 = vmatpush.msra.mxu0 0.0
  %360 = vmatpush.msra.mxu0 0.0
  %361 = vmatpush.msra.mxu0 0.0
  %362 = vmatpush.msra.mxu0 %v280
  %363 = vmatpush.msra.mxu0 %v278
  %364 = vmatpush.msra.mxu0 %v276
  %365 = vmatpush.msra.mxu0 %v274
  %366 = vmatpush.msra.mxu0 %v272
  %367 = vmatpush.msra.mxu0 %v270
  %368 = vmatpush.msra.mxu0 %v268
  %369 = vmatpush.msra.mxu0 %v266
  %370 = vmatmul.f32.gmra.mxu0 %v284
  %v371 = vpop.f32.mrf.mxu0
  %v372 = vadd.f32 0.0, %v371
  %373 = vdwg.mxu0
  %v376 = vrot.slane %v372, 6
  %v377 = vsel %vm197, %v352, %v376
  %v379 = vadd.f32 %v333, %v377
  %v380 = vxor.u32 %v331, 2147483648
  %v381 = vmul.f32 %v380, 1.442695
  %v382 = vpow.pop %v381
  %v383 = vadd.f32 %v382, 1.0
  %v384 = vrcp.pop %v383
  %v385 = vmul.f32 %v383, %v384
  %v386 = vsub.f32 1.0, %v385
  %v387 = vmul.f32 %v384, %v386
  %v388 = vadd.f32 %v384, %v387
  %vm389 = vweird.f32 %v383
  %vm390 = vweird.f32 %v384
  %vm391 = vmor %vm389, %vm390
  %v392 = vsel %vm391, %v384, %v388
  %v393 = vand.u32 2147483647, %v383
  %vm394 = vcmp.eq.f32.partialorder %v393, 8.507059e+37
  %v395 = vand.u32 %v383, 2147483648
  %v396 = vor.u32 1.1754944e-38, %v395
  %v397 = vsel %vm394, %v396, %v392
  %v398 = vmul.f32 1.0, %v397
  %v400 = vrot.slane %v331, 2
  %v402 = vtanh.pop %v400
  %403 = vrot.lane.b32.xlu0 %v331, 64
  %v404 = vpop.permute.xlu0 %403
  %v405 = vrot.slane %v404, 2
  %v407 = vxor.u32 %v405, 2147483648
  %v408 = vmul.f32 %v407, 1.442695
  %v409 = vpow.pop %v408
  %v410 = vadd.f32 %v409, 1.0
  %v411 = vrcp.pop %v410
  %v412 = vmul.f32 %v410, %v411
  %v413 = vsub.f32 1.0, %v412
  %v414 = vmul.f32 %v411, %v413
  %v415 = vadd.f32 %v411, %v414
  %vm416 = vweird.f32 %v410
  %vm417 = vweird.f32 %v411
  %vm418 = vmor %vm416, %vm417
  %v419 = vsel %vm418, %v411, %v415
  %v420 = vand.u32 2147483647, %v410
  %vm421 = vcmp.eq.f32.partialorder %v420, 8.507059e+37
  %v422 = vand.u32 %v410, 2147483648
  %v423 = vor.u32 1.1754944e-38, %v422
  %v424 = vsel %vm421, %v423, %v419
  %v425 = vmul.f32 1.0, %v424
  %v426 = vmul.f32 %v398, 0.0
  %v427 = vmul.f32 %v398, %v402
  %429 = vrot.lane.b32.xlu0 %v427, 64
  %v430 = vpop.permute.xlu0 %429
  %v432 = vadd.f32 %v426, %v430
  %v433 = vtanh.pop %v432
  %435 = vrot.lane.b32.xlu0 %v433, 64
  %v436 = vpop.permute.xlu0 %435
  %v438 = vmul.f32 %v425, %v436
  %v439 = vxor.u32 %v379, 2147483648
  %v440 = vmul.f32 %v439, 1.442695
  %v441 = vpow.pop %v440
  %v442 = vadd.f32 %v441, 1.0
  %v443 = vrcp.pop %v442
  %v444 = vmul.f32 %v442, %v443
  %v445 = vsub.f32 1.0, %v444
  %v446 = vmul.f32 %v443, %v445
  %v447 = vadd.f32 %v443, %v446
  %vm448 = vweird.f32 %v442
  %vm449 = vweird.f32 %v443
  %vm450 = vmor %vm448, %vm449
  %v451 = vsel %vm450, %v443, %v447
  %v452 = vand.u32 2147483647, %v442
  %vm453 = vcmp.eq.f32.partialorder %v452, 8.507059e+37
  %v454 = vand.u32 %v442, 2147483648
  %v455 = vor.u32 1.1754944e-38, %v454
  %v456 = vsel %vm453, %v455, %v451
  %v457 = vmul.f32 1.0, %v456
  %v459 = vrot.slane %v379, 2
  %v461 = vtanh.pop %v459
  %462 = vrot.lane.b32.xlu0 %v379, 64
  %v463 = vpop.permute.xlu0 %462
  %v464 = vrot.slane %v463, 2
  %v466 = vxor.u32 %v464, 2147483648
  %v467 = vmul.f32 %v466, 1.442695
  %v468 = vpow.pop %v467
  %v469 = vadd.f32 %v468, 1.0
  %v470 = vrcp.pop %v469
  %v471 = vmul.f32 %v469, %v470
  %v472 = vsub.f32 1.0, %v471
  %v473 = vmul.f32 %v470, %v472
  %v474 = vadd.f32 %v470, %v473
  %vm475 = vweird.f32 %v469
  %vm476 = vweird.f32 %v470
  %vm477 = vmor %vm475, %vm476
  %v478 = vsel %vm477, %v470, %v474
  %v479 = vand.u32 2147483647, %v469
  %vm480 = vcmp.eq.f32.partialorder %v479, 8.507059e+37
  %v481 = vand.u32 %v469, 2147483648
  %v482 = vor.u32 1.1754944e-38, %v481
  %v483 = vsel %vm480, %v482, %v478
  %v484 = vmul.f32 1.0, %v483
  %v485 = vmul.f32 %v457, 0.0
  %v486 = vmul.f32 %v457, %v461
  %488 = vrot.lane.b32.xlu0 %v486, 64
  %v489 = vpop.permute.xlu0 %488
  %v491 = vadd.f32 %v485, %v489
  %v492 = vtanh.pop %v491
  %494 = vrot.lane.b32.xlu0 %v492, 64
  %v495 = vpop.permute.xlu0 %494
  %v497 = vmul.f32 %v484, %v495
  %v498 = vld [vmem:[%s1] sm:$0x3]
  %s499 = scalar_lea.vmem %s1, 14
  %v500 = vld [vmem:[%s499] sm:$0x3]
  %v501 = vsub.f32 1.0, %v498
  %v502 = vsub.f32 1.0, %v500
  %504 = vset.pattern.permute.xlu0 0
  %505 = vperm.xlu0 %504, %v498
  %v506 = vpop.permute.xlu0 %505
  %v508 = vmul.f32 %v438, %v506
  %510 = vset.pattern.permute.xlu0 0
  %511 = vperm.xlu0 %510, %v500
  %v512 = vpop.permute.xlu0 %511
  %v514 = vmul.f32 %v497, %v512
  %vm515 = vcmask 517120
  %516 = vst.msk [vmem:[#allocation3] sm:$0x3] %vm515, %v508
  %518 = vst [vmem:[#allocation1] ss:$4 sm:$0xff] %v514
  %v519 = vld.sshfl [vmem:[#allocation1] sm:$0xff pattern:$0x73625140]
  %520 = vrot.lane.b32.xlu0 %v519, 64
  %v521 = vpop.permute.xlu0 %520
  %s523 = scalar_lea.vmem [#allocation3], 14
  %vm524 = vcmask 1041920
  %525 = vst.msk [vmem:[%s523] sm:$0x3] %vm524, %v521
  %527 = vset.pattern.permute.xlu0 0
  %528 = vperm.xlu0 %527, %v501
  %v529 = vpop.permute.xlu0 %528
  %v531 = vmul.f32 %v529, 0.0
  %v532 = vadd.f32 %v508, %v531
  %v533 = vmul.f32 %v432, %v506
  %v534 = vadd.f32 %v533, %v531
  %536 = vset.pattern.permute.xlu0 0
  %537 = vperm.xlu0 %536, %v502
  %v538 = vpop.permute.xlu0 %537
  %v540 = vmul.f32 %v538, 0.0
  %v541 = vadd.f32 %v514, %v540
  %v542 = vmul.f32 %v491, %v512
  %v543 = vadd.f32 %v542, %v540
  %s544 = scalar_lea.vmem [#allocation2], 8
  %v545 = vld [vmem:[%s544] sm:$0xf]
  %v547 = vsel %vm282, %v532, 0
  %549 = vmatpush.msra.mxu0 0.0
  %550 = vmatpush.msra.mxu0 0.0
  %551 = vmatpush.msra.mxu0 0.0
  %552 = vmatpush.msra.mxu0 0.0
  %553 = vmatpush.msra.mxu0 0.0
  %554 = vmatpush.msra.mxu0 0.0
  %555 = vmatpush.msra.mxu0 0.0
  %556 = vmatpush.msra.mxu0 0.0
  %557 = vmatpush.msra.mxu0 %v263
  %558 = vmatpush.msra.mxu0 %v261
  %559 = vmatpush.msra.mxu0 %v259
  %560 = vmatpush.msra.mxu0 %v257
  %561 = vmatpush.msra.mxu0 %v255
  %562 = vmatpush.msra.mxu0 %v253
  %563 = vmatpush.msra.mxu0 %v251
  %564 = vmatpush.msra.mxu0 %v249
  %565 = vmatmul.f32.gmra.mxu0 %v547
  %v566 = vpop.f32.mrf.mxu0
  %v567 = vadd.f32 0.0, %v566
  %568 = vdwg.mxu0
  %569 = vmatpush.msra.mxu0 0.0
  %570 = vmatpush.msra.mxu0 0.0
  %571 = vmatpush.msra.mxu0 0.0
  %572 = vmatpush.msra.mxu0 0.0
  %573 = vmatpush.msra.mxu0 0.0
  %574 = vmatpush.msra.mxu0 0.0
  %575 = vmatpush.msra.mxu0 0.0
  %576 = vmatpush.msra.mxu0 0.0
  %577 = vmatpush.msra.mxu0 %v264
  %578 = vmatpush.msra.mxu0 %v262
  %579 = vmatpush.msra.mxu0 %v260
  %580 = vmatpush.msra.mxu0 %v258
  %581 = vmatpush.msra.mxu0 %v256
  %582 = vmatpush.msra.mxu0 %v254
  %583 = vmatpush.msra.mxu0 %v252
  %584 = vmatpush.msra.mxu0 %v250
  %585 = vmatmul.f32.gmra.mxu0 %v547
  %v586 = vpop.f32.mrf.mxu0
  %v587 = vadd.f32 0.0, %v586
  %588 = vdwg.mxu0
  %v591 = vrot.slane %v587, 6
  %v592 = vsel %vm197, %v567, %v591
  %v594 = vadd.f32 %v545, %v592
  %s595 = scalar_lea.vmem [#allocation2], 48
  %v596 = vld [vmem:[%s595 + $0x4] sm:$0xf]
  %v598 = vsel %vm282, %v541, 0
  %600 = vmatpush.msra.mxu0 0.0
  %601 = vmatpush.msra.mxu0 0.0
  %602 = vmatpush.msra.mxu0 0.0
  %603 = vmatpush.msra.mxu0 0.0
  %604 = vmatpush.msra.mxu0 0.0
  %605 = vmatpush.msra.mxu0 0.0
  %606 = vmatpush.msra.mxu0 0.0
  %607 = vmatpush.msra.mxu0 0.0
  %608 = vmatpush.msra.mxu0 %v279
  %609 = vmatpush.msra.mxu0 %v277
  %610 = vmatpush.msra.mxu0 %v275
  %611 = vmatpush.msra.mxu0 %v273
  %612 = vmatpush.msra.mxu0 %v271
  %613 = vmatpush.msra.mxu0 %v269
  %614 = vmatpush.msra.mxu0 %v267
  %615 = vmatpush.msra.mxu0 %v265
  %616 = vmatmul.f32.gmra.mxu0 %v598
  %v617 = vpop.f32.mrf.mxu0
  %v618 = vadd.f32 0.0, %v617
  %619 = vdwg.mxu0
  %620 = vmatpush.msra.mxu0 0.0
  %621 = vmatpush.msra.mxu0 0.0
  %622 = vmatpush.msra.mxu0 0.0
  %623 = vmatpush.msra.mxu0 0.0
  %624 = vmatpush.msra.mxu0 0.0
  %625 = vmatpush.msra.mxu0 0.0
  %626 = vmatpush.msra.mxu0 0.0
  %627 = vmatpush.msra.mxu0 0.0
  %628 = vmatpush.msra.mxu0 %v280
  %629 = vmatpush.msra.mxu0 %v278
  %630 = vmatpush.msra.mxu0 %v276
  %631 = vmatpush.msra.mxu0 %v274
  %632 = vmatpush.msra.mxu0 %v272
  %633 = vmatpush.msra.mxu0 %v270
  %634 = vmatpush.msra.mxu0 %v268
  %635 = vmatpush.msra.mxu0 %v266
  %636 = vmatmul.f32.gmra.mxu0 %v598
  %v637 = vpop.f32.mrf.mxu0
  %v638 = vadd.f32 0.0, %v637
  %639 = vdwg.mxu0
  %v642 = vrot.slane %v638, 6
  %v643 = vsel %vm197, %v618, %v642
  %v645 = vadd.f32 %v596, %v643
  %v646 = vxor.u32 %v594, 2147483648
  %v647 = vmul.f32 %v646, 1.442695
  %v648 = vpow.pop %v647
  %v649 = vadd.f32 %v648, 1.0
  %v650 = vrcp.pop %v649
  %v651 = vmul.f32 %v649, %v650
  %v652 = vsub.f32 1.0, %v651
  %v653 = vmul.f32 %v650, %v652
  %v654 = vadd.f32 %v650, %v653
  %vm655 = vweird.f32 %v649
  %vm656 = vweird.f32 %v650
  %vm657 = vmor %vm655, %vm656
  %v658 = vsel %vm657, %v650, %v654
  %v659 = vand.u32 2147483647, %v649
  %vm660 = vcmp.eq.f32.partialorder %v659, 8.507059e+37
  %v661 = vand.u32 %v649, 2147483648
  %v662 = vor.u32 1.1754944e-38, %v661
  %v663 = vsel %vm660, %v662, %v658
  %v664 = vmul.f32 1.0, %v663
  %v666 = vrot.slane %v594, 2
  %v668 = vtanh.pop %v666
  %669 = vrot.lane.b32.xlu0 %v594, 64
  %v670 = vpop.permute.xlu0 %669
  %v671 = vrot.slane %v670, 2
  %v673 = vxor.u32 %v671, 2147483648
  %v674 = vmul.f32 %v673, 1.442695
  %v675 = vpow.pop %v674
  %v676 = vadd.f32 %v675, 1.0
  %v677 = vrcp.pop %v676
  %v678 = vmul.f32 %v676, %v677
  %v679 = vsub.f32 1.0, %v678
  %v680 = vmul.f32 %v677, %v679
  %v681 = vadd.f32 %v677, %v680
  %vm682 = vweird.f32 %v676
  %vm683 = vweird.f32 %v677
  %vm684 = vmor %vm682, %vm683
  %v685 = vsel %vm684, %v677, %v681
  %v686 = vand.u32 2147483647, %v676
  %vm687 = vcmp.eq.f32.partialorder %v686, 8.507059e+37
  %v688 = vand.u32 %v676, 2147483648
  %v689 = vor.u32 1.1754944e-38, %v688
  %v690 = vsel %vm687, %v689, %v685
  %v691 = vmul.f32 1.0, %v690
  %v692 = vmul.f32 %v664, %v534
  %v693 = vmul.f32 %v664, %v668
  %695 = vrot.lane.b32.xlu0 %v693, 64
  %v696 = vpop.permute.xlu0 %695
  %v698 = vadd.f32 %v692, %v696
  %v699 = vtanh.pop %v698
  %701 = vrot.lane.b32.xlu0 %v699, 64
  %v702 = vpop.permute.xlu0 %701
  %v704 = vmul.f32 %v691, %v702
  %v705 = vxor.u32 %v645, 2147483648
  %v706 = vmul.f32 %v705, 1.442695
  %v707 = vpow.pop %v706
  %v708 = vadd.f32 %v707, 1.0
  %v709 = vrcp.pop %v708
  %v710 = vmul.f32 %v708, %v709
  %v711 = vsub.f32 1.0, %v710
  %v712 = vmul.f32 %v709, %v711
  %v713 = vadd.f32 %v709, %v712
  %vm714 = vweird.f32 %v708
  %vm715 = vweird.f32 %v709
  %vm716 = vmor %vm714, %vm715
  %v717 = vsel %vm716, %v709, %v713
  %v718 = vand.u32 2147483647, %v708
  %vm719 = vcmp.eq.f32.partialorder %v718, 8.507059e+37
  %v720 = vand.u32 %v708, 2147483648
  %v721 = vor.u32 1.1754944e-38, %v720
  %v722 = vsel %vm719, %v721, %v717
  %v723 = vmul.f32 1.0, %v722
  %v725 = vrot.slane %v645, 2
  %v727 = vtanh.pop %v725
  %728 = vrot.lane.b32.xlu0 %v645, 64
  %v729 = vpop.permute.xlu0 %728
  %v730 = vrot.slane %v729, 2
  %v732 = vxor.u32 %v730, 2147483648
  %v733 = vmul.f32 %v732, 1.442695
  %v734 = vpow.pop %v733
  %v735 = vadd.f32 %v734, 1.0
  %v736 = vrcp.pop %v735
  %v737 = vmul.f32 %v735, %v736
  %v738 = vsub.f32 1.0, %v737
  %v739 = vmul.f32 %v736, %v738
  %v740 = vadd.f32 %v736, %v739
  %vm741 = vweird.f32 %v735
  %vm742 = vweird.f32 %v736
  %vm743 = vmor %vm741, %vm742
  %v744 = vsel %vm743, %v736, %v740
  %v745 = vand.u32 2147483647, %v735
  %vm746 = vcmp.eq.f32.partialorder %v745, 8.507059e+37
  %v747 = vand.u32 %v735, 2147483648
  %v748 = vor.u32 1.1754944e-38, %v747
  %v749 = vsel %vm746, %v748, %v744
  %v750 = vmul.f32 1.0, %v749
  %v751 = vmul.f32 %v723, %v543
  %v752 = vmul.f32 %v723, %v727
  %754 = vrot.lane.b32.xlu0 %v752, 64
  %v755 = vpop.permute.xlu0 %754
  %v757 = vadd.f32 %v751, %v755
  %v758 = vtanh.pop %v757
  %760 = vrot.lane.b32.xlu0 %v758, 64
  %v761 = vpop.permute.xlu0 %760
  %v763 = vmul.f32 %v750, %v761
  %s764 = scalar_lea.vmem %s1, 2
  %v765 = vld [vmem:[%s764] sm:$0x3]
  %s766 = scalar_lea.vmem %s1, 12
  %v767 = vld [vmem:[%s766] sm:$0x3]
  %v768 = vsub.f32 1.0, %v765
  %v769 = vsub.f32 1.0, %v767
  %771 = vset.pattern.permute.xlu0 0
  %772 = vperm.xlu0 %771, %v765
  %v773 = vpop.permute.xlu0 %772
  %v775 = vmul.f32 %v704, %v773
  %777 = vset.pattern.permute.xlu0 0
  %778 = vperm.xlu0 %777, %v767
  %v779 = vpop.permute.xlu0 %778
  %v781 = vmul.f32 %v763, %v779
  %s782 = scalar_lea.vmem [#allocation3], 2
  %783 = vst.msk [vmem:[%s782] sm:$0x3] %vm515, %v775
  %785 = vst [vmem:[#allocation1] ss:$4 sm:$0xff] %v781
  %v786 = vld.sshfl [vmem:[#allocation1] sm:$0xff pattern:$0x73625140]
  %787 = vrot.lane.b32.xlu0 %v786, 64
  %v788 = vpop.permute.xlu0 %787
  %s790 = scalar_lea.vmem [#allocation3], 12
  %791 = vst.msk [vmem:[%s790] sm:$0x3] %vm524, %v788
  %793 = vset.pattern.permute.xlu0 0
  %794 = vperm.xlu0 %793, %v768
  %v795 = vpop.permute.xlu0 %794
  %v797 = vmul.f32 %v532, %v795
  %v798 = vadd.f32 %v775, %v797
  %v799 = vmul.f32 %v698, %v773
  %v800 = vmul.f32 %v534, %v795
  %v801 = vadd.f32 %v799, %v800
  %803 = vset.pattern.permute.xlu0 0
  %804 = vperm.xlu0 %803, %v769
  %v805 = vpop.permute.xlu0 %804
  %v807 = vmul.f32 %v541, %v805
  %v808 = vadd.f32 %v781, %v807
  %v809 = vmul.f32 %v757, %v779
  %v810 = vmul.f32 %v543, %v805
  %v811 = vadd.f32 %v809, %v810
  %s812 = scalar_lea.vmem [#allocation2], 16
  %v813 = vld [vmem:[%s812] sm:$0xf]
  %v815 = vsel %vm282, %v798, 0
  %817 = vmatpush.msra.mxu0 0.0
  %818 = vmatpush.msra.mxu0 0.0
  %819 = vmatpush.msra.mxu0 0.0
  %820 = vmatpush.msra.mxu0 0.0
  %821 = vmatpush.msra.mxu0 0.0
  %822 = vmatpush.msra.mxu0 0.0
  %823 = vmatpush.msra.mxu0 0.0
  %824 = vmatpush.msra.mxu0 0.0
  %825 = vmatpush.msra.mxu0 %v263
  %826 = vmatpush.msra.mxu0 %v261
  %827 = vmatpush.msra.mxu0 %v259
  %828 = vmatpush.msra.mxu0 %v257
  %829 = vmatpush.msra.mxu0 %v255
  %830 = vmatpush.msra.mxu0 %v253
  %831 = vmatpush.msra.mxu0 %v251
  %832 = vmatpush.msra.mxu0 %v249
  %833 = vmatmul.f32.gmra.mxu0 %v815
  %v834 = vpop.f32.mrf.mxu0
  %v835 = vadd.f32 0.0, %v834
  %836 = vdwg.mxu0
  %837 = vmatpush.msra.mxu0 0.0
  %838 = vmatpush.msra.mxu0 0.0
  %839 = vmatpush.msra.mxu0 0.0
  %840 = vmatpush.msra.mxu0 0.0
  %841 = vmatpush.msra.mxu0 0.0
  %842 = vmatpush.msra.mxu0 0.0
  %843 = vmatpush.msra.mxu0 0.0
  %844 = vmatpush.msra.mxu0 0.0
  %845 = vmatpush.msra.mxu0 %v264
  %846 = vmatpush.msra.mxu0 %v262
  %847 = vmatpush.msra.mxu0 %v260
  %848 = vmatpush.msra.mxu0 %v258
  %849 = vmatpush.msra.mxu0 %v256
  %850 = vmatpush.msra.mxu0 %v254
  %851 = vmatpush.msra.mxu0 %v252
  %852 = vmatpush.msra.mxu0 %v250
  %853 = vmatmul.f32.gmra.mxu0 %v815
  %v854 = vpop.f32.mrf.mxu0
  %v855 = vadd.f32 0.0, %v854
  %856 = vdwg.mxu0
  %v859 = vrot.slane %v855, 6
  %v860 = vsel %vm197, %v835, %v859
  %v862 = vadd.f32 %v813, %v860
  %s863 = scalar_lea.vmem [#allocation2], 40
  %v864 = vld [vmem:[%s863 + $0x4] sm:$0xf]
  %v866 = vsel %vm282, %v808, 0
  %868 = vmatpush.msra.mxu0 0.0
  %869 = vmatpush.msra.mxu0 0.0
  %870 = vmatpush.msra.mxu0 0.0
  %871 = vmatpush.msra.mxu0 0.0
  %872 = vmatpush.msra.mxu0 0.0
  %873 = vmatpush.msra.mxu0 0.0
  %874 = vmatpush.msra.mxu0 0.0
  %875 = vmatpush.msra.mxu0 0.0
  %876 = vmatpush.msra.mxu0 %v279
  %877 = vmatpush.msra.mxu0 %v277
  %878 = vmatpush.msra.mxu0 %v275
  %879 = vmatpush.msra.mxu0 %v273
  %880 = vmatpush.msra.mxu0 %v271
  %881 = vmatpush.msra.mxu0 %v269
  %882 = vmatpush.msra.mxu0 %v267
  %883 = vmatpush.msra.mxu0 %v265
  %884 = vmatmul.f32.gmra.mxu0 %v866
  %v885 = vpop.f32.mrf.mxu0
  %v886 = vadd.f32 0.0, %v885
  %887 = vdwg.mxu0
  %888 = vmatpush.msra.mxu0 0.0
  %889 = vmatpush.msra.mxu0 0.0
  %890 = vmatpush.msra.mxu0 0.0
  %891 = vmatpush.msra.mxu0 0.0
  %892 = vmatpush.msra.mxu0 0.0
  %893 = vmatpush.msra.mxu0 0.0
  %894 = vmatpush.msra.mxu0 0.0
  %895 = vmatpush.msra.mxu0 0.0
  %896 = vmatpush.msra.mxu0 %v280
  %897 = vmatpush.msra.mxu0 %v278
  %898 = vmatpush.msra.mxu0 %v276
  %899 = vmatpush.msra.mxu0 %v274
  %900 = vmatpush.msra.mxu0 %v272
  %901 = vmatpush.msra.mxu0 %v270
  %902 = vmatpush.msra.mxu0 %v268
  %903 = vmatpush.msra.mxu0 %v266
  %904 = vmatmul.f32.gmra.mxu0 %v866
  %v905 = vpop.f32.mrf.mxu0
  %v906 = vadd.f32 0.0, %v905
  %907 = vdwg.mxu0
  %v910 = vrot.slane %v906, 6
  %v911 = vsel %vm197, %v886, %v910
  %v913 = vadd.f32 %v864, %v911
  %v914 = vxor.u32 %v862, 2147483648
  %v915 = vmul.f32 %v914, 1.442695
  %v916 = vpow.pop %v915
  %v917 = vadd.f32 %v916, 1.0
  %v918 = vrcp.pop %v917
  %v919 = vmul.f32 %v917, %v918
  %v920 = vsub.f32 1.0, %v919
  %v921 = vmul.f32 %v918, %v920
  %v922 = vadd.f32 %v918, %v921
  %vm923 = vweird.f32 %v917
  %vm924 = vweird.f32 %v918
  %vm925 = vmor %vm923, %vm924
  %v926 = vsel %vm925, %v918, %v922
  %v927 = vand.u32 2147483647, %v917
  %vm928 = vcmp.eq.f32.partialorder %v927, 8.507059e+37
  %v929 = vand.u32 %v917, 2147483648
  %v930 = vor.u32 1.1754944e-38, %v929
  %v931 = vsel %vm928, %v930, %v926
  %v932 = vmul.f32 1.0, %v931
  %v934 = vrot.slane %v862, 2
  %v936 = vtanh.pop %v934
  %937 = vrot.lane.b32.xlu0 %v862, 64
  %v938 = vpop.permute.xlu0 %937
  %v939 = vrot.slane %v938, 2
  %v941 = vxor.u32 %v939, 2147483648
  %v942 = vmul.f32 %v941, 1.442695
  %v943 = vpow.pop %v942
  %v944 = vadd.f32 %v943, 1.0
  %v945 = vrcp.pop %v944
  %v946 = vmul.f32 %v944, %v945
  %v947 = vsub.f32 1.0, %v946
  %v948 = vmul.f32 %v945, %v947
  %v949 = vadd.f32 %v945, %v948
  %vm950 = vweird.f32 %v944
  %vm951 = vweird.f32 %v945
  %vm952 = vmor %vm950, %vm951
  %v953 = vsel %vm952, %v945, %v949
  %v954 = vand.u32 2147483647, %v944
  %vm955 = vcmp.eq.f32.partialorder %v954, 8.507059e+37
  %v956 = vand.u32 %v944, 2147483648
  %v957 = vor.u32 1.1754944e-38, %v956
  %v958 = vsel %vm955, %v957, %v953
  %v959 = vmul.f32 1.0, %v958
  %v960 = vmul.f32 %v932, %v801
  %v961 = vmul.f32 %v932, %v936
  %963 = vrot.lane.b32.xlu0 %v961, 64
  %v964 = vpop.permute.xlu0 %963
  %v966 = vadd.f32 %v960, %v964
  %v967 = vtanh.pop %v966
  %969 = vrot.lane.b32.xlu0 %v967, 64
  %v970 = vpop.permute.xlu0 %969
  %v972 = vmul.f32 %v959, %v970
  %v973 = vxor.u32 %v913, 2147483648
  %v974 = vmul.f32 %v973, 1.442695
  %v975 = vpow.pop %v974
  %v976 = vadd.f32 %v975, 1.0
  %v977 = vrcp.pop %v976
  %v978 = vmul.f32 %v976, %v977
  %v979 = vsub.f32 1.0, %v978
  %v980 = vmul.f32 %v977, %v979
  %v981 = vadd.f32 %v977, %v980
  %vm982 = vweird.f32 %v976
  %vm983 = vweird.f32 %v977
  %vm984 = vmor %vm982, %vm983
  %v985 = vsel %vm984, %v977, %v981
  %v986 = vand.u32 2147483647, %v976
  %vm987 = vcmp.eq.f32.partialorder %v986, 8.507059e+37
  %v988 = vand.u32 %v976, 2147483648
  %v989 = vor.u32 1.1754944e-38, %v988
  %v990 = vsel %vm987, %v989, %v985
  %v991 = vmul.f32 1.0, %v990
  %v993 = vrot.slane %v913, 2
  %v995 = vtanh.pop %v993
  %996 = vrot.lane.b32.xlu0 %v913, 64
  %v997 = vpop.permute.xlu0 %996
  %v998 = vrot.slane %v997, 2
  %v1000 = vxor.u32 %v998, 2147483648
  %v1001 = vmul.f32 %v1000, 1.442695
  %v1002 = vpow.pop %v1001
  %v1003 = vadd.f32 %v1002, 1.0
  %v1004 = vrcp.pop %v1003
  %v1005 = vmul.f32 %v1003, %v1004
  %v1006 = vsub.f32 1.0, %v1005
  %v1007 = vmul.f32 %v1004, %v1006
  %v1008 = vadd.f32 %v1004, %v1007
  %vm1009 = vweird.f32 %v1003
  %vm1010 = vweird.f32 %v1004
  %vm1011 = vmor %vm1009, %vm1010
  %v1012 = vsel %vm1011, %v1004, %v1008
  %v1013 = vand.u32 2147483647, %v1003
  %vm1014 = vcmp.eq.f32.partialorder %v1013, 8.507059e+37
  %v1015 = vand.u32 %v1003, 2147483648
  %v1016 = vor.u32 1.1754944e-38, %v1015
  %v1017 = vsel %vm1014, %v1016, %v1012
  %v1018 = vmul.f32 1.0, %v1017
  %v1019 = vmul.f32 %v991, %v811
  %v1020 = vmul.f32 %v991, %v995
  %1022 = vrot.lane.b32.xlu0 %v1020, 64
  %v1023 = vpop.permute.xlu0 %1022
  %v1025 = vadd.f32 %v1019, %v1023
  %v1026 = vtanh.pop %v1025
  %1028 = vrot.lane.b32.xlu0 %v1026, 64
  %v1029 = vpop.permute.xlu0 %1028
  %v1031 = vmul.f32 %v1018, %v1029
  %s1032 = scalar_lea.vmem %s1, 4
  %v1033 = vld [vmem:[%s1032] sm:$0x3]
  %s1034 = scalar_lea.vmem %s1, 10
  %v1035 = vld [vmem:[%s1034] sm:$0x3]
  %v1036 = vsub.f32 1.0, %v1033
  %v1037 = vsub.f32 1.0, %v1035
  %1039 = vset.pattern.permute.xlu0 0
  %1040 = vperm.xlu0 %1039, %v1033
  %v1041 = vpop.permute.xlu0 %1040
  %v1043 = vmul.f32 %v972, %v1041
  %1045 = vset.pattern.permute.xlu0 0
  %1046 = vperm.xlu0 %1045, %v1035
  %v1047 = vpop.permute.xlu0 %1046
  %v1049 = vmul.f32 %v1031, %v1047
  %s1050 = scalar_lea.vmem [#allocation3], 4
  %1051 = vst.msk [vmem:[%s1050] sm:$0x3] %vm515, %v1043
  %1053 = vst [vmem:[#allocation1] ss:$4 sm:$0xff] %v1049
  %v1054 = vld.sshfl [vmem:[#allocation1] sm:$0xff pattern:$0x73625140]
  %1055 = vrot.lane.b32.xlu0 %v1054, 64
  %v1056 = vpop.permute.xlu0 %1055
  %s1058 = scalar_lea.vmem [#allocation3], 10
  %1059 = vst.msk [vmem:[%s1058] sm:$0x3] %vm524, %v1056
  %1061 = vset.pattern.permute.xlu0 0
  %1062 = vperm.xlu0 %1061, %v1036
  %v1063 = vpop.permute.xlu0 %1062
  %v1065 = vmul.f32 %v798, %v1063
  %v1066 = vadd.f32 %v1043, %v1065
  %v1067 = vmul.f32 %v966, %v1041
  %v1068 = vmul.f32 %v801, %v1063
  %v1069 = vadd.f32 %v1067, %v1068
  %1071 = vset.pattern.permute.xlu0 0
  %1072 = vperm.xlu0 %1071, %v1037
  %v1073 = vpop.permute.xlu0 %1072
  %v1075 = vmul.f32 %v808, %v1073
  %v1076 = vadd.f32 %v1049, %v1075
  %v1077 = vmul.f32 %v1025, %v1047
  %v1078 = vmul.f32 %v811, %v1073
  %v1079 = vadd.f32 %v1077, %v1078
  %s1080 = scalar_lea.vmem [#allocation2], 24
  %v1081 = vld [vmem:[%s1080] sm:$0xf]
  %v1083 = vsel %vm282, %v1066, 0
  %1085 = vmatpush.msra.mxu0 0.0
  %1086 = vmatpush.msra.mxu0 0.0
  %1087 = vmatpush.msra.mxu0 0.0
  %1088 = vmatpush.msra.mxu0 0.0
  %1089 = vmatpush.msra.mxu0 0.0
  %1090 = vmatpush.msra.mxu0 0.0
  %1091 = vmatpush.msra.mxu0 0.0
  %1092 = vmatpush.msra.mxu0 0.0
  %1093 = vmatpush.msra.mxu0 %v263
  %1094 = vmatpush.msra.mxu0 %v261
  %1095 = vmatpush.msra.mxu0 %v259
  %1096 = vmatpush.msra.mxu0 %v257
  %1097 = vmatpush.msra.mxu0 %v255
  %1098 = vmatpush.msra.mxu0 %v253
  %1099 = vmatpush.msra.mxu0 %v251
  %1100 = vmatpush.msra.mxu0 %v249
  %1101 = vmatmul.f32.gmra.mxu0 %v1083
  %v1102 = vpop.f32.mrf.mxu0
  %v1103 = vadd.f32 0.0, %v1102
  %1104 = vdwg.mxu0
  %1105 = vmatpush.msra.mxu0 0.0
  %1106 = vmatpush.msra.mxu0 0.0
  %1107 = vmatpush.msra.mxu0 0.0
  %1108 = vmatpush.msra.mxu0 0.0
  %1109 = vmatpush.msra.mxu0 0.0
  %1110 = vmatpush.msra.mxu0 0.0
  %1111 = vmatpush.msra.mxu0 0.0
  %1112 = vmatpush.msra.mxu0 0.0
  %1113 = vmatpush.msra.mxu0 %v264
  %1114 = vmatpush.msra.mxu0 %v262
  %1115 = vmatpush.msra.mxu0 %v260
  %1116 = vmatpush.msra.mxu0 %v258
  %1117 = vmatpush.msra.mxu0 %v256
  %1118 = vmatpush.msra.mxu0 %v254
  %1119 = vmatpush.msra.mxu0 %v252
  %1120 = vmatpush.msra.mxu0 %v250
  %1121 = vmatmul.f32.gmra.mxu0 %v1083
  %v1122 = vpop.f32.mrf.mxu0
  %v1123 = vadd.f32 0.0, %v1122
  %1124 = vdwg.mxu0
  %v1127 = vrot.slane %v1123, 6
  %v1128 = vsel %vm197, %v1103, %v1127
  %v1130 = vadd.f32 %v1081, %v1128
  %s1131 = scalar_lea.vmem [#allocation2], 32
  %v1132 = vld [vmem:[%s1131 + $0x4] sm:$0xf]
  %v1134 = vsel %vm282, %v1076, 0
  %1136 = vmatpush.msra.mxu0 0.0
  %1137 = vmatpush.msra.mxu0 0.0
  %1138 = vmatpush.msra.mxu0 0.0
  %1139 = vmatpush.msra.mxu0 0.0
  %1140 = vmatpush.msra.mxu0 0.0
  %1141 = vmatpush.msra.mxu0 0.0
  %1142 = vmatpush.msra.mxu0 0.0
  %1143 = vmatpush.msra.mxu0 0.0
  %1144 = vmatpush.msra.mxu0 %v279
  %1145 = vmatpush.msra.mxu0 %v277
  %1146 = vmatpush.msra.mxu0 %v275
  %1147 = vmatpush.msra.mxu0 %v273
  %1148 = vmatpush.msra.mxu0 %v271
  %1149 = vmatpush.msra.mxu0 %v269
  %1150 = vmatpush.msra.mxu0 %v267
  %1151 = vmatpush.msra.mxu0 %v265
  %1152 = vmatmul.f32.gmra.mxu0 %v1134
  %v1153 = vpop.f32.mrf.mxu0
  %v1154 = vadd.f32 0.0, %v1153
  %1155 = vdwg.mxu0
  %1156 = vmatpush.msra.mxu0 0.0
  %1157 = vmatpush.msra.mxu0 0.0
  %1158 = vmatpush.msra.mxu0 0.0
  %1159 = vmatpush.msra.mxu0 0.0
  %1160 = vmatpush.msra.mxu0 0.0
  %1161 = vmatpush.msra.mxu0 0.0
  %1162 = vmatpush.msra.mxu0 0.0
  %1163 = vmatpush.msra.mxu0 0.0
  %1164 = vmatpush.msra.mxu0 %v280
  %1165 = vmatpush.msra.mxu0 %v278
  %1166 = vmatpush.msra.mxu0 %v276
  %1167 = vmatpush.msra.mxu0 %v274
  %1168 = vmatpush.msra.mxu0 %v272
  %1169 = vmatpush.msra.mxu0 %v270
  %1170 = vmatpush.msra.mxu0 %v268
  %1171 = vmatpush.msra.mxu0 %v266
  %1172 = vmatmul.f32.gmra.mxu0 %v1134
  %v1173 = vpop.f32.mrf.mxu0
  %v1174 = vadd.f32 0.0, %v1173
  %1175 = vdwg.mxu0
  %v1178 = vrot.slane %v1174, 6
  %v1179 = vsel %vm197, %v1154, %v1178
  %v1181 = vadd.f32 %v1132, %v1179
  %v1182 = vxor.u32 %v1130, 2147483648
  %v1183 = vmul.f32 %v1182, 1.442695
  %v1184 = vpow.pop %v1183
  %v1185 = vadd.f32 %v1184, 1.0
  %v1186 = vrcp.pop %v1185
  %v1187 = vmul.f32 %v1185, %v1186
  %v1188 = vsub.f32 1.0, %v1187
  %v1189 = vmul.f32 %v1186, %v1188
  %v1190 = vadd.f32 %v1186, %v1189
  %vm1191 = vweird.f32 %v1185
  %vm1192 = vweird.f32 %v1186
  %vm1193 = vmor %vm1191, %vm1192
  %v1194 = vsel %vm1193, %v1186, %v1190
  %v1195 = vand.u32 2147483647, %v1185
  %vm1196 = vcmp.eq.f32.partialorder %v1195, 8.507059e+37
  %v1197 = vand.u32 %v1185, 2147483648
  %v1198 = vor.u32 1.1754944e-38, %v1197
  %v1199 = vsel %vm1196, %v1198, %v1194
  %v1200 = vmul.f32 1.0, %v1199
  %v1202 = vrot.slane %v1130, 2
  %v1204 = vtanh.pop %v1202
  %1205 = vrot.lane.b32.xlu0 %v1130, 64
  %v1206 = vpop.permute.xlu0 %1205
  %v1207 = vrot.slane %v1206, 2
  %v1209 = vxor.u32 %v1207, 2147483648
  %v1210 = vmul.f32 %v1209, 1.442695
  %v1211 = vpow.pop %v1210
  %v1212 = vadd.f32 %v1211, 1.0
  %v1213 = vrcp.pop %v1212
  %v1214 = vmul.f32 %v1212, %v1213
  %v1215 = vsub.f32 1.0, %v1214
  %v1216 = vmul.f32 %v1213, %v1215
  %v1217 = vadd.f32 %v1213, %v1216
  %vm1218 = vweird.f32 %v1212
  %vm1219 = vweird.f32 %v1213
  %vm1220 = vmor %vm1218, %vm1219
  %v1221 = vsel %vm1220, %v1213, %v1217
  %v1222 = vand.u32 2147483647, %v1212
  %vm1223 = vcmp.eq.f32.partialorder %v1222, 8.507059e+37
  %v1224 = vand.u32 %v1212, 2147483648
  %v1225 = vor.u32 1.1754944e-38, %v1224
  %v1226 = vsel %vm1223, %v1225, %v1221
  %v1227 = vmul.f32 1.0, %v1226
  %v1228 = vmul.f32 %v1200, %v1069
  %v1229 = vmul.f32 %v1200, %v1204
  %1231 = vrot.lane.b32.xlu0 %v1229, 64
  %v1232 = vpop.permute.xlu0 %1231
  %v1234 = vadd.f32 %v1228, %v1232
  %v1235 = vtanh.pop %v1234
  %1237 = vrot.lane.b32.xlu0 %v1235, 64
  %v1238 = vpop.permute.xlu0 %1237
  %v1240 = vmul.f32 %v1227, %v1238
  %v1241 = vxor.u32 %v1181, 2147483648
  %v1242 = vmul.f32 %v1241, 1.442695
  %v1243 = vpow.pop %v1242
  %v1244 = vadd.f32 %v1243, 1.0
  %v1245 = vrcp.pop %v1244
  %v1246 = vmul.f32 %v1244, %v1245
  %v1247 = vsub.f32 1.0, %v1246
  %v1248 = vmul.f32 %v1245, %v1247
  %v1249 = vadd.f32 %v1245, %v1248
  %vm1250 = vweird.f32 %v1244
  %vm1251 = vweird.f32 %v1245
  %vm1252 = vmor %vm1250, %vm1251
  %v1253 = vsel %vm1252, %v1245, %v1249
  %v1254 = vand.u32 2147483647, %v1244
  %vm1255 = vcmp.eq.f32.partialorder %v1254, 8.507059e+37
  %v1256 = vand.u32 %v1244, 2147483648
  %v1257 = vor.u32 1.1754944e-38, %v1256
  %v1258 = vsel %vm1255, %v1257, %v1253
  %v1259 = vmul.f32 1.0, %v1258
  %v1261 = vrot.slane %v1181, 2
  %v1263 = vtanh.pop %v1261
  %1264 = vrot.lane.b32.xlu0 %v1181, 64
  %v1265 = vpop.permute.xlu0 %1264
  %v1266 = vrot.slane %v1265, 2
  %v1268 = vxor.u32 %v1266, 2147483648
  %v1269 = vmul.f32 %v1268, 1.442695
  %v1270 = vpow.pop %v1269
  %v1271 = vadd.f32 %v1270, 1.0
  %v1272 = vrcp.pop %v1271
  %v1273 = vmul.f32 %v1271, %v1272
  %v1274 = vsub.f32 1.0, %v1273
  %v1275 = vmul.f32 %v1272, %v1274
  %v1276 = vadd.f32 %v1272, %v1275
  %vm1277 = vweird.f32 %v1271
  %vm1278 = vweird.f32 %v1272
  %vm1279 = vmor %vm1277, %vm1278
  %v1280 = vsel %vm1279, %v1272, %v1276
  %v1281 = vand.u32 2147483647, %v1271
  %vm1282 = vcmp.eq.f32.partialorder %v1281, 8.507059e+37
  %v1283 = vand.u32 %v1271, 2147483648
  %v1284 = vor.u32 1.1754944e-38, %v1283
  %v1285 = vsel %vm1282, %v1284, %v1280
  %v1286 = vmul.f32 1.0, %v1285
  %v1287 = vmul.f32 %v1259, %v1079
  %v1288 = vmul.f32 %v1259, %v1263
  %1290 = vrot.lane.b32.xlu0 %v1288, 64
  %v1291 = vpop.permute.xlu0 %1290
  %v1293 = vadd.f32 %v1287, %v1291
  %v1294 = vtanh.pop %v1293
  %1296 = vrot.lane.b32.xlu0 %v1294, 64
  %v1297 = vpop.permute.xlu0 %1296
  %v1299 = vmul.f32 %v1286, %v1297
  %s1300 = scalar_lea.vmem %s1, 6
  %v1301 = vld [vmem:[%s1300] sm:$0x3]
  %s1302 = scalar_lea.vmem %s1, 8
  %v1303 = vld [vmem:[%s1302] sm:$0x3]
  %v1304 = vsub.f32 1.0, %v1301
  %v1305 = vsub.f32 1.0, %v1303
  %1307 = vset.pattern.permute.xlu0 0
  %1308 = vperm.xlu0 %1307, %v1301
  %v1309 = vpop.permute.xlu0 %1308
  %v1311 = vmul.f32 %v1240, %v1309
  %1313 = vset.pattern.permute.xlu0 0
  %1314 = vperm.xlu0 %1313, %v1303
  %v1315 = vpop.permute.xlu0 %1314
  %v1317 = vmul.f32 %v1299, %v1315
  %s1318 = scalar_lea.vmem [#allocation3], 6
  %1319 = vst.msk [vmem:[%s1318] sm:$0x3] %vm515, %v1311
  %1321 = vst [vmem:[#allocation1] ss:$4 sm:$0xff] %v1317
  %v1322 = vld.sshfl [vmem:[#allocation1] sm:$0xff pattern:$0x73625140]
  %1323 = vrot.lane.b32.xlu0 %v1322, 64
  %v1324 = vpop.permute.xlu0 %1323
  %s1326 = scalar_lea.vmem [#allocation3], 8
  %1327 = vst.msk [vmem:[%s1326] sm:$0x3] %vm524, %v1324
  %1329 = vset.pattern.permute.xlu0 0
  %1330 = vperm.xlu0 %1329, %v1304
  %v1331 = vpop.permute.xlu0 %1330
  %v1333 = vmul.f32 %v1066, %v1331
  %v1334 = vadd.f32 %v1311, %v1333
  %v1335 = vmul.f32 %v1234, %v1309
  %v1336 = vmul.f32 %v1069, %v1331
  %v1337 = vadd.f32 %v1335, %v1336
  %1339 = vset.pattern.permute.xlu0 0
  %1340 = vperm.xlu0 %1339, %v1305
  %v1341 = vpop.permute.xlu0 %1340
  %v1343 = vmul.f32 %v1076, %v1341
  %v1344 = vadd.f32 %v1317, %v1343
  %v1345 = vmul.f32 %v1293, %v1315
  %v1346 = vmul.f32 %v1079, %v1341
  %v1347 = vadd.f32 %v1345, %v1346
  %v1348 = vld [vmem:[%s1131] sm:$0xf]
  %v1350 = vsel %vm282, %v1334, 0
  %1352 = vmatpush.msra.mxu0 0.0
  %1353 = vmatpush.msra.mxu0 0.0
  %1354 = vmatpush.msra.mxu0 0.0
  %1355 = vmatpush.msra.mxu0 0.0
  %1356 = vmatpush.msra.mxu0 0.0
  %1357 = vmatpush.msra.mxu0 0.0
  %1358 = vmatpush.msra.mxu0 0.0
  %1359 = vmatpush.msra.mxu0 0.0
  %1360 = vmatpush.msra.mxu0 %v263
  %1361 = vmatpush.msra.mxu0 %v261
  %1362 = vmatpush.msra.mxu0 %v259
  %1363 = vmatpush.msra.mxu0 %v257
  %1364 = vmatpush.msra.mxu0 %v255
  %1365 = vmatpush.msra.mxu0 %v253
  %1366 = vmatpush.msra.mxu0 %v251
  %1367 = vmatpush.msra.mxu0 %v249
  %1368 = vmatmul.f32.gmra.mxu0 %v1350
  %v1369 = vpop.f32.mrf.mxu0
  %v1370 = vadd.f32 0.0, %v1369
  %1371 = vdwg.mxu0
  %1372 = vmatpush.msra.mxu0 0.0
  %1373 = vmatpush.msra.mxu0 0.0
  %1374 = vmatpush.msra.mxu0 0.0
  %1375 = vmatpush.msra.mxu0 0.0
  %1376 = vmatpush.msra.mxu0 0.0
  %1377 = vmatpush.msra.mxu0 0.0
  %1378 = vmatpush.msra.mxu0 0.0
  %1379 = vmatpush.msra.mxu0 0.0
  %1380 = vmatpush.msra.mxu0 %v264
  %1381 = vmatpush.msra.mxu0 %v262
  %1382 = vmatpush.msra.mxu0 %v260
  %1383 = vmatpush.msra.mxu0 %v258
  %1384 = vmatpush.msra.mxu0 %v256
  %1385 = vmatpush.msra.mxu0 %v254
  %1386 = vmatpush.msra.mxu0 %v252
  %1387 = vmatpush.msra.mxu0 %v250
  %1388 = vmatmul.f32.gmra.mxu0 %v1350
  %v1389 = vpop.f32.mrf.mxu0
  %v1390 = vadd.f32 0.0, %v1389
  %1391 = vdwg.mxu0
  %v1394 = vrot.slane %v1390, 6
  %v1395 = vsel %vm197, %v1370, %v1394
  %v1397 = vadd.f32 %v1348, %v1395
  %v1398 = vld [vmem:[%s1080 + $0x4] sm:$0xf]
  %v1400 = vsel %vm282, %v1344, 0
  %1402 = vmatpush.msra.mxu0 0.0
  %1403 = vmatpush.msra.mxu0 0.0
  %1404 = vmatpush.msra.mxu0 0.0
  %1405 = vmatpush.msra.mxu0 0.0
  %1406 = vmatpush.msra.mxu0 0.0
  %1407 = vmatpush.msra.mxu0 0.0
  %1408 = vmatpush.msra.mxu0 0.0
  %1409 = vmatpush.msra.mxu0 0.0
  %1410 = vmatpush.msra.mxu0 %v279
  %1411 = vmatpush.msra.mxu0 %v277
  %1412 = vmatpush.msra.mxu0 %v275
  %1413 = vmatpush.msra.mxu0 %v273
  %1414 = vmatpush.msra.mxu0 %v271
  %1415 = vmatpush.msra.mxu0 %v269
  %1416 = vmatpush.msra.mxu0 %v267
  %1417 = vmatpush.msra.mxu0 %v265
  %1418 = vmatmul.f32.gmra.mxu0 %v1400
  %v1419 = vpop.f32.mrf.mxu0
  %v1420 = vadd.f32 0.0, %v1419
  %1421 = vdwg.mxu0
  %1422 = vmatpush.msra.mxu0 0.0
  %1423 = vmatpush.msra.mxu0 0.0
  %1424 = vmatpush.msra.mxu0 0.0
  %1425 = vmatpush.msra.mxu0 0.0
  %1426 = vmatpush.msra.mxu0 0.0
  %1427 = vmatpush.msra.mxu0 0.0
  %1428 = vmatpush.msra.mxu0 0.0
  %1429 = vmatpush.msra.mxu0 0.0
  %1430 = vmatpush.msra.mxu0 %v280
  %1431 = vmatpush.msra.mxu0 %v278
  %1432 = vmatpush.msra.mxu0 %v276
  %1433 = vmatpush.msra.mxu0 %v274
  %1434 = vmatpush.msra.mxu0 %v272
  %1435 = vmatpush.msra.mxu0 %v270
  %1436 = vmatpush.msra.mxu0 %v268
  %1437 = vmatpush.msra.mxu0 %v266
  %1438 = vmatmul.f32.gmra.mxu0 %v1400
  %v1439 = vpop.f32.mrf.mxu0
  %v1440 = vadd.f32 0.0, %v1439
  %1441 = vdwg.mxu0
  %v1444 = vrot.slane %v1440, 6
  %v1445 = vsel %vm197, %v1420, %v1444
  %v1447 = vadd.f32 %v1398, %v1445
  %v1448 = vxor.u32 %v1397, 2147483648
  %v1449 = vmul.f32 %v1448, 1.442695
  %v1450 = vpow.pop %v1449
  %v1451 = vadd.f32 %v1450, 1.0
  %v1452 = vrcp.pop %v1451
  %v1453 = vmul.f32 %v1451, %v1452
  %v1454 = vsub.f32 1.0, %v1453
  %v1455 = vmul.f32 %v1452, %v1454
  %v1456 = vadd.f32 %v1452, %v1455
  %vm1457 = vweird.f32 %v1451
  %vm1458 = vweird.f32 %v1452
  %vm1459 = vmor %vm1457, %vm1458
  %v1460 = vsel %vm1459, %v1452, %v1456
  %v1461 = vand.u32 2147483647, %v1451
  %vm1462 = vcmp.eq.f32.partialorder %v1461, 8.507059e+37
  %v1463 = vand.u32 %v1451, 2147483648
  %v1464 = vor.u32 1.1754944e-38, %v1463
  %v1465 = vsel %vm1462, %v1464, %v1460
  %v1466 = vmul.f32 1.0, %v1465
  %v1468 = vrot.slane %v1397, 2
  %v1470 = vtanh.pop %v1468
  %1471 = vrot.lane.b32.xlu0 %v1397, 64
  %v1472 = vpop.permute.xlu0 %1471
  %v1473 = vrot.slane %v1472, 2
  %v1475 = vxor.u32 %v1473, 2147483648
  %v1476 = vmul.f32 %v1475, 1.442695
  %v1477 = vpow.pop %v1476
  %v1478 = vadd.f32 %v1477, 1.0
  %v1479 = vrcp.pop %v1478
  %v1480 = vmul.f32 %v1478, %v1479
  %v1481 = vsub.f32 1.0, %v1480
  %v1482 = vmul.f32 %v1479, %v1481
  %v1483 = vadd.f32 %v1479, %v1482
  %vm1484 = vweird.f32 %v1478
  %vm1485 = vweird.f32 %v1479
  %vm1486 = vmor %vm1484, %vm1485
  %v1487 = vsel %vm1486, %v1479, %v1483
  %v1488 = vand.u32 2147483647, %v1478
  %vm1489 = vcmp.eq.f32.partialorder %v1488, 8.507059e+37
  %v1490 = vand.u32 %v1478, 2147483648
  %v1491 = vor.u32 1.1754944e-38, %v1490
  %v1492 = vsel %vm1489, %v1491, %v1487
  %v1493 = vmul.f32 1.0, %v1492
  %v1494 = vmul.f32 %v1466, %v1337
  %v1495 = vmul.f32 %v1466, %v1470
  %1497 = vrot.lane.b32.xlu0 %v1495, 64
  %v1498 = vpop.permute.xlu0 %1497
  %v1500 = vadd.f32 %v1494, %v1498
  %v1501 = vtanh.pop %v1500
  %1503 = vrot.lane.b32.xlu0 %v1501, 64
  %v1504 = vpop.permute.xlu0 %1503
  %v1506 = vmul.f32 %v1493, %v1504
  %v1507 = vxor.u32 %v1447, 2147483648
  %v1508 = vmul.f32 %v1507, 1.442695
  %v1509 = vpow.pop %v1508
  %v1510 = vadd.f32 %v1509, 1.0
  %v1511 = vrcp.pop %v1510
  %v1512 = vmul.f32 %v1510, %v1511
  %v1513 = vsub.f32 1.0, %v1512
  %v1514 = vmul.f32 %v1511, %v1513
  %v1515 = vadd.f32 %v1511, %v1514
  %vm1516 = vweird.f32 %v1510
  %vm1517 = vweird.f32 %v1511
  %vm1518 = vmor %vm1516, %vm1517
  %v1519 = vsel %vm1518, %v1511, %v1515
  %v1520 = vand.u32 2147483647, %v1510
  %vm1521 = vcmp.eq.f32.partialorder %v1520, 8.507059e+37
  %v1522 = vand.u32 %v1510, 2147483648
  %v1523 = vor.u32 1.1754944e-38, %v1522
  %v1524 = vsel %vm1521, %v1523, %v1519
  %v1525 = vmul.f32 1.0, %v1524
  %v1527 = vrot.slane %v1447, 2
  %v1529 = vtanh.pop %v1527
  %1530 = vrot.lane.b32.xlu0 %v1447, 64
  %v1531 = vpop.permute.xlu0 %1530
  %v1532 = vrot.slane %v1531, 2
  %v1534 = vxor.u32 %v1532, 2147483648
  %v1535 = vmul.f32 %v1534, 1.442695
  %v1536 = vpow.pop %v1535
  %v1537 = vadd.f32 %v1536, 1.0
  %v1538 = vrcp.pop %v1537
  %v1539 = vmul.f32 %v1537, %v1538
  %v1540 = vsub.f32 1.0, %v1539
  %v1541 = vmul.f32 %v1538, %v1540
  %v1542 = vadd.f32 %v1538, %v1541
  %vm1543 = vweird.f32 %v1537
  %vm1544 = vweird.f32 %v1538
  %vm1545 = vmor %vm1543, %vm1544
  %v1546 = vsel %vm1545, %v1538, %v1542
  %v1547 = vand.u32 2147483647, %v1537
  %vm1548 = vcmp.eq.f32.partialorder %v1547, 8.507059e+37
  %v1549 = vand.u32 %v1537, 2147483648
  %v1550 = vor.u32 1.1754944e-38, %v1549
  %v1551 = vsel %vm1548, %v1550, %v1546
  %v1552 = vmul.f32 1.0, %v1551
  %v1553 = vmul.f32 %v1525, %v1347
  %v1554 = vmul.f32 %v1525, %v1529
  %1556 = vrot.lane.b32.xlu0 %v1554, 64
  %v1557 = vpop.permute.xlu0 %1556
  %v1559 = vadd.f32 %v1553, %v1557
  %v1560 = vtanh.pop %v1559
  %1562 = vrot.lane.b32.xlu0 %v1560, 64
  %v1563 = vpop.permute.xlu0 %1562
  %v1565 = vmul.f32 %v1552, %v1563
  %v1566 = vld [vmem:[%s1302] sm:$0x3]
  %v1567 = vld [vmem:[%s1300] sm:$0x3]
  %v1568 = vsub.f32 1.0, %v1566
  %v1569 = vsub.f32 1.0, %v1567
  %1571 = vset.pattern.permute.xlu0 0
  %1572 = vperm.xlu0 %1571, %v1566
  %v1573 = vpop.permute.xlu0 %1572
  %v1575 = vmul.f32 %v1506, %v1573
  %1577 = vset.pattern.permute.xlu0 0
  %1578 = vperm.xlu0 %1577, %v1567
  %v1579 = vpop.permute.xlu0 %1578
  %v1581 = vmul.f32 %v1565, %v1579
  %1582 = vst.msk [vmem:[%s1326] sm:$0x3] %vm515, %v1575
  %1584 = vst [vmem:[#allocation1] ss:$4 sm:$0xff] %v1581
  %v1585 = vld.sshfl [vmem:[#allocation1] sm:$0xff pattern:$0x73625140]
  %1586 = vrot.lane.b32.xlu0 %v1585, 64
  %v1587 = vpop.permute.xlu0 %1586
  %1589 = vst.msk [vmem:[%s1318] sm:$0x3] %vm524, %v1587
  %1591 = vset.pattern.permute.xlu0 0
  %1592 = vperm.xlu0 %1591, %v1568
  %v1593 = vpop.permute.xlu0 %1592
  %v1595 = vmul.f32 %v1334, %v1593
  %v1596 = vadd.f32 %v1575, %v1595
  %v1597 = vmul.f32 %v1500, %v1573
  %v1598 = vmul.f32 %v1337, %v1593
  %v1599 = vadd.f32 %v1597, %v1598
  %1601 = vset.pattern.permute.xlu0 0
  %1602 = vperm.xlu0 %1601, %v1569
  %v1603 = vpop.permute.xlu0 %1602
  %v1605 = vmul.f32 %v1344, %v1603
  %v1606 = vadd.f32 %v1581, %v1605
  %v1607 = vmul.f32 %v1559, %v1579
  %v1608 = vmul.f32 %v1347, %v1603
  %v1609 = vadd.f32 %v1607, %v1608
  %v1610 = vld [vmem:[%s863] sm:$0xf]
  %v1612 = vsel %vm282, %v1596, 0
  %1614 = vmatpush.msra.mxu0 0.0
  %1615 = vmatpush.msra.mxu0 0.0
  %1616 = vmatpush.msra.mxu0 0.0
  %1617 = vmatpush.msra.mxu0 0.0
  %1618 = vmatpush.msra.mxu0 0.0
  %1619 = vmatpush.msra.mxu0 0.0
  %1620 = vmatpush.msra.mxu0 0.0
  %1621 = vmatpush.msra.mxu0 0.0
  %1622 = vmatpush.msra.mxu0 %v263
  %1623 = vmatpush.msra.mxu0 %v261
  %1624 = vmatpush.msra.mxu0 %v259
  %1625 = vmatpush.msra.mxu0 %v257
  %1626 = vmatpush.msra.mxu0 %v255
  %1627 = vmatpush.msra.mxu0 %v253
  %1628 = vmatpush.msra.mxu0 %v251
  %1629 = vmatpush.msra.mxu0 %v249
  %1630 = vmatmul.f32.gmra.mxu0 %v1612
  %v1631 = vpop.f32.mrf.mxu0
  %v1632 = vadd.f32 0.0, %v1631
  %1633 = vdwg.mxu0
  %1634 = vmatpush.msra.mxu0 0.0
  %1635 = vmatpush.msra.mxu0 0.0
  %1636 = vmatpush.msra.mxu0 0.0
  %1637 = vmatpush.msra.mxu0 0.0
  %1638 = vmatpush.msra.mxu0 0.0
  %1639 = vmatpush.msra.mxu0 0.0
  %1640 = vmatpush.msra.mxu0 0.0
  %1641 = vmatpush.msra.mxu0 0.0
  %1642 = vmatpush.msra.mxu0 %v264
  %1643 = vmatpush.msra.mxu0 %v262
  %1644 = vmatpush.msra.mxu0 %v260
  %1645 = vmatpush.msra.mxu0 %v258
  %1646 = vmatpush.msra.mxu0 %v256
  %1647 = vmatpush.msra.mxu0 %v254
  %1648 = vmatpush.msra.mxu0 %v252
  %1649 = vmatpush.msra.mxu0 %v250
  %1650 = vmatmul.f32.gmra.mxu0 %v1612
  %v1651 = vpop.f32.mrf.mxu0
  %v1652 = vadd.f32 0.0, %v1651
  %1653 = vdwg.mxu0
  %v1656 = vrot.slane %v1652, 6
  %v1657 = vsel %vm197, %v1632, %v1656
  %v1659 = vadd.f32 %v1610, %v1657
  %v1660 = vld [vmem:[%s812 + $0x4] sm:$0xf]
  %v1662 = vsel %vm282, %v1606, 0
  %1664 = vmatpush.msra.mxu0 0.0
  %1665 = vmatpush.msra.mxu0 0.0
  %1666 = vmatpush.msra.mxu0 0.0
  %1667 = vmatpush.msra.mxu0 0.0
  %1668 = vmatpush.msra.mxu0 0.0
  %1669 = vmatpush.msra.mxu0 0.0
  %1670 = vmatpush.msra.mxu0 0.0
  %1671 = vmatpush.msra.mxu0 0.0
  %1672 = vmatpush.msra.mxu0 %v279
  %1673 = vmatpush.msra.mxu0 %v277
  %1674 = vmatpush.msra.mxu0 %v275
  %1675 = vmatpush.msra.mxu0 %v273
  %1676 = vmatpush.msra.mxu0 %v271
  %1677 = vmatpush.msra.mxu0 %v269
  %1678 = vmatpush.msra.mxu0 %v267
  %1679 = vmatpush.msra.mxu0 %v265
  %1680 = vmatmul.f32.gmra.mxu0 %v1662
  %v1681 = vpop.f32.mrf.mxu0
  %v1682 = vadd.f32 0.0, %v1681
  %1683 = vdwg.mxu0
  %1684 = vmatpush.msra.mxu0 0.0
  %1685 = vmatpush.msra.mxu0 0.0
  %1686 = vmatpush.msra.mxu0 0.0
  %1687 = vmatpush.msra.mxu0 0.0
  %1688 = vmatpush.msra.mxu0 0.0
  %1689 = vmatpush.msra.mxu0 0.0
  %1690 = vmatpush.msra.mxu0 0.0
  %1691 = vmatpush.msra.mxu0 0.0
  %1692 = vmatpush.msra.mxu0 %v280
  %1693 = vmatpush.msra.mxu0 %v278
  %1694 = vmatpush.msra.mxu0 %v276
  %1695 = vmatpush.msra.mxu0 %v274
  %1696 = vmatpush.msra.mxu0 %v272
  %1697 = vmatpush.msra.mxu0 %v270
  %1698 = vmatpush.msra.mxu0 %v268
  %1699 = vmatpush.msra.mxu0 %v266
  %1700 = vmatmul.f32.gmra.mxu0 %v1662
  %v1701 = vpop.f32.mrf.mxu0
  %v1702 = vadd.f32 0.0, %v1701
  %1703 = vdwg.mxu0
  %v1706 = vrot.slane %v1702, 6
  %v1707 = vsel %vm197, %v1682, %v1706
  %v1709 = vadd.f32 %v1660, %v1707
  %v1710 = vxor.u32 %v1659, 2147483648
  %v1711 = vmul.f32 %v1710, 1.442695
  %v1712 = vpow.pop %v1711
  %v1713 = vadd.f32 %v1712, 1.0
  %v1714 = vrcp.pop %v1713
  %v1715 = vmul.f32 %v1713, %v1714
  %v1716 = vsub.f32 1.0, %v1715
  %v1717 = vmul.f32 %v1714, %v1716
  %v1718 = vadd.f32 %v1714, %v1717
  %vm1719 = vweird.f32 %v1713
  %vm1720 = vweird.f32 %v1714
  %vm1721 = vmor %vm1719, %vm1720
  %v1722 = vsel %vm1721, %v1714, %v1718
  %v1723 = vand.u32 2147483647, %v1713
  %vm1724 = vcmp.eq.f32.partialorder %v1723, 8.507059e+37
  %v1725 = vand.u32 %v1713, 2147483648
  %v1726 = vor.u32 1.1754944e-38, %v1725
  %v1727 = vsel %vm1724, %v1726, %v1722
  %v1728 = vmul.f32 1.0, %v1727
  %v1730 = vrot.slane %v1659, 2
  %v1732 = vtanh.pop %v1730
  %1733 = vrot.lane.b32.xlu0 %v1659, 64
  %v1734 = vpop.permute.xlu0 %1733
  %v1735 = vrot.slane %v1734, 2
  %v1737 = vxor.u32 %v1735, 2147483648
  %v1738 = vmul.f32 %v1737, 1.442695
  %v1739 = vpow.pop %v1738
  %v1740 = vadd.f32 %v1739, 1.0
  %v1741 = vrcp.pop %v1740
  %v1742 = vmul.f32 %v1740, %v1741
  %v1743 = vsub.f32 1.0, %v1742
  %v1744 = vmul.f32 %v1741, %v1743
  %v1745 = vadd.f32 %v1741, %v1744
  %vm1746 = vweird.f32 %v1740
  %vm1747 = vweird.f32 %v1741
  %vm1748 = vmor %vm1746, %vm1747
  %v1749 = vsel %vm1748, %v1741, %v1745
  %v1750 = vand.u32 2147483647, %v1740
  %vm1751 = vcmp.eq.f32.partialorder %v1750, 8.507059e+37
  %v1752 = vand.u32 %v1740, 2147483648
  %v1753 = vor.u32 1.1754944e-38, %v1752
  %v1754 = vsel %vm1751, %v1753, %v1749
  %v1755 = vmul.f32 1.0, %v1754
  %v1756 = vmul.f32 %v1728, %v1599
  %v1757 = vmul.f32 %v1728, %v1732
  %1759 = vrot.lane.b32.xlu0 %v1757, 64
  %v1760 = vpop.permute.xlu0 %1759
  %v1762 = vadd.f32 %v1756, %v1760
  %v1763 = vtanh.pop %v1762
  %1765 = vrot.lane.b32.xlu0 %v1763, 64
  %v1766 = vpop.permute.xlu0 %1765
  %v1768 = vmul.f32 %v1755, %v1766
  %v1769 = vxor.u32 %v1709, 2147483648
  %v1770 = vmul.f32 %v1769, 1.442695
  %v1771 = vpow.pop %v1770
  %v1772 = vadd.f32 %v1771, 1.0
  %v1773 = vrcp.pop %v1772
  %v1774 = vmul.f32 %v1772, %v1773
  %v1775 = vsub.f32 1.0, %v1774
  %v1776 = vmul.f32 %v1773, %v1775
  %v1777 = vadd.f32 %v1773, %v1776
  %vm1778 = vweird.f32 %v1772
  %vm1779 = vweird.f32 %v1773
  %vm1780 = vmor %vm1778, %vm1779
  %v1781 = vsel %vm1780, %v1773, %v1777
  %v1782 = vand.u32 2147483647, %v1772
  %vm1783 = vcmp.eq.f32.partialorder %v1782, 8.507059e+37
  %v1784 = vand.u32 %v1772, 2147483648
  %v1785 = vor.u32 1.1754944e-38, %v1784
  %v1786 = vsel %vm1783, %v1785, %v1781
  %v1787 = vmul.f32 1.0, %v1786
  %v1789 = vrot.slane %v1709, 2
  %v1791 = vtanh.pop %v1789
  %1792 = vrot.lane.b32.xlu0 %v1709, 64
  %v1793 = vpop.permute.xlu0 %1792
  %v1794 = vrot.slane %v1793, 2
  %v1796 = vxor.u32 %v1794, 2147483648
  %v1797 = vmul.f32 %v1796, 1.442695
  %v1798 = vpow.pop %v1797
  %v1799 = vadd.f32 %v1798, 1.0
  %v1800 = vrcp.pop %v1799
  %v1801 = vmul.f32 %v1799, %v1800
  %v1802 = vsub.f32 1.0, %v1801
  %v1803 = vmul.f32 %v1800, %v1802
  %v1804 = vadd.f32 %v1800, %v1803
  %vm1805 = vweird.f32 %v1799
  %vm1806 = vweird.f32 %v1800
  %vm1807 = vmor %vm1805, %vm1806
  %v1808 = vsel %vm1807, %v1800, %v1804
  %v1809 = vand.u32 2147483647, %v1799
  %vm1810 = vcmp.eq.f32.partialorder %v1809, 8.507059e+37
  %v1811 = vand.u32 %v1799, 2147483648
  %v1812 = vor.u32 1.1754944e-38, %v1811
  %v1813 = vsel %vm1810, %v1812, %v1808
  %v1814 = vmul.f32 1.0, %v1813
  %v1815 = vmul.f32 %v1787, %v1609
  %v1816 = vmul.f32 %v1787, %v1791
  %1818 = vrot.lane.b32.xlu0 %v1816, 64
  %v1819 = vpop.permute.xlu0 %1818
  %v1821 = vadd.f32 %v1815, %v1819
  %v1822 = vtanh.pop %v1821
  %1824 = vrot.lane.b32.xlu0 %v1822, 64
  %v1825 = vpop.permute.xlu0 %1824
  %v1827 = vmul.f32 %v1814, %v1825
  %v1828 = vld [vmem:[%s1034] sm:$0x3]
  %v1829 = vld [vmem:[%s1032] sm:$0x3]
  %v1830 = vsub.f32 1.0, %v1828
  %v1831 = vsub.f32 1.0, %v1829
  %1833 = vset.pattern.permute.xlu0 0
  %1834 = vperm.xlu0 %1833, %v1828
  %v1835 = vpop.permute.xlu0 %1834
  %v1837 = vmul.f32 %v1768, %v1835
  %1839 = vset.pattern.permute.xlu0 0
  %1840 = vperm.xlu0 %1839, %v1829
  %v1841 = vpop.permute.xlu0 %1840
  %v1843 = vmul.f32 %v1827, %v1841
  %1844 = vst.msk [vmem:[%s1058] sm:$0x3] %vm515, %v1837
  %1846 = vst [vmem:[#allocation1] ss:$4 sm:$0xff] %v1843
  %v1847 = vld.sshfl [vmem:[#allocation1] sm:$0xff pattern:$0x73625140]
  %1848 = vrot.lane.b32.xlu0 %v1847, 64
  %v1849 = vpop.permute.xlu0 %1848
  %1851 = vst.msk [vmem:[%s1050] sm:$0x3] %vm524, %v1849
  %1853 = vset.pattern.permute.xlu0 0
  %1854 = vperm.xlu0 %1853, %v1830
  %v1855 = vpop.permute.xlu0 %1854
  %v1857 = vmul.f32 %v1596, %v1855
  %v1858 = vadd.f32 %v1837, %v1857
  %v1859 = vmul.f32 %v1762, %v1835
  %v1860 = vmul.f32 %v1599, %v1855
  %v1861 = vadd.f32 %v1859, %v1860
  %1863 = vset.pattern.permute.xlu0 0
  %1864 = vperm.xlu0 %1863, %v1831
  %v1865 = vpop.permute.xlu0 %1864
  %v1867 = vmul.f32 %v1606, %v1865
  %v1868 = vadd.f32 %v1843, %v1867
  %v1869 = vmul.f32 %v1821, %v1841
  %v1870 = vmul.f32 %v1609, %v1865
  %v1871 = vadd.f32 %v1869, %v1870
  %v1872 = vld [vmem:[%s595] sm:$0xf]
  %v1874 = vsel %vm282, %v1858, 0
  %1876 = vmatpush.msra.mxu0 0.0
  %1877 = vmatpush.msra.mxu0 0.0
  %1878 = vmatpush.msra.mxu0 0.0
  %1879 = vmatpush.msra.mxu0 0.0
  %1880 = vmatpush.msra.mxu0 0.0
  %1881 = vmatpush.msra.mxu0 0.0
  %1882 = vmatpush.msra.mxu0 0.0
  %1883 = vmatpush.msra.mxu0 0.0
  %1884 = vmatpush.msra.mxu0 %v263
  %1885 = vmatpush.msra.mxu0 %v261
  %1886 = vmatpush.msra.mxu0 %v259
  %1887 = vmatpush.msra.mxu0 %v257
  %1888 = vmatpush.msra.mxu0 %v255
  %1889 = vmatpush.msra.mxu0 %v253
  %1890 = vmatpush.msra.mxu0 %v251
  %1891 = vmatpush.msra.mxu0 %v249
  %1892 = vmatmul.f32.gmra.mxu0 %v1874
  %v1893 = vpop.f32.mrf.mxu0
  %v1894 = vadd.f32 0.0, %v1893
  %1895 = vdwg.mxu0
  %1896 = vmatpush.msra.mxu0 0.0
  %1897 = vmatpush.msra.mxu0 0.0
  %1898 = vmatpush.msra.mxu0 0.0
  %1899 = vmatpush.msra.mxu0 0.0
  %1900 = vmatpush.msra.mxu0 0.0
  %1901 = vmatpush.msra.mxu0 0.0
  %1902 = vmatpush.msra.mxu0 0.0
  %1903 = vmatpush.msra.mxu0 0.0
  %1904 = vmatpush.msra.mxu0 %v264
  %1905 = vmatpush.msra.mxu0 %v262
  %1906 = vmatpush.msra.mxu0 %v260
  %1907 = vmatpush.msra.mxu0 %v258
  %1908 = vmatpush.msra.mxu0 %v256
  %1909 = vmatpush.msra.mxu0 %v254
  %1910 = vmatpush.msra.mxu0 %v252
  %1911 = vmatpush.msra.mxu0 %v250
  %1912 = vmatmul.f32.gmra.mxu0 %v1874
  %v1913 = vpop.f32.mrf.mxu0
  %v1914 = vadd.f32 0.0, %v1913
  %1915 = vdwg.mxu0
  %v1918 = vrot.slane %v1914, 6
  %v1919 = vsel %vm197, %v1894, %v1918
  %v1921 = vadd.f32 %v1872, %v1919
  %v1922 = vld [vmem:[%s544 + $0x4] sm:$0xf]
  %v1924 = vsel %vm282, %v1868, 0
  %1926 = vmatpush.msra.mxu0 0.0
  %1927 = vmatpush.msra.mxu0 0.0
  %1928 = vmatpush.msra.mxu0 0.0
  %1929 = vmatpush.msra.mxu0 0.0
  %1930 = vmatpush.msra.mxu0 0.0
  %1931 = vmatpush.msra.mxu0 0.0
  %1932 = vmatpush.msra.mxu0 0.0
  %1933 = vmatpush.msra.mxu0 0.0
  %1934 = vmatpush.msra.mxu0 %v279
  %1935 = vmatpush.msra.mxu0 %v277
  %1936 = vmatpush.msra.mxu0 %v275
  %1937 = vmatpush.msra.mxu0 %v273
  %1938 = vmatpush.msra.mxu0 %v271
  %1939 = vmatpush.msra.mxu0 %v269
  %1940 = vmatpush.msra.mxu0 %v267
  %1941 = vmatpush.msra.mxu0 %v265
  %1942 = vmatmul.f32.gmra.mxu0 %v1924
  %v1943 = vpop.f32.mrf.mxu0
  %v1944 = vadd.f32 0.0, %v1943
  %1945 = vdwg.mxu0
  %1946 = vmatpush.msra.mxu0 0.0
  %1947 = vmatpush.msra.mxu0 0.0
  %1948 = vmatpush.msra.mxu0 0.0
  %1949 = vmatpush.msra.mxu0 0.0
  %1950 = vmatpush.msra.mxu0 0.0
  %1951 = vmatpush.msra.mxu0 0.0
  %1952 = vmatpush.msra.mxu0 0.0
  %1953 = vmatpush.msra.mxu0 0.0
  %1954 = vmatpush.msra.mxu0 %v280
  %1955 = vmatpush.msra.mxu0 %v278
  %1956 = vmatpush.msra.mxu0 %v276
  %1957 = vmatpush.msra.mxu0 %v274
  %1958 = vmatpush.msra.mxu0 %v272
  %1959 = vmatpush.msra.mxu0 %v270
  %1960 = vmatpush.msra.mxu0 %v268
  %1961 = vmatpush.msra.mxu0 %v266
  %1962 = vmatmul.f32.gmra.mxu0 %v1924
  %v1963 = vpop.f32.mrf.mxu0
  %v1964 = vadd.f32 0.0, %v1963
  %1965 = vdwg.mxu0
  %v1968 = vrot.slane %v1964, 6
  %v1969 = vsel %vm197, %v1944, %v1968
  %v1971 = vadd.f32 %v1922, %v1969
  %v1972 = vxor.u32 %v1921, 2147483648
  %v1973 = vmul.f32 %v1972, 1.442695
  %v1974 = vpow.pop %v1973
  %v1975 = vadd.f32 %v1974, 1.0
  %v1976 = vrcp.pop %v1975
  %v1977 = vmul.f32 %v1975, %v1976
  %v1978 = vsub.f32 1.0, %v1977
  %v1979 = vmul.f32 %v1976, %v1978
  %v1980 = vadd.f32 %v1976, %v1979
  %vm1981 = vweird.f32 %v1975
  %vm1982 = vweird.f32 %v1976
  %vm1983 = vmor %vm1981, %vm1982
  %v1984 = vsel %vm1983, %v1976, %v1980
  %v1985 = vand.u32 2147483647, %v1975
  %vm1986 = vcmp.eq.f32.partialorder %v1985, 8.507059e+37
  %v1987 = vand.u32 %v1975, 2147483648
  %v1988 = vor.u32 1.1754944e-38, %v1987
  %v1989 = vsel %vm1986, %v1988, %v1984
  %v1990 = vmul.f32 1.0, %v1989
  %v1992 = vrot.slane %v1921, 2
  %v1994 = vtanh.pop %v1992
  %1995 = vrot.lane.b32.xlu0 %v1921, 64
  %v1996 = vpop.permute.xlu0 %1995
  %v1997 = vrot.slane %v1996, 2
  %v1999 = vxor.u32 %v1997, 2147483648
  %v2000 = vmul.f32 %v1999, 1.442695
  %v2001 = vpow.pop %v2000
  %v2002 = vadd.f32 %v2001, 1.0
  %v2003 = vrcp.pop %v2002
  %v2004 = vmul.f32 %v2002, %v2003
  %v2005 = vsub.f32 1.0, %v2004
  %v2006 = vmul.f32 %v2003, %v2005
  %v2007 = vadd.f32 %v2003, %v2006
  %vm2008 = vweird.f32 %v2002
  %vm2009 = vweird.f32 %v2003
  %vm2010 = vmor %vm2008, %vm2009
  %v2011 = vsel %vm2010, %v2003, %v2007
  %v2012 = vand.u32 2147483647, %v2002
  %vm2013 = vcmp.eq.f32.partialorder %v2012, 8.507059e+37
  %v2014 = vand.u32 %v2002, 2147483648
  %v2015 = vor.u32 1.1754944e-38, %v2014
  %v2016 = vsel %vm2013, %v2015, %v2011
  %v2017 = vmul.f32 1.0, %v2016
  %v2018 = vmul.f32 %v1990, %v1861
  %v2019 = vmul.f32 %v1990, %v1994
  %2021 = vrot.lane.b32.xlu0 %v2019, 64
  %v2022 = vpop.permute.xlu0 %2021
  %v2024 = vadd.f32 %v2018, %v2022
  %v2025 = vtanh.pop %v2024
  %2027 = vrot.lane.b32.xlu0 %v2025, 64
  %v2028 = vpop.permute.xlu0 %2027
  %v2030 = vmul.f32 %v2017, %v2028
  %v2031 = vxor.u32 %v1971, 2147483648
  %v2032 = vmul.f32 %v2031, 1.442695
  %v2033 = vpow.pop %v2032
  %v2034 = vadd.f32 %v2033, 1.0
  %v2035 = vrcp.pop %v2034
  %v2036 = vmul.f32 %v2034, %v2035
  %v2037 = vsub.f32 1.0, %v2036
  %v2038 = vmul.f32 %v2035, %v2037
  %v2039 = vadd.f32 %v2035, %v2038
  %vm2040 = vweird.f32 %v2034
  %vm2041 = vweird.f32 %v2035
  %vm2042 = vmor %vm2040, %vm2041
  %v2043 = vsel %vm2042, %v2035, %v2039
  %v2044 = vand.u32 2147483647, %v2034
  %vm2045 = vcmp.eq.f32.partialorder %v2044, 8.507059e+37
  %v2046 = vand.u32 %v2034, 2147483648
  %v2047 = vor.u32 1.1754944e-38, %v2046
  %v2048 = vsel %vm2045, %v2047, %v2043
  %v2049 = vmul.f32 1.0, %v2048
  %v2051 = vrot.slane %v1971, 2
  %v2053 = vtanh.pop %v2051
  %2054 = vrot.lane.b32.xlu0 %v1971, 64
  %v2055 = vpop.permute.xlu0 %2054
  %v2056 = vrot.slane %v2055, 2
  %v2058 = vxor.u32 %v2056, 2147483648
  %v2059 = vmul.f32 %v2058, 1.442695
  %v2060 = vpow.pop %v2059
  %v2061 = vadd.f32 %v2060, 1.0
  %v2062 = vrcp.pop %v2061
  %v2063 = vmul.f32 %v2061, %v2062
  %v2064 = vsub.f32 1.0, %v2063
  %v2065 = vmul.f32 %v2062, %v2064
  %v2066 = vadd.f32 %v2062, %v2065
  %vm2067 = vweird.f32 %v2061
  %vm2068 = vweird.f32 %v2062
  %vm2069 = vmor %vm2067, %vm2068
  %v2070 = vsel %vm2069, %v2062, %v2066
  %v2071 = vand.u32 2147483647, %v2061
  %vm2072 = vcmp.eq.f32.partialorder %v2071, 8.507059e+37
  %v2073 = vand.u32 %v2061, 2147483648
  %v2074 = vor.u32 1.1754944e-38, %v2073
  %v2075 = vsel %vm2072, %v2074, %v2070
  %v2076 = vmul.f32 1.0, %v2075
  %v2077 = vmul.f32 %v2049, %v1871
  %v2078 = vmul.f32 %v2049, %v2053
  %2080 = vrot.lane.b32.xlu0 %v2078, 64
  %v2081 = vpop.permute.xlu0 %2080
  %v2083 = vadd.f32 %v2077, %v2081
  %v2084 = vtanh.pop %v2083
  %2086 = vrot.lane.b32.xlu0 %v2084, 64
  %v2087 = vpop.permute.xlu0 %2086
  %v2089 = vmul.f32 %v2076, %v2087
  %v2090 = vld [vmem:[%s766] sm:$0x3]
  %v2091 = vld [vmem:[%s764] sm:$0x3]
  %v2092 = vsub.f32 1.0, %v2090
  %v2093 = vsub.f32 1.0, %v2091
  %2095 = vset.pattern.permute.xlu0 0
  %2096 = vperm.xlu0 %2095, %v2090
  %v2097 = vpop.permute.xlu0 %2096
  %v2099 = vmul.f32 %v2030, %v2097
  %2101 = vset.pattern.permute.xlu0 0
  %2102 = vperm.xlu0 %2101, %v2091
  %v2103 = vpop.permute.xlu0 %2102
  %v2105 = vmul.f32 %v2089, %v2103
  %2106 = vst.msk [vmem:[%s790] sm:$0x3] %vm515, %v2099
  %2108 = vst [vmem:[#allocation1] ss:$4 sm:$0xff] %v2105
  %v2109 = vld.sshfl [vmem:[#allocation1] sm:$0xff pattern:$0x73625140]
  %2110 = vrot.lane.b32.xlu0 %v2109, 64
  %v2111 = vpop.permute.xlu0 %2110
  %2113 = vst.msk [vmem:[%s782] sm:$0x3] %vm524, %v2111
  %2115 = vset.pattern.permute.xlu0 0
  %2116 = vperm.xlu0 %2115, %v2092
  %v2117 = vpop.permute.xlu0 %2116
  %v2119 = vmul.f32 %v1858, %v2117
  %v2120 = vadd.f32 %v2099, %v2119
  %v2121 = vmul.f32 %v2024, %v2097
  %v2122 = vmul.f32 %v1861, %v2117
  %v2123 = vadd.f32 %v2121, %v2122
  %2125 = vset.pattern.permute.xlu0 0
  %2126 = vperm.xlu0 %2125, %v2093
  %v2127 = vpop.permute.xlu0 %2126
  %v2129 = vmul.f32 %v1868, %v2127
  %v2130 = vadd.f32 %v2105, %v2129
  %v2131 = vmul.f32 %v2083, %v2103
  %v2132 = vmul.f32 %v1871, %v2127
  %v2133 = vadd.f32 %v2131, %v2132
  %v2134 = vld [vmem:[%s332] sm:$0xf]
  %v2136 = vsel %vm282, %v2120, 0
  %2138 = vmatpush.msra.mxu0 0.0
  %2139 = vmatpush.msra.mxu0 0.0
  %2140 = vmatpush.msra.mxu0 0.0
  %2141 = vmatpush.msra.mxu0 0.0
  %2142 = vmatpush.msra.mxu0 0.0
  %2143 = vmatpush.msra.mxu0 0.0
  %2144 = vmatpush.msra.mxu0 0.0
  %2145 = vmatpush.msra.mxu0 0.0
  %2146 = vmatpush.msra.mxu0 %v263
  %2147 = vmatpush.msra.mxu0 %v261
  %2148 = vmatpush.msra.mxu0 %v259
  %2149 = vmatpush.msra.mxu0 %v257
  %2150 = vmatpush.msra.mxu0 %v255
  %2151 = vmatpush.msra.mxu0 %v253
  %2152 = vmatpush.msra.mxu0 %v251
  %2153 = vmatpush.msra.mxu0 %v249
  %2154 = vmatmul.f32.gmra.mxu0 %v2136
  %v2155 = vpop.f32.mrf.mxu0
  %v2156 = vadd.f32 0.0, %v2155
  %2157 = vdwg.mxu0
  %2158 = vmatpush.msra.mxu0 0.0
  %2159 = vmatpush.msra.mxu0 0.0
  %2160 = vmatpush.msra.mxu0 0.0
  %2161 = vmatpush.msra.mxu0 0.0
  %2162 = vmatpush.msra.mxu0 0.0
  %2163 = vmatpush.msra.mxu0 0.0
  %2164 = vmatpush.msra.mxu0 0.0
  %2165 = vmatpush.msra.mxu0 0.0
  %2166 = vmatpush.msra.mxu0 %v264
  %2167 = vmatpush.msra.mxu0 %v262
  %2168 = vmatpush.msra.mxu0 %v260
  %2169 = vmatpush.msra.mxu0 %v258
  %2170 = vmatpush.msra.mxu0 %v256
  %2171 = vmatpush.msra.mxu0 %v254
  %2172 = vmatpush.msra.mxu0 %v252
  %2173 = vmatpush.msra.mxu0 %v250
  %2174 = vmatmul.f32.gmra.mxu0 %v2136
  %v2175 = vpop.f32.mrf.mxu0
  %v2176 = vadd.f32 0.0, %v2175
  %2177 = vdwg.mxu0
  %v2180 = vrot.slane %v2176, 6
  %v2181 = vsel %vm197, %v2156, %v2180
  %v2183 = vadd.f32 %v2134, %v2181
  %v2184 = vld [vmem:[#allocation2 + $0x4] sm:$0xf]
  %v2186 = vsel %vm282, %v2130, 0
  %2188 = vmatpush.msra.mxu0 0.0
  %2189 = vmatpush.msra.mxu0 0.0
  %2190 = vmatpush.msra.mxu0 0.0
  %2191 = vmatpush.msra.mxu0 0.0
  %2192 = vmatpush.msra.mxu0 0.0
  %2193 = vmatpush.msra.mxu0 0.0
  %2194 = vmatpush.msra.mxu0 0.0
  %2195 = vmatpush.msra.mxu0 0.0
  %2196 = vmatpush.msra.mxu0 %v279
  %2197 = vmatpush.msra.mxu0 %v277
  %2198 = vmatpush.msra.mxu0 %v275
  %2199 = vmatpush.msra.mxu0 %v273
  %2200 = vmatpush.msra.mxu0 %v271
  %2201 = vmatpush.msra.mxu0 %v269
  %2202 = vmatpush.msra.mxu0 %v267
  %2203 = vmatpush.msra.mxu0 %v265
  %2204 = vmatmul.f32.gmra.mxu0 %v2186
  %v2205 = vpop.f32.mrf.mxu0
  %v2206 = vadd.f32 0.0, %v2205
  %2207 = vdwg.mxu0
  %2208 = vmatpush.msra.mxu0 0.0
  %2209 = vmatpush.msra.mxu0 0.0
  %2210 = vmatpush.msra.mxu0 0.0
  %2211 = vmatpush.msra.mxu0 0.0
  %2212 = vmatpush.msra.mxu0 0.0
  %2213 = vmatpush.msra.mxu0 0.0
  %2214 = vmatpush.msra.mxu0 0.0
  %2215 = vmatpush.msra.mxu0 0.0
  %2216 = vmatpush.msra.mxu0 %v280
  %2217 = vmatpush.msra.mxu0 %v278
  %2218 = vmatpush.msra.mxu0 %v276
  %2219 = vmatpush.msra.mxu0 %v274
  %2220 = vmatpush.msra.mxu0 %v272
  %2221 = vmatpush.msra.mxu0 %v270
  %2222 = vmatpush.msra.mxu0 %v268
  %2223 = vmatpush.msra.mxu0 %v266
  %2224 = vmatmul.f32.gmra.mxu0 %v2186
  %v2225 = vpop.f32.mrf.mxu0
  %v2226 = vadd.f32 0.0, %v2225
  %2227 = vdwg.mxu0
  %v2230 = vrot.slane %v2226, 6
  %v2231 = vsel %vm197, %v2206, %v2230
  %v2233 = vadd.f32 %v2184, %v2231
  %v2234 = vxor.u32 %v2183, 2147483648
  %v2235 = vmul.f32 %v2234, 1.442695
  %v2236 = vpow.pop %v2235
  %v2237 = vadd.f32 %v2236, 1.0
  %v2238 = vrcp.pop %v2237
  %v2239 = vmul.f32 %v2237, %v2238
  %v2240 = vsub.f32 1.0, %v2239
  %v2241 = vmul.f32 %v2238, %v2240
  %v2242 = vadd.f32 %v2238, %v2241
  %vm2243 = vweird.f32 %v2237
  %vm2244 = vweird.f32 %v2238
  %vm2245 = vmor %vm2243, %vm2244
  %v2246 = vsel %vm2245, %v2238, %v2242
  %v2247 = vand.u32 2147483647, %v2237
  %vm2248 = vcmp.eq.f32.partialorder %v2247, 8.507059e+37
  %v2249 = vand.u32 %v2237, 2147483648
  %v2250 = vor.u32 1.1754944e-38, %v2249
  %v2251 = vsel %vm2248, %v2250, %v2246
  %v2252 = vmul.f32 1.0, %v2251
  %v2254 = vrot.slane %v2183, 2
  %v2256 = vtanh.pop %v2254
  %2257 = vrot.lane.b32.xlu0 %v2183, 64
  %v2258 = vpop.permute.xlu0 %2257
  %v2259 = vrot.slane %v2258, 2
  %v2261 = vxor.u32 %v2259, 2147483648
  %v2262 = vmul.f32 %v2261, 1.442695
  %v2263 = vpow.pop %v2262
  %v2264 = vadd.f32 %v2263, 1.0
  %v2265 = vrcp.pop %v2264
  %v2266 = vmul.f32 %v2264, %v2265
  %v2267 = vsub.f32 1.0, %v2266
  %v2268 = vmul.f32 %v2265, %v2267
  %v2269 = vadd.f32 %v2265, %v2268
  %vm2270 = vweird.f32 %v2264
  %vm2271 = vweird.f32 %v2265
  %vm2272 = vmor %vm2270, %vm2271
  %v2273 = vsel %vm2272, %v2265, %v2269
  %v2274 = vand.u32 2147483647, %v2264
  %vm2275 = vcmp.eq.f32.partialorder %v2274, 8.507059e+37
  %v2276 = vand.u32 %v2264, 2147483648
  %v2277 = vor.u32 1.1754944e-38, %v2276
  %v2278 = vsel %vm2275, %v2277, %v2273
  %v2279 = vmul.f32 1.0, %v2278
  %v2280 = vmul.f32 %v2252, %v2123
  %v2281 = vmul.f32 %v2252, %v2256
  %2283 = vrot.lane.b32.xlu0 %v2281, 64
  %v2284 = vpop.permute.xlu0 %2283
  %v2286 = vadd.f32 %v2280, %v2284
  %v2287 = vtanh.pop %v2286
  %2289 = vrot.lane.b32.xlu0 %v2287, 64
  %v2290 = vpop.permute.xlu0 %2289
  %v2292 = vmul.f32 %v2279, %v2290
  %v2293 = vxor.u32 %v2233, 2147483648
  %v2294 = vmul.f32 %v2293, 1.442695
  %v2295 = vpow.pop %v2294
  %v2296 = vadd.f32 %v2295, 1.0
  %v2297 = vrcp.pop %v2296
  %v2298 = vmul.f32 %v2296, %v2297
  %v2299 = vsub.f32 1.0, %v2298
  %v2300 = vmul.f32 %v2297, %v2299
  %v2301 = vadd.f32 %v2297, %v2300
  %vm2302 = vweird.f32 %v2296
  %vm2303 = vweird.f32 %v2297
  %vm2304 = vmor %vm2302, %vm2303
  %v2305 = vsel %vm2304, %v2297, %v2301
  %v2306 = vand.u32 2147483647, %v2296
  %vm2307 = vcmp.eq.f32.partialorder %v2306, 8.507059e+37
  %v2308 = vand.u32 %v2296, 2147483648
  %v2309 = vor.u32 1.1754944e-38, %v2308
  %v2310 = vsel %vm2307, %v2309, %v2305
  %v2311 = vmul.f32 1.0, %v2310
  %v2313 = vrot.slane %v2233, 2
  %v2315 = vtanh.pop %v2313
  %2316 = vrot.lane.b32.xlu0 %v2233, 64
  %v2317 = vpop.permute.xlu0 %2316
  %v2318 = vrot.slane %v2317, 2
  %v2320 = vxor.u32 %v2318, 2147483648
  %v2321 = vmul.f32 %v2320, 1.442695
  %v2322 = vpow.pop %v2321
  %v2323 = vadd.f32 %v2322, 1.0
  %v2324 = vrcp.pop %v2323
  %v2325 = vmul.f32 %v2323, %v2324
  %v2326 = vsub.f32 1.0, %v2325
  %v2327 = vmul.f32 %v2324, %v2326
  %v2328 = vadd.f32 %v2324, %v2327
  %vm2329 = vweird.f32 %v2323
  %vm2330 = vweird.f32 %v2324
  %vm2331 = vmor %vm2329, %vm2330
  %v2332 = vsel %vm2331, %v2324, %v2328
  %v2333 = vand.u32 2147483647, %v2323
  %vm2334 = vcmp.eq.f32.partialorder %v2333, 8.507059e+37
  %v2335 = vand.u32 %v2323, 2147483648
  %v2336 = vor.u32 1.1754944e-38, %v2335
  %v2337 = vsel %vm2334, %v2336, %v2332
  %v2338 = vmul.f32 1.0, %v2337
  %v2339 = vmul.f32 %v2311, %v2133
  %v2340 = vmul.f32 %v2311, %v2315
  %2342 = vrot.lane.b32.xlu0 %v2340, 64
  %v2343 = vpop.permute.xlu0 %2342
  %v2345 = vadd.f32 %v2339, %v2343
  %v2346 = vtanh.pop %v2345
  %2348 = vrot.lane.b32.xlu0 %v2346, 64
  %v2349 = vpop.permute.xlu0 %2348
  %v2351 = vmul.f32 %v2338, %v2349
  %v2352 = vld [vmem:[%s499] sm:$0x3]
  %v2353 = vld [vmem:[%s1] sm:$0x3]
  %2355 = vset.pattern.permute.xlu0 0
  %2356 = vperm.xlu0 %2355, %v2352
  %v2357 = vpop.permute.xlu0 %2356
  %v2359 = vmul.f32 %v2292, %v2357
  %2361 = vset.pattern.permute.xlu0 0
  %2362 = vperm.xlu0 %2361, %v2353
  %v2363 = vpop.permute.xlu0 %2362
  %v2365 = vmul.f32 %v2351, %v2363
  %2366 = vst.msk [vmem:[%s523] sm:$0x3] %vm515, %v2359
  %2368 = vst [vmem:[#allocation1] ss:$4 sm:$0xff] %v2365
  %v2369 = vld.sshfl [vmem:[#allocation1] sm:$0xff pattern:$0x73625140]
  %2370 = vrot.lane.b32.xlu0 %v2369, 64
  %v2371 = vpop.permute.xlu0 %2370
  %2373 = vst.msk [vmem:[#allocation3] sm:$0x3] %vm524, %v2371
  %v2374 = vld [vmem:[#allocation3] sm:$0x3]
  %v2375 = vld [vmem:[#allocation3 + $0x2] sm:$0x3]
  %v2376 = vld [vmem:[#allocation3 + $0x4] sm:$0x3]
  %v2377 = vld [vmem:[#allocation3 + $0x6] sm:$0x3]
  %v2378 = vld [vmem:[#allocation3 + $0x8] sm:$0x3]
  %v2379 = vld [vmem:[#allocation3 + $0xa] sm:$0x3]
  %v2380 = vld [vmem:[#allocation3 + $0xc] sm:$0x3]
  %v2381 = vld [vmem:[#allocation3 + $0xe] sm:$0x3]
  %v2382 = vld [vmem:[%s4] sm:$0xff]
  %v2383 = vld [vmem:[%s4 + $0x8] sm:$0xff]
  %v2384 = vld [vmem:[%s4 + $0x10] sm:$0xff]
  %v2385 = vld [vmem:[%s4 + $0x18] sm:$0xff]
  %v2386 = vld [vmem:[%s4 + $0x20] sm:$0xff]
  %v2387 = vld [vmem:[%s4 + $0x28] sm:$0xff]
  %v2388 = vld [vmem:[%s4 + $0x30] sm:$0xff]
  %v2389 = vld [vmem:[%s4 + $0x38] sm:$0xff]
  %v2390 = vld [vmem:[%s4 + $0x40] sm:$0xff]
  %v2391 = vld [vmem:[%s4 + $0x48] sm:$0xff]
  %v2392 = vld [vmem:[%s4 + $0x50] sm:$0xff]
  %v2393 = vld [vmem:[%s4 + $0x58] sm:$0xff]
  %v2394 = vld [vmem:[%s4 + $0x60] sm:$0xff]
  %v2395 = vld [vmem:[%s4 + $0x68] sm:$0xff]
  %v2396 = vld [vmem:[%s4 + $0x70] sm:$0xff]
  %v2397 = vld [vmem:[%s4 + $0x78] sm:$0xff]
  %v2398 = vld [vmem:[%s4 + $0x80] sm:$0xff]
  %v2399 = vld [vmem:[%s4 + $0x88] sm:$0xff]
  %v2400 = vld [vmem:[%s4 + $0x90] sm:$0xff]
  %v2401 = vld [vmem:[%s4 + $0x98] sm:$0xff]
  %v2402 = vld [vmem:[%s4 + $0xa0] sm:$0xff]
  %v2403 = vld [vmem:[%s4 + $0xa8] sm:$0xff]
  %v2404 = vld [vmem:[%s4 + $0xb0] sm:$0xff]
  %v2405 = vld [vmem:[%s4 + $0xb8] sm:$0xff]
  %v2406 = vld [vmem:[%s4 + $0xc0] sm:$0xff]
  %v2407 = vld [vmem:[%s4 + $0xc8] sm:$0xff]
  %v2408 = vld [vmem:[%s4 + $0xd0] sm:$0xff]
  %v2409 = vld [vmem:[%s4 + $0xd8] sm:$0xff]
  %v2410 = vld [vmem:[%s4 + $0xe0] sm:$0xff]
  %v2411 = vld [vmem:[%s4 + $0xe8] sm:$0xff]
  %v2412 = vld [vmem:[%s4 + $0xf0] sm:$0xff]
  %v2413 = vld [vmem:[%s4 + $0xf8] sm:$0xff]
  %v2414 = vld [vmem:[%s4 + $0x100] sm:$0xff]
  %v2415 = vld [vmem:[%s4 + $0x108] sm:$0xff]
  %v2416 = vld [vmem:[%s4 + $0x110] sm:$0xff]
  %v2417 = vld [vmem:[%s4 + $0x118] sm:$0xff]
  %v2418 = vld [vmem:[%s4 + $0x120] sm:$0xff]
  %v2419 = vld [vmem:[%s4 + $0x128] sm:$0xff]
  %v2420 = vld [vmem:[%s4 + $0x130] sm:$0xff]
  %v2421 = vld [vmem:[%s4 + $0x138] sm:$0xff]
  %v2422 = vld [vmem:[%s4 + $0x140] sm:$0xff]
  %v2423 = vld [vmem:[%s4 + $0x148] sm:$0xff]
  %v2424 = vld [vmem:[%s4 + $0x150] sm:$0xff]
  %v2425 = vld [vmem:[%s4 + $0x158] sm:$0xff]
  %v2426 = vld [vmem:[%s4 + $0x160] sm:$0xff]
  %v2427 = vld [vmem:[%s4 + $0x168] sm:$0xff]
  %v2428 = vld [vmem:[%s4 + $0x170] sm:$0xff]
  %v2429 = vld [vmem:[%s4 + $0x178] sm:$0xff]
  %v2430 = vld [vmem:[%s4 + $0x180] sm:$0xff]
  %v2431 = vld [vmem:[%s4 + $0x188] sm:$0xff]
  %v2432 = vld [vmem:[%s4 + $0x190] sm:$0xff]
  %v2433 = vld [vmem:[%s4 + $0x198] sm:$0xff]
  %v2434 = vld [vmem:[%s4 + $0x1a0] sm:$0xff]
  %v2435 = vld [vmem:[%s4 + $0x1a8] sm:$0xff]
  %v2436 = vld [vmem:[%s4 + $0x1b0] sm:$0xff]
  %v2437 = vld [vmem:[%s4 + $0x1b8] sm:$0xff]
  %v2438 = vld [vmem:[%s4 + $0x1c0] sm:$0xff]
  %v2439 = vld [vmem:[%s4 + $0x1c8] sm:$0xff]
  %v2440 = vld [vmem:[%s4 + $0x1d0] sm:$0xff]
  %v2441 = vld [vmem:[%s4 + $0x1d8] sm:$0xff]
  %v2442 = vld [vmem:[%s4 + $0x1e0] sm:$0xff]
  %v2443 = vld [vmem:[%s4 + $0x1e8] sm:$0xff]
  %v2444 = vld [vmem:[%s4 + $0x1f0] sm:$0xff]
  %v2445 = vld [vmem:[%s4 + $0x1f8] sm:$0xff]
  %v2446 = vld [vmem:[%s5] sm:$0xf]
  %v2448 = vperm.slane %v2446, 0
  %v2449 = vperm.slane %v2446, 1
  %v2450 = vperm.slane %v2446, 2
  %v2451 = vperm.slane %v2446, 3
  %2464 = vst [vmem:[#allocation1] ss:$4 sm:$0xff] %v2374
  %s2465 = scalar_lea.vmem [#allocation1], 1
  %2466 = vst [vmem:[%s2465] ss:$4 sm:$0xff] %v2375
  %s2467 = scalar_lea.vmem [#allocation1], 2
  %2468 = vst [vmem:[%s2467] ss:$4 sm:$0xff] %v2376
  %s2469 = scalar_lea.vmem [#allocation1], 3
  %2470 = vst [vmem:[%s2469] ss:$4 sm:$0xff] %v2377
  %s2471 = scalar_lea.vmem [#allocation1], 32
  %2472 = vst [vmem:[%s2471] ss:$4 sm:$0xff] %v2378
  %s2473 = scalar_lea.vmem [#allocation1], 33
  %2474 = vst [vmem:[%s2473] ss:$4 sm:$0xff] %v2379
  %s2475 = scalar_lea.vmem [#allocation1], 34
  %2476 = vst [vmem:[%s2475] ss:$4 sm:$0xff] %v2380
  %s2477 = scalar_lea.vmem [#allocation1], 35
  %2478 = vst [vmem:[%s2477] ss:$4 sm:$0xff] %v2381
  %v2479 = vld.sshfl [vmem:[#allocation1] sm:$0xff pattern:$0x73625140]
  %v2480 = vld.sshfl [vmem:[#allocation1 + $0x20] sm:$0xff pattern:$0x73625140]
  %2483 = vmatpush.msra.mxu0 %v2442
  %2484 = vmatpush.msra.mxu0 %v2438
  %2485 = vmatpush.msra.mxu0 %v2434
  %2486 = vmatpush.msra.mxu0 %v2430
  %2487 = vmatpush.msra.mxu0 %v2426
  %2488 = vmatpush.msra.mxu0 %v2422
  %2489 = vmatpush.msra.mxu0 %v2418
  %2490 = vmatpush.msra.mxu0 %v2414
  %2491 = vmatpush.msra.mxu0 %v2410
  %2492 = vmatpush.msra.mxu0 %v2406
  %2493 = vmatpush.msra.mxu0 %v2402
  %2494 = vmatpush.msra.mxu0 %v2398
  %2495 = vmatpush.msra.mxu0 %v2394
  %2496 = vmatpush.msra.mxu0 %v2390
  %2497 = vmatpush.msra.mxu0 %v2386
  %2498 = vmatpush.msra.mxu0 %v2382
  %2499 = vmatmul.f32.gmra.mxu0 %v2479
  %v2500 = vpop.f32.mrf.mxu0
  %v2501 = vadd.f32 %v2448, %v2500
  %2502 = vmatmul.f32.gmra.mxu0 %v2480
  %v2503 = vpop.f32.mrf.mxu0
  %v2504 = vadd.f32 %v2448, %v2503
  %2505 = vdwg.mxu0
  %2506 = vmatpush.msra.mxu0 %v2443
  %2507 = vmatpush.msra.mxu0 %v2439
  %2508 = vmatpush.msra.mxu0 %v2435
  %2509 = vmatpush.msra.mxu0 %v2431
  %2510 = vmatpush.msra.mxu0 %v2427
  %2511 = vmatpush.msra.mxu0 %v2423
  %2512 = vmatpush.msra.mxu0 %v2419
  %2513 = vmatpush.msra.mxu0 %v2415
  %2514 = vmatpush.msra.mxu0 %v2411
  %2515 = vmatpush.msra.mxu0 %v2407
  %2516 = vmatpush.msra.mxu0 %v2403
  %2517 = vmatpush.msra.mxu0 %v2399
  %2518 = vmatpush.msra.mxu0 %v2395
  %2519 = vmatpush.msra.mxu0 %v2391
  %2520 = vmatpush.msra.mxu0 %v2387
  %2521 = vmatpush.msra.mxu0 %v2383
  %2522 = vmatmul.f32.gmra.mxu0 %v2479
  %v2523 = vpop.f32.mrf.mxu0
  %v2524 = vadd.f32 %v2449, %v2523
  %2525 = vmatmul.f32.gmra.mxu0 %v2480
  %v2526 = vpop.f32.mrf.mxu0
  %v2527 = vadd.f32 %v2449, %v2526
  %2528 = vdwg.mxu0
  %2529 = vmatpush.msra.mxu0 %v2444
  %2530 = vmatpush.msra.mxu0 %v2440
  %2531 = vmatpush.msra.mxu0 %v2436
  %2532 = vmatpush.msra.mxu0 %v2432
  %2533 = vmatpush.msra.mxu0 %v2428
  %2534 = vmatpush.msra.mxu0 %v2424
  %2535 = vmatpush.msra.mxu0 %v2420
  %2536 = vmatpush.msra.mxu0 %v2416
  %2537 = vmatpush.msra.mxu0 %v2412
  %2538 = vmatpush.msra.mxu0 %v2408
  %2539 = vmatpush.msra.mxu0 %v2404
  %2540 = vmatpush.msra.mxu0 %v2400
  %2541 = vmatpush.msra.mxu0 %v2396
  %2542 = vmatpush.msra.mxu0 %v2392
  %2543 = vmatpush.msra.mxu0 %v2388
  %2544 = vmatpush.msra.mxu0 %v2384
  %2545 = vmatmul.f32.gmra.mxu0 %v2479
  %v2546 = vpop.f32.mrf.mxu0
  %v2547 = vadd.f32 %v2450, %v2546
  %2548 = vmatmul.f32.gmra.mxu0 %v2480
  %v2549 = vpop.f32.mrf.mxu0
  %v2550 = vadd.f32 %v2450, %v2549
  %2551 = vdwg.mxu0
  %2552 = vmatpush.msra.mxu0 %v2445
  %2553 = vmatpush.msra.mxu0 %v2441
  %2554 = vmatpush.msra.mxu0 %v2437
  %2555 = vmatpush.msra.mxu0 %v2433
  %2556 = vmatpush.msra.mxu0 %v2429
  %2557 = vmatpush.msra.mxu0 %v2425
  %2558 = vmatpush.msra.mxu0 %v2421
  %2559 = vmatpush.msra.mxu0 %v2417
  %2560 = vmatpush.msra.mxu0 %v2413
  %2561 = vmatpush.msra.mxu0 %v2409
  %2562 = vmatpush.msra.mxu0 %v2405
  %2563 = vmatpush.msra.mxu0 %v2401
  %2564 = vmatpush.msra.mxu0 %v2397
  %2565 = vmatpush.msra.mxu0 %v2393
  %2566 = vmatpush.msra.mxu0 %v2389
  %2567 = vmatpush.msra.mxu0 %v2385
  %2568 = vmatmul.f32.gmra.mxu0 %v2479
  %v2569 = vpop.f32.mrf.mxu0
  %v2570 = vadd.f32 %v2451, %v2569
  %2571 = vmatmul.f32.gmra.mxu0 %v2480
  %v2572 = vpop.f32.mrf.mxu0
  %v2573 = vadd.f32 %v2451, %v2572
  %2574 = vdwg.mxu0
  %v2583 = vrot.slane %v2524, 6
  %v2584 = vrot.slane %v2547, 4
  %v2585 = vrot.slane %v2570, 2
  %v2586 = vrot.slane %v2527, 6
  %v2587 = vrot.slane %v2550, 4
  %v2588 = vrot.slane %v2573, 2
  %v2589 = vsel %vm197, %v2501, %v2583
  %v2590 = vsel %vm199, %v2584, %v2585
  %v2591 = vsel %vm201, %v2589, %v2590
  %v2592 = vsel %vm203, %v2501, %v2583
  %v2593 = vsel %vm205, %v2585, %v2584
  %v2594 = vsel %vm207, %v2592, %v2593
  %v2595 = vrot.slane %v2594, 2
  %v2596 = vsel %vm199, %v2501, %v2583
  %v2597 = vsel %vm197, %v2584, %v2585
  %v2598 = vsel %vm201, %v2597, %v2596
  %v2599 = vrot.slane %v2598, 4
  %v2600 = vsel %vm205, %v2583, %v2501
  %v2601 = vsel %vm203, %v2584, %v2585
  %v2602 = vsel %vm207, %v2601, %v2600
  %v2603 = vrot.slane %v2602, 6
  %v2604 = vsel %vm197, %v2504, %v2586
  %v2605 = vsel %vm199, %v2587, %v2588
  %v2606 = vsel %vm201, %v2604, %v2605
  %v2607 = vsel %vm203, %v2504, %v2586
  %v2608 = vsel %vm205, %v2588, %v2587
  %v2609 = vsel %vm207, %v2607, %v2608
  %v2610 = vrot.slane %v2609, 2
  %v2611 = vsel %vm199, %v2504, %v2586
  %v2612 = vsel %vm197, %v2587, %v2588
  %v2613 = vsel %vm201, %v2612, %v2611
  %v2614 = vrot.slane %v2613, 4
  %v2615 = vsel %vm205, %v2586, %v2504
  %v2616 = vsel %vm203, %v2587, %v2588
  %v2617 = vsel %vm207, %v2616, %v2615
  %v2618 = vrot.slane %v2617, 6
  %2627 = vst [vmem:[#allocation2] sm:$0xff] %v2591
  %2628 = vst [vmem:[#allocation2 + $0x8] sm:$0xff] %v2595
  %2629 = vst [vmem:[#allocation2 + $0x10] sm:$0xff] %v2599
  %2630 = vst [vmem:[#allocation2 + $0x18] sm:$0xff] %v2603
  %2631 = vst [vmem:[#allocation2 + $0x20] sm:$0xff] %v2606
  %2632 = vst [vmem:[#allocation2 + $0x28] sm:$0xff] %v2610
  %2633 = vst [vmem:[#allocation2 + $0x30] sm:$0xff] %v2614
  %2634 = vst [vmem:[#allocation2 + $0x38] sm:$0xff] %v2618
  %v2635 = vld [vmem:[%s8] sm:$0xff]
  %v2636 = vld [vmem:[%s8 + $0x8] sm:$0xff]
  %v2637 = vld [vmem:[%s8 + $0x10] sm:$0xff]
  %v2638 = vld [vmem:[%s8 + $0x18] sm:$0xff]
  %v2639 = vld [vmem:[%s8 + $0x20] sm:$0xff]
  %v2640 = vld [vmem:[%s8 + $0x28] sm:$0xff]
  %v2641 = vld [vmem:[%s8 + $0x30] sm:$0xff]
  %v2642 = vld [vmem:[%s8 + $0x38] sm:$0xff]
  %v2643 = vld [vmem:[%s8 + $0x40] sm:$0xff]
  %v2644 = vld [vmem:[%s8 + $0x48] sm:$0xff]
  %v2645 = vld [vmem:[%s8 + $0x50] sm:$0xff]
  %v2646 = vld [vmem:[%s8 + $0x58] sm:$0xff]
  %v2647 = vld [vmem:[%s8 + $0x60] sm:$0xff]
  %v2648 = vld [vmem:[%s8 + $0x68] sm:$0xff]
  %v2649 = vld [vmem:[%s8 + $0x70] sm:$0xff]
  %v2650 = vld [vmem:[%s8 + $0x78] sm:$0xff]
  %v2651 = vld [vmem:[%s9] sm:$0xff]
  %v2652 = vld [vmem:[%s9 + $0x8] sm:$0xff]
  %v2653 = vld [vmem:[%s9 + $0x10] sm:$0xff]
  %v2654 = vld [vmem:[%s9 + $0x18] sm:$0xff]
  %v2655 = vld [vmem:[%s9 + $0x20] sm:$0xff]
  %v2656 = vld [vmem:[%s9 + $0x28] sm:$0xff]
  %v2657 = vld [vmem:[%s9 + $0x30] sm:$0xff]
  %v2658 = vld [vmem:[%s9 + $0x38] sm:$0xff]
  %v2659 = vld [vmem:[%s9 + $0x40] sm:$0xff]
  %v2660 = vld [vmem:[%s9 + $0x48] sm:$0xff]
  %v2661 = vld [vmem:[%s9 + $0x50] sm:$0xff]
  %v2662 = vld [vmem:[%s9 + $0x58] sm:$0xff]
  %v2663 = vld [vmem:[%s9 + $0x60] sm:$0xff]
  %v2664 = vld [vmem:[%s9 + $0x68] sm:$0xff]
  %v2665 = vld [vmem:[%s9 + $0x70] sm:$0xff]
  %v2666 = vld [vmem:[%s9 + $0x78] sm:$0xff]
  %v2667 = vld [vmem:[#allocation2] sm:$0xf]
  %2668 = vmatpush.msra.mxu0 0.0
  %2669 = vmatpush.msra.mxu0 0.0
  %2670 = vmatpush.msra.mxu0 0.0
  %2671 = vmatpush.msra.mxu0 0.0
  %2672 = vmatpush.msra.mxu0 0.0
  %2673 = vmatpush.msra.mxu0 0.0
  %2674 = vmatpush.msra.mxu0 0.0
  %2675 = vmatpush.msra.mxu0 0.0
  %2676 = vmatpush.msra.mxu0 %v2649
  %2677 = vmatpush.msra.mxu0 %v2647
  %2678 = vmatpush.msra.mxu0 %v2645
  %2679 = vmatpush.msra.mxu0 %v2643
  %2680 = vmatpush.msra.mxu0 %v2641
  %2681 = vmatpush.msra.mxu0 %v2639
  %2682 = vmatpush.msra.mxu0 %v2637
  %2683 = vmatpush.msra.mxu0 %v2635
  %2684 = vmatmul.f32.gmra.mxu0 %v284
  %v2685 = vpop.f32.mrf.mxu0
  %v2686 = vadd.f32 0.0, %v2685
  %2687 = vdwg.mxu0
  %2688 = vmatpush.msra.mxu0 0.0
  %2689 = vmatpush.msra.mxu0 0.0
  %2690 = vmatpush.msra.mxu0 0.0
  %2691 = vmatpush.msra.mxu0 0.0
  %2692 = vmatpush.msra.mxu0 0.0
  %2693 = vmatpush.msra.mxu0 0.0
  %2694 = vmatpush.msra.mxu0 0.0
  %2695 = vmatpush.msra.mxu0 0.0
  %2696 = vmatpush.msra.mxu0 %v2650
  %2697 = vmatpush.msra.mxu0 %v2648
  %2698 = vmatpush.msra.mxu0 %v2646
  %2699 = vmatpush.msra.mxu0 %v2644
  %2700 = vmatpush.msra.mxu0 %v2642
  %2701 = vmatpush.msra.mxu0 %v2640
  %2702 = vmatpush.msra.mxu0 %v2638
  %2703 = vmatpush.msra.mxu0 %v2636
  %2704 = vmatmul.f32.gmra.mxu0 %v284
  %v2705 = vpop.f32.mrf.mxu0
  %v2706 = vadd.f32 0.0, %v2705
  %2707 = vdwg.mxu0
  %v2710 = vrot.slane %v2706, 6
  %v2711 = vsel %vm197, %v2686, %v2710
  %v2713 = vadd.f32 %v2667, %v2711
  %v2714 = vld [vmem:[%s332 + $0x4] sm:$0xf]
  %2715 = vmatpush.msra.mxu0 0.0
  %2716 = vmatpush.msra.mxu0 0.0
  %2717 = vmatpush.msra.mxu0 0.0
  %2718 = vmatpush.msra.mxu0 0.0
  %2719 = vmatpush.msra.mxu0 0.0
  %2720 = vmatpush.msra.mxu0 0.0
  %2721 = vmatpush.msra.mxu0 0.0
  %2722 = vmatpush.msra.mxu0 0.0
  %2723 = vmatpush.msra.mxu0 %v2665
  %2724 = vmatpush.msra.mxu0 %v2663
  %2725 = vmatpush.msra.mxu0 %v2661
  %2726 = vmatpush.msra.mxu0 %v2659
  %2727 = vmatpush.msra.mxu0 %v2657
  %2728 = vmatpush.msra.mxu0 %v2655
  %2729 = vmatpush.msra.mxu0 %v2653
  %2730 = vmatpush.msra.mxu0 %v2651
  %2731 = vmatmul.f32.gmra.mxu0 %v284
  %v2732 = vpop.f32.mrf.mxu0
  %v2733 = vadd.f32 0.0, %v2732
  %2734 = vdwg.mxu0
  %2735 = vmatpush.msra.mxu0 0.0
  %2736 = vmatpush.msra.mxu0 0.0
  %2737 = vmatpush.msra.mxu0 0.0
  %2738 = vmatpush.msra.mxu0 0.0
  %2739 = vmatpush.msra.mxu0 0.0
  %2740 = vmatpush.msra.mxu0 0.0
  %2741 = vmatpush.msra.mxu0 0.0
  %2742 = vmatpush.msra.mxu0 0.0
  %2743 = vmatpush.msra.mxu0 %v2666
  %2744 = vmatpush.msra.mxu0 %v2664
  %2745 = vmatpush.msra.mxu0 %v2662
  %2746 = vmatpush.msra.mxu0 %v2660
  %2747 = vmatpush.msra.mxu0 %v2658
  %2748 = vmatpush.msra.mxu0 %v2656
  %2749 = vmatpush.msra.mxu0 %v2654
  %2750 = vmatpush.msra.mxu0 %v2652
  %2751 = vmatmul.f32.gmra.mxu0 %v284
  %v2752 = vpop.f32.mrf.mxu0
  %v2753 = vadd.f32 0.0, %v2752
  %2754 = vdwg.mxu0
  %v2757 = vrot.slane %v2753, 6
  %v2758 = vsel %vm197, %v2733, %v2757
  %v2760 = vadd.f32 %v2714, %v2758
  %v2761 = vxor.u32 %v2713, 2147483648
  %v2762 = vmul.f32 %v2761, 1.442695
  %v2763 = vpow.pop %v2762
  %v2764 = vadd.f32 %v2763, 1.0
  %v2765 = vrcp.pop %v2764
  %v2766 = vmul.f32 %v2764, %v2765
  %v2767 = vsub.f32 1.0, %v2766
  %v2768 = vmul.f32 %v2765, %v2767
  %v2769 = vadd.f32 %v2765, %v2768
  %vm2770 = vweird.f32 %v2764
  %vm2771 = vweird.f32 %v2765
  %vm2772 = vmor %vm2770, %vm2771
  %v2773 = vsel %vm2772, %v2765, %v2769
  %v2774 = vand.u32 2147483647, %v2764
  %vm2775 = vcmp.eq.f32.partialorder %v2774, 8.507059e+37
  %v2776 = vand.u32 %v2764, 2147483648
  %v2777 = vor.u32 1.1754944e-38, %v2776
  %v2778 = vsel %vm2775, %v2777, %v2773
  %v2779 = vmul.f32 1.0, %v2778
  %v2781 = vrot.slane %v2713, 2
  %v2783 = vtanh.pop %v2781
  %2784 = vrot.lane.b32.xlu0 %v2713, 64
  %v2785 = vpop.permute.xlu0 %2784
  %v2786 = vrot.slane %v2785, 2
  %v2788 = vxor.u32 %v2786, 2147483648
  %v2789 = vmul.f32 %v2788, 1.442695
  %v2790 = vpow.pop %v2789
  %v2791 = vadd.f32 %v2790, 1.0
  %v2792 = vrcp.pop %v2791
  %v2793 = vmul.f32 %v2791, %v2792
  %v2794 = vsub.f32 1.0, %v2793
  %v2795 = vmul.f32 %v2792, %v2794
  %v2796 = vadd.f32 %v2792, %v2795
  %vm2797 = vweird.f32 %v2791
  %vm2798 = vweird.f32 %v2792
  %vm2799 = vmor %vm2797, %vm2798
  %v2800 = vsel %vm2799, %v2792, %v2796
  %v2801 = vand.u32 2147483647, %v2791
  %vm2802 = vcmp.eq.f32.partialorder %v2801, 8.507059e+37
  %v2803 = vand.u32 %v2791, 2147483648
  %v2804 = vor.u32 1.1754944e-38, %v2803
  %v2805 = vsel %vm2802, %v2804, %v2800
  %v2806 = vmul.f32 1.0, %v2805
  %v2807 = vmul.f32 %v2779, 0.0
  %v2808 = vmul.f32 %v2779, %v2783
  %2810 = vrot.lane.b32.xlu0 %v2808, 64
  %v2811 = vpop.permute.xlu0 %2810
  %v2813 = vadd.f32 %v2807, %v2811
  %v2814 = vtanh.pop %v2813
  %2816 = vrot.lane.b32.xlu0 %v2814, 64
  %v2817 = vpop.permute.xlu0 %2816
  %v2819 = vmul.f32 %v2806, %v2817
  %v2820 = vxor.u32 %v2760, 2147483648
  %v2821 = vmul.f32 %v2820, 1.442695
  %v2822 = vpow.pop %v2821
  %v2823 = vadd.f32 %v2822, 1.0
  %v2824 = vrcp.pop %v2823
  %v2825 = vmul.f32 %v2823, %v2824
  %v2826 = vsub.f32 1.0, %v2825
  %v2827 = vmul.f32 %v2824, %v2826
  %v2828 = vadd.f32 %v2824, %v2827
  %vm2829 = vweird.f32 %v2823
  %vm2830 = vweird.f32 %v2824
  %vm2831 = vmor %vm2829, %vm2830
  %v2832 = vsel %vm2831, %v2824, %v2828
  %v2833 = vand.u32 2147483647, %v2823
  %vm2834 = vcmp.eq.f32.partialorder %v2833, 8.507059e+37
  %v2835 = vand.u32 %v2823, 2147483648
  %v2836 = vor.u32 1.1754944e-38, %v2835
  %v2837 = vsel %vm2834, %v2836, %v2832
  %v2838 = vmul.f32 1.0, %v2837
  %v2840 = vrot.slane %v2760, 2
  %v2842 = vtanh.pop %v2840
  %2843 = vrot.lane.b32.xlu0 %v2760, 64
  %v2844 = vpop.permute.xlu0 %2843
  %v2845 = vrot.slane %v2844, 2
  %v2847 = vxor.u32 %v2845, 2147483648
  %v2848 = vmul.f32 %v2847, 1.442695
  %v2849 = vpow.pop %v2848
  %v2850 = vadd.f32 %v2849, 1.0
  %v2851 = vrcp.pop %v2850
  %v2852 = vmul.f32 %v2850, %v2851
  %v2853 = vsub.f32 1.0, %v2852
  %v2854 = vmul.f32 %v2851, %v2853
  %v2855 = vadd.f32 %v2851, %v2854
  %vm2856 = vweird.f32 %v2850
  %vm2857 = vweird.f32 %v2851
  %vm2858 = vmor %vm2856, %vm2857
  %v2859 = vsel %vm2858, %v2851, %v2855
  %v2860 = vand.u32 2147483647, %v2850
  %vm2861 = vcmp.eq.f32.partialorder %v2860, 8.507059e+37
  %v2862 = vand.u32 %v2850, 2147483648
  %v2863 = vor.u32 1.1754944e-38, %v2862
  %v2864 = vsel %vm2861, %v2863, %v2859
  %v2865 = vmul.f32 1.0, %v2864
  %v2866 = vmul.f32 %v2838, 0.0
  %v2867 = vmul.f32 %v2838, %v2842
  %2869 = vrot.lane.b32.xlu0 %v2867, 64
  %v2870 = vpop.permute.xlu0 %2869
  %v2872 = vadd.f32 %v2866, %v2870
  %v2873 = vtanh.pop %v2872
  %2875 = vrot.lane.b32.xlu0 %v2873, 64
  %v2876 = vpop.permute.xlu0 %2875
  %v2878 = vmul.f32 %v2865, %v2876
  %v2879 = vld [vmem:[%s1] sm:$0x3]
  %v2880 = vld [vmem:[%s499] sm:$0x3]
  %v2881 = vsub.f32 1.0, %v2879
  %v2882 = vsub.f32 1.0, %v2880
  %2884 = vset.pattern.permute.xlu0 0
  %2885 = vperm.xlu0 %2884, %v2879
  %v2886 = vpop.permute.xlu0 %2885
  %v2888 = vmul.f32 %v2819, %v2886
  %2890 = vset.pattern.permute.xlu0 0
  %2891 = vperm.xlu0 %2890, %v2880
  %v2892 = vpop.permute.xlu0 %2891
  %v2894 = vmul.f32 %v2878, %v2892
  %2895 = vst.msk [vmem:[%s10] sm:$0x3] %vm515, %v2888
  %2897 = vst [vmem:[#allocation1] ss:$4 sm:$0xff] %v2894
  %v2898 = vld.sshfl [vmem:[#allocation1] sm:$0xff pattern:$0x73625140]
  %2899 = vrot.lane.b32.xlu0 %v2898, 64
  %v2900 = vpop.permute.xlu0 %2899
  %s2902 = scalar_lea.vmem %s10, 14
  %2903 = vst.msk [vmem:[%s2902] sm:$0x3] %vm524, %v2900
  %2905 = vset.pattern.permute.xlu0 0
  %2906 = vperm.xlu0 %2905, %v2881
  %v2907 = vpop.permute.xlu0 %2906
  %v2909 = vmul.f32 %v2907, 0.0
  %v2910 = vadd.f32 %v2888, %v2909
  %v2911 = vmul.f32 %v2813, %v2886
  %v2912 = vadd.f32 %v2911, %v2909
  %2914 = vset.pattern.permute.xlu0 0
  %2915 = vperm.xlu0 %2914, %v2882
  %v2916 = vpop.permute.xlu0 %2915
  %v2918 = vmul.f32 %v2916, 0.0
  %v2919 = vadd.f32 %v2894, %v2918
  %v2920 = vmul.f32 %v2872, %v2892
  %v2921 = vadd.f32 %v2920, %v2918
  %v2922 = vld [vmem:[%s544] sm:$0xf]
  %v2924 = vsel %vm282, %v2910, 0
  %2926 = vmatpush.msra.mxu0 0.0
  %2927 = vmatpush.msra.mxu0 0.0
  %2928 = vmatpush.msra.mxu0 0.0
  %2929 = vmatpush.msra.mxu0 0.0
  %2930 = vmatpush.msra.mxu0 0.0
  %2931 = vmatpush.msra.mxu0 0.0
  %2932 = vmatpush.msra.mxu0 0.0
  %2933 = vmatpush.msra.mxu0 0.0
  %2934 = vmatpush.msra.mxu0 %v2649
  %2935 = vmatpush.msra.mxu0 %v2647
  %2936 = vmatpush.msra.mxu0 %v2645
  %2937 = vmatpush.msra.mxu0 %v2643
  %2938 = vmatpush.msra.mxu0 %v2641
  %2939 = vmatpush.msra.mxu0 %v2639
  %2940 = vmatpush.msra.mxu0 %v2637
  %2941 = vmatpush.msra.mxu0 %v2635
  %2942 = vmatmul.f32.gmra.mxu0 %v2924
  %v2943 = vpop.f32.mrf.mxu0
  %v2944 = vadd.f32 0.0, %v2943
  %2945 = vdwg.mxu0
  %2946 = vmatpush.msra.mxu0 0.0
  %2947 = vmatpush.msra.mxu0 0.0
  %2948 = vmatpush.msra.mxu0 0.0
  %2949 = vmatpush.msra.mxu0 0.0
  %2950 = vmatpush.msra.mxu0 0.0
  %2951 = vmatpush.msra.mxu0 0.0
  %2952 = vmatpush.msra.mxu0 0.0
  %2953 = vmatpush.msra.mxu0 0.0
  %2954 = vmatpush.msra.mxu0 %v2650
  %2955 = vmatpush.msra.mxu0 %v2648
  %2956 = vmatpush.msra.mxu0 %v2646
  %2957 = vmatpush.msra.mxu0 %v2644
  %2958 = vmatpush.msra.mxu0 %v2642
  %2959 = vmatpush.msra.mxu0 %v2640
  %2960 = vmatpush.msra.mxu0 %v2638
  %2961 = vmatpush.msra.mxu0 %v2636
  %2962 = vmatmul.f32.gmra.mxu0 %v2924
  %v2963 = vpop.f32.mrf.mxu0
  %v2964 = vadd.f32 0.0, %v2963
  %2965 = vdwg.mxu0
  %v2968 = vrot.slane %v2964, 6
  %v2969 = vsel %vm197, %v2944, %v2968
  %v2971 = vadd.f32 %v2922, %v2969
  %v2972 = vld [vmem:[%s595 + $0x4] sm:$0xf]
  %v2974 = vsel %vm282, %v2919, 0
  %2976 = vmatpush.msra.mxu0 0.0
  %2977 = vmatpush.msra.mxu0 0.0
  %2978 = vmatpush.msra.mxu0 0.0
  %2979 = vmatpush.msra.mxu0 0.0
  %2980 = vmatpush.msra.mxu0 0.0
  %2981 = vmatpush.msra.mxu0 0.0
  %2982 = vmatpush.msra.mxu0 0.0
  %2983 = vmatpush.msra.mxu0 0.0
  %2984 = vmatpush.msra.mxu0 %v2665
  %2985 = vmatpush.msra.mxu0 %v2663
  %2986 = vmatpush.msra.mxu0 %v2661
  %2987 = vmatpush.msra.mxu0 %v2659
  %2988 = vmatpush.msra.mxu0 %v2657
  %2989 = vmatpush.msra.mxu0 %v2655
  %2990 = vmatpush.msra.mxu0 %v2653
  %2991 = vmatpush.msra.mxu0 %v2651
  %2992 = vmatmul.f32.gmra.mxu0 %v2974
  %v2993 = vpop.f32.mrf.mxu0
  %v2994 = vadd.f32 0.0, %v2993
  %2995 = vdwg.mxu0
  %2996 = vmatpush.msra.mxu0 0.0
  %2997 = vmatpush.msra.mxu0 0.0
  %2998 = vmatpush.msra.mxu0 0.0
  %2999 = vmatpush.msra.mxu0 0.0
  %3000 = vmatpush.msra.mxu0 0.0
  %3001 = vmatpush.msra.mxu0 0.0
  %3002 = vmatpush.msra.mxu0 0.0
  %3003 = vmatpush.msra.mxu0 0.0
  %3004 = vmatpush.msra.mxu0 %v2666
  %3005 = vmatpush.msra.mxu0 %v2664
  %3006 = vmatpush.msra.mxu0 %v2662
  %3007 = vmatpush.msra.mxu0 %v2660
  %3008 = vmatpush.msra.mxu0 %v2658
  %3009 = vmatpush.msra.mxu0 %v2656
  %3010 = vmatpush.msra.mxu0 %v2654
  %3011 = vmatpush.msra.mxu0 %v2652
  %3012 = vmatmul.f32.gmra.mxu0 %v2974
  %v3013 = vpop.f32.mrf.mxu0
  %v3014 = vadd.f32 0.0, %v3013
  %3015 = vdwg.mxu0
  %v3018 = vrot.slane %v3014, 6
  %v3019 = vsel %vm197, %v2994, %v3018
  %v3021 = vadd.f32 %v2972, %v3019
  %v3022 = vxor.u32 %v2971, 2147483648
  %v3023 = vmul.f32 %v3022, 1.442695
  %v3024 = vpow.pop %v3023
  %v3025 = vadd.f32 %v3024, 1.0
  %v3026 = vrcp.pop %v3025
  %v3027 = vmul.f32 %v3025, %v3026
  %v3028 = vsub.f32 1.0, %v3027
  %v3029 = vmul.f32 %v3026, %v3028
  %v3030 = vadd.f32 %v3026, %v3029
  %vm3031 = vweird.f32 %v3025
  %vm3032 = vweird.f32 %v3026
  %vm3033 = vmor %vm3031, %vm3032
  %v3034 = vsel %vm3033, %v3026, %v3030
  %v3035 = vand.u32 2147483647, %v3025
  %vm3036 = vcmp.eq.f32.partialorder %v3035, 8.507059e+37
  %v3037 = vand.u32 %v3025, 2147483648
  %v3038 = vor.u32 1.1754944e-38, %v3037
  %v3039 = vsel %vm3036, %v3038, %v3034
  %v3040 = vmul.f32 1.0, %v3039
  %v3042 = vrot.slane %v2971, 2
  %v3044 = vtanh.pop %v3042
  %3045 = vrot.lane.b32.xlu0 %v2971, 64
  %v3046 = vpop.permute.xlu0 %3045
  %v3047 = vrot.slane %v3046, 2
  %v3049 = vxor.u32 %v3047, 2147483648
  %v3050 = vmul.f32 %v3049, 1.442695
  %v3051 = vpow.pop %v3050
  %v3052 = vadd.f32 %v3051, 1.0
  %v3053 = vrcp.pop %v3052
  %v3054 = vmul.f32 %v3052, %v3053
  %v3055 = vsub.f32 1.0, %v3054
  %v3056 = vmul.f32 %v3053, %v3055
  %v3057 = vadd.f32 %v3053, %v3056
  %vm3058 = vweird.f32 %v3052
  %vm3059 = vweird.f32 %v3053
  %vm3060 = vmor %vm3058, %vm3059
  %v3061 = vsel %vm3060, %v3053, %v3057
  %v3062 = vand.u32 2147483647, %v3052
  %vm3063 = vcmp.eq.f32.partialorder %v3062, 8.507059e+37
  %v3064 = vand.u32 %v3052, 2147483648
  %v3065 = vor.u32 1.1754944e-38, %v3064
  %v3066 = vsel %vm3063, %v3065, %v3061
  %v3067 = vmul.f32 1.0, %v3066
  %v3068 = vmul.f32 %v3040, %v2912
  %v3069 = vmul.f32 %v3040, %v3044
  %3071 = vrot.lane.b32.xlu0 %v3069, 64
  %v3072 = vpop.permute.xlu0 %3071
  %v3074 = vadd.f32 %v3068, %v3072
  %v3075 = vtanh.pop %v3074
  %3077 = vrot.lane.b32.xlu0 %v3075, 64
  %v3078 = vpop.permute.xlu0 %3077
  %v3080 = vmul.f32 %v3067, %v3078
  %v3081 = vxor.u32 %v3021, 2147483648
  %v3082 = vmul.f32 %v3081, 1.442695
  %v3083 = vpow.pop %v3082
  %v3084 = vadd.f32 %v3083, 1.0
  %v3085 = vrcp.pop %v3084
  %v3086 = vmul.f32 %v3084, %v3085
  %v3087 = vsub.f32 1.0, %v3086
  %v3088 = vmul.f32 %v3085, %v3087
  %v3089 = vadd.f32 %v3085, %v3088
  %vm3090 = vweird.f32 %v3084
  %vm3091 = vweird.f32 %v3085
  %vm3092 = vmor %vm3090, %vm3091
  %v3093 = vsel %vm3092, %v3085, %v3089
  %v3094 = vand.u32 2147483647, %v3084
  %vm3095 = vcmp.eq.f32.partialorder %v3094, 8.507059e+37
  %v3096 = vand.u32 %v3084, 2147483648
  %v3097 = vor.u32 1.1754944e-38, %v3096
  %v3098 = vsel %vm3095, %v3097, %v3093
  %v3099 = vmul.f32 1.0, %v3098
  %v3101 = vrot.slane %v3021, 2
  %v3103 = vtanh.pop %v3101
  %3104 = vrot.lane.b32.xlu0 %v3021, 64
  %v3105 = vpop.permute.xlu0 %3104
  %v3106 = vrot.slane %v3105, 2
  %v3108 = vxor.u32 %v3106, 2147483648
  %v3109 = vmul.f32 %v3108, 1.442695
  %v3110 = vpow.pop %v3109
  %v3111 = vadd.f32 %v3110, 1.0
  %v3112 = vrcp.pop %v3111
  %v3113 = vmul.f32 %v3111, %v3112
  %v3114 = vsub.f32 1.0, %v3113
  %v3115 = vmul.f32 %v3112, %v3114
  %v3116 = vadd.f32 %v3112, %v3115
  %vm3117 = vweird.f32 %v3111
  %vm3118 = vweird.f32 %v3112
  %vm3119 = vmor %vm3117, %vm3118
  %v3120 = vsel %vm3119, %v3112, %v3116
  %v3121 = vand.u32 2147483647, %v3111
  %vm3122 = vcmp.eq.f32.partialorder %v3121, 8.507059e+37
  %v3123 = vand.u32 %v3111, 2147483648
  %v3124 = vor.u32 1.1754944e-38, %v3123
  %v3125 = vsel %vm3122, %v3124, %v3120
  %v3126 = vmul.f32 1.0, %v3125
  %v3127 = vmul.f32 %v3099, %v2921
  %v3128 = vmul.f32 %v3099, %v3103
  %3130 = vrot.lane.b32.xlu0 %v3128, 64
  %v3131 = vpop.permute.xlu0 %3130
  %v3133 = vadd.f32 %v3127, %v3131
  %v3134 = vtanh.pop %v3133
  %3136 = vrot.lane.b32.xlu0 %v3134, 64
  %v3137 = vpop.permute.xlu0 %3136
  %v3139 = vmul.f32 %v3126, %v3137
  %v3140 = vld [vmem:[%s764] sm:$0x3]
  %v3141 = vld [vmem:[%s766] sm:$0x3]
  %v3142 = vsub.f32 1.0, %v3140
  %v3143 = vsub.f32 1.0, %v3141
  %3145 = vset.pattern.permute.xlu0 0
  %3146 = vperm.xlu0 %3145, %v3140
  %v3147 = vpop.permute.xlu0 %3146
  %v3149 = vmul.f32 %v3080, %v3147
  %3151 = vset.pattern.permute.xlu0 0
  %3152 = vperm.xlu0 %3151, %v3141
  %v3153 = vpop.permute.xlu0 %3152
  %v3155 = vmul.f32 %v3139, %v3153
  %s3156 = scalar_lea.vmem %s10, 2
  %3157 = vst.msk [vmem:[%s3156] sm:$0x3] %vm515, %v3149
  %3159 = vst [vmem:[#allocation1] ss:$4 sm:$0xff] %v3155
  %v3160 = vld.sshfl [vmem:[#allocation1] sm:$0xff pattern:$0x73625140]
  %3161 = vrot.lane.b32.xlu0 %v3160, 64
  %v3162 = vpop.permute.xlu0 %3161
  %s3164 = scalar_lea.vmem %s10, 12
  %3165 = vst.msk [vmem:[%s3164] sm:$0x3] %vm524, %v3162
  %3167 = vset.pattern.permute.xlu0 0
  %3168 = vperm.xlu0 %3167, %v3142
  %v3169 = vpop.permute.xlu0 %3168
  %v3171 = vmul.f32 %v2910, %v3169
  %v3172 = vadd.f32 %v3149, %v3171
  %v3173 = vmul.f32 %v3074, %v3147
  %v3174 = vmul.f32 %v2912, %v3169
  %v3175 = vadd.f32 %v3173, %v3174
  %3177 = vset.pattern.permute.xlu0 0
  %3178 = vperm.xlu0 %3177, %v3143
  %v3179 = vpop.permute.xlu0 %3178
  %v3181 = vmul.f32 %v2919, %v3179
  %v3182 = vadd.f32 %v3155, %v3181
  %v3183 = vmul.f32 %v3133, %v3153
  %v3184 = vmul.f32 %v2921, %v3179
  %v3185 = vadd.f32 %v3183, %v3184
  %v3186 = vld [vmem:[%s812] sm:$0xf]
  %v3188 = vsel %vm282, %v3172, 0
  %3190 = vmatpush.msra.mxu0 0.0
  %3191 = vmatpush.msra.mxu0 0.0
  %3192 = vmatpush.msra.mxu0 0.0
  %3193 = vmatpush.msra.mxu0 0.0
  %3194 = vmatpush.msra.mxu0 0.0
  %3195 = vmatpush.msra.mxu0 0.0
  %3196 = vmatpush.msra.mxu0 0.0
  %3197 = vmatpush.msra.mxu0 0.0
  %3198 = vmatpush.msra.mxu0 %v2649
  %3199 = vmatpush.msra.mxu0 %v2647
  %3200 = vmatpush.msra.mxu0 %v2645
  %3201 = vmatpush.msra.mxu0 %v2643
  %3202 = vmatpush.msra.mxu0 %v2641
  %3203 = vmatpush.msra.mxu0 %v2639
  %3204 = vmatpush.msra.mxu0 %v2637
  %3205 = vmatpush.msra.mxu0 %v2635
  %3206 = vmatmul.f32.gmra.mxu0 %v3188
  %v3207 = vpop.f32.mrf.mxu0
  %v3208 = vadd.f32 0.0, %v3207
  %3209 = vdwg.mxu0
  %3210 = vmatpush.msra.mxu0 0.0
  %3211 = vmatpush.msra.mxu0 0.0
  %3212 = vmatpush.msra.mxu0 0.0
  %3213 = vmatpush.msra.mxu0 0.0
  %3214 = vmatpush.msra.mxu0 0.0
  %3215 = vmatpush.msra.mxu0 0.0
  %3216 = vmatpush.msra.mxu0 0.0
  %3217 = vmatpush.msra.mxu0 0.0
  %3218 = vmatpush.msra.mxu0 %v2650
  %3219 = vmatpush.msra.mxu0 %v2648
  %3220 = vmatpush.msra.mxu0 %v2646
  %3221 = vmatpush.msra.mxu0 %v2644
  %3222 = vmatpush.msra.mxu0 %v2642
  %3223 = vmatpush.msra.mxu0 %v2640
  %3224 = vmatpush.msra.mxu0 %v2638
  %3225 = vmatpush.msra.mxu0 %v2636
  %3226 = vmatmul.f32.gmra.mxu0 %v3188
  %v3227 = vpop.f32.mrf.mxu0
  %v3228 = vadd.f32 0.0, %v3227
  %3229 = vdwg.mxu0
  %v3232 = vrot.slane %v3228, 6
  %v3233 = vsel %vm197, %v3208, %v3232
  %v3235 = vadd.f32 %v3186, %v3233
  %v3236 = vld [vmem:[%s863 + $0x4] sm:$0xf]
  %v3238 = vsel %vm282, %v3182, 0
  %3240 = vmatpush.msra.mxu0 0.0
  %3241 = vmatpush.msra.mxu0 0.0
  %3242 = vmatpush.msra.mxu0 0.0
  %3243 = vmatpush.msra.mxu0 0.0
  %3244 = vmatpush.msra.mxu0 0.0
  %3245 = vmatpush.msra.mxu0 0.0
  %3246 = vmatpush.msra.mxu0 0.0
  %3247 = vmatpush.msra.mxu0 0.0
  %3248 = vmatpush.msra.mxu0 %v2665
  %3249 = vmatpush.msra.mxu0 %v2663
  %3250 = vmatpush.msra.mxu0 %v2661
  %3251 = vmatpush.msra.mxu0 %v2659
  %3252 = vmatpush.msra.mxu0 %v2657
  %3253 = vmatpush.msra.mxu0 %v2655
  %3254 = vmatpush.msra.mxu0 %v2653
  %3255 = vmatpush.msra.mxu0 %v2651
  %3256 = vmatmul.f32.gmra.mxu0 %v3238
  %v3257 = vpop.f32.mrf.mxu0
  %v3258 = vadd.f32 0.0, %v3257
  %3259 = vdwg.mxu0
  %3260 = vmatpush.msra.mxu0 0.0
  %3261 = vmatpush.msra.mxu0 0.0
  %3262 = vmatpush.msra.mxu0 0.0
  %3263 = vmatpush.msra.mxu0 0.0
  %3264 = vmatpush.msra.mxu0 0.0
  %3265 = vmatpush.msra.mxu0 0.0
  %3266 = vmatpush.msra.mxu0 0.0
  %3267 = vmatpush.msra.mxu0 0.0
  %3268 = vmatpush.msra.mxu0 %v2666
  %3269 = vmatpush.msra.mxu0 %v2664
  %3270 = vmatpush.msra.mxu0 %v2662
  %3271 = vmatpush.msra.mxu0 %v2660
  %3272 = vmatpush.msra.mxu0 %v2658
  %3273 = vmatpush.msra.mxu0 %v2656
  %3274 = vmatpush.msra.mxu0 %v2654
  %3275 = vmatpush.msra.mxu0 %v2652
  %3276 = vmatmul.f32.gmra.mxu0 %v3238
  %v3277 = vpop.f32.mrf.mxu0
  %v3278 = vadd.f32 0.0, %v3277
  %3279 = vdwg.mxu0
  %v3282 = vrot.slane %v3278, 6
  %v3283 = vsel %vm197, %v3258, %v3282
  %v3285 = vadd.f32 %v3236, %v3283
  %v3286 = vxor.u32 %v3235, 2147483648
  %v3287 = vmul.f32 %v3286, 1.442695
  %v3288 = vpow.pop %v3287
  %v3289 = vadd.f32 %v3288, 1.0
  %v3290 = vrcp.pop %v3289
  %v3291 = vmul.f32 %v3289, %v3290
  %v3292 = vsub.f32 1.0, %v3291
  %v3293 = vmul.f32 %v3290, %v3292
  %v3294 = vadd.f32 %v3290, %v3293
  %vm3295 = vweird.f32 %v3289
  %vm3296 = vweird.f32 %v3290
  %vm3297 = vmor %vm3295, %vm3296
  %v3298 = vsel %vm3297, %v3290, %v3294
  %v3299 = vand.u32 2147483647, %v3289
  %vm3300 = vcmp.eq.f32.partialorder %v3299, 8.507059e+37
  %v3301 = vand.u32 %v3289, 2147483648
  %v3302 = vor.u32 1.1754944e-38, %v3301
  %v3303 = vsel %vm3300, %v3302, %v3298
  %v3304 = vmul.f32 1.0, %v3303
  %v3306 = vrot.slane %v3235, 2
  %v3308 = vtanh.pop %v3306
  %3309 = vrot.lane.b32.xlu0 %v3235, 64
  %v3310 = vpop.permute.xlu0 %3309
  %v3311 = vrot.slane %v3310, 2
  %v3313 = vxor.u32 %v3311, 2147483648
  %v3314 = vmul.f32 %v3313, 1.442695
  %v3315 = vpow.pop %v3314
  %v3316 = vadd.f32 %v3315, 1.0
  %v3317 = vrcp.pop %v3316
  %v3318 = vmul.f32 %v3316, %v3317
  %v3319 = vsub.f32 1.0, %v3318
  %v3320 = vmul.f32 %v3317, %v3319
  %v3321 = vadd.f32 %v3317, %v3320
  %vm3322 = vweird.f32 %v3316
  %vm3323 = vweird.f32 %v3317
  %vm3324 = vmor %vm3322, %vm3323
  %v3325 = vsel %vm3324, %v3317, %v3321
  %v3326 = vand.u32 2147483647, %v3316
  %vm3327 = vcmp.eq.f32.partialorder %v3326, 8.507059e+37
  %v3328 = vand.u32 %v3316, 2147483648
  %v3329 = vor.u32 1.1754944e-38, %v3328
  %v3330 = vsel %vm3327, %v3329, %v3325
  %v3331 = vmul.f32 1.0, %v3330
  %v3332 = vmul.f32 %v3304, %v3175
  %v3333 = vmul.f32 %v3304, %v3308
  %3335 = vrot.lane.b32.xlu0 %v3333, 64
  %v3336 = vpop.permute.xlu0 %3335
  %v3338 = vadd.f32 %v3332, %v3336
  %v3339 = vtanh.pop %v3338
  %3341 = vrot.lane.b32.xlu0 %v3339, 64
  %v3342 = vpop.permute.xlu0 %3341
  %v3344 = vmul.f32 %v3331, %v3342
  %v3345 = vxor.u32 %v3285, 2147483648
  %v3346 = vmul.f32 %v3345, 1.442695
  %v3347 = vpow.pop %v3346
  %v3348 = vadd.f32 %v3347, 1.0
  %v3349 = vrcp.pop %v3348
  %v3350 = vmul.f32 %v3348, %v3349
  %v3351 = vsub.f32 1.0, %v3350
  %v3352 = vmul.f32 %v3349, %v3351
  %v3353 = vadd.f32 %v3349, %v3352
  %vm3354 = vweird.f32 %v3348
  %vm3355 = vweird.f32 %v3349
  %vm3356 = vmor %vm3354, %vm3355
  %v3357 = vsel %vm3356, %v3349, %v3353
  %v3358 = vand.u32 2147483647, %v3348
  %vm3359 = vcmp.eq.f32.partialorder %v3358, 8.507059e+37
  %v3360 = vand.u32 %v3348, 2147483648
  %v3361 = vor.u32 1.1754944e-38, %v3360
  %v3362 = vsel %vm3359, %v3361, %v3357
  %v3363 = vmul.f32 1.0, %v3362
  %v3365 = vrot.slane %v3285, 2
  %v3367 = vtanh.pop %v3365
  %3368 = vrot.lane.b32.xlu0 %v3285, 64
  %v3369 = vpop.permute.xlu0 %3368
  %v3370 = vrot.slane %v3369, 2
  %v3372 = vxor.u32 %v3370, 2147483648
  %v3373 = vmul.f32 %v3372, 1.442695
  %v3374 = vpow.pop %v3373
  %v3375 = vadd.f32 %v3374, 1.0
  %v3376 = vrcp.pop %v3375
  %v3377 = vmul.f32 %v3375, %v3376
  %v3378 = vsub.f32 1.0, %v3377
  %v3379 = vmul.f32 %v3376, %v3378
  %v3380 = vadd.f32 %v3376, %v3379
  %vm3381 = vweird.f32 %v3375
  %vm3382 = vweird.f32 %v3376
  %vm3383 = vmor %vm3381, %vm3382
  %v3384 = vsel %vm3383, %v3376, %v3380
  %v3385 = vand.u32 2147483647, %v3375
  %vm3386 = vcmp.eq.f32.partialorder %v3385, 8.507059e+37
  %v3387 = vand.u32 %v3375, 2147483648
  %v3388 = vor.u32 1.1754944e-38, %v3387
  %v3389 = vsel %vm3386, %v3388, %v3384
  %v3390 = vmul.f32 1.0, %v3389
  %v3391 = vmul.f32 %v3363, %v3185
  %v3392 = vmul.f32 %v3363, %v3367
  %3394 = vrot.lane.b32.xlu0 %v3392, 64
  %v3395 = vpop.permute.xlu0 %3394
  %v3397 = vadd.f32 %v3391, %v3395
  %v3398 = vtanh.pop %v3397
  %3400 = vrot.lane.b32.xlu0 %v3398, 64
  %v3401 = vpop.permute.xlu0 %3400
  %v3403 = vmul.f32 %v3390, %v3401
  %v3404 = vld [vmem:[%s1032] sm:$0x3]
  %v3405 = vld [vmem:[%s1034] sm:$0x3]
  %v3406 = vsub.f32 1.0, %v3404
  %v3407 = vsub.f32 1.0, %v3405
  %3409 = vset.pattern.permute.xlu0 0
  %3410 = vperm.xlu0 %3409, %v3404
  %v3411 = vpop.permute.xlu0 %3410
  %v3413 = vmul.f32 %v3344, %v3411
  %3415 = vset.pattern.permute.xlu0 0
  %3416 = vperm.xlu0 %3415, %v3405
  %v3417 = vpop.permute.xlu0 %3416
  %v3419 = vmul.f32 %v3403, %v3417
  %s3420 = scalar_lea.vmem %s10, 4
  %3421 = vst.msk [vmem:[%s3420] sm:$0x3] %vm515, %v3413
  %3423 = vst [vmem:[#allocation1] ss:$4 sm:$0xff] %v3419
  %v3424 = vld.sshfl [vmem:[#allocation1] sm:$0xff pattern:$0x73625140]
  %3425 = vrot.lane.b32.xlu0 %v3424, 64
  %v3426 = vpop.permute.xlu0 %3425
  %s3428 = scalar_lea.vmem %s10, 10
  %3429 = vst.msk [vmem:[%s3428] sm:$0x3] %vm524, %v3426
  %3431 = vset.pattern.permute.xlu0 0
  %3432 = vperm.xlu0 %3431, %v3406
  %v3433 = vpop.permute.xlu0 %3432
  %v3435 = vmul.f32 %v3172, %v3433
  %v3436 = vadd.f32 %v3413, %v3435
  %v3437 = vmul.f32 %v3338, %v3411
  %v3438 = vmul.f32 %v3175, %v3433
  %v3439 = vadd.f32 %v3437, %v3438
  %3441 = vset.pattern.permute.xlu0 0
  %3442 = vperm.xlu0 %3441, %v3407
  %v3443 = vpop.permute.xlu0 %3442
  %v3445 = vmul.f32 %v3182, %v3443
  %v3446 = vadd.f32 %v3419, %v3445
  %v3447 = vmul.f32 %v3397, %v3417
  %v3448 = vmul.f32 %v3185, %v3443
  %v3449 = vadd.f32 %v3447, %v3448
  %v3450 = vld [vmem:[%s1080] sm:$0xf]
  %v3452 = vsel %vm282, %v3436, 0
  %3454 = vmatpush.msra.mxu0 0.0
  %3455 = vmatpush.msra.mxu0 0.0
  %3456 = vmatpush.msra.mxu0 0.0
  %3457 = vmatpush.msra.mxu0 0.0
  %3458 = vmatpush.msra.mxu0 0.0
  %3459 = vmatpush.msra.mxu0 0.0
  %3460 = vmatpush.msra.mxu0 0.0
  %3461 = vmatpush.msra.mxu0 0.0
  %3462 = vmatpush.msra.mxu0 %v2649
  %3463 = vmatpush.msra.mxu0 %v2647
  %3464 = vmatpush.msra.mxu0 %v2645
  %3465 = vmatpush.msra.mxu0 %v2643
  %3466 = vmatpush.msra.mxu0 %v2641
  %3467 = vmatpush.msra.mxu0 %v2639
  %3468 = vmatpush.msra.mxu0 %v2637
  %3469 = vmatpush.msra.mxu0 %v2635
  %3470 = vmatmul.f32.gmra.mxu0 %v3452
  %v3471 = vpop.f32.mrf.mxu0
  %v3472 = vadd.f32 0.0, %v3471
  %3473 = vdwg.mxu0
  %3474 = vmatpush.msra.mxu0 0.0
  %3475 = vmatpush.msra.mxu0 0.0
  %3476 = vmatpush.msra.mxu0 0.0
  %3477 = vmatpush.msra.mxu0 0.0
  %3478 = vmatpush.msra.mxu0 0.0
  %3479 = vmatpush.msra.mxu0 0.0
  %3480 = vmatpush.msra.mxu0 0.0
  %3481 = vmatpush.msra.mxu0 0.0
  %3482 = vmatpush.msra.mxu0 %v2650
  %3483 = vmatpush.msra.mxu0 %v2648
  %3484 = vmatpush.msra.mxu0 %v2646
  %3485 = vmatpush.msra.mxu0 %v2644
  %3486 = vmatpush.msra.mxu0 %v2642
  %3487 = vmatpush.msra.mxu0 %v2640
  %3488 = vmatpush.msra.mxu0 %v2638
  %3489 = vmatpush.msra.mxu0 %v2636
  %3490 = vmatmul.f32.gmra.mxu0 %v3452
  %v3491 = vpop.f32.mrf.mxu0
  %v3492 = vadd.f32 0.0, %v3491
  %3493 = vdwg.mxu0
  %v3496 = vrot.slane %v3492, 6
  %v3497 = vsel %vm197, %v3472, %v3496
  %v3499 = vadd.f32 %v3450, %v3497
  %v3500 = vld [vmem:[%s1131 + $0x4] sm:$0xf]
  %v3502 = vsel %vm282, %v3446, 0
  %3504 = vmatpush.msra.mxu0 0.0
  %3505 = vmatpush.msra.mxu0 0.0
  %3506 = vmatpush.msra.mxu0 0.0
  %3507 = vmatpush.msra.mxu0 0.0
  %3508 = vmatpush.msra.mxu0 0.0
  %3509 = vmatpush.msra.mxu0 0.0
  %3510 = vmatpush.msra.mxu0 0.0
  %3511 = vmatpush.msra.mxu0 0.0
  %3512 = vmatpush.msra.mxu0 %v2665
  %3513 = vmatpush.msra.mxu0 %v2663
  %3514 = vmatpush.msra.mxu0 %v2661
  %3515 = vmatpush.msra.mxu0 %v2659
  %3516 = vmatpush.msra.mxu0 %v2657
  %3517 = vmatpush.msra.mxu0 %v2655
  %3518 = vmatpush.msra.mxu0 %v2653
  %3519 = vmatpush.msra.mxu0 %v2651
  %3520 = vmatmul.f32.gmra.mxu0 %v3502
  %v3521 = vpop.f32.mrf.mxu0
  %v3522 = vadd.f32 0.0, %v3521
  %3523 = vdwg.mxu0
  %3524 = vmatpush.msra.mxu0 0.0
  %3525 = vmatpush.msra.mxu0 0.0
  %3526 = vmatpush.msra.mxu0 0.0
  %3527 = vmatpush.msra.mxu0 0.0
  %3528 = vmatpush.msra.mxu0 0.0
  %3529 = vmatpush.msra.mxu0 0.0
  %3530 = vmatpush.msra.mxu0 0.0
  %3531 = vmatpush.msra.mxu0 0.0
  %3532 = vmatpush.msra.mxu0 %v2666
  %3533 = vmatpush.msra.mxu0 %v2664
  %3534 = vmatpush.msra.mxu0 %v2662
  %3535 = vmatpush.msra.mxu0 %v2660
  %3536 = vmatpush.msra.mxu0 %v2658
  %3537 = vmatpush.msra.mxu0 %v2656
  %3538 = vmatpush.msra.mxu0 %v2654
  %3539 = vmatpush.msra.mxu0 %v2652
  %3540 = vmatmul.f32.gmra.mxu0 %v3502
  %v3541 = vpop.f32.mrf.mxu0
  %v3542 = vadd.f32 0.0, %v3541
  %3543 = vdwg.mxu0
  %v3546 = vrot.slane %v3542, 6
  %v3547 = vsel %vm197, %v3522, %v3546
  %v3549 = vadd.f32 %v3500, %v3547
  %v3550 = vxor.u32 %v3499, 2147483648
  %v3551 = vmul.f32 %v3550, 1.442695
  %v3552 = vpow.pop %v3551
  %v3553 = vadd.f32 %v3552, 1.0
  %v3554 = vrcp.pop %v3553
  %v3555 = vmul.f32 %v3553, %v3554
  %v3556 = vsub.f32 1.0, %v3555
  %v3557 = vmul.f32 %v3554, %v3556
  %v3558 = vadd.f32 %v3554, %v3557
  %vm3559 = vweird.f32 %v3553
  %vm3560 = vweird.f32 %v3554
  %vm3561 = vmor %vm3559, %vm3560
  %v3562 = vsel %vm3561, %v3554, %v3558
  %v3563 = vand.u32 2147483647, %v3553
  %vm3564 = vcmp.eq.f32.partialorder %v3563, 8.507059e+37
  %v3565 = vand.u32 %v3553, 2147483648
  %v3566 = vor.u32 1.1754944e-38, %v3565
  %v3567 = vsel %vm3564, %v3566, %v3562
  %v3568 = vmul.f32 1.0, %v3567
  %v3570 = vrot.slane %v3499, 2
  %v3572 = vtanh.pop %v3570
  %3573 = vrot.lane.b32.xlu0 %v3499, 64
  %v3574 = vpop.permute.xlu0 %3573
  %v3575 = vrot.slane %v3574, 2
  %v3577 = vxor.u32 %v3575, 2147483648
  %v3578 = vmul.f32 %v3577, 1.442695
  %v3579 = vpow.pop %v3578
  %v3580 = vadd.f32 %v3579, 1.0
  %v3581 = vrcp.pop %v3580
  %v3582 = vmul.f32 %v3580, %v3581
  %v3583 = vsub.f32 1.0, %v3582
  %v3584 = vmul.f32 %v3581, %v3583
  %v3585 = vadd.f32 %v3581, %v3584
  %vm3586 = vweird.f32 %v3580
  %vm3587 = vweird.f32 %v3581
  %vm3588 = vmor %vm3586, %vm3587
  %v3589 = vsel %vm3588, %v3581, %v3585
  %v3590 = vand.u32 2147483647, %v3580
  %vm3591 = vcmp.eq.f32.partialorder %v3590, 8.507059e+37
  %v3592 = vand.u32 %v3580, 2147483648
  %v3593 = vor.u32 1.1754944e-38, %v3592
  %v3594 = vsel %vm3591, %v3593, %v3589
  %v3595 = vmul.f32 1.0, %v3594
  %v3596 = vmul.f32 %v3568, %v3439
  %v3597 = vmul.f32 %v3568, %v3572
  %3599 = vrot.lane.b32.xlu0 %v3597, 64
  %v3600 = vpop.permute.xlu0 %3599
  %v3602 = vadd.f32 %v3596, %v3600
  %v3603 = vtanh.pop %v3602
  %3605 = vrot.lane.b32.xlu0 %v3603, 64
  %v3606 = vpop.permute.xlu0 %3605
  %v3608 = vmul.f32 %v3595, %v3606
  %v3609 = vxor.u32 %v3549, 2147483648
  %v3610 = vmul.f32 %v3609, 1.442695
  %v3611 = vpow.pop %v3610
  %v3612 = vadd.f32 %v3611, 1.0
  %v3613 = vrcp.pop %v3612
  %v3614 = vmul.f32 %v3612, %v3613
  %v3615 = vsub.f32 1.0, %v3614
  %v3616 = vmul.f32 %v3613, %v3615
  %v3617 = vadd.f32 %v3613, %v3616
  %vm3618 = vweird.f32 %v3612
  %vm3619 = vweird.f32 %v3613
  %vm3620 = vmor %vm3618, %vm3619
  %v3621 = vsel %vm3620, %v3613, %v3617
  %v3622 = vand.u32 2147483647, %v3612
  %vm3623 = vcmp.eq.f32.partialorder %v3622, 8.507059e+37
  %v3624 = vand.u32 %v3612, 2147483648
  %v3625 = vor.u32 1.1754944e-38, %v3624
  %v3626 = vsel %vm3623, %v3625, %v3621
  %v3627 = vmul.f32 1.0, %v3626
  %v3629 = vrot.slane %v3549, 2
  %v3631 = vtanh.pop %v3629
  %3632 = vrot.lane.b32.xlu0 %v3549, 64
  %v3633 = vpop.permute.xlu0 %3632
  %v3634 = vrot.slane %v3633, 2
  %v3636 = vxor.u32 %v3634, 2147483648
  %v3637 = vmul.f32 %v3636, 1.442695
  %v3638 = vpow.pop %v3637
  %v3639 = vadd.f32 %v3638, 1.0
  %v3640 = vrcp.pop %v3639
  %v3641 = vmul.f32 %v3639, %v3640
  %v3642 = vsub.f32 1.0, %v3641
  %v3643 = vmul.f32 %v3640, %v3642
  %v3644 = vadd.f32 %v3640, %v3643
  %vm3645 = vweird.f32 %v3639
  %vm3646 = vweird.f32 %v3640
  %vm3647 = vmor %vm3645, %vm3646
  %v3648 = vsel %vm3647, %v3640, %v3644
  %v3649 = vand.u32 2147483647, %v3639
  %vm3650 = vcmp.eq.f32.partialorder %v3649, 8.507059e+37
  %v3651 = vand.u32 %v3639, 2147483648
  %v3652 = vor.u32 1.1754944e-38, %v3651
  %v3653 = vsel %vm3650, %v3652, %v3648
  %v3654 = vmul.f32 1.0, %v3653
  %v3655 = vmul.f32 %v3627, %v3449
  %v3656 = vmul.f32 %v3627, %v3631
  %3658 = vrot.lane.b32.xlu0 %v3656, 64
  %v3659 = vpop.permute.xlu0 %3658
  %v3661 = vadd.f32 %v3655, %v3659
  %v3662 = vtanh.pop %v3661
  %3664 = vrot.lane.b32.xlu0 %v3662, 64
  %v3665 = vpop.permute.xlu0 %3664
  %v3667 = vmul.f32 %v3654, %v3665
  %v3668 = vld [vmem:[%s1300] sm:$0x3]
  %v3669 = vld [vmem:[%s1302] sm:$0x3]
  %v3670 = vsub.f32 1.0, %v3668
  %v3671 = vsub.f32 1.0, %v3669
  %3673 = vset.pattern.permute.xlu0 0
  %3674 = vperm.xlu0 %3673, %v3668
  %v3675 = vpop.permute.xlu0 %3674
  %v3677 = vmul.f32 %v3608, %v3675
  %3679 = vset.pattern.permute.xlu0 0
  %3680 = vperm.xlu0 %3679, %v3669
  %v3681 = vpop.permute.xlu0 %3680
  %v3683 = vmul.f32 %v3667, %v3681
  %s3684 = scalar_lea.vmem %s10, 6
  %3685 = vst.msk [vmem:[%s3684] sm:$0x3] %vm515, %v3677
  %3687 = vst [vmem:[#allocation1] ss:$4 sm:$0xff] %v3683
  %v3688 = vld.sshfl [vmem:[#allocation1] sm:$0xff pattern:$0x73625140]
  %3689 = vrot.lane.b32.xlu0 %v3688, 64
  %v3690 = vpop.permute.xlu0 %3689
  %s3692 = scalar_lea.vmem %s10, 8
  %3693 = vst.msk [vmem:[%s3692] sm:$0x3] %vm524, %v3690
  %3695 = vset.pattern.permute.xlu0 0
  %3696 = vperm.xlu0 %3695, %v3670
  %v3697 = vpop.permute.xlu0 %3696
  %v3699 = vmul.f32 %v3436, %v3697
  %v3700 = vadd.f32 %v3677, %v3699
  %v3701 = vmul.f32 %v3602, %v3675
  %v3702 = vmul.f32 %v3439, %v3697
  %v3703 = vadd.f32 %v3701, %v3702
  %3705 = vset.pattern.permute.xlu0 0
  %3706 = vperm.xlu0 %3705, %v3671
  %v3707 = vpop.permute.xlu0 %3706
  %v3709 = vmul.f32 %v3446, %v3707
  %v3710 = vadd.f32 %v3683, %v3709
  %v3711 = vmul.f32 %v3661, %v3681
  %v3712 = vmul.f32 %v3449, %v3707
  %v3713 = vadd.f32 %v3711, %v3712
  %v3714 = vld [vmem:[%s1131] sm:$0xf]
  %v3716 = vsel %vm282, %v3700, 0
  %3718 = vmatpush.msra.mxu0 0.0
  %3719 = vmatpush.msra.mxu0 0.0
  %3720 = vmatpush.msra.mxu0 0.0
  %3721 = vmatpush.msra.mxu0 0.0
  %3722 = vmatpush.msra.mxu0 0.0
  %3723 = vmatpush.msra.mxu0 0.0
  %3724 = vmatpush.msra.mxu0 0.0
  %3725 = vmatpush.msra.mxu0 0.0
  %3726 = vmatpush.msra.mxu0 %v2649
  %3727 = vmatpush.msra.mxu0 %v2647
  %3728 = vmatpush.msra.mxu0 %v2645
  %3729 = vmatpush.msra.mxu0 %v2643
  %3730 = vmatpush.msra.mxu0 %v2641
  %3731 = vmatpush.msra.mxu0 %v2639
  %3732 = vmatpush.msra.mxu0 %v2637
  %3733 = vmatpush.msra.mxu0 %v2635
  %3734 = vmatmul.f32.gmra.mxu0 %v3716
  %v3735 = vpop.f32.mrf.mxu0
  %v3736 = vadd.f32 0.0, %v3735
  %3737 = vdwg.mxu0
  %3738 = vmatpush.msra.mxu0 0.0
  %3739 = vmatpush.msra.mxu0 0.0
  %3740 = vmatpush.msra.mxu0 0.0
  %3741 = vmatpush.msra.mxu0 0.0
  %3742 = vmatpush.msra.mxu0 0.0
  %3743 = vmatpush.msra.mxu0 0.0
  %3744 = vmatpush.msra.mxu0 0.0
  %3745 = vmatpush.msra.mxu0 0.0
  %3746 = vmatpush.msra.mxu0 %v2650
  %3747 = vmatpush.msra.mxu0 %v2648
  %3748 = vmatpush.msra.mxu0 %v2646
  %3749 = vmatpush.msra.mxu0 %v2644
  %3750 = vmatpush.msra.mxu0 %v2642
  %3751 = vmatpush.msra.mxu0 %v2640
  %3752 = vmatpush.msra.mxu0 %v2638
  %3753 = vmatpush.msra.mxu0 %v2636
  %3754 = vmatmul.f32.gmra.mxu0 %v3716
  %v3755 = vpop.f32.mrf.mxu0
  %v3756 = vadd.f32 0.0, %v3755
  %3757 = vdwg.mxu0
  %v3760 = vrot.slane %v3756, 6
  %v3761 = vsel %vm197, %v3736, %v3760
  %v3763 = vadd.f32 %v3714, %v3761
  %v3764 = vld [vmem:[%s1080 + $0x4] sm:$0xf]
  %v3766 = vsel %vm282, %v3710, 0
  %3768 = vmatpush.msra.mxu0 0.0
  %3769 = vmatpush.msra.mxu0 0.0
  %3770 = vmatpush.msra.mxu0 0.0
  %3771 = vmatpush.msra.mxu0 0.0
  %3772 = vmatpush.msra.mxu0 0.0
  %3773 = vmatpush.msra.mxu0 0.0
  %3774 = vmatpush.msra.mxu0 0.0
  %3775 = vmatpush.msra.mxu0 0.0
  %3776 = vmatpush.msra.mxu0 %v2665
  %3777 = vmatpush.msra.mxu0 %v2663
  %3778 = vmatpush.msra.mxu0 %v2661
  %3779 = vmatpush.msra.mxu0 %v2659
  %3780 = vmatpush.msra.mxu0 %v2657
  %3781 = vmatpush.msra.mxu0 %v2655
  %3782 = vmatpush.msra.mxu0 %v2653
  %3783 = vmatpush.msra.mxu0 %v2651
  %3784 = vmatmul.f32.gmra.mxu0 %v3766
  %v3785 = vpop.f32.mrf.mxu0
  %v3786 = vadd.f32 0.0, %v3785
  %3787 = vdwg.mxu0
  %3788 = vmatpush.msra.mxu0 0.0
  %3789 = vmatpush.msra.mxu0 0.0
  %3790 = vmatpush.msra.mxu0 0.0
  %3791 = vmatpush.msra.mxu0 0.0
  %3792 = vmatpush.msra.mxu0 0.0
  %3793 = vmatpush.msra.mxu0 0.0
  %3794 = vmatpush.msra.mxu0 0.0
  %3795 = vmatpush.msra.mxu0 0.0
  %3796 = vmatpush.msra.mxu0 %v2666
  %3797 = vmatpush.msra.mxu0 %v2664
  %3798 = vmatpush.msra.mxu0 %v2662
  %3799 = vmatpush.msra.mxu0 %v2660
  %3800 = vmatpush.msra.mxu0 %v2658
  %3801 = vmatpush.msra.mxu0 %v2656
  %3802 = vmatpush.msra.mxu0 %v2654
  %3803 = vmatpush.msra.mxu0 %v2652
  %3804 = vmatmul.f32.gmra.mxu0 %v3766
  %v3805 = vpop.f32.mrf.mxu0
  %v3806 = vadd.f32 0.0, %v3805
  %3807 = vdwg.mxu0
  %v3810 = vrot.slane %v3806, 6
  %v3811 = vsel %vm197, %v3786, %v3810
  %v3813 = vadd.f32 %v3764, %v3811
  %v3814 = vxor.u32 %v3763, 2147483648
  %v3815 = vmul.f32 %v3814, 1.442695
  %v3816 = vpow.pop %v3815
  %v3817 = vadd.f32 %v3816, 1.0
  %v3818 = vrcp.pop %v3817
  %v3819 = vmul.f32 %v3817, %v3818
  %v3820 = vsub.f32 1.0, %v3819
  %v3821 = vmul.f32 %v3818, %v3820
  %v3822 = vadd.f32 %v3818, %v3821
  %vm3823 = vweird.f32 %v3817
  %vm3824 = vweird.f32 %v3818
  %vm3825 = vmor %vm3823, %vm3824
  %v3826 = vsel %vm3825, %v3818, %v3822
  %v3827 = vand.u32 2147483647, %v3817
  %vm3828 = vcmp.eq.f32.partialorder %v3827, 8.507059e+37
  %v3829 = vand.u32 %v3817, 2147483648
  %v3830 = vor.u32 1.1754944e-38, %v3829
  %v3831 = vsel %vm3828, %v3830, %v3826
  %v3832 = vmul.f32 1.0, %v3831
  %v3834 = vrot.slane %v3763, 2
  %v3836 = vtanh.pop %v3834
  %3837 = vrot.lane.b32.xlu0 %v3763, 64
  %v3838 = vpop.permute.xlu0 %3837
  %v3839 = vrot.slane %v3838, 2
  %v3841 = vxor.u32 %v3839, 2147483648
  %v3842 = vmul.f32 %v3841, 1.442695
  %v3843 = vpow.pop %v3842
  %v3844 = vadd.f32 %v3843, 1.0
  %v3845 = vrcp.pop %v3844
  %v3846 = vmul.f32 %v3844, %v3845
  %v3847 = vsub.f32 1.0, %v3846
  %v3848 = vmul.f32 %v3845, %v3847
  %v3849 = vadd.f32 %v3845, %v3848
  %vm3850 = vweird.f32 %v3844
  %vm3851 = vweird.f32 %v3845
  %vm3852 = vmor %vm3850, %vm3851
  %v3853 = vsel %vm3852, %v3845, %v3849
  %v3854 = vand.u32 2147483647, %v3844
  %vm3855 = vcmp.eq.f32.partialorder %v3854, 8.507059e+37
  %v3856 = vand.u32 %v3844, 2147483648
  %v3857 = vor.u32 1.1754944e-38, %v3856
  %v3858 = vsel %vm3855, %v3857, %v3853
  %v3859 = vmul.f32 1.0, %v3858
  %v3860 = vmul.f32 %v3832, %v3703
  %v3861 = vmul.f32 %v3832, %v3836
  %3863 = vrot.lane.b32.xlu0 %v3861, 64
  %v3864 = vpop.permute.xlu0 %3863
  %v3866 = vadd.f32 %v3860, %v3864
  %v3867 = vtanh.pop %v3866
  %3869 = vrot.lane.b32.xlu0 %v3867, 64
  %v3870 = vpop.permute.xlu0 %3869
  %v3872 = vmul.f32 %v3859, %v3870
  %v3873 = vxor.u32 %v3813, 2147483648
  %v3874 = vmul.f32 %v3873, 1.442695
  %v3875 = vpow.pop %v3874
  %v3876 = vadd.f32 %v3875, 1.0
  %v3877 = vrcp.pop %v3876
  %v3878 = vmul.f32 %v3876, %v3877
  %v3879 = vsub.f32 1.0, %v3878
  %v3880 = vmul.f32 %v3877, %v3879
  %v3881 = vadd.f32 %v3877, %v3880
  %vm3882 = vweird.f32 %v3876
  %vm3883 = vweird.f32 %v3877
  %vm3884 = vmor %vm3882, %vm3883
  %v3885 = vsel %vm3884, %v3877, %v3881
  %v3886 = vand.u32 2147483647, %v3876
  %vm3887 = vcmp.eq.f32.partialorder %v3886, 8.507059e+37
  %v3888 = vand.u32 %v3876, 2147483648
  %v3889 = vor.u32 1.1754944e-38, %v3888
  %v3890 = vsel %vm3887, %v3889, %v3885
  %v3891 = vmul.f32 1.0, %v3890
  %v3893 = vrot.slane %v3813, 2
  %v3895 = vtanh.pop %v3893
  %3896 = vrot.lane.b32.xlu0 %v3813, 64
  %v3897 = vpop.permute.xlu0 %3896
  %v3898 = vrot.slane %v3897, 2
  %v3900 = vxor.u32 %v3898, 2147483648
  %v3901 = vmul.f32 %v3900, 1.442695
  %v3902 = vpow.pop %v3901
  %v3903 = vadd.f32 %v3902, 1.0
  %v3904 = vrcp.pop %v3903
  %v3905 = vmul.f32 %v3903, %v3904
  %v3906 = vsub.f32 1.0, %v3905
  %v3907 = vmul.f32 %v3904, %v3906
  %v3908 = vadd.f32 %v3904, %v3907
  %vm3909 = vweird.f32 %v3903
  %vm3910 = vweird.f32 %v3904
  %vm3911 = vmor %vm3909, %vm3910
  %v3912 = vsel %vm3911, %v3904, %v3908
  %v3913 = vand.u32 2147483647, %v3903
  %vm3914 = vcmp.eq.f32.partialorder %v3913, 8.507059e+37
  %v3915 = vand.u32 %v3903, 2147483648
  %v3916 = vor.u32 1.1754944e-38, %v3915
  %v3917 = vsel %vm3914, %v3916, %v3912
  %v3918 = vmul.f32 1.0, %v3917
  %v3919 = vmul.f32 %v3891, %v3713
  %v3920 = vmul.f32 %v3891, %v3895
  %3922 = vrot.lane.b32.xlu0 %v3920, 64
  %v3923 = vpop.permute.xlu0 %3922
  %v3925 = vadd.f32 %v3919, %v3923
  %v3926 = vtanh.pop %v3925
  %3928 = vrot.lane.b32.xlu0 %v3926, 64
  %v3929 = vpop.permute.xlu0 %3928
  %v3931 = vmul.f32 %v3918, %v3929
  %v3932 = vld [vmem:[%s1302] sm:$0x3]
  %v3933 = vld [vmem:[%s1300] sm:$0x3]
  %v3934 = vsub.f32 1.0, %v3932
  %v3935 = vsub.f32 1.0, %v3933
  %3937 = vset.pattern.permute.xlu0 0
  %3938 = vperm.xlu0 %3937, %v3932
  %v3939 = vpop.permute.xlu0 %3938
  %v3941 = vmul.f32 %v3872, %v3939
  %3943 = vset.pattern.permute.xlu0 0
  %3944 = vperm.xlu0 %3943, %v3933
  %v3945 = vpop.permute.xlu0 %3944
  %v3947 = vmul.f32 %v3931, %v3945
  %3948 = vst.msk [vmem:[%s3692] sm:$0x3] %vm515, %v3941
  %3950 = vst [vmem:[#allocation1] ss:$4 sm:$0xff] %v3947
  %v3951 = vld.sshfl [vmem:[#allocation1] sm:$0xff pattern:$0x73625140]
  %3952 = vrot.lane.b32.xlu0 %v3951, 64
  %v3953 = vpop.permute.xlu0 %3952
  %3955 = vst.msk [vmem:[%s3684] sm:$0x3] %vm524, %v3953
  %3957 = vset.pattern.permute.xlu0 0
  %3958 = vperm.xlu0 %3957, %v3934
  %v3959 = vpop.permute.xlu0 %3958
  %v3961 = vmul.f32 %v3700, %v3959
  %v3962 = vadd.f32 %v3941, %v3961
  %v3963 = vmul.f32 %v3866, %v3939
  %v3964 = vmul.f32 %v3703, %v3959
  %v3965 = vadd.f32 %v3963, %v3964
  %3967 = vset.pattern.permute.xlu0 0
  %3968 = vperm.xlu0 %3967, %v3935
  %v3969 = vpop.permute.xlu0 %3968
  %v3971 = vmul.f32 %v3710, %v3969
  %v3972 = vadd.f32 %v3947, %v3971
  %v3973 = vmul.f32 %v3925, %v3945
  %v3974 = vmul.f32 %v3713, %v3969
  %v3975 = vadd.f32 %v3973, %v3974
  %v3976 = vld [vmem:[%s863] sm:$0xf]
  %v3978 = vsel %vm282, %v3962, 0
  %3980 = vmatpush.msra.mxu0 0.0
  %3981 = vmatpush.msra.mxu0 0.0
  %3982 = vmatpush.msra.mxu0 0.0
  %3983 = vmatpush.msra.mxu0 0.0
  %3984 = vmatpush.msra.mxu0 0.0
  %3985 = vmatpush.msra.mxu0 0.0
  %3986 = vmatpush.msra.mxu0 0.0
  %3987 = vmatpush.msra.mxu0 0.0
  %3988 = vmatpush.msra.mxu0 %v2649
  %3989 = vmatpush.msra.mxu0 %v2647
  %3990 = vmatpush.msra.mxu0 %v2645
  %3991 = vmatpush.msra.mxu0 %v2643
  %3992 = vmatpush.msra.mxu0 %v2641
  %3993 = vmatpush.msra.mxu0 %v2639
  %3994 = vmatpush.msra.mxu0 %v2637
  %3995 = vmatpush.msra.mxu0 %v2635
  %3996 = vmatmul.f32.gmra.mxu0 %v3978
  %v3997 = vpop.f32.mrf.mxu0
  %v3998 = vadd.f32 0.0, %v3997
  %3999 = vdwg.mxu0
  %4000 = vmatpush.msra.mxu0 0.0
  %4001 = vmatpush.msra.mxu0 0.0
  %4002 = vmatpush.msra.mxu0 0.0
  %4003 = vmatpush.msra.mxu0 0.0
  %4004 = vmatpush.msra.mxu0 0.0
  %4005 = vmatpush.msra.mxu0 0.0
  %4006 = vmatpush.msra.mxu0 0.0
  %4007 = vmatpush.msra.mxu0 0.0
  %4008 = vmatpush.msra.mxu0 %v2650
  %4009 = vmatpush.msra.mxu0 %v2648
  %4010 = vmatpush.msra.mxu0 %v2646
  %4011 = vmatpush.msra.mxu0 %v2644
  %4012 = vmatpush.msra.mxu0 %v2642
  %4013 = vmatpush.msra.mxu0 %v2640
  %4014 = vmatpush.msra.mxu0 %v2638
  %4015 = vmatpush.msra.mxu0 %v2636
  %4016 = vmatmul.f32.gmra.mxu0 %v3978
  %v4017 = vpop.f32.mrf.mxu0
  %v4018 = vadd.f32 0.0, %v4017
  %4019 = vdwg.mxu0
  %v4022 = vrot.slane %v4018, 6
  %v4023 = vsel %vm197, %v3998, %v4022
  %v4025 = vadd.f32 %v3976, %v4023
  %v4026 = vld [vmem:[%s812 + $0x4] sm:$0xf]
  %v4028 = vsel %vm282, %v3972, 0
  %4030 = vmatpush.msra.mxu0 0.0
  %4031 = vmatpush.msra.mxu0 0.0
  %4032 = vmatpush.msra.mxu0 0.0
  %4033 = vmatpush.msra.mxu0 0.0
  %4034 = vmatpush.msra.mxu0 0.0
  %4035 = vmatpush.msra.mxu0 0.0
  %4036 = vmatpush.msra.mxu0 0.0
  %4037 = vmatpush.msra.mxu0 0.0
  %4038 = vmatpush.msra.mxu0 %v2665
  %4039 = vmatpush.msra.mxu0 %v2663
  %4040 = vmatpush.msra.mxu0 %v2661
  %4041 = vmatpush.msra.mxu0 %v2659
  %4042 = vmatpush.msra.mxu0 %v2657
  %4043 = vmatpush.msra.mxu0 %v2655
  %4044 = vmatpush.msra.mxu0 %v2653
  %4045 = vmatpush.msra.mxu0 %v2651
  %4046 = vmatmul.f32.gmra.mxu0 %v4028
  %v4047 = vpop.f32.mrf.mxu0
  %v4048 = vadd.f32 0.0, %v4047
  %4049 = vdwg.mxu0
  %4050 = vmatpush.msra.mxu0 0.0
  %4051 = vmatpush.msra.mxu0 0.0
  %4052 = vmatpush.msra.mxu0 0.0
  %4053 = vmatpush.msra.mxu0 0.0
  %4054 = vmatpush.msra.mxu0 0.0
  %4055 = vmatpush.msra.mxu0 0.0
  %4056 = vmatpush.msra.mxu0 0.0
  %4057 = vmatpush.msra.mxu0 0.0
  %4058 = vmatpush.msra.mxu0 %v2666
  %4059 = vmatpush.msra.mxu0 %v2664
  %4060 = vmatpush.msra.mxu0 %v2662
  %4061 = vmatpush.msra.mxu0 %v2660
  %4062 = vmatpush.msra.mxu0 %v2658
  %4063 = vmatpush.msra.mxu0 %v2656
  %4064 = vmatpush.msra.mxu0 %v2654
  %4065 = vmatpush.msra.mxu0 %v2652
  %4066 = vmatmul.f32.gmra.mxu0 %v4028
  %v4067 = vpop.f32.mrf.mxu0
  %v4068 = vadd.f32 0.0, %v4067
  %4069 = vdwg.mxu0
  %v4072 = vrot.slane %v4068, 6
  %v4073 = vsel %vm197, %v4048, %v4072
  %v4075 = vadd.f32 %v4026, %v4073
  %v4076 = vxor.u32 %v4025, 2147483648
  %v4077 = vmul.f32 %v4076, 1.442695
  %v4078 = vpow.pop %v4077
  %v4079 = vadd.f32 %v4078, 1.0
  %v4080 = vrcp.pop %v4079
  %v4081 = vmul.f32 %v4079, %v4080
  %v4082 = vsub.f32 1.0, %v4081
  %v4083 = vmul.f32 %v4080, %v4082
  %v4084 = vadd.f32 %v4080, %v4083
  %vm4085 = vweird.f32 %v4079
  %vm4086 = vweird.f32 %v4080
  %vm4087 = vmor %vm4085, %vm4086
  %v4088 = vsel %vm4087, %v4080, %v4084
  %v4089 = vand.u32 2147483647, %v4079
  %vm4090 = vcmp.eq.f32.partialorder %v4089, 8.507059e+37
  %v4091 = vand.u32 %v4079, 2147483648
  %v4092 = vor.u32 1.1754944e-38, %v4091
  %v4093 = vsel %vm4090, %v4092, %v4088
  %v4094 = vmul.f32 1.0, %v4093
  %v4096 = vrot.slane %v4025, 2
  %v4098 = vtanh.pop %v4096
  %4099 = vrot.lane.b32.xlu0 %v4025, 64
  %v4100 = vpop.permute.xlu0 %4099
  %v4101 = vrot.slane %v4100, 2
  %v4103 = vxor.u32 %v4101, 2147483648
  %v4104 = vmul.f32 %v4103, 1.442695
  %v4105 = vpow.pop %v4104
  %v4106 = vadd.f32 %v4105, 1.0
  %v4107 = vrcp.pop %v4106
  %v4108 = vmul.f32 %v4106, %v4107
  %v4109 = vsub.f32 1.0, %v4108
  %v4110 = vmul.f32 %v4107, %v4109
  %v4111 = vadd.f32 %v4107, %v4110
  %vm4112 = vweird.f32 %v4106
  %vm4113 = vweird.f32 %v4107
  %vm4114 = vmor %vm4112, %vm4113
  %v4115 = vsel %vm4114, %v4107, %v4111
  %v4116 = vand.u32 2147483647, %v4106
  %vm4117 = vcmp.eq.f32.partialorder %v4116, 8.507059e+37
  %v4118 = vand.u32 %v4106, 2147483648
  %v4119 = vor.u32 1.1754944e-38, %v4118
  %v4120 = vsel %vm4117, %v4119, %v4115
  %v4121 = vmul.f32 1.0, %v4120
  %v4122 = vmul.f32 %v4094, %v3965
  %v4123 = vmul.f32 %v4094, %v4098
  %4125 = vrot.lane.b32.xlu0 %v4123, 64
  %v4126 = vpop.permute.xlu0 %4125
  %v4128 = vadd.f32 %v4122, %v4126
  %v4129 = vtanh.pop %v4128
  %4131 = vrot.lane.b32.xlu0 %v4129, 64
  %v4132 = vpop.permute.xlu0 %4131
  %v4134 = vmul.f32 %v4121, %v4132
  %v4135 = vxor.u32 %v4075, 2147483648
  %v4136 = vmul.f32 %v4135, 1.442695
  %v4137 = vpow.pop %v4136
  %v4138 = vadd.f32 %v4137, 1.0
  %v4139 = vrcp.pop %v4138
  %v4140 = vmul.f32 %v4138, %v4139
  %v4141 = vsub.f32 1.0, %v4140
  %v4142 = vmul.f32 %v4139, %v4141
  %v4143 = vadd.f32 %v4139, %v4142
  %vm4144 = vweird.f32 %v4138
  %vm4145 = vweird.f32 %v4139
  %vm4146 = vmor %vm4144, %vm4145
  %v4147 = vsel %vm4146, %v4139, %v4143
  %v4148 = vand.u32 2147483647, %v4138
  %vm4149 = vcmp.eq.f32.partialorder %v4148, 8.507059e+37
  %v4150 = vand.u32 %v4138, 2147483648
  %v4151 = vor.u32 1.1754944e-38, %v4150
  %v4152 = vsel %vm4149, %v4151, %v4147
  %v4153 = vmul.f32 1.0, %v4152
  %v4155 = vrot.slane %v4075, 2
  %v4157 = vtanh.pop %v4155
  %4158 = vrot.lane.b32.xlu0 %v4075, 64
  %v4159 = vpop.permute.xlu0 %4158
  %v4160 = vrot.slane %v4159, 2
  %v4162 = vxor.u32 %v4160, 2147483648
  %v4163 = vmul.f32 %v4162, 1.442695
  %v4164 = vpow.pop %v4163
  %v4165 = vadd.f32 %v4164, 1.0
  %v4166 = vrcp.pop %v4165
  %v4167 = vmul.f32 %v4165, %v4166
  %v4168 = vsub.f32 1.0, %v4167
  %v4169 = vmul.f32 %v4166, %v4168
  %v4170 = vadd.f32 %v4166, %v4169
  %vm4171 = vweird.f32 %v4165
  %vm4172 = vweird.f32 %v4166
  %vm4173 = vmor %vm4171, %vm4172
  %v4174 = vsel %vm4173, %v4166, %v4170
  %v4175 = vand.u32 2147483647, %v4165
  %vm4176 = vcmp.eq.f32.partialorder %v4175, 8.507059e+37
  %v4177 = vand.u32 %v4165, 2147483648
  %v4178 = vor.u32 1.1754944e-38, %v4177
  %v4179 = vsel %vm4176, %v4178, %v4174
  %v4180 = vmul.f32 1.0, %v4179
  %v4181 = vmul.f32 %v4153, %v3975
  %v4182 = vmul.f32 %v4153, %v4157
  %4184 = vrot.lane.b32.xlu0 %v4182, 64
  %v4185 = vpop.permute.xlu0 %4184
  %v4187 = vadd.f32 %v4181, %v4185
  %v4188 = vtanh.pop %v4187
  %4190 = vrot.lane.b32.xlu0 %v4188, 64
  %v4191 = vpop.permute.xlu0 %4190
  %v4193 = vmul.f32 %v4180, %v4191
  %v4194 = vld [vmem:[%s1034] sm:$0x3]
  %v4195 = vld [vmem:[%s1032] sm:$0x3]
  %v4196 = vsub.f32 1.0, %v4194
  %v4197 = vsub.f32 1.0, %v4195
  %4199 = vset.pattern.permute.xlu0 0
  %4200 = vperm.xlu0 %4199, %v4194
  %v4201 = vpop.permute.xlu0 %4200
  %v4203 = vmul.f32 %v4134, %v4201
  %4205 = vset.pattern.permute.xlu0 0
  %4206 = vperm.xlu0 %4205, %v4195
  %v4207 = vpop.permute.xlu0 %4206
  %v4209 = vmul.f32 %v4193, %v4207
  %4210 = vst.msk [vmem:[%s3428] sm:$0x3] %vm515, %v4203
  %4212 = vst [vmem:[#allocation1] ss:$4 sm:$0xff] %v4209
  %v4213 = vld.sshfl [vmem:[#allocation1] sm:$0xff pattern:$0x73625140]
  %4214 = vrot.lane.b32.xlu0 %v4213, 64
  %v4215 = vpop.permute.xlu0 %4214
  %4217 = vst.msk [vmem:[%s3420] sm:$0x3] %vm524, %v4215
  %4219 = vset.pattern.permute.xlu0 0
  %4220 = vperm.xlu0 %4219, %v4196
  %v4221 = vpop.permute.xlu0 %4220
  %v4223 = vmul.f32 %v3962, %v4221
  %v4224 = vadd.f32 %v4203, %v4223
  %v4225 = vmul.f32 %v4128, %v4201
  %v4226 = vmul.f32 %v3965, %v4221
  %v4227 = vadd.f32 %v4225, %v4226
  %4229 = vset.pattern.permute.xlu0 0
  %4230 = vperm.xlu0 %4229, %v4197
  %v4231 = vpop.permute.xlu0 %4230
  %v4233 = vmul.f32 %v3972, %v4231
  %v4234 = vadd.f32 %v4209, %v4233
  %v4235 = vmul.f32 %v4187, %v4207
  %v4236 = vmul.f32 %v3975, %v4231
  %v4237 = vadd.f32 %v4235, %v4236
  %v4238 = vld [vmem:[%s595] sm:$0xf]
  %v4240 = vsel %vm282, %v4224, 0
  %4242 = vmatpush.msra.mxu0 0.0
  %4243 = vmatpush.msra.mxu0 0.0
  %4244 = vmatpush.msra.mxu0 0.0
  %4245 = vmatpush.msra.mxu0 0.0
  %4246 = vmatpush.msra.mxu0 0.0
  %4247 = vmatpush.msra.mxu0 0.0
  %4248 = vmatpush.msra.mxu0 0.0
  %4249 = vmatpush.msra.mxu0 0.0
  %4250 = vmatpush.msra.mxu0 %v2649
  %4251 = vmatpush.msra.mxu0 %v2647
  %4252 = vmatpush.msra.mxu0 %v2645
  %4253 = vmatpush.msra.mxu0 %v2643
  %4254 = vmatpush.msra.mxu0 %v2641
  %4255 = vmatpush.msra.mxu0 %v2639
  %4256 = vmatpush.msra.mxu0 %v2637
  %4257 = vmatpush.msra.mxu0 %v2635
  %4258 = vmatmul.f32.gmra.mxu0 %v4240
  %v4259 = vpop.f32.mrf.mxu0
  %v4260 = vadd.f32 0.0, %v4259
  %4261 = vdwg.mxu0
  %4262 = vmatpush.msra.mxu0 0.0
  %4263 = vmatpush.msra.mxu0 0.0
  %4264 = vmatpush.msra.mxu0 0.0
  %4265 = vmatpush.msra.mxu0 0.0
  %4266 = vmatpush.msra.mxu0 0.0
  %4267 = vmatpush.msra.mxu0 0.0
  %4268 = vmatpush.msra.mxu0 0.0
  %4269 = vmatpush.msra.mxu0 0.0
  %4270 = vmatpush.msra.mxu0 %v2650
  %4271 = vmatpush.msra.mxu0 %v2648
  %4272 = vmatpush.msra.mxu0 %v2646
  %4273 = vmatpush.msra.mxu0 %v2644
  %4274 = vmatpush.msra.mxu0 %v2642
  %4275 = vmatpush.msra.mxu0 %v2640
  %4276 = vmatpush.msra.mxu0 %v2638
  %4277 = vmatpush.msra.mxu0 %v2636
  %4278 = vmatmul.f32.gmra.mxu0 %v4240
  %v4279 = vpop.f32.mrf.mxu0
  %v4280 = vadd.f32 0.0, %v4279
  %4281 = vdwg.mxu0
  %v4284 = vrot.slane %v4280, 6
  %v4285 = vsel %vm197, %v4260, %v4284
  %v4287 = vadd.f32 %v4238, %v4285
  %v4288 = vld [vmem:[%s544 + $0x4] sm:$0xf]
  %v4290 = vsel %vm282, %v4234, 0
  %4292 = vmatpush.msra.mxu0 0.0
  %4293 = vmatpush.msra.mxu0 0.0
  %4294 = vmatpush.msra.mxu0 0.0
  %4295 = vmatpush.msra.mxu0 0.0
  %4296 = vmatpush.msra.mxu0 0.0
  %4297 = vmatpush.msra.mxu0 0.0
  %4298 = vmatpush.msra.mxu0 0.0
  %4299 = vmatpush.msra.mxu0 0.0
  %4300 = vmatpush.msra.mxu0 %v2665
  %4301 = vmatpush.msra.mxu0 %v2663
  %4302 = vmatpush.msra.mxu0 %v2661
  %4303 = vmatpush.msra.mxu0 %v2659
  %4304 = vmatpush.msra.mxu0 %v2657
  %4305 = vmatpush.msra.mxu0 %v2655
  %4306 = vmatpush.msra.mxu0 %v2653
  %4307 = vmatpush.msra.mxu0 %v2651
  %4308 = vmatmul.f32.gmra.mxu0 %v4290
  %v4309 = vpop.f32.mrf.mxu0
  %v4310 = vadd.f32 0.0, %v4309
  %4311 = vdwg.mxu0
  %4312 = vmatpush.msra.mxu0 0.0
  %4313 = vmatpush.msra.mxu0 0.0
  %4314 = vmatpush.msra.mxu0 0.0
  %4315 = vmatpush.msra.mxu0 0.0
  %4316 = vmatpush.msra.mxu0 0.0
  %4317 = vmatpush.msra.mxu0 0.0
  %4318 = vmatpush.msra.mxu0 0.0
  %4319 = vmatpush.msra.mxu0 0.0
  %4320 = vmatpush.msra.mxu0 %v2666
  %4321 = vmatpush.msra.mxu0 %v2664
  %4322 = vmatpush.msra.mxu0 %v2662
  %4323 = vmatpush.msra.mxu0 %v2660
  %4324 = vmatpush.msra.mxu0 %v2658
  %4325 = vmatpush.msra.mxu0 %v2656
  %4326 = vmatpush.msra.mxu0 %v2654
  %4327 = vmatpush.msra.mxu0 %v2652
  %4328 = vmatmul.f32.gmra.mxu0 %v4290
  %v4329 = vpop.f32.mrf.mxu0
  %v4330 = vadd.f32 0.0, %v4329
  %4331 = vdwg.mxu0
  %v4334 = vrot.slane %v4330, 6
  %v4335 = vsel %vm197, %v4310, %v4334
  %v4337 = vadd.f32 %v4288, %v4335
  %v4338 = vxor.u32 %v4287, 2147483648
  %v4339 = vmul.f32 %v4338, 1.442695
  %v4340 = vpow.pop %v4339
  %v4341 = vadd.f32 %v4340, 1.0
  %v4342 = vrcp.pop %v4341
  %v4343 = vmul.f32 %v4341, %v4342
  %v4344 = vsub.f32 1.0, %v4343
  %v4345 = vmul.f32 %v4342, %v4344
  %v4346 = vadd.f32 %v4342, %v4345
  %vm4347 = vweird.f32 %v4341
  %vm4348 = vweird.f32 %v4342
  %vm4349 = vmor %vm4347, %vm4348
  %v4350 = vsel %vm4349, %v4342, %v4346
  %v4351 = vand.u32 2147483647, %v4341
  %vm4352 = vcmp.eq.f32.partialorder %v4351, 8.507059e+37
  %v4353 = vand.u32 %v4341, 2147483648
  %v4354 = vor.u32 1.1754944e-38, %v4353
  %v4355 = vsel %vm4352, %v4354, %v4350
  %v4356 = vmul.f32 1.0, %v4355
  %v4358 = vrot.slane %v4287, 2
  %v4360 = vtanh.pop %v4358
  %4361 = vrot.lane.b32.xlu0 %v4287, 64
  %v4362 = vpop.permute.xlu0 %4361
  %v4363 = vrot.slane %v4362, 2
  %v4365 = vxor.u32 %v4363, 2147483648
  %v4366 = vmul.f32 %v4365, 1.442695
  %v4367 = vpow.pop %v4366
  %v4368 = vadd.f32 %v4367, 1.0
  %v4369 = vrcp.pop %v4368
  %v4370 = vmul.f32 %v4368, %v4369
  %v4371 = vsub.f32 1.0, %v4370
  %v4372 = vmul.f32 %v4369, %v4371
  %v4373 = vadd.f32 %v4369, %v4372
  %vm4374 = vweird.f32 %v4368
  %vm4375 = vweird.f32 %v4369
  %vm4376 = vmor %vm4374, %vm4375
  %v4377 = vsel %vm4376, %v4369, %v4373
  %v4378 = vand.u32 2147483647, %v4368
  %vm4379 = vcmp.eq.f32.partialorder %v4378, 8.507059e+37
  %v4380 = vand.u32 %v4368, 2147483648
  %v4381 = vor.u32 1.1754944e-38, %v4380
  %v4382 = vsel %vm4379, %v4381, %v4377
  %v4383 = vmul.f32 1.0, %v4382
  %v4384 = vmul.f32 %v4356, %v4227
  %v4385 = vmul.f32 %v4356, %v4360
  %4387 = vrot.lane.b32.xlu0 %v4385, 64
  %v4388 = vpop.permute.xlu0 %4387
  %v4390 = vadd.f32 %v4384, %v4388
  %v4391 = vtanh.pop %v4390
  %4393 = vrot.lane.b32.xlu0 %v4391, 64
  %v4394 = vpop.permute.xlu0 %4393
  %v4396 = vmul.f32 %v4383, %v4394
  %v4397 = vxor.u32 %v4337, 2147483648
  %v4398 = vmul.f32 %v4397, 1.442695
  %v4399 = vpow.pop %v4398
  %v4400 = vadd.f32 %v4399, 1.0
  %v4401 = vrcp.pop %v4400
  %v4402 = vmul.f32 %v4400, %v4401
  %v4403 = vsub.f32 1.0, %v4402
  %v4404 = vmul.f32 %v4401, %v4403
  %v4405 = vadd.f32 %v4401, %v4404
  %vm4406 = vweird.f32 %v4400
  %vm4407 = vweird.f32 %v4401
  %vm4408 = vmor %vm4406, %vm4407
  %v4409 = vsel %vm4408, %v4401, %v4405
  %v4410 = vand.u32 2147483647, %v4400
  %vm4411 = vcmp.eq.f32.partialorder %v4410, 8.507059e+37
  %v4412 = vand.u32 %v4400, 2147483648
  %v4413 = vor.u32 1.1754944e-38, %v4412
  %v4414 = vsel %vm4411, %v4413, %v4409
  %v4415 = vmul.f32 1.0, %v4414
  %v4417 = vrot.slane %v4337, 2
  %v4419 = vtanh.pop %v4417
  %4420 = vrot.lane.b32.xlu0 %v4337, 64
  %v4421 = vpop.permute.xlu0 %4420
  %v4422 = vrot.slane %v4421, 2
  %v4424 = vxor.u32 %v4422, 2147483648
  %v4425 = vmul.f32 %v4424, 1.442695
  %v4426 = vpow.pop %v4425
  %v4427 = vadd.f32 %v4426, 1.0
  %v4428 = vrcp.pop %v4427
  %v4429 = vmul.f32 %v4427, %v4428
  %v4430 = vsub.f32 1.0, %v4429
  %v4431 = vmul.f32 %v4428, %v4430
  %v4432 = vadd.f32 %v4428, %v4431
  %vm4433 = vweird.f32 %v4427
  %vm4434 = vweird.f32 %v4428
  %vm4435 = vmor %vm4433, %vm4434
  %v4436 = vsel %vm4435, %v4428, %v4432
  %v4437 = vand.u32 2147483647, %v4427
  %vm4438 = vcmp.eq.f32.partialorder %v4437, 8.507059e+37
  %v4439 = vand.u32 %v4427, 2147483648
  %v4440 = vor.u32 1.1754944e-38, %v4439
  %v4441 = vsel %vm4438, %v4440, %v4436
  %v4442 = vmul.f32 1.0, %v4441
  %v4443 = vmul.f32 %v4415, %v4237
  %v4444 = vmul.f32 %v4415, %v4419
  %4446 = vrot.lane.b32.xlu0 %v4444, 64
  %v4447 = vpop.permute.xlu0 %4446
  %v4449 = vadd.f32 %v4443, %v4447
  %v4450 = vtanh.pop %v4449
  %4452 = vrot.lane.b32.xlu0 %v4450, 64
  %v4453 = vpop.permute.xlu0 %4452
  %v4455 = vmul.f32 %v4442, %v4453
  %v4456 = vld [vmem:[%s766] sm:$0x3]
  %v4457 = vld [vmem:[%s764] sm:$0x3]
  %v4458 = vsub.f32 1.0, %v4456
  %v4459 = vsub.f32 1.0, %v4457
  %4461 = vset.pattern.permute.xlu0 0
  %4462 = vperm.xlu0 %4461, %v4456
  %v4463 = vpop.permute.xlu0 %4462
  %v4465 = vmul.f32 %v4396, %v4463
  %4467 = vset.pattern.permute.xlu0 0
  %4468 = vperm.xlu0 %4467, %v4457
  %v4469 = vpop.permute.xlu0 %4468
  %v4471 = vmul.f32 %v4455, %v4469
  %4472 = vst.msk [vmem:[%s3164] sm:$0x3] %vm515, %v4465
  %4474 = vst [vmem:[#allocation1] ss:$4 sm:$0xff] %v4471
  %v4475 = vld.sshfl [vmem:[#allocation1] sm:$0xff pattern:$0x73625140]
  %4476 = vrot.lane.b32.xlu0 %v4475, 64
  %v4477 = vpop.permute.xlu0 %4476
  %4479 = vst.msk [vmem:[%s3156] sm:$0x3] %vm524, %v4477
  %4481 = vset.pattern.permute.xlu0 0
  %4482 = vperm.xlu0 %4481, %v4458
  %v4483 = vpop.permute.xlu0 %4482
  %v4485 = vmul.f32 %v4224, %v4483
  %v4486 = vadd.f32 %v4465, %v4485
  %v4487 = vmul.f32 %v4390, %v4463
  %v4488 = vmul.f32 %v4227, %v4483
  %v4489 = vadd.f32 %v4487, %v4488
  %4491 = vset.pattern.permute.xlu0 0
  %4492 = vperm.xlu0 %4491, %v4459
  %v4493 = vpop.permute.xlu0 %4492
  %v4495 = vmul.f32 %v4234, %v4493
  %v4496 = vadd.f32 %v4471, %v4495
  %v4497 = vmul.f32 %v4449, %v4469
  %v4498 = vmul.f32 %v4237, %v4493
  %v4499 = vadd.f32 %v4497, %v4498
  %v4500 = vld [vmem:[%s332] sm:$0xf]
  %v4502 = vsel %vm282, %v4486, 0
  %4504 = vmatpush.msra.mxu0 0.0
  %4505 = vmatpush.msra.mxu0 0.0
  %4506 = vmatpush.msra.mxu0 0.0
  %4507 = vmatpush.msra.mxu0 0.0
  %4508 = vmatpush.msra.mxu0 0.0
  %4509 = vmatpush.msra.mxu0 0.0
  %4510 = vmatpush.msra.mxu0 0.0
  %4511 = vmatpush.msra.mxu0 0.0
  %4512 = vmatpush.msra.mxu0 %v2649
  %4513 = vmatpush.msra.mxu0 %v2647
  %4514 = vmatpush.msra.mxu0 %v2645
  %4515 = vmatpush.msra.mxu0 %v2643
  %4516 = vmatpush.msra.mxu0 %v2641
  %4517 = vmatpush.msra.mxu0 %v2639
  %4518 = vmatpush.msra.mxu0 %v2637
  %4519 = vmatpush.msra.mxu0 %v2635
  %4520 = vmatmul.f32.gmra.mxu0 %v4502
  %v4521 = vpop.f32.mrf.mxu0
  %v4522 = vadd.f32 0.0, %v4521
  %4523 = vdwg.mxu0
  %4524 = vmatpush.msra.mxu0 0.0
  %4525 = vmatpush.msra.mxu0 0.0
  %4526 = vmatpush.msra.mxu0 0.0
  %4527 = vmatpush.msra.mxu0 0.0
  %4528 = vmatpush.msra.mxu0 0.0
  %4529 = vmatpush.msra.mxu0 0.0
  %4530 = vmatpush.msra.mxu0 0.0
  %4531 = vmatpush.msra.mxu0 0.0
  %4532 = vmatpush.msra.mxu0 %v2650
  %4533 = vmatpush.msra.mxu0 %v2648
  %4534 = vmatpush.msra.mxu0 %v2646
  %4535 = vmatpush.msra.mxu0 %v2644
  %4536 = vmatpush.msra.mxu0 %v2642
  %4537 = vmatpush.msra.mxu0 %v2640
  %4538 = vmatpush.msra.mxu0 %v2638
  %4539 = vmatpush.msra.mxu0 %v2636
  %4540 = vmatmul.f32.gmra.mxu0 %v4502
  %v4541 = vpop.f32.mrf.mxu0
  %v4542 = vadd.f32 0.0, %v4541
  %4543 = vdwg.mxu0
  %v4546 = vrot.slane %v4542, 6
  %v4547 = vsel %vm197, %v4522, %v4546
  %v4549 = vadd.f32 %v4500, %v4547
  %v4550 = vld [vmem:[#allocation2 + $0x4] sm:$0xf]
  %v4552 = vsel %vm282, %v4496, 0
  %4554 = vmatpush.msra.mxu0 0.0
  %4555 = vmatpush.msra.mxu0 0.0
  %4556 = vmatpush.msra.mxu0 0.0
  %4557 = vmatpush.msra.mxu0 0.0
  %4558 = vmatpush.msra.mxu0 0.0
  %4559 = vmatpush.msra.mxu0 0.0
  %4560 = vmatpush.msra.mxu0 0.0
  %4561 = vmatpush.msra.mxu0 0.0
  %4562 = vmatpush.msra.mxu0 %v2665
  %4563 = vmatpush.msra.mxu0 %v2663
  %4564 = vmatpush.msra.mxu0 %v2661
  %4565 = vmatpush.msra.mxu0 %v2659
  %4566 = vmatpush.msra.mxu0 %v2657
  %4567 = vmatpush.msra.mxu0 %v2655
  %4568 = vmatpush.msra.mxu0 %v2653
  %4569 = vmatpush.msra.mxu0 %v2651
  %4570 = vmatmul.f32.gmra.mxu0 %v4552
  %v4571 = vpop.f32.mrf.mxu0
  %v4572 = vadd.f32 0.0, %v4571
  %4573 = vdwg.mxu0
  %4574 = vmatpush.msra.mxu0 0.0
  %4575 = vmatpush.msra.mxu0 0.0
  %4576 = vmatpush.msra.mxu0 0.0
  %4577 = vmatpush.msra.mxu0 0.0
  %4578 = vmatpush.msra.mxu0 0.0
  %4579 = vmatpush.msra.mxu0 0.0
  %4580 = vmatpush.msra.mxu0 0.0
  %4581 = vmatpush.msra.mxu0 0.0
  %4582 = vmatpush.msra.mxu0 %v2666
  %4583 = vmatpush.msra.mxu0 %v2664
  %4584 = vmatpush.msra.mxu0 %v2662
  %4585 = vmatpush.msra.mxu0 %v2660
  %4586 = vmatpush.msra.mxu0 %v2658
  %4587 = vmatpush.msra.mxu0 %v2656
  %4588 = vmatpush.msra.mxu0 %v2654
  %4589 = vmatpush.msra.mxu0 %v2652
  %4590 = vmatmul.f32.gmra.mxu0 %v4552
  %v4591 = vpop.f32.mrf.mxu0
  %v4592 = vadd.f32 0.0, %v4591
  %4593 = vdwg.mxu0
  %v4596 = vrot.slane %v4592, 6
  %v4597 = vsel %vm197, %v4572, %v4596
  %v4599 = vadd.f32 %v4550, %v4597
  %v4600 = vxor.u32 %v4549, 2147483648
  %v4601 = vmul.f32 %v4600, 1.442695
  %v4602 = vpow.pop %v4601
  %v4603 = vadd.f32 %v4602, 1.0
  %v4604 = vrcp.pop %v4603
  %v4605 = vmul.f32 %v4603, %v4604
  %v4606 = vsub.f32 1.0, %v4605
  %v4607 = vmul.f32 %v4604, %v4606
  %v4608 = vadd.f32 %v4604, %v4607
  %vm4609 = vweird.f32 %v4603
  %vm4610 = vweird.f32 %v4604
  %vm4611 = vmor %vm4609, %vm4610
  %v4612 = vsel %vm4611, %v4604, %v4608
  %v4613 = vand.u32 2147483647, %v4603
  %vm4614 = vcmp.eq.f32.partialorder %v4613, 8.507059e+37
  %v4615 = vand.u32 %v4603, 2147483648
  %v4616 = vor.u32 1.1754944e-38, %v4615
  %v4617 = vsel %vm4614, %v4616, %v4612
  %v4618 = vmul.f32 1.0, %v4617
  %v4620 = vrot.slane %v4549, 2
  %v4622 = vtanh.pop %v4620
  %4623 = vrot.lane.b32.xlu0 %v4549, 64
  %v4624 = vpop.permute.xlu0 %4623
  %v4625 = vrot.slane %v4624, 2
  %v4627 = vxor.u32 %v4625, 2147483648
  %v4628 = vmul.f32 %v4627, 1.442695
  %v4629 = vpow.pop %v4628
  %v4630 = vadd.f32 %v4629, 1.0
  %v4631 = vrcp.pop %v4630
  %v4632 = vmul.f32 %v4630, %v4631
  %v4633 = vsub.f32 1.0, %v4632
  %v4634 = vmul.f32 %v4631, %v4633
  %v4635 = vadd.f32 %v4631, %v4634
  %vm4636 = vweird.f32 %v4630
  %vm4637 = vweird.f32 %v4631
  %vm4638 = vmor %vm4636, %vm4637
  %v4639 = vsel %vm4638, %v4631, %v4635
  %v4640 = vand.u32 2147483647, %v4630
  %vm4641 = vcmp.eq.f32.partialorder %v4640, 8.507059e+37
  %v4642 = vand.u32 %v4630, 2147483648
  %v4643 = vor.u32 1.1754944e-38, %v4642
  %v4644 = vsel %vm4641, %v4643, %v4639
  %v4645 = vmul.f32 1.0, %v4644
  %v4646 = vmul.f32 %v4618, %v4489
  %v4647 = vmul.f32 %v4618, %v4622
  %4649 = vrot.lane.b32.xlu0 %v4647, 64
  %v4650 = vpop.permute.xlu0 %4649
  %v4652 = vadd.f32 %v4646, %v4650
  %v4653 = vtanh.pop %v4652
  %4655 = vrot.lane.b32.xlu0 %v4653, 64
  %v4656 = vpop.permute.xlu0 %4655
  %v4658 = vmul.f32 %v4645, %v4656
  %v4659 = vxor.u32 %v4599, 2147483648
  %v4660 = vmul.f32 %v4659, 1.442695
  %v4661 = vpow.pop %v4660
  %v4662 = vadd.f32 %v4661, 1.0
  %v4663 = vrcp.pop %v4662
  %v4664 = vmul.f32 %v4662, %v4663
  %v4665 = vsub.f32 1.0, %v4664
  %v4666 = vmul.f32 %v4663, %v4665
  %v4667 = vadd.f32 %v4663, %v4666
  %vm4668 = vweird.f32 %v4662
  %vm4669 = vweird.f32 %v4663
  %vm4670 = vmor %vm4668, %vm4669
  %v4671 = vsel %vm4670, %v4663, %v4667
  %v4672 = vand.u32 2147483647, %v4662
  %vm4673 = vcmp.eq.f32.partialorder %v4672, 8.507059e+37
  %v4674 = vand.u32 %v4662, 2147483648
  %v4675 = vor.u32 1.1754944e-38, %v4674
  %v4676 = vsel %vm4673, %v4675, %v4671
  %v4677 = vmul.f32 1.0, %v4676
  %v4679 = vrot.slane %v4599, 2
  %v4681 = vtanh.pop %v4679
  %4682 = vrot.lane.b32.xlu0 %v4599, 64
  %v4683 = vpop.permute.xlu0 %4682
  %v4684 = vrot.slane %v4683, 2
  %v4686 = vxor.u32 %v4684, 2147483648
  %v4687 = vmul.f32 %v4686, 1.442695
  %v4688 = vpow.pop %v4687
  %v4689 = vadd.f32 %v4688, 1.0
  %v4690 = vrcp.pop %v4689
  %v4691 = vmul.f32 %v4689, %v4690
  %v4692 = vsub.f32 1.0, %v4691
  %v4693 = vmul.f32 %v4690, %v4692
  %v4694 = vadd.f32 %v4690, %v4693
  %vm4695 = vweird.f32 %v4689
  %vm4696 = vweird.f32 %v4690
  %vm4697 = vmor %vm4695, %vm4696
  %v4698 = vsel %vm4697, %v4690, %v4694
  %v4699 = vand.u32 2147483647, %v4689
  %vm4700 = vcmp.eq.f32.partialorder %v4699, 8.507059e+37
  %v4701 = vand.u32 %v4689, 2147483648
  %v4702 = vor.u32 1.1754944e-38, %v4701
  %v4703 = vsel %vm4700, %v4702, %v4698
  %v4704 = vmul.f32 1.0, %v4703
  %v4705 = vmul.f32 %v4677, %v4499
  %v4706 = vmul.f32 %v4677, %v4681
  %4708 = vrot.lane.b32.xlu0 %v4706, 64
  %v4709 = vpop.permute.xlu0 %4708
  %v4711 = vadd.f32 %v4705, %v4709
  %v4712 = vtanh.pop %v4711
  %4714 = vrot.lane.b32.xlu0 %v4712, 64
  %v4715 = vpop.permute.xlu0 %4714
  %v4717 = vmul.f32 %v4704, %v4715
  %v4718 = vld [vmem:[%s499] sm:$0x3]
  %v4719 = vld [vmem:[%s1] sm:$0x3]
  %4721 = vset.pattern.permute.xlu0 0
  %4722 = vperm.xlu0 %4721, %v4718
  %v4723 = vpop.permute.xlu0 %4722
  %v4725 = vmul.f32 %v4658, %v4723
  %4727 = vset.pattern.permute.xlu0 0
  %4728 = vperm.xlu0 %4727, %v4719
  %v4729 = vpop.permute.xlu0 %4728
  %v4731 = vmul.f32 %v4717, %v4729
  %4732 = vst.msk [vmem:[%s2902] sm:$0x3] %vm515, %v4725
  %4734 = vst [vmem:[#allocation1] ss:$4 sm:$0xff] %v4731
  %v4735 = vld.sshfl [vmem:[#allocation1] sm:$0xff pattern:$0x73625140]
  %4736 = vrot.lane.b32.xlu0 %v4735, 64
  %v4737 = vpop.permute.xlu0 %4736
  %4739 = vst.msk [vmem:[%s10] sm:$0x3] %vm524, %v4737
  // Predicated region
  $region42: #{seq2seq_with_attention.2} parent=0 // pred_check
    _
  $region43: #{seq2seq_with_attention.2} parent=0 // pred_check_branch
    %4741 = sbr.rel (0) target = $region45
  $region44: #{seq2seq_with_attention.2} parent=0 // pred_region
    _
  $region45: #{seq2seq_with_attention.2} parent=0 // pred_fallthru
    _
  // Predicated region
  $region46: #{seq2seq_with_attention.2} parent=0 // pred_check
    _
  $region47: #{seq2seq_with_attention.2} parent=0 // pred_check_branch
    %4743 = sbr.rel (0) target = $region49
  $region48: #{seq2seq_with_attention.2} parent=0 // pred_region
    _
  $region49: #{seq2seq_with_attention.2} parent=0 // pred_fallthru
    _

</llo_original>
